<compile_context>
chip_gen: v5e
topology: v5e:2x2
jax: 0.10.0
libtpu: 0.0.40
codegen_flags: <defaults>
</compile_context>

<pallas_src>
import math

import jax
import jax.numpy as jnp
from jax import lax
from jax.experimental import pallas as pl
from jax.experimental.pallas import tpu as pltpu

NEG_SLOPE = 0.1
BN_EPS = 1e-3
LANE = 128
_TAPS = tuple((dy, dx) for dy in range(3) for dx in range(3))


# --------------------------------------------------------------------------- utils
def _ceil_to(v, m):
    return ((v + m - 1) // m) * m


def _compiler_params():
    return pltpu.CompilerParams(
        dimension_semantics=("parallel", "parallel"),
        vmem_limit_bytes=48 * 1024 * 1024,
    )


def _fold_bn(gamma, beta, mean, var):
    scale = gamma * lax.rsqrt(var + BN_EPS)
    shift = beta - mean * scale
    return scale, shift


def _pad_vec(v, cp, value):
    c = v.shape[0]
    if cp > c:
        v = jnp.pad(v, (0, cp - c), constant_values=value)
    return v.reshape(1, cp).astype(jnp.float32)


def _conv3x3_w_to_mat(w_oihw, cin_p, cout_p):
    """(Cout, Cin, 3, 3) -> bf16 (9*Cin_p, Cout_p), tap-major rows."""
    cout, cin, _, _ = w_oihw.shape
    wt = jnp.transpose(w_oihw, (2, 3, 1, 0))            # (3, 3, Cin, Cout)
    wt = jnp.pad(wt, ((0, 0), (0, 0), (0, cin_p - cin), (0, cout_p - cout)))
    return wt.reshape(9 * cin_p, cout_p).astype(jnp.bfloat16)


def _phase_flatten(x_nhwc, s, hph, wph, cin_p, pad_val_c):
    """Pad spatially (value pad_val_c per channel), space-to-depth by stride s,
    flatten to (N, s*s*hph*wph, cin_p) bf16 rows."""
    n, h, w, c = x_nhwc.shape
    hp, wp = s * hph, s * wph
    base = jnp.broadcast_to(pad_val_c.astype(jnp.float32), (n, hp, wp, c))
    xpad = base.at[:, 1:h + 1, 1:w + 1, :].set(x_nhwc)
    phases = [xpad[:, py::s, px::s, :] for py in range(s) for px in range(s)]
    xph = jnp.stack(phases, axis=1).reshape(n, s * s * hph * wph, c)
    if cin_p > c:
        xph = jnp.pad(xph, ((0, 0), (0, 0), (0, cin_p - c)))
    return xph.astype(jnp.bfloat16)


def _embed(v_nhwc, rows, cols, cpad, r0, c0, dtype):
    """Place v into a zero (N, rows, cols, cpad) canvas at (r0, c0, channel 0)."""
    n, hh, ww, c = v_nhwc.shape
    base = jnp.zeros((n, rows, cols, cpad), dtype)
    return base.at[:, r0:r0 + hh, c0:c0 + ww, :c].set(v_nhwc.astype(dtype))


# --------------------------------------------------------------------------- kernels
def _make_conv1_kernel(m, wph, rph, cin_p, stride, prologue):
    """[BN1+lrelu] -> 3x3 conv (9 shifted matmuls) -> +bias -> BN2 affine -> lrelu."""

    def kernel(*refs):
        if prologue:
            (x_ref, w_ref, b_ref, s2_ref, t2_ref, s1_ref, t1_ref,
             o_ref, acc_ref) = refs
        else:
            x_ref, w_ref, b_ref, s2_ref, t2_ref, o_ref, acc_ref = refs

        a = x_ref[0]                                    # (S*S*rph, cin_p) bf16
        if prologue:                                    # fused BN1 + LeakyReLU
            af = a.astype(jnp.float32) * s1_ref[...] + t1_ref[...]
            a = jnp.where(af > 0, af, NEG_SLOPE * af).astype(jnp.bfloat16)

        for t, (dy, dx) in enumerate(_TAPS):
            ph = (dy % stride) * stride + (dx % stride)
            off = ph * rph + (dy // stride) * wph + (dx // stride)
            contrib = jnp.dot(a[off:off + m, :],
                              w_ref[t * cin_p:(t + 1) * cin_p, :],
                              preferred_element_type=jnp.float32)
            if t == 0:
                acc_ref[...] = contrib
            else:
                acc_ref[...] += contrib

        y = acc_ref[...] + b_ref[...]
        z = y * s2_ref[...] + t2_ref[...]               # fused BN2 affine
        o_ref[0] = jnp.where(z > 0, z, NEG_SLOPE * z).astype(o_ref.dtype)

    return kernel


def _make_conv2_kernel(m, wph, cp, project, prologue):
    """3x3 conv (stride 1) -> +bias -> + residual (identity or fused 1x1 proj)."""

    def kernel(*refs):
        if project and prologue:
            (h_ref, w_ref, b_ref, xs_ref, ws_ref, bs_ref, s1_ref, t1_ref,
             o_ref, acc_ref) = refs
        elif project:
            h_ref, w_ref, b_ref, xs_ref, ws_ref, bs_ref, o_ref, acc_ref = refs
        else:
            h_ref, w_ref, b_ref, res_ref, o_ref, acc_ref = refs

        h = h_ref[0]                                    # (rph2, cp) bf16
        for t, (dy, dx) in enumerate(_TAPS):
            off = dy * wph + dx
            contrib = jnp.dot(h[off:off + m, :],
                              w_ref[t * cp:(t + 1) * cp, :],
                              preferred_element_type=jnp.float32)
            if t == 0:
                acc_ref[...] = contrib
            else:
                acc_ref[...] += contrib

        y = acc_ref[...] + b_ref[...]
        if project:                                     # fused 1x1 shortcut conv
            xs = xs_ref[0]
            if prologue:
                af = xs.astype(jnp.float32) * s1_ref[...] + t1_ref[...]
                xs = jnp.where(af > 0, af, NEG_SLOPE * af).astype(jnp.bfloat16)
            y = y + jnp.dot(xs, ws_ref[...],
                            preferred_element_type=jnp.float32) + bs_ref[...]
        else:                                           # identity residual
            y = y + res_ref[0]
        o_ref[0] = y.astype(o_ref.dtype)

    return kernel


# --------------------------------------------------------------------------- pallas_call wrappers
def _conv1_call(xph, w_mat, bias, s2, t2, s1, t1, *, stride, hph, wph, ho, prologue):
    n, rtot, cin_p = xph.shape
    cout_p = w_mat.shape[1]
    rph = hph * wph
    m = ho * wph
    tn = 256 if cout_p % 256 == 0 else LANE
    nj = cout_p // tn

    in_specs = [
        pl.BlockSpec((1, rtot, cin_p), lambda b, j: (b, 0, 0)),
        pl.BlockSpec((9 * cin_p, tn), lambda b, j: (0, j)),
        pl.BlockSpec((1, tn), lambda b, j: (0, j)),
        pl.BlockSpec((1, tn), lambda b, j: (0, j)),
        pl.BlockSpec((1, tn), lambda b, j: (0, j)),
    ]
    args = [xph, w_mat, bias, s2, t2]
    if prologue:
        in_specs += [pl.BlockSpec((1, cin_p), lambda b, j: (0, 0)),
                     pl.BlockSpec((1, cin_p), lambda b, j: (0, 0))]
        args += [s1, t1]

    return pl.pallas_call(
        _make_conv1_kernel(m, wph, rph, cin_p, stride, prologue),
        out_shape=jax.ShapeDtypeStruct((n, m, cout_p), jnp.bfloat16),
        grid=(n, nj),
        in_specs=in_specs,
        out_specs=pl.BlockSpec((1, m, tn), lambda b, j: (b, 0, j)),
        scratch_shapes=[pltpu.VMEM((m, tn), jnp.float32)],
        compiler_params=_compiler_params(),
    )(*args)


def _conv2_call(hph, w2, b2, res_or_xs, ws=None, bs=None, s1=None, t1=None, *,
                wph, ho, project, prologue):
    n, rph2, cp = hph.shape
    m = ho * wph
    tn = 256 if cp % 256 == 0 else LANE
    nj = cp // tn
    cin_p = res_or_xs.shape[2]

    in_specs = [
        pl.BlockSpec((1, rph2, cp), lambda b, j: (b, 0, 0)),
        pl.BlockSpec((9 * cp, tn), lambda b, j: (0, j)),
        pl.BlockSpec((1, tn), lambda b, j: (0, j)),
    ]
    args = [hph, w2, b2]
    if project:
        in_specs += [
            pl.BlockSpec((1, m, cin_p), lambda b, j: (b, 0, 0)),
            pl.BlockSpec((cin_p, tn), lambda b, j: (0, j)),
            pl.BlockSpec((1, tn), lambda b, j: (0, j)),
        ]
        args += [res_or_xs, ws, bs]
        if prologue:
            in_specs += [pl.BlockSpec((1, cin_p), lambda b, j: (0, 0)),
                         pl.BlockSpec((1, cin_p), lambda b, j: (0, 0))]
            args += [s1, t1]
    else:
        in_specs.append(pl.BlockSpec((1, m, tn), lambda b, j: (b, 0, j)))
        args.append(res_or_xs)

    return pl.pallas_call(
        _make_conv2_kernel(m, wph, cp, project, prologue),
        out_shape=jax.ShapeDtypeStruct((n, m, cp), jnp.float32),
        grid=(n, nj),
        in_specs=in_specs,
        out_specs=pl.BlockSpec((1, m, tn), lambda b, j: (b, 0, j)),
        scratch_shapes=[pltpu.VMEM((m, tn), jnp.float32)],
        compiler_params=_compiler_params(),
    )(*args)


# --------------------------------------------------------------------------- forward
def basic_block_forward(x_nchw, params, stride, activate_before_residual=False,
                        drop_rate=0.0):
    assert drop_rate == 0.0  # TODO(synk): drop_rate > 0 dropout not implemented
    in_planes = x_nchw.shape[1]
    out_planes = params["conv1_w"].shape[0]
    equal = in_planes == out_planes
    if equal:
        assert stride == 1, "identity residual requires stride 1"

    x = jnp.transpose(x_nchw, (0, 2, 3, 1)).astype(jnp.float32)   # NHWC
    n, h, w, _ = x.shape
    cin_p = _ceil_to(in_planes, LANE)
    cout_p = _ceil_to(out_planes, LANE)
    s = stride

    s1, t1 = _fold_bn(params["bn1_gamma"], params["bn1_beta"],
                      params["bn1_mean"], params["bn1_var"])
    s2, t2 = _fold_bn(params["bn2_gamma"], params["bn2_beta"],
                      params["bn2_mean"], params["bn2_var"])
    s1p, t1p = _pad_vec(s1, cin_p, 1.0), _pad_vec(t1, cin_p, 0.0)
    s2p, t2p = _pad_vec(s2, cout_p, 1.0), _pad_vec(t2, cout_p, 0.0)

    # conv1 sees the BN1+lrelu-activated input except in the
    # (not equalInOut, not activate_before_residual) branch of the module.
    prologue = equal or activate_before_residual

    # --- kernel A geometry (3x3 conv, stride s, via space-to-depth phases) ---
    ho = (h - 1) // s + 1
    wo = (w - 1) // s + 1
    qmax = 2 // s
    wph1 = wo + qmax
    hph1 = ho + qmax + 1

    if prologue:
        ok = jnp.abs(s1) > 1e-8
        pad_val = jnp.where(ok, -t1 / jnp.where(ok, s1, 1.0), 0.0)
        # TODO(synk): if bn1 gamma == 0 the pre-activation pad value cannot map
        # to exactly zero after the fused affine+lrelu.
    else:
        pad_val = jnp.zeros((in_planes,), jnp.float32)

    xph = _phase_flatten(x, s, hph1, wph1, cin_p, pad_val)
    w1m = _conv3x3_w_to_mat(params["conv1_w"], cin_p, cout_p)
    b1p = _pad_vec(params["conv1_b"], cout_p, 0.0)

    h_flat = _conv1_call(xph, w1m, b1p, s2p, t2p, s1p, t1p,
                         stride=s, hph=hph1, wph=wph1, ho=ho, prologue=prologue)

    # --- kernel B geometry (3x3 conv, stride 1, on (ho, wo)) ---
    wph2 = wo + 2
    hph2 = ho + 3
    h_valid = h_flat.reshape(n, ho, wph1, cout_p)[:, :, :wo, :]
    hph = _embed(h_valid, hph2, wph2, cout_p, 1, 1,
                 jnp.bfloat16).reshape(n, hph2 * wph2, cout_p)

    w2m = _conv3x3_w_to_mat(params["conv2_w"], cout_p, cout_p)
    b2p = _pad_vec(params["conv2_b"], cout_p, 0.0)

    if equal:
        res = _embed(x, ho, wph2, cout_p, 0, 0,
                     jnp.float32).reshape(n, ho * wph2, cout_p)
        out_flat = _conv2_call(hph, w2m, b2p, res,
                               wph=wph2, ho=ho, project=False, prologue=False)
    else:
        xs = x[:, ::s, ::s, :]
        xsf = _embed(xs, ho, wph2, cin_p, 0, 0,
                     jnp.bfloat16).reshape(n, ho * wph2, cin_p)
        wsm = jnp.pad(jnp.transpose(params["short_w"][:, :, 0, 0], (1, 0)),
                      ((0, cin_p - in_planes), (0, cout_p - out_planes))
                      ).astype(jnp.bfloat16)
        bsp = _pad_vec(params["short_b"], cout_p, 0.0)
        out_flat = _conv2_call(hph, w2m, b2p, xsf, wsm, bsp, s1p, t1p,
                               wph=wph2, ho=ho, project=True,
                               prologue=activate_before_residual)

    out = out_flat.reshape(n, ho, wph2, cout_p)[:, :, :wo, :out_planes]
    return jnp.transpose(out, (0, 3, 1, 2))             # back to NCHW


def network_block_forward(x_nchw, layers_params, stride, drop_rate=0.0,
                          activate_before_residual=False):
    out = x_nchw
    for i, p in enumerate(layers_params):
        out = basic_block_forward(out, p, stride if i == 0 else 1,
                                  activate_before_residual, drop_rate)
    return out


# --------------------------------------------------------------------------- reference (pure JAX, NCHW, f32)
def reference_basic_block(x, p, stride, activate_before_residual):
    def bn(v, g, b, m, var):
        inv = lax.rsqrt(var + BN_EPS)
        return (v - m[None, :, None, None]) * (g * inv)[None, :, None, None] \
            + b[None, :, None, None]

    def lrelu(v):
        return jnp.where(v > 0, v, NEG_SLOPE * v)

    def conv(v, w, b, s, pad):
        y = lax.conv_general_dilated(
            v, w, (s, s), [(pad, pad), (pad, pad)],
            dimension_numbers=("NCHW", "OIHW", "NCHW"),
            precision=lax.Precision.HIGHEST)
        return y + b[None, :, None, None]

    in_planes = x.shape[1]
    out_planes = p["conv1_w"].shape[0]
    equal = in_planes == out_planes

    if (not equal) and activate_before_residual:
        x = lrelu(bn(x, p["bn1_gamma"], p["bn1_beta"], p["bn1_mean"], p["bn1_var"]))
        conv1_in = x
    elif equal:
        conv1_in = lrelu(bn(x, p["bn1_gamma"], p["bn1_beta"],
                            p["bn1_mean"], p["bn1_var"]))
    else:
        conv1_in = x

    out = lrelu(bn(conv(conv1_in, p["conv1_w"], p["conv1_b"], stride, 1),
                   p["bn2_gamma"], p["bn2_beta"], p["bn2_mean"], p["bn2_var"]))
    out = conv(out, p["conv2_w"], p["conv2_b"], 1, 1)
    if equal:
        return x + out
    return conv(x, p["short_w"], p["short_b"], stride, 0) + out


def reference_network_block(x, layers_params, stride, activate_before_residual=False):
    out = x
    for i, p in enumerate(layers_params):
        out = reference_basic_block(out, p, stride if i == 0 else 1,
                                    activate_before_residual)
    return out


# --------------------------------------------------------------------------- params
def init_params(key, in_planes, out_planes):
    ks = jax.random.split(key, 16)
    f32 = jnp.float32
    p = {
        "bn1_gamma": jax.random.uniform(ks[0], (in_planes,), f32, 0.5, 1.5),
        "bn1_beta": 0.1 * jax.random.normal(ks[1], (in_planes,), f32),
        "bn1_mean": 0.1 * jax.random.normal(ks[2], (in_planes,), f32),
        "bn1_var": jax.random.uniform(ks[3], (in_planes,), f32, 0.5, 1.5),
        "conv1_w": jax.random.normal(ks[4], (out_planes, in_planes, 3, 3), f32)
                   * math.sqrt(2.0 / (9 * in_planes)),
        "conv1_b": 0.01 * jax.random.normal(ks[5], (out_planes,), f32),
        "bn2_gamma": jax.random.uniform(ks[6], (out_planes,), f32, 0.5, 1.5),
        "bn2_beta": 0.1 * jax.random.normal(ks[7], (out_planes,), f32),
        "bn2_mean": 0.1 * jax.random.normal(ks[8], (out_planes,), f32),
        "bn2_var": jax.random.uniform(ks[9], (out_planes,), f32, 0.5, 1.5),
        "conv2_w": jax.random.normal(ks[10], (out_planes, out_planes, 3, 3), f32)
                   * math.sqrt(2.0 / (9 * out_planes)),
        "conv2_b": 0.01 * jax.random.normal(ks[11], (out_planes,), f32),
    }
    if in_planes != out_planes:
        p["short_w"] = jax.random.normal(ks[12], (out_planes, in_planes, 1, 1), f32) \
                       * math.sqrt(2.0 / in_planes)
        p["short_b"] = 0.01 * jax.random.normal(ks[13], (out_planes,), f32)
    return p


# --------------------------------------------------------------------------- main
if __name__ == "__main__":
    key = jax.random.PRNGKey(0)
    kx1, kx2, kpa, kpb, kpc = jax.random.split(key, 5)

    fwd = jax.jit(network_block_forward,
                  static_argnames=("stride", "activate_before_residual"))

    # Case 1: NetworkBlock(nb_layers=2, 4 -> 8 planes, stride 2,
    #                      activate_before_residual=True)
    #   layer 0: projection shortcut + stride-2 conv, layer 1: identity residual.
    x1 = jax.random.normal(kx1, (2, 4, 16, 16), dtype=jnp.float32)
    p1 = [init_params(kpa, 4, 8), init_params(kpb, 8, 8)]
    y1 = jax.block_until_ready(fwd(x1, p1, stride=2, activate_before_residual=True))
    r1 = reference_network_block(x1, p1, stride=2, activate_before_residual=True)
    assert y1.shape == (2, 8, 8, 8), y1.shape
    err1 = float(jnp.max(jnp.abs(y1 - r1)))
    assert jnp.allclose(y1, r1, atol=2e-1, rtol=1e-1), err1  # bf16 matmuls, f32 accum

    # Case 2: NetworkBlock(nb_layers=1, 8 -> 16 planes, stride 1,
    #                      activate_before_residual=False)
    #   projection shortcut, conv1 on the raw (un-activated) input.
    x2 = jax.random.normal(kx2, (2, 8, 16, 16), dtype=jnp.float32)
    p2 = [init_params(kpc, 8, 16)]
    y2 = jax.block_until_ready(fwd(x2, p2, stride=1, activate_before_residual=False))
    r2 = reference_network_block(x2, p2, stride=1, activate_before_residual=False)
    assert y2.shape == (2, 16, 16, 16), y2.shape
    err2 = float(jnp.max(jnp.abs(y2 - r2)))
    assert jnp.allclose(y2, r2, atol=2e-1, rtol=1e-1), err2

    print("KERNEL_OK")
</pallas_src>

<mosaic_0001>
module attributes {stable_mosaic.version = 11 : i64} {
  func.func @kernel(%arg0: i32, %arg1: i32, %arg2: memref<1x360x128xbf16, #tpu.memory_space<vmem>>, %arg3: memref<1152x128xbf16, #tpu.memory_space<vmem>>, %arg4: memref<1x128xf32, #tpu.memory_space<vmem>>, %arg5: memref<1x128xf32, #tpu.memory_space<vmem>>, %arg6: memref<1x128xf32, #tpu.memory_space<vmem>>, %arg7: memref<1x128xf32, #tpu.memory_space<vmem>>, %arg8: memref<1x128xf32, #tpu.memory_space<vmem>>, %arg9: memref<1x72x128xbf16, #tpu.memory_space<vmem>>, %arg10: memref<72x128xf32, #tpu.memory_space<vmem>>) attributes {dimension_semantics = [#tpu.dimension_semantics<parallel>, #tpu.dimension_semantics<parallel>], iteration_bounds = array<i64: 2, 1>, scalar_prefetch = 0 : i64, scratch_operands = 1 : i64, tpu.core_type = #tpu.core_type<tc>, window_params = [{transform_indices = @transform_0, window_bounds = array<i64: 1, 360, 128>}, {transform_indices = @transform_1, window_bounds = array<i64: 1152, 128>}, {transform_indices = @transform_2, window_bounds = array<i64: 1, 128>}, {transform_indices = @transform_3, window_bounds = array<i64: 1, 128>}, {transform_indices = @transform_4, window_bounds = array<i64: 1, 128>}, {pipeline_mode = #tpu.pipeline_mode<synchronous>, transform_indices = @transform_5, window_bounds = array<i64: 1, 128>}, {pipeline_mode = #tpu.pipeline_mode<synchronous>, transform_indices = @transform_6, window_bounds = array<i64: 1, 128>}, {transform_indices = @transform_7, window_bounds = array<i64: 1, 72, 128>}]} {
    %c0 = arith.constant 0 : index
    %c0_0 = arith.constant 0 : index
    %c0_1 = arith.constant 0 : index
    %0 = vector.load %arg2[%c0, %c0_0, %c0_1] : memref<1x360x128xbf16, #tpu.memory_space<vmem>>, vector<1x360x128xbf16>
    %1 = vector.shape_cast %0 : vector<1x360x128xbf16> to vector<360x128xbf16>
    %2 = arith.extf %1 : vector<360x128xbf16> to vector<360x128xf32>
    %c0_2 = arith.constant 0 : index
    %c0_3 = arith.constant 0 : index
    %3 = vector.load %arg7[%c0_2, %c0_3] : memref<1x128xf32, #tpu.memory_space<vmem>>, vector<1x128xf32>
    %4 = vector.broadcast %3 : vector<1x128xf32> to vector<360x128xf32>
    %5 = arith.mulf %2, %4 : vector<360x128xf32>
    %c0_4 = arith.constant 0 : index
    %c0_5 = arith.constant 0 : index
    %6 = vector.load %arg8[%c0_4, %c0_5] : memref<1x128xf32, #tpu.memory_space<vmem>>, vector<1x128xf32>
    %7 = vector.broadcast %6 : vector<1x128xf32> to vector<360x128xf32>
    %8 = arith.addf %5, %7 : vector<360x128xf32>
    %cst = arith.constant 0.000000e+00 : f32
    %9 = vector.broadcast %cst : f32 to vector<360x128xf32>
    %10 = arith.cmpf ogt, %8, %9 : vector<360x128xf32>
    %cst_6 = arith.constant 1.000000e-01 : f32
    %11 = vector.broadcast %cst_6 : f32 to vector<360x128xf32>
    %12 = arith.mulf %11, %8 : vector<360x128xf32>
    %13 = arith.select %10, %8, %12 : vector<360x128xi1>, vector<360x128xf32>
    %14 = arith.truncf %13 : vector<360x128xf32> to vector<360x128xbf16>
    %15 = vector.extract_strided_slice %14 {offsets = [0, 0], sizes = [72, 128], strides = [1, 1]} : vector<360x128xbf16> to vector<72x128xbf16>
    %c0_7 = arith.constant 0 : index
    %c0_8 = arith.constant 0 : index
    %16 = vector.load %arg3[%c0_7, %c0_8] : memref<1152x128xbf16, #tpu.memory_space<vmem>>, vector<128x128xbf16>
    %cst_9 = arith.constant dense<0.000000e+00> : vector<72x128xf32>
    %17 = tpu.matmul %15, %16, %cst_9 {dimension_numbers = #tpu.dot_dimension_numbers<[1], [0], [0], [1], [0, 0, 1, 1], [], []>} : vector<72x128xbf16>, vector<128x128xbf16>, vector<72x128xf32> -> vector<72x128xf32>
    %c0_10 = arith.constant 0 : index
    %c0_11 = arith.constant 0 : index
    %18 = vector.load %arg10[%c0_10, %c0_11] : memref<72x128xf32, #tpu.memory_space<vmem>>, vector<72x128xf32>
    tpu.vector_store %arg10[%c0_10, %c0_11], %17 {strides = array<i32>} : memref<72x128xf32, #tpu.memory_space<vmem>>, vector<72x128xf32>,
    %19 = vector.extract_strided_slice %14 {offsets = [90, 0], sizes = [72, 128], strides = [1, 1]} : vector<360x128xbf16> to vector<72x128xbf16>
    %c128 = arith.constant 128 : index
    %c0_12 = arith.constant 0 : index
    %20 = vector.load %arg3[%c128, %c0_12] : memref<1152x128xbf16, #tpu.memory_space<vmem>>, vector<128x128xbf16>
    %cst_13 = arith.constant dense<0.000000e+00> : vector<72x128xf32>
    %21 = tpu.matmul %19, %20, %cst_13 {dimension_numbers = #tpu.dot_dimension_numbers<[1], [0], [0], [1], [0, 0, 1, 1], [], []>} : vector<72x128xbf16>, vector<128x128xbf16>, vector<72x128xf32> -> vector<72x128xf32>
    %c0_14 = arith.constant 0 : index
    %c0_15 = arith.constant 0 : index
    %22 = vector.load %arg10[%c0_14, %c0_15] : memref<72x128xf32, #tpu.memory_space<vmem>>, vector<72x128xf32>
    %23 = arith.addf %22, %21 : vector<72x128xf32>
    %c0_16 = arith.constant 0 : index
    %c0_17 = arith.constant 0 : index
    %24 = vector.load %arg10[%c0_16, %c0_17] : memref<72x128xf32, #tpu.memory_space<vmem>>, vector<72x128xf32>
    tpu.vector_store %arg10[%c0_16, %c0_17], %23 {strides = array<i32>} : memref<72x128xf32, #tpu.memory_space<vmem>>, vector<72x128xf32>,
    %25 = vector.extract_strided_slice %14 {offsets = [1, 0], sizes = [72, 128], strides = [1, 1]} : vector<360x128xbf16> to vector<72x128xbf16>
    %c256 = arith.constant 256 : index
    %c0_18 = arith.constant 0 : index
    %26 = vector.load %arg3[%c256, %c0_18] : memref<1152x128xbf16, #tpu.memory_space<vmem>>, vector<128x128xbf16>
    %cst_19 = arith.constant dense<0.000000e+00> : vector<72x128xf32>
    %27 = tpu.matmul %25, %26, %cst_19 {dimension_numbers = #tpu.dot_dimension_numbers<[1], [0], [0], [1], [0, 0, 1, 1], [], []>} : vector<72x128xbf16>, vector<128x128xbf16>, vector<72x128xf32> -> vector<72x128xf32>
    %c0_20 = arith.constant 0 : index
    %c0_21 = arith.constant 0 : index
    %28 = vector.load %arg10[%c0_20, %c0_21] : memref<72x128xf32, #tpu.memory_space<vmem>>, vector<72x128xf32>
    %29 = arith.addf %28, %27 : vector<72x128xf32>
    %c0_22 = arith.constant 0 : index
    %c0_23 = arith.constant 0 : index
    %30 = vector.load %arg10[%c0_22, %c0_23] : memref<72x128xf32, #tpu.memory_space<vmem>>, vector<72x128xf32>
    tpu.vector_store %arg10[%c0_22, %c0_23], %29 {strides = array<i32>} : memref<72x128xf32, #tpu.memory_space<vmem>>, vector<72x128xf32>,
    %31 = vector.extract_strided_slice %14 {offsets = [180, 0], sizes = [72, 128], strides = [1, 1]} : vector<360x128xbf16> to vector<72x128xbf16>
    %c384 = arith.constant 384 : index
    %c0_24 = arith.constant 0 : index
    %32 = vector.load %arg3[%c384, %c0_24] : memref<1152x128xbf16, #tpu.memory_space<vmem>>, vector<128x128xbf16>
    %cst_25 = arith.constant dense<0.000000e+00> : vector<72x128xf32>
    %33 = tpu.matmul %31, %32, %cst_25 {dimension_numbers = #tpu.dot_dimension_numbers<[1], [0], [0], [1], [0, 0, 1, 1], [], []>} : vector<72x128xbf16>, vector<128x128xbf16>, vector<72x128xf32> -> vector<72x128xf32>
    %c0_26 = arith.constant 0 : index
    %c0_27 = arith.constant 0 : index
    %34 = vector.load %arg10[%c0_26, %c0_27] : memref<72x128xf32, #tpu.memory_space<vmem>>, vector<72x128xf32>
    %35 = arith.addf %34, %33 : vector<72x128xf32>
    %c0_28 = arith.constant 0 : index
    %c0_29 = arith.constant 0 : index
    %36 = vector.load %arg10[%c0_28, %c0_29] : memref<72x128xf32, #tpu.memory_space<vmem>>, vector<72x128xf32>
    tpu.vector_store %arg10[%c0_28, %c0_29], %35 {strides = array<i32>} : memref<72x128xf32, #tpu.memory_space<vmem>>, vector<72x128xf32>,
    %37 = vector.extract_strided_slice %14 {offsets = [270, 0], sizes = [72, 128], strides = [1, 1]} : vector<360x128xbf16> to vector<72x128xbf16>
    %c512 = arith.constant 512 : index
    %c0_30 = arith.constant 0 : index
    %38 = vector.load %arg3[%c512, %c0_30] : memref<1152x128xbf16, #tpu.memory_space<vmem>>, vector<128x128xbf16>
    %cst_31 = arith.constant dense<0.000000e+00> : vector<72x128xf32>
    %39 = tpu.matmul %37, %38, %cst_31 {dimension_numbers = #tpu.dot_dimension_numbers<[1], [0], [0], [1], [0, 0, 1, 1], [], []>} : vector<72x128xbf16>, vector<128x128xbf16>, vector<72x128xf32> -> vector<72x128xf32>
    %c0_32 = arith.constant 0 : index
    %c0_33 = arith.constant 0 : index
    %40 = vector.load %arg10[%c0_32, %c0_33] : memref<72x128xf32, #tpu.memory_space<vmem>>, vector<72x128xf32>
    %41 = arith.addf %40, %39 : vector<72x128xf32>
    %c0_34 = arith.constant 0 : index
    %c0_35 = arith.constant 0 : index
    %42 = vector.load %arg10[%c0_34, %c0_35] : memref<72x128xf32, #tpu.memory_space<vmem>>, vector<72x128xf32>
    tpu.vector_store %arg10[%c0_34, %c0_35], %41 {strides = array<i32>} : memref<72x128xf32, #tpu.memory_space<vmem>>, vector<72x128xf32>,
    %43 = vector.extract_strided_slice %14 {offsets = [181, 0], sizes = [72, 128], strides = [1, 1]} : vector<360x128xbf16> to vector<72x128xbf16>
    %c640 = arith.constant 640 : index
    %c0_36 = arith.constant 0 : index
    %44 = vector.load %arg3[%c640, %c0_36] : memref<1152x128xbf16, #tpu.memory_space<vmem>>, vector<128x128xbf16>
    %cst_37 = arith.constant dense<0.000000e+00> : vector<72x128xf32>
    %45 = tpu.matmul %43, %44, %cst_37 {dimension_numbers = #tpu.dot_dimension_numbers<[1], [0], [0], [1], [0, 0, 1, 1], [], []>} : vector<72x128xbf16>, vector<128x128xbf16>, vector<72x128xf32> -> vector<72x128xf32>
    %c0_38 = arith.constant 0 : index
    %c0_39 = arith.constant 0 : index
    %46 = vector.load %arg10[%c0_38, %c0_39] : memref<72x128xf32, #tpu.memory_space<vmem>>, vector<72x128xf32>
    %47 = arith.addf %46, %45 : vector<72x128xf32>
    %c0_40 = arith.constant 0 : index
    %c0_41 = arith.constant 0 : index
    %48 = vector.load %arg10[%c0_40, %c0_41] : memref<72x128xf32, #tpu.memory_space<vmem>>, vector<72x128xf32>
    tpu.vector_store %arg10[%c0_40, %c0_41], %47 {strides = array<i32>} : memref<72x128xf32, #tpu.memory_space<vmem>>, vector<72x128xf32>,
    %49 = vector.extract_strided_slice %14 {offsets = [9, 0], sizes = [72, 128], strides = [1, 1]} : vector<360x128xbf16> to vector<72x128xbf16>
    %c768 = arith.constant 768 : index
    %c0_42 = arith.constant 0 : index
    %50 = vector.load %arg3[%c768, %c0_42] : memref<1152x128xbf16, #tpu.memory_space<vmem>>, vector<128x128xbf16>
    %cst_43 = arith.constant dense<0.000000e+00> : vector<72x128xf32>
    %51 = tpu.matmul %49, %50, %cst_43 {dimension_numbers = #tpu.dot_dimension_numbers<[1], [0], [0], [1], [0, 0, 1, 1], [], []>} : vector<72x128xbf16>, vector<128x128xbf16>, vector<72x128xf32> -> vector<72x128xf32>
    %c0_44 = arith.constant 0 : index
    %c0_45 = arith.constant 0 : index
    %52 = vector.load %arg10[%c0_44, %c0_45] : memref<72x128xf32, #tpu.memory_space<vmem>>, vector<72x128xf32>
    %53 = arith.addf %52, %51 : vector<72x128xf32>
    %c0_46 = arith.constant 0 : index
    %c0_47 = arith.constant 0 : index
    %54 = vector.load %arg10[%c0_46, %c0_47] : memref<72x128xf32, #tpu.memory_space<vmem>>, vector<72x128xf32>
    tpu.vector_store %arg10[%c0_46, %c0_47], %53 {strides = array<i32>} : memref<72x128xf32, #tpu.memory_space<vmem>>, vector<72x128xf32>,
    %55 = vector.extract_strided_slice %14 {offsets = [99, 0], sizes = [72, 128], strides = [1, 1]} : vector<360x128xbf16> to vector<72x128xbf16>
    %c896 = arith.constant 896 : index
    %c0_48 = arith.constant 0 : index
    %56 = vector.load %arg3[%c896, %c0_48] : memref<1152x128xbf16, #tpu.memory_space<vmem>>, vector<128x128xbf16>
    %cst_49 = arith.constant dense<0.000000e+00> : vector<72x128xf32>
    %57 = tpu.matmul %55, %56, %cst_49 {dimension_numbers = #tpu.dot_dimension_numbers<[1], [0], [0], [1], [0, 0, 1, 1], [], []>} : vector<72x128xbf16>, vector<128x128xbf16>, vector<72x128xf32> -> vector<72x128xf32>
    %c0_50 = arith.constant 0 : index
    %c0_51 = arith.constant 0 : index
    %58 = vector.load %arg10[%c0_50, %c0_51] : memref<72x128xf32, #tpu.memory_space<vmem>>, vector<72x128xf32>
    %59 = arith.addf %58, %57 : vector<72x128xf32>
    %c0_52 = arith.constant 0 : index
    %c0_53 = arith.constant 0 : index
    %60 = vector.load %arg10[%c0_52, %c0_53] : memref<72x128xf32, #tpu.memory_space<vmem>>, vector<72x128xf32>
    tpu.vector_store %arg10[%c0_52, %c0_53], %59 {strides = array<i32>} : memref<72x128xf32, #tpu.memory_space<vmem>>, vector<72x128xf32>,
    %61 = vector.extract_strided_slice %14 {offsets = [10, 0], sizes = [72, 128], strides = [1, 1]} : vector<360x128xbf16> to vector<72x128xbf16>
    %c1024 = arith.constant 1024 : index
    %c0_54 = arith.constant 0 : index
    %62 = vector.load %arg3[%c1024, %c0_54] : memref<1152x128xbf16, #tpu.memory_space<vmem>>, vector<128x128xbf16>
    %cst_55 = arith.constant dense<0.000000e+00> : vector<72x128xf32>
    %63 = tpu.matmul %61, %62, %cst_55 {dimension_numbers = #tpu.dot_dimension_numbers<[1], [0], [0], [1], [0, 0, 1, 1], [], []>} : vector<72x128xbf16>, vector<128x128xbf16>, vector<72x128xf32> -> vector<72x128xf32>
    %c0_56 = arith.constant 0 : index
    %c0_57 = arith.constant 0 : index
    %64 = vector.load %arg10[%c0_56, %c0_57] : memref<72x128xf32, #tpu.memory_space<vmem>>, vector<72x128xf32>
    %65 = arith.addf %64, %63 : vector<72x128xf32>
    %c0_58 = arith.constant 0 : index
    %c0_59 = arith.constant 0 : index
    %66 = vector.load %arg10[%c0_58, %c0_59] : memref<72x128xf32, #tpu.memory_space<vmem>>, vector<72x128xf32>
    tpu.vector_store %arg10[%c0_58, %c0_59], %65 {strides = array<i32>} : memref<72x128xf32, #tpu.memory_space<vmem>>, vector<72x128xf32>,
    %c0_60 = arith.constant 0 : index
    %c0_61 = arith.constant 0 : index
    %67 = vector.load %arg10[%c0_60, %c0_61] : memref<72x128xf32, #tpu.memory_space<vmem>>, vector<72x128xf32>
    %c0_62 = arith.constant 0 : index
    %c0_63 = arith.constant 0 : index
    %68 = vector.load %arg4[%c0_62, %c0_63] : memref<1x128xf32, #tpu.memory_space<vmem>>, vector<1x128xf32>
    %69 = vector.broadcast %68 : vector<1x128xf32> to vector<72x128xf32>
    %70 = arith.addf %67, %69 : vector<72x128xf32>
    %c0_64 = arith.constant 0 : index
    %c0_65 = arith.constant 0 : index
    %71 = vector.load %arg5[%c0_64, %c0_65] : memref<1x128xf32, #tpu.memory_space<vmem>>, vector<1x128xf32>
    %72 = vector.broadcast %71 : vector<1x128xf32> to vector<72x128xf32>
    %73 = arith.mulf %70, %72 : vector<72x128xf32>
    %c0_66 = arith.constant 0 : index
    %c0_67 = arith.constant 0 : index
    %74 = vector.load %arg6[%c0_66, %c0_67] : memref<1x128xf32, #tpu.memory_space<vmem>>, vector<1x128xf32>
    %75 = vector.broadcast %74 : vector<1x128xf32> to vector<72x128xf32>
    %76 = arith.addf %73, %75 : vector<72x128xf32>
    %cst_68 = arith.constant 0.000000e+00 : f32
    %77 = vector.broadcast %cst_68 : f32 to vector<72x128xf32>
    %78 = arith.cmpf ogt, %76, %77 : vector<72x128xf32>
    %cst_69 = arith.constant 1.000000e-01 : f32
    %79 = vector.broadcast %cst_69 : f32 to vector<72x128xf32>
    %80 = arith.mulf %79, %76 : vector<72x128xf32>
    %81 = arith.select %78, %76, %80 : vector<72x128xi1>, vector<72x128xf32>
    %82 = arith.truncf %81 : vector<72x128xf32> to vector<72x128xbf16>
    %c0_70 = arith.constant 0 : index
    %c0_71 = arith.constant 0 : index
    %c0_72 = arith.constant 0 : index
    %83 = vector.load %arg9[%c0_70, %c0_71, %c0_72] : memref<1x72x128xbf16, #tpu.memory_space<vmem>>, vector<1x72x128xbf16>
    %84 = vector.shape_cast %83 : vector<1x72x128xbf16> to vector<72x128xbf16>
    %85 = vector.shape_cast %82 : vector<72x128xbf16> to vector<1x72x128xbf16>
    tpu.vector_store %arg9[%c0_70, %c0_71, %c0_72], %85 {strides = array<i32>} : memref<1x72x128xbf16, #tpu.memory_space<vmem>>, vector<1x72x128xbf16>,
    return
  }
  func.func @transform_0(%arg0: i32, %arg1: i32) -> (i32, i32, i32) {
    %c0_i32 = arith.constant 0 : i32
    %c0_i32_0 = arith.constant 0 : i32
    %c0_i32_1 = arith.constant 0 : i32
    return %arg0, %c0_i32, %c0_i32_0 : i32, i32, i32
  }
  func.func @transform_1(%arg0: i32, %arg1: i32) -> (i32, i32) {
    %c0_i32 = arith.constant 0 : i32
    %c0_i32_0 = arith.constant 0 : i32
    return %c0_i32, %arg1 : i32, i32
  }
  func.func @transform_2(%arg0: i32, %arg1: i32) -> (i32, i32) {
    %c0_i32 = arith.constant 0 : i32
    %c0_i32_0 = arith.constant 0 : i32
    return %c0_i32, %arg1 : i32, i32
  }
  func.func @transform_3(%arg0: i32, %arg1: i32) -> (i32, i32) {
    %c0_i32 = arith.constant 0 : i32
    %c0_i32_0 = arith.constant 0 : i32
    return %c0_i32, %arg1 : i32, i32
  }
  func.func @transform_4(%arg0: i32, %arg1: i32) -> (i32, i32) {
    %c0_i32 = arith.constant 0 : i32
    %c0_i32_0 = arith.constant 0 : i32
    return %c0_i32, %arg1 : i32, i32
  }
  func.func @transform_5(%arg0: i32, %arg1: i32) -> (i32, i32) {
    %c0_i32 = arith.constant 0 : i32
    %c0_i32_0 = arith.constant 0 : i32
    %c0_i32_1 = arith.constant 0 : i32
    return %c0_i32, %c0_i32_0 : i32, i32
  }
  func.func @transform_6(%arg0: i32, %arg1: i32) -> (i32, i32) {
    %c0_i32 = arith.constant 0 : i32
    %c0_i32_0 = arith.constant 0 : i32
    %c0_i32_1 = arith.constant 0 : i32
    return %c0_i32, %c0_i32_0 : i32, i32
  }
  func.func @transform_7(%arg0: i32, %arg1: i32) -> (i32, i32, i32) {
    %c0_i32 = arith.constant 0 : i32
    %c0_i32_0 = arith.constant 0 : i32
    return %arg0, %c0_i32, %arg1 : i32, i32, i32
  }
}

module attributes {stable_mosaic.version = 11 : i64} {
  func.func @kernel(%arg0: i32, %arg1: i32, %arg2: memref<1x110x128xbf16, #tpu.memory_space<vmem>>, %arg3: memref<1152x128xbf16, #tpu.memory_space<vmem>>, %arg4: memref<1x128xf32, #tpu.memory_space<vmem>>, %arg5: memref<1x80x128xbf16, #tpu.memory_space<vmem>>, %arg6: memref<128x128xbf16, #tpu.memory_space<vmem>>, %arg7: memref<1x128xf32, #tpu.memory_space<vmem>>, %arg8: memref<1x128xf32, #tpu.memory_space<vmem>>, %arg9: memref<1x128xf32, #tpu.memory_space<vmem>>, %arg10: memref<1x80x128xf32, #tpu.memory_space<vmem>>, %arg11: memref<80x128xf32, #tpu.memory_space<vmem>>) attributes {dimension_semantics = [#tpu.dimension_semantics<parallel>, #tpu.dimension_semantics<parallel>], iteration_bounds = array<i64: 2, 1>, scalar_prefetch = 0 : i64, scratch_operands = 1 : i64, tpu.core_type = #tpu.core_type<tc>, window_params = [{transform_indices = @transform_0, window_bounds = array<i64: 1, 110, 128>}, {transform_indices = @transform_1, window_bounds = array<i64: 1152, 128>}, {transform_indices = @transform_2, window_bounds = array<i64: 1, 128>}, {transform_indices = @transform_3, window_bounds = array<i64: 1, 80, 128>}, {transform_indices = @transform_4, window_bounds = array<i64: 128, 128>}, {transform_indices = @transform_5, window_bounds = array<i64: 1, 128>}, {pipeline_mode = #tpu.pipeline_mode<synchronous>, transform_indices = @transform_6, window_bounds = array<i64: 1, 128>}, {pipeline_mode = #tpu.pipeline_mode<synchronous>, transform_indices = @transform_7, window_bounds = array<i64: 1, 128>}, {transform_indices = @transform_8, window_bounds = array<i64: 1, 80, 128>}]} {
    %c0 = arith.constant 0 : index
    %c0_0 = arith.constant 0 : index
    %c0_1 = arith.constant 0 : index
    %0 = vector.load %arg2[%c0, %c0_0, %c0_1] : memref<1x110x128xbf16, #tpu.memory_space<vmem>>, vector<1x110x128xbf16>
    %1 = vector.shape_cast %0 : vector<1x110x128xbf16> to vector<110x128xbf16>
    %2 = vector.extract_strided_slice %1 {offsets = [0, 0], sizes = [80, 128], strides = [1, 1]} : vector<110x128xbf16> to vector<80x128xbf16>
    %c0_2 = arith.constant 0 : index
    %c0_3 = arith.constant 0 : index
    %3 = vector.load %arg3[%c0_2, %c0_3] : memref<1152x128xbf16, #tpu.memory_space<vmem>>, vector<128x128xbf16>
    %cst = arith.constant dense<0.000000e+00> : vector<80x128xf32>
    %4 = tpu.matmul %2, %3, %cst {dimension_numbers = #tpu.dot_dimension_numbers<[1], [0], [0], [1], [0, 0, 1, 1], [], []>} : vector<80x128xbf16>, vector<128x128xbf16>, vector<80x128xf32> -> vector<80x128xf32>
    %c0_4 = arith.constant 0 : index
    %c0_5 = arith.constant 0 : index
    %5 = vector.load %arg11[%c0_4, %c0_5] : memref<80x128xf32, #tpu.memory_space<vmem>>, vector<80x128xf32>
    tpu.vector_store %arg11[%c0_4, %c0_5], %4 {strides = array<i32>} : memref<80x128xf32, #tpu.memory_space<vmem>>, vector<80x128xf32>,
    %6 = vector.extract_strided_slice %1 {offsets = [1, 0], sizes = [80, 128], strides = [1, 1]} : vector<110x128xbf16> to vector<80x128xbf16>
    %c128 = arith.constant 128 : index
    %c0_6 = arith.constant 0 : index
    %7 = vector.load %arg3[%c128, %c0_6] : memref<1152x128xbf16, #tpu.memory_space<vmem>>, vector<128x128xbf16>
    %cst_7 = arith.constant dense<0.000000e+00> : vector<80x128xf32>
    %8 = tpu.matmul %6, %7, %cst_7 {dimension_numbers = #tpu.dot_dimension_numbers<[1], [0], [0], [1], [0, 0, 1, 1], [], []>} : vector<80x128xbf16>, vector<128x128xbf16>, vector<80x128xf32> -> vector<80x128xf32>
    %c0_8 = arith.constant 0 : index
    %c0_9 = arith.constant 0 : index
    %9 = vector.load %arg11[%c0_8, %c0_9] : memref<80x128xf32, #tpu.memory_space<vmem>>, vector<80x128xf32>
    %10 = arith.addf %9, %8 : vector<80x128xf32>
    %c0_10 = arith.constant 0 : index
    %c0_11 = arith.constant 0 : index
    %11 = vector.load %arg11[%c0_10, %c0_11] : memref<80x128xf32, #tpu.memory_space<vmem>>, vector<80x128xf32>
    tpu.vector_store %arg11[%c0_10, %c0_11], %10 {strides = array<i32>} : memref<80x128xf32, #tpu.memory_space<vmem>>, vector<80x128xf32>,
    %12 = vector.extract_strided_slice %1 {offsets = [2, 0], sizes = [80, 128], strides = [1, 1]} : vector<110x128xbf16> to vector<80x128xbf16>
    %c256 = arith.constant 256 : index
    %c0_12 = arith.constant 0 : index
    %13 = vector.load %arg3[%c256, %c0_12] : memref<1152x128xbf16, #tpu.memory_space<vmem>>, vector<128x128xbf16>
    %cst_13 = arith.constant dense<0.000000e+00> : vector<80x128xf32>
    %14 = tpu.matmul %12, %13, %cst_13 {dimension_numbers = #tpu.dot_dimension_numbers<[1], [0], [0], [1], [0, 0, 1, 1], [], []>} : vector<80x128xbf16>, vector<128x128xbf16>, vector<80x128xf32> -> vector<80x128xf32>
    %c0_14 = arith.constant 0 : index
    %c0_15 = arith.constant 0 : index
    %15 = vector.load %arg11[%c0_14, %c0_15] : memref<80x128xf32, #tpu.memory_space<vmem>>, vector<80x128xf32>
    %16 = arith.addf %15, %14 : vector<80x128xf32>
    %c0_16 = arith.constant 0 : index
    %c0_17 = arith.constant 0 : index
    %17 = vector.load %arg11[%c0_16, %c0_17] : memref<80x128xf32, #tpu.memory_space<vmem>>, vector<80x128xf32>
    tpu.vector_store %arg11[%c0_16, %c0_17], %16 {strides = array<i32>} : memref<80x128xf32, #tpu.memory_space<vmem>>, vector<80x128xf32>,
    %18 = vector.extract_strided_slice %1 {offsets = [10, 0], sizes = [80, 128], strides = [1, 1]} : vector<110x128xbf16> to vector<80x128xbf16>
    %c384 = arith.constant 384 : index
    %c0_18 = arith.constant 0 : index
    %19 = vector.load %arg3[%c384, %c0_18] : memref<1152x128xbf16, #tpu.memory_space<vmem>>, vector<128x128xbf16>
    %cst_19 = arith.constant dense<0.000000e+00> : vector<80x128xf32>
    %20 = tpu.matmul %18, %19, %cst_19 {dimension_numbers = #tpu.dot_dimension_numbers<[1], [0], [0], [1], [0, 0, 1, 1], [], []>} : vector<80x128xbf16>, vector<128x128xbf16>, vector<80x128xf32> -> vector<80x128xf32>
    %c0_20 = arith.constant 0 : index
    %c0_21 = arith.constant 0 : index
    %21 = vector.load %arg11[%c0_20, %c0_21] : memref<80x128xf32, #tpu.memory_space<vmem>>, vector<80x128xf32>
    %22 = arith.addf %21, %20 : vector<80x128xf32>
    %c0_22 = arith.constant 0 : index
    %c0_23 = arith.constant 0 : index
    %23 = vector.load %arg11[%c0_22, %c0_23] : memref<80x128xf32, #tpu.memory_space<vmem>>, vector<80x128xf32>
    tpu.vector_store %arg11[%c0_22, %c0_23], %22 {strides = array<i32>} : memref<80x128xf32, #tpu.memory_space<vmem>>, vector<80x128xf32>,
    %24 = vector.extract_strided_slice %1 {offsets = [11, 0], sizes = [80, 128], strides = [1, 1]} : vector<110x128xbf16> to vector<80x128xbf16>
    %c512 = arith.constant 512 : index
    %c0_24 = arith.constant 0 : index
    %25 = vector.load %arg3[%c512, %c0_24] : memref<1152x128xbf16, #tpu.memory_space<vmem>>, vector<128x128xbf16>
    %cst_25 = arith.constant dense<0.000000e+00> : vector<80x128xf32>
    %26 = tpu.matmul %24, %25, %cst_25 {dimension_numbers = #tpu.dot_dimension_numbers<[1], [0], [0], [1], [0, 0, 1, 1], [], []>} : vector<80x128xbf16>, vector<128x128xbf16>, vector<80x128xf32> -> vector<80x128xf32>
    %c0_26 = arith.constant 0 : index
    %c0_27 = arith.constant 0 : index
    %27 = vector.load %arg11[%c0_26, %c0_27] : memref<80x128xf32, #tpu.memory_space<vmem>>, vector<80x128xf32>
    %28 = arith.addf %27, %26 : vector<80x128xf32>
    %c0_28 = arith.constant 0 : index
    %c0_29 = arith.constant 0 : index
    %29 = vector.load %arg11[%c0_28, %c0_29] : memref<80x128xf32, #tpu.memory_space<vmem>>, vector<80x128xf32>
    tpu.vector_store %arg11[%c0_28, %c0_29], %28 {strides = array<i32>} : memref<80x128xf32, #tpu.memory_space<vmem>>, vector<80x128xf32>,
    %30 = vector.extract_strided_slice %1 {offsets = [12, 0], sizes = [80, 128], strides = [1, 1]} : vector<110x128xbf16> to vector<80x128xbf16>
    %c640 = arith.constant 640 : index
    %c0_30 = arith.constant 0 : index
    %31 = vector.load %arg3[%c640, %c0_30] : memref<1152x128xbf16, #tpu.memory_space<vmem>>, vector<128x128xbf16>
    %cst_31 = arith.constant dense<0.000000e+00> : vector<80x128xf32>
    %32 = tpu.matmul %30, %31, %cst_31 {dimension_numbers = #tpu.dot_dimension_numbers<[1], [0], [0], [1], [0, 0, 1, 1], [], []>} : vector<80x128xbf16>, vector<128x128xbf16>, vector<80x128xf32> -> vector<80x128xf32>
    %c0_32 = arith.constant 0 : index
    %c0_33 = arith.constant 0 : index
    %33 = vector.load %arg11[%c0_32, %c0_33] : memref<80x128xf32, #tpu.memory_space<vmem>>, vector<80x128xf32>
    %34 = arith.addf %33, %32 : vector<80x128xf32>
    %c0_34 = arith.constant 0 : index
    %c0_35 = arith.constant 0 : index
    %35 = vector.load %arg11[%c0_34, %c0_35] : memref<80x128xf32, #tpu.memory_space<vmem>>, vector<80x128xf32>
    tpu.vector_store %arg11[%c0_34, %c0_35], %34 {strides = array<i32>} : memref<80x128xf32, #tpu.memory_space<vmem>>, vector<80x128xf32>,
    %36 = vector.extract_strided_slice %1 {offsets = [20, 0], sizes = [80, 128], strides = [1, 1]} : vector<110x128xbf16> to vector<80x128xbf16>
    %c768 = arith.constant 768 : index
    %c0_36 = arith.constant 0 : index
    %37 = vector.load %arg3[%c768, %c0_36] : memref<1152x128xbf16, #tpu.memory_space<vmem>>, vector<128x128xbf16>
    %cst_37 = arith.constant dense<0.000000e+00> : vector<80x128xf32>
    %38 = tpu.matmul %36, %37, %cst_37 {dimension_numbers = #tpu.dot_dimension_numbers<[1], [0], [0], [1], [0, 0, 1, 1], [], []>} : vector<80x128xbf16>, vector<128x128xbf16>, vector<80x128xf32> -> vector<80x128xf32>
    %c0_38 = arith.constant 0 : index
    %c0_39 = arith.constant 0 : index
    %39 = vector.load %arg11[%c0_38, %c0_39] : memref<80x128xf32, #tpu.memory_space<vmem>>, vector<80x128xf32>
    %40 = arith.addf %39, %38 : vector<80x128xf32>
    %c0_40 = arith.constant 0 : index
    %c0_41 = arith.constant 0 : index
    %41 = vector.load %arg11[%c0_40, %c0_41] : memref<80x128xf32, #tpu.memory_space<vmem>>, vector<80x128xf32>
    tpu.vector_store %arg11[%c0_40, %c0_41], %40 {strides = array<i32>} : memref<80x128xf32, #tpu.memory_space<vmem>>, vector<80x128xf32>,
    %42 = vector.extract_strided_slice %1 {offsets = [21, 0], sizes = [80, 128], strides = [1, 1]} : vector<110x128xbf16> to vector<80x128xbf16>
    %c896 = arith.constant 896 : index
    %c0_42 = arith.constant 0 : index
    %43 = vector.load %arg3[%c896, %c0_42] : memref<1152x128xbf16, #tpu.memory_space<vmem>>, vector<128x128xbf16>
    %cst_43 = arith.constant dense<0.000000e+00> : vector<80x128xf32>
    %44 = tpu.matmul %42, %43, %cst_43 {dimension_numbers = #tpu.dot_dimension_numbers<[1], [0], [0], [1], [0, 0, 1, 1], [], []>} : vector<80x128xbf16>, vector<128x128xbf16>, vector<80x128xf32> -> vector<80x128xf32>
    %c0_44 = arith.constant 0 : index
    %c0_45 = arith.constant 0 : index
    %45 = vector.load %arg11[%c0_44, %c0_45] : memref<80x128xf32, #tpu.memory_space<vmem>>, vector<80x128xf32>
    %46 = arith.addf %45, %44 : vector<80x128xf32>
    %c0_46 = arith.constant 0 : index
    %c0_47 = arith.constant 0 : index
    %47 = vector.load %arg11[%c0_46, %c0_47] : memref<80x128xf32, #tpu.memory_space<vmem>>, vector<80x128xf32>
    tpu.vector_store %arg11[%c0_46, %c0_47], %46 {strides = array<i32>} : memref<80x128xf32, #tpu.memory_space<vmem>>, vector<80x128xf32>,
    %48 = vector.extract_strided_slice %1 {offsets = [22, 0], sizes = [80, 128], strides = [1, 1]} : vector<110x128xbf16> to vector<80x128xbf16>
    %c1024 = arith.constant 1024 : index
    %c0_48 = arith.constant 0 : index
    %49 = vector.load %arg3[%c1024, %c0_48] : memref<1152x128xbf16, #tpu.memory_space<vmem>>, vector<128x128xbf16>
    %cst_49 = arith.constant dense<0.000000e+00> : vector<80x128xf32>
    %50 = tpu.matmul %48, %49, %cst_49 {dimension_numbers = #tpu.dot_dimension_numbers<[1], [0], [0], [1], [0, 0, 1, 1], [], []>} : vector<80x128xbf16>, vector<128x128xbf16>, vector<80x128xf32> -> vector<80x128xf32>
    %c0_50 = arith.constant 0 : index
    %c0_51 = arith.constant 0 : index
    %51 = vector.load %arg11[%c0_50, %c0_51] : memref<80x128xf32, #tpu.memory_space<vmem>>, vector<80x128xf32>
    %52 = arith.addf %51, %50 : vector<80x128xf32>
    %c0_52 = arith.constant 0 : index
    %c0_53 = arith.constant 0 : index
    %53 = vector.load %arg11[%c0_52, %c0_53] : memref<80x128xf32, #tpu.memory_space<vmem>>, vector<80x128xf32>
    tpu.vector_store %arg11[%c0_52, %c0_53], %52 {strides = array<i32>} : memref<80x128xf32, #tpu.memory_space<vmem>>, vector<80x128xf32>,
    %c0_54 = arith.constant 0 : index
    %c0_55 = arith.constant 0 : index
    %54 = vector.load %arg11[%c0_54, %c0_55] : memref<80x128xf32, #tpu.memory_space<vmem>>, vector<80x128xf32>
    %c0_56 = arith.constant 0 : index
    %c0_57 = arith.constant 0 : index
    %55 = vector.load %arg4[%c0_56, %c0_57] : memref<1x128xf32, #tpu.memory_space<vmem>>, vector<1x128xf32>
    %56 = vector.broadcast %55 : vector<1x128xf32> to vector<80x128xf32>
    %57 = arith.addf %54, %56 : vector<80x128xf32>
    %c0_58 = arith.constant 0 : index
    %c0_59 = arith.constant 0 : index
    %c0_60 = arith.constant 0 : index
    %58 = vector.load %arg5[%c0_58, %c0_59, %c0_60] : memref<1x80x128xbf16, #tpu.memory_space<vmem>>, vector<1x80x128xbf16>
    %59 = vector.shape_cast %58 : vector<1x80x128xbf16> to vector<80x128xbf16>
    %60 = arith.extf %59 : vector<80x128xbf16> to vector<80x128xf32>
    %c0_61 = arith.constant 0 : index
    %c0_62 = arith.constant 0 : index
    %61 = vector.load %arg8[%c0_61, %c0_62] : memref<1x128xf32, #tpu.memory_space<vmem>>, vector<1x128xf32>
    %62 = vector.broadcast %61 : vector<1x128xf32> to vector<80x128xf32>
    %63 = arith.mulf %60, %62 : vector<80x128xf32>
    %c0_63 = arith.constant 0 : index
    %c0_64 = arith.constant 0 : index
    %64 = vector.load %arg9[%c0_63, %c0_64] : memref<1x128xf32, #tpu.memory_space<vmem>>, vector<1x128xf32>
    %65 = vector.broadcast %64 : vector<1x128xf32> to vector<80x128xf32>
    %66 = arith.addf %63, %65 : vector<80x128xf32>
    %cst_65 = arith.constant 0.000000e+00 : f32
    %67 = vector.broadcast %cst_65 : f32 to vector<80x128xf32>
    %68 = arith.cmpf ogt, %66, %67 : vector<80x128xf32>
    %cst_66 = arith.constant 1.000000e-01 : f32
    %69 = vector.broadcast %cst_66 : f32 to vector<80x128xf32>
    %70 = arith.mulf %69, %66 : vector<80x128xf32>
    %71 = arith.select %68, %66, %70 : vector<80x128xi1>, vector<80x128xf32>
    %72 = arith.truncf %71 : vector<80x128xf32> to vector<80x128xbf16>
    %c0_67 = arith.constant 0 : index
    %c0_68 = arith.constant 0 : index
    %73 = vector.load %arg6[%c0_67, %c0_68] : memref<128x128xbf16, #tpu.memory_space<vmem>>, vector<128x128xbf16>
    %cst_69 = arith.constant dense<0.000000e+00> : vector<80x128xf32>
    %74 = tpu.matmul %72, %73, %cst_69 {dimension_numbers = #tpu.dot_dimension_numbers<[1], [0], [0], [1], [0, 0, 1, 1], [], []>} : vector<80x128xbf16>, vector<128x128xbf16>, vector<80x128xf32> -> vector<80x128xf32>
    %75 = arith.addf %57, %74 : vector<80x128xf32>
    %c0_70 = arith.constant 0 : index
    %c0_71 = arith.constant 0 : index
    %76 = vector.load %arg7[%c0_70, %c0_71] : memref<1x128xf32, #tpu.memory_space<vmem>>, vector<1x128xf32>
    %77 = vector.broadcast %76 : vector<1x128xf32> to vector<80x128xf32>
    %78 = arith.addf %75, %77 : vector<80x128xf32>
    %c0_72 = arith.constant 0 : index
    %c0_73 = arith.constant 0 : index
    %c0_74 = arith.constant 0 : index
    %79 = vector.load %arg10[%c0_72, %c0_73, %c0_74] : memref<1x80x128xf32, #tpu.memory_space<vmem>>, vector<1x80x128xf32>
    %80 = vector.shape_cast %79 : vector<1x80x128xf32> to vector<80x128xf32>
    %81 = vector.shape_cast %78 : vector<80x128xf32> to vector<1x80x128xf32>
    tpu.vector_store %arg10[%c0_72, %c0_73, %c0_74], %81 {strides = array<i32>} : memref<1x80x128xf32, #tpu.memory_space<vmem>>, vector<1x80x128xf32>,
    return
  }
  func.func @transform_0(%arg0: i32, %arg1: i32) -> (i32, i32, i32) {
    %c0_i32 = arith.constant 0 : i32
    %c0_i32_0 = arith.constant 0 : i32
    %c0_i32_1 = arith.constant 0 : i32
    return %arg0, %c0_i32, %c0_i32_0 : i32, i32, i32
  }
  func.func @transform_1(%arg0: i32, %arg1: i32) -> (i32, i32) {
    %c0_i32 = arith.constant 0 : i32
    %c0_i32_0 = arith.constant 0 : i32
    return %c0_i32, %arg1 : i32, i32
  }
  func.func @transform_2(%arg0: i32, %arg1: i32) -> (i32, i32) {
    %c0_i32 = arith.constant 0 : i32
    %c0_i32_0 = arith.constant 0 : i32
    return %c0_i32, %arg1 : i32, i32
  }
  func.func @transform_3(%arg0: i32, %arg1: i32) -> (i32, i32, i32) {
    %c0_i32 = arith.constant 0 : i32
    %c0_i32_0 = arith.constant 0 : i32
    %c0_i32_1 = arith.constant 0 : i32
    return %arg0, %c0_i32, %c0_i32_0 : i32, i32, i32
  }
  func.func @transform_4(%arg0: i32, %arg1: i32) -> (i32, i32) {
    %c0_i32 = arith.constant 0 : i32
    %c0_i32_0 = arith.constant 0 : i32
    return %c0_i32, %arg1 : i32, i32
  }
  func.func @transform_5(%arg0: i32, %arg1: i32) -> (i32, i32) {
    %c0_i32 = arith.constant 0 : i32
    %c0_i32_0 = arith.constant 0 : i32
    return %c0_i32, %arg1 : i32, i32
  }
  func.func @transform_6(%arg0: i32, %arg1: i32) -> (i32, i32) {
    %c0_i32 = arith.constant 0 : i32
    %c0_i32_0 = arith.constant 0 : i32
    %c0_i32_1 = arith.constant 0 : i32
    return %c0_i32, %c0_i32_0 : i32, i32
  }
  func.func @transform_7(%arg0: i32, %arg1: i32) -> (i32, i32) {
    %c0_i32 = arith.constant 0 : i32
    %c0_i32_0 = arith.constant 0 : i32
    %c0_i32_1 = arith.constant 0 : i32
    return %c0_i32, %c0_i32_0 : i32, i32
  }
  func.func @transform_8(%arg0: i32, %arg1: i32) -> (i32, i32, i32) {
    %c0_i32 = arith.constant 0 : i32
    %c0_i32_0 = arith.constant 0 : i32
    return %arg0, %c0_i32, %arg1 : i32, i32, i32
  }
}

module attributes {stable_mosaic.version = 11 : i64} {
  func.func @kernel(%arg0: i32, %arg1: i32, %arg2: memref<1x110x128xbf16, #tpu.memory_space<vmem>>, %arg3: memref<1152x128xbf16, #tpu.memory_space<vmem>>, %arg4: memref<1x128xf32, #tpu.memory_space<vmem>>, %arg5: memref<1x128xf32, #tpu.memory_space<vmem>>, %arg6: memref<1x128xf32, #tpu.memory_space<vmem>>, %arg7: memref<1x128xf32, #tpu.memory_space<vmem>>, %arg8: memref<1x128xf32, #tpu.memory_space<vmem>>, %arg9: memref<1x80x128xbf16, #tpu.memory_space<vmem>>, %arg10: memref<80x128xf32, #tpu.memory_space<vmem>>) attributes {dimension_semantics = [#tpu.dimension_semantics<parallel>, #tpu.dimension_semantics<parallel>], iteration_bounds = array<i64: 2, 1>, scalar_prefetch = 0 : i64, scratch_operands = 1 : i64, tpu.core_type = #tpu.core_type<tc>, window_params = [{transform_indices = @transform_0, window_bounds = array<i64: 1, 110, 128>}, {transform_indices = @transform_1, window_bounds = array<i64: 1152, 128>}, {transform_indices = @transform_2, window_bounds = array<i64: 1, 128>}, {transform_indices = @transform_3, window_bounds = array<i64: 1, 128>}, {transform_indices = @transform_4, window_bounds = array<i64: 1, 128>}, {pipeline_mode = #tpu.pipeline_mode<synchronous>, transform_indices = @transform_5, window_bounds = array<i64: 1, 128>}, {pipeline_mode = #tpu.pipeline_mode<synchronous>, transform_indices = @transform_6, window_bounds = array<i64: 1, 128>}, {transform_indices = @transform_7, window_bounds = array<i64: 1, 80, 128>}]} {
    %c0 = arith.constant 0 : index
    %c0_0 = arith.constant 0 : index
    %c0_1 = arith.constant 0 : index
    %0 = vector.load %arg2[%c0, %c0_0, %c0_1] : memref<1x110x128xbf16, #tpu.memory_space<vmem>>, vector<1x110x128xbf16>
    %1 = vector.shape_cast %0 : vector<1x110x128xbf16> to vector<110x128xbf16>
    %2 = arith.extf %1 : vector<110x128xbf16> to vector<110x128xf32>
    %c0_2 = arith.constant 0 : index
    %c0_3 = arith.constant 0 : index
    %3 = vector.load %arg7[%c0_2, %c0_3] : memref<1x128xf32, #tpu.memory_space<vmem>>, vector<1x128xf32>
    %4 = vector.broadcast %3 : vector<1x128xf32> to vector<110x128xf32>
    %5 = arith.mulf %2, %4 : vector<110x128xf32>
    %c0_4 = arith.constant 0 : index
    %c0_5 = arith.constant 0 : index
    %6 = vector.load %arg8[%c0_4, %c0_5] : memref<1x128xf32, #tpu.memory_space<vmem>>, vector<1x128xf32>
    %7 = vector.broadcast %6 : vector<1x128xf32> to vector<110x128xf32>
    %8 = arith.addf %5, %7 : vector<110x128xf32>
    %cst = arith.constant 0.000000e+00 : f32
    %9 = vector.broadcast %cst : f32 to vector<110x128xf32>
    %10 = arith.cmpf ogt, %8, %9 : vector<110x128xf32>
    %cst_6 = arith.constant 1.000000e-01 : f32
    %11 = vector.broadcast %cst_6 : f32 to vector<110x128xf32>
    %12 = arith.mulf %11, %8 : vector<110x128xf32>
    %13 = arith.select %10, %8, %12 : vector<110x128xi1>, vector<110x128xf32>
    %14 = arith.truncf %13 : vector<110x128xf32> to vector<110x128xbf16>
    %15 = vector.extract_strided_slice %14 {offsets = [0, 0], sizes = [80, 128], strides = [1, 1]} : vector<110x128xbf16> to vector<80x128xbf16>
    %c0_7 = arith.constant 0 : index
    %c0_8 = arith.constant 0 : index
    %16 = vector.load %arg3[%c0_7, %c0_8] : memref<1152x128xbf16, #tpu.memory_space<vmem>>, vector<128x128xbf16>
    %cst_9 = arith.constant dense<0.000000e+00> : vector<80x128xf32>
    %17 = tpu.matmul %15, %16, %cst_9 {dimension_numbers = #tpu.dot_dimension_numbers<[1], [0], [0], [1], [0, 0, 1, 1], [], []>} : vector<80x128xbf16>, vector<128x128xbf16>, vector<80x128xf32> -> vector<80x128xf32>
    %c0_10 = arith.constant 0 : index
    %c0_11 = arith.constant 0 : index
    %18 = vector.load %arg10[%c0_10, %c0_11] : memref<80x128xf32, #tpu.memory_space<vmem>>, vector<80x128xf32>
    tpu.vector_store %arg10[%c0_10, %c0_11], %17 {strides = array<i32>} : memref<80x128xf32, #tpu.memory_space<vmem>>, vector<80x128xf32>,
    %19 = vector.extract_strided_slice %14 {offsets = [1, 0], sizes = [80, 128], strides = [1, 1]} : vector<110x128xbf16> to vector<80x128xbf16>
    %c128 = arith.constant 128 : index
    %c0_12 = arith.constant 0 : index
    %20 = vector.load %arg3[%c128, %c0_12] : memref<1152x128xbf16, #tpu.memory_space<vmem>>, vector<128x128xbf16>
    %cst_13 = arith.constant dense<0.000000e+00> : vector<80x128xf32>
    %21 = tpu.matmul %19, %20, %cst_13 {dimension_numbers = #tpu.dot_dimension_numbers<[1], [0], [0], [1], [0, 0, 1, 1], [], []>} : vector<80x128xbf16>, vector<128x128xbf16>, vector<80x128xf32> -> vector<80x128xf32>
    %c0_14 = arith.constant 0 : index
    %c0_15 = arith.constant 0 : index
    %22 = vector.load %arg10[%c0_14, %c0_15] : memref<80x128xf32, #tpu.memory_space<vmem>>, vector<80x128xf32>
    %23 = arith.addf %22, %21 : vector<80x128xf32>
    %c0_16 = arith.constant 0 : index
    %c0_17 = arith.constant 0 : index
    %24 = vector.load %arg10[%c0_16, %c0_17] : memref<80x128xf32, #tpu.memory_space<vmem>>, vector<80x128xf32>
    tpu.vector_store %arg10[%c0_16, %c0_17], %23 {strides = array<i32>} : memref<80x128xf32, #tpu.memory_space<vmem>>, vector<80x128xf32>,
    %25 = vector.extract_strided_slice %14 {offsets = [2, 0], sizes = [80, 128], strides = [1, 1]} : vector<110x128xbf16> to vector<80x128xbf16>
    %c256 = arith.constant 256 : index
    %c0_18 = arith.constant 0 : index
    %26 = vector.load %arg3[%c256, %c0_18] : memref<1152x128xbf16, #tpu.memory_space<vmem>>, vector<128x128xbf16>
    %cst_19 = arith.constant dense<0.000000e+00> : vector<80x128xf32>
    %27 = tpu.matmul %25, %26, %cst_19 {dimension_numbers = #tpu.dot_dimension_numbers<[1], [0], [0], [1], [0, 0, 1, 1], [], []>} : vector<80x128xbf16>, vector<128x128xbf16>, vector<80x128xf32> -> vector<80x128xf32>
    %c0_20 = arith.constant 0 : index
    %c0_21 = arith.constant 0 : index
    %28 = vector.load %arg10[%c0_20, %c0_21] : memref<80x128xf32, #tpu.memory_space<vmem>>, vector<80x128xf32>
    %29 = arith.addf %28, %27 : vector<80x128xf32>
    %c0_22 = arith.constant 0 : index
    %c0_23 = arith.constant 0 : index
    %30 = vector.load %arg10[%c0_22, %c0_23] : memref<80x128xf32, #tpu.memory_space<vmem>>, vector<80x128xf32>
    tpu.vector_store %arg10[%c0_22, %c0_23], %29 {strides = array<i32>} : memref<80x128xf32, #tpu.memory_space<vmem>>, vector<80x128xf32>,
    %31 = vector.extract_strided_slice %14 {offsets = [10, 0], sizes = [80, 128], strides = [1, 1]} : vector<110x128xbf16> to vector<80x128xbf16>
    %c384 = arith.constant 384 : index
    %c0_24 = arith.constant 0 : index
    %32 = vector.load %arg3[%c384, %c0_24] : memref<1152x128xbf16, #tpu.memory_space<vmem>>, vector<128x128xbf16>
    %cst_25 = arith.constant dense<0.000000e+00> : vector<80x128xf32>
    %33 = tpu.matmul %31, %32, %cst_25 {dimension_numbers = #tpu.dot_dimension_numbers<[1], [0], [0], [1], [0, 0, 1, 1], [], []>} : vector<80x128xbf16>, vector<128x128xbf16>, vector<80x128xf32> -> vector<80x128xf32>
    %c0_26 = arith.constant 0 : index
    %c0_27 = arith.constant 0 : index
    %34 = vector.load %arg10[%c0_26, %c0_27] : memref<80x128xf32, #tpu.memory_space<vmem>>, vector<80x128xf32>
    %35 = arith.addf %34, %33 : vector<80x128xf32>
    %c0_28 = arith.constant 0 : index
    %c0_29 = arith.constant 0 : index
    %36 = vector.load %arg10[%c0_28, %c0_29] : memref<80x128xf32, #tpu.memory_space<vmem>>, vector<80x128xf32>
    tpu.vector_store %arg10[%c0_28, %c0_29], %35 {strides = array<i32>} : memref<80x128xf32, #tpu.memory_space<vmem>>, vector<80x128xf32>,
    %37 = vector.extract_strided_slice %14 {offsets = [11, 0], sizes = [80, 128], strides = [1, 1]} : vector<110x128xbf16> to vector<80x128xbf16>
    %c512 = arith.constant 512 : index
    %c0_30 = arith.constant 0 : index
    %38 = vector.load %arg3[%c512, %c0_30] : memref<1152x128xbf16, #tpu.memory_space<vmem>>, vector<128x128xbf16>
    %cst_31 = arith.constant dense<0.000000e+00> : vector<80x128xf32>
    %39 = tpu.matmul %37, %38, %cst_31 {dimension_numbers = #tpu.dot_dimension_numbers<[1], [0], [0], [1], [0, 0, 1, 1], [], []>} : vector<80x128xbf16>, vector<128x128xbf16>, vector<80x128xf32> -> vector<80x128xf32>
    %c0_32 = arith.constant 0 : index
    %c0_33 = arith.constant 0 : index
    %40 = vector.load %arg10[%c0_32, %c0_33] : memref<80x128xf32, #tpu.memory_space<vmem>>, vector<80x128xf32>
    %41 = arith.addf %40, %39 : vector<80x128xf32>
    %c0_34 = arith.constant 0 : index
    %c0_35 = arith.constant 0 : index
    %42 = vector.load %arg10[%c0_34, %c0_35] : memref<80x128xf32, #tpu.memory_space<vmem>>, vector<80x128xf32>
    tpu.vector_store %arg10[%c0_34, %c0_35], %41 {strides = array<i32>} : memref<80x128xf32, #tpu.memory_space<vmem>>, vector<80x128xf32>,
    %43 = vector.extract_strided_slice %14 {offsets = [12, 0], sizes = [80, 128], strides = [1, 1]} : vector<110x128xbf16> to vector<80x128xbf16>
    %c640 = arith.constant 640 : index
    %c0_36 = arith.constant 0 : index
    %44 = vector.load %arg3[%c640, %c0_36] : memref<1152x128xbf16, #tpu.memory_space<vmem>>, vector<128x128xbf16>
    %cst_37 = arith.constant dense<0.000000e+00> : vector<80x128xf32>
    %45 = tpu.matmul %43, %44, %cst_37 {dimension_numbers = #tpu.dot_dimension_numbers<[1], [0], [0], [1], [0, 0, 1, 1], [], []>} : vector<80x128xbf16>, vector<128x128xbf16>, vector<80x128xf32> -> vector<80x128xf32>
    %c0_38 = arith.constant 0 : index
    %c0_39 = arith.constant 0 : index
    %46 = vector.load %arg10[%c0_38, %c0_39] : memref<80x128xf32, #tpu.memory_space<vmem>>, vector<80x128xf32>
    %47 = arith.addf %46, %45 : vector<80x128xf32>
    %c0_40 = arith.constant 0 : index
    %c0_41 = arith.constant 0 : index
    %48 = vector.load %arg10[%c0_40, %c0_41] : memref<80x128xf32, #tpu.memory_space<vmem>>, vector<80x128xf32>
    tpu.vector_store %arg10[%c0_40, %c0_41], %47 {strides = array<i32>} : memref<80x128xf32, #tpu.memory_space<vmem>>, vector<80x128xf32>,
    %49 = vector.extract_strided_slice %14 {offsets = [20, 0], sizes = [80, 128], strides = [1, 1]} : vector<110x128xbf16> to vector<80x128xbf16>
    %c768 = arith.constant 768 : index
    %c0_42 = arith.constant 0 : index
    %50 = vector.load %arg3[%c768, %c0_42] : memref<1152x128xbf16, #tpu.memory_space<vmem>>, vector<128x128xbf16>
    %cst_43 = arith.constant dense<0.000000e+00> : vector<80x128xf32>
    %51 = tpu.matmul %49, %50, %cst_43 {dimension_numbers = #tpu.dot_dimension_numbers<[1], [0], [0], [1], [0, 0, 1, 1], [], []>} : vector<80x128xbf16>, vector<128x128xbf16>, vector<80x128xf32> -> vector<80x128xf32>
    %c0_44 = arith.constant 0 : index
    %c0_45 = arith.constant 0 : index
    %52 = vector.load %arg10[%c0_44, %c0_45] : memref<80x128xf32, #tpu.memory_space<vmem>>, vector<80x128xf32>
    %53 = arith.addf %52, %51 : vector<80x128xf32>
    %c0_46 = arith.constant 0 : index
    %c0_47 = arith.constant 0 : index
    %54 = vector.load %arg10[%c0_46, %c0_47] : memref<80x128xf32, #tpu.memory_space<vmem>>, vector<80x128xf32>
    tpu.vector_store %arg10[%c0_46, %c0_47], %53 {strides = array<i32>} : memref<80x128xf32, #tpu.memory_space<vmem>>, vector<80x128xf32>,
    %55 = vector.extract_strided_slice %14 {offsets = [21, 0], sizes = [80, 128], strides = [1, 1]} : vector<110x128xbf16> to vector<80x128xbf16>
    %c896 = arith.constant 896 : index
    %c0_48 = arith.constant 0 : index
    %56 = vector.load %arg3[%c896, %c0_48] : memref<1152x128xbf16, #tpu.memory_space<vmem>>, vector<128x128xbf16>
    %cst_49 = arith.constant dense<0.000000e+00> : vector<80x128xf32>
    %57 = tpu.matmul %55, %56, %cst_49 {dimension_numbers = #tpu.dot_dimension_numbers<[1], [0], [0], [1], [0, 0, 1, 1], [], []>} : vector<80x128xbf16>, vector<128x128xbf16>, vector<80x128xf32> -> vector<80x128xf32>
    %c0_50 = arith.constant 0 : index
    %c0_51 = arith.constant 0 : index
    %58 = vector.load %arg10[%c0_50, %c0_51] : memref<80x128xf32, #tpu.memory_space<vmem>>, vector<80x128xf32>
    %59 = arith.addf %58, %57 : vector<80x128xf32>
    %c0_52 = arith.constant 0 : index
    %c0_53 = arith.constant 0 : index
    %60 = vector.load %arg10[%c0_52, %c0_53] : memref<80x128xf32, #tpu.memory_space<vmem>>, vector<80x128xf32>
    tpu.vector_store %arg10[%c0_52, %c0_53], %59 {strides = array<i32>} : memref<80x128xf32, #tpu.memory_space<vmem>>, vector<80x128xf32>,
    %61 = vector.extract_strided_slice %14 {offsets = [22, 0], sizes = [80, 128], strides = [1, 1]} : vector<110x128xbf16> to vector<80x128xbf16>
    %c1024 = arith.constant 1024 : index
    %c0_54 = arith.constant 0 : index
    %62 = vector.load %arg3[%c1024, %c0_54] : memref<1152x128xbf16, #tpu.memory_space<vmem>>, vector<128x128xbf16>
    %cst_55 = arith.constant dense<0.000000e+00> : vector<80x128xf32>
    %63 = tpu.matmul %61, %62, %cst_55 {dimension_numbers = #tpu.dot_dimension_numbers<[1], [0], [0], [1], [0, 0, 1, 1], [], []>} : vector<80x128xbf16>, vector<128x128xbf16>, vector<80x128xf32> -> vector<80x128xf32>
    %c0_56 = arith.constant 0 : index
    %c0_57 = arith.constant 0 : index
    %64 = vector.load %arg10[%c0_56, %c0_57] : memref<80x128xf32, #tpu.memory_space<vmem>>, vector<80x128xf32>
    %65 = arith.addf %64, %63 : vector<80x128xf32>
    %c0_58 = arith.constant 0 : index
    %c0_59 = arith.constant 0 : index
    %66 = vector.load %arg10[%c0_58, %c0_59] : memref<80x128xf32, #tpu.memory_space<vmem>>, vector<80x128xf32>
    tpu.vector_store %arg10[%c0_58, %c0_59], %65 {strides = array<i32>} : memref<80x128xf32, #tpu.memory_space<vmem>>, vector<80x128xf32>,
    %c0_60 = arith.constant 0 : index
    %c0_61 = arith.constant 0 : index
    %67 = vector.load %arg10[%c0_60, %c0_61] : memref<80x128xf32, #tpu.memory_space<vmem>>, vector<80x128xf32>
    %c0_62 = arith.constant 0 : index
    %c0_63 = arith.constant 0 : index
    %68 = vector.load %arg4[%c0_62, %c0_63] : memref<1x128xf32, #tpu.memory_space<vmem>>, vector<1x128xf32>
    %69 = vector.broadcast %68 : vector<1x128xf32> to vector<80x128xf32>
    %70 = arith.addf %67, %69 : vector<80x128xf32>
    %c0_64 = arith.constant 0 : index
    %c0_65 = arith.constant 0 : index
    %71 = vector.load %arg5[%c0_64, %c0_65] : memref<1x128xf32, #tpu.memory_space<vmem>>, vector<1x128xf32>
    %72 = vector.broadcast %71 : vector<1x128xf32> to vector<80x128xf32>
    %73 = arith.mulf %70, %72 : vector<80x128xf32>
    %c0_66 = arith.constant 0 : index
    %c0_67 = arith.constant 0 : index
    %74 = vector.load %arg6[%c0_66, %c0_67] : memref<1x128xf32, #tpu.memory_space<vmem>>, vector<1x128xf32>
    %75 = vector.broadcast %74 : vector<1x128xf32> to vector<80x128xf32>
    %76 = arith.addf %73, %75 : vector<80x128xf32>
    %cst_68 = arith.constant 0.000000e+00 : f32
    %77 = vector.broadcast %cst_68 : f32 to vector<80x128xf32>
    %78 = arith.cmpf ogt, %76, %77 : vector<80x128xf32>
    %cst_69 = arith.constant 1.000000e-01 : f32
    %79 = vector.broadcast %cst_69 : f32 to vector<80x128xf32>
    %80 = arith.mulf %79, %76 : vector<80x128xf32>
    %81 = arith.select %78, %76, %80 : vector<80x128xi1>, vector<80x128xf32>
    %82 = arith.truncf %81 : vector<80x128xf32> to vector<80x128xbf16>
    %c0_70 = arith.constant 0 : index
    %c0_71 = arith.constant 0 : index
    %c0_72 = arith.constant 0 : index
    %83 = vector.load %arg9[%c0_70, %c0_71, %c0_72] : memref<1x80x128xbf16, #tpu.memory_space<vmem>>, vector<1x80x128xbf16>
    %84 = vector.shape_cast %83 : vector<1x80x128xbf16> to vector<80x128xbf16>
    %85 = vector.shape_cast %82 : vector<80x128xbf16> to vector<1x80x128xbf16>
    tpu.vector_store %arg9[%c0_70, %c0_71, %c0_72], %85 {strides = array<i32>} : memref<1x80x128xbf16, #tpu.memory_space<vmem>>, vector<1x80x128xbf16>,
    return
  }
  func.func @transform_0(%arg0: i32, %arg1: i32) -> (i32, i32, i32) {
    %c0_i32 = arith.constant 0 : i32
    %c0_i32_0 = arith.constant 0 : i32
    %c0_i32_1 = arith.constant 0 : i32
    return %arg0, %c0_i32, %c0_i32_0 : i32, i32, i32
  }
  func.func @transform_1(%arg0: i32, %arg1: i32) -> (i32, i32) {
    %c0_i32 = arith.constant 0 : i32
    %c0_i32_0 = arith.constant 0 : i32
    return %c0_i32, %arg1 : i32, i32
  }
  func.func @transform_2(%arg0: i32, %arg1: i32) -> (i32, i32) {
    %c0_i32 = arith.constant 0 : i32
    %c0_i32_0 = arith.constant 0 : i32
    return %c0_i32, %arg1 : i32, i32
  }
  func.func @transform_3(%arg0: i32, %arg1: i32) -> (i32, i32) {
    %c0_i32 = arith.constant 0 : i32
    %c0_i32_0 = arith.constant 0 : i32
    return %c0_i32, %arg1 : i32, i32
  }
  func.func @transform_4(%arg0: i32, %arg1: i32) -> (i32, i32) {
    %c0_i32 = arith.constant 0 : i32
    %c0_i32_0 = arith.constant 0 : i32
    return %c0_i32, %arg1 : i32, i32
  }
  func.func @transform_5(%arg0: i32, %arg1: i32) -> (i32, i32) {
    %c0_i32 = arith.constant 0 : i32
    %c0_i32_0 = arith.constant 0 : i32
    %c0_i32_1 = arith.constant 0 : i32
    return %c0_i32, %c0_i32_0 : i32, i32
  }
  func.func @transform_6(%arg0: i32, %arg1: i32) -> (i32, i32) {
    %c0_i32 = arith.constant 0 : i32
    %c0_i32_0 = arith.constant 0 : i32
    %c0_i32_1 = arith.constant 0 : i32
    return %c0_i32, %c0_i32_0 : i32, i32
  }
  func.func @transform_7(%arg0: i32, %arg1: i32) -> (i32, i32, i32) {
    %c0_i32 = arith.constant 0 : i32
    %c0_i32_0 = arith.constant 0 : i32
    return %arg0, %c0_i32, %arg1 : i32, i32, i32
  }
}

module attributes {stable_mosaic.version = 11 : i64} {
  func.func @kernel(%arg0: i32, %arg1: i32, %arg2: memref<1x110x128xbf16, #tpu.memory_space<vmem>>, %arg3: memref<1152x128xbf16, #tpu.memory_space<vmem>>, %arg4: memref<1x128xf32, #tpu.memory_space<vmem>>, %arg5: memref<1x80x128xf32, #tpu.memory_space<vmem>>, %arg6: memref<1x80x128xf32, #tpu.memory_space<vmem>>, %arg7: memref<80x128xf32, #tpu.memory_space<vmem>>) attributes {dimension_semantics = [#tpu.dimension_semantics<parallel>, #tpu.dimension_semantics<parallel>], iteration_bounds = array<i64: 2, 1>, scalar_prefetch = 0 : i64, scratch_operands = 1 : i64, tpu.core_type = #tpu.core_type<tc>, window_params = [{transform_indices = @transform_0, window_bounds = array<i64: 1, 110, 128>}, {transform_indices = @transform_1, window_bounds = array<i64: 1152, 128>}, {transform_indices = @transform_2, window_bounds = array<i64: 1, 128>}, {transform_indices = @transform_3, window_bounds = array<i64: 1, 80, 128>}, {transform_indices = @transform_4, window_bounds = array<i64: 1, 80, 128>}]} {
    %c0 = arith.constant 0 : index
    %c0_0 = arith.constant 0 : index
    %c0_1 = arith.constant 0 : index
    %0 = vector.load %arg2[%c0, %c0_0, %c0_1] : memref<1x110x128xbf16, #tpu.memory_space<vmem>>, vector<1x110x128xbf16>
    %1 = vector.shape_cast %0 : vector<1x110x128xbf16> to vector<110x128xbf16>
    %2 = vector.extract_strided_slice %1 {offsets = [0, 0], sizes = [80, 128], strides = [1, 1]} : vector<110x128xbf16> to vector<80x128xbf16>
    %c0_2 = arith.constant 0 : index
    %c0_3 = arith.constant 0 : index
    %3 = vector.load %arg3[%c0_2, %c0_3] : memref<1152x128xbf16, #tpu.memory_space<vmem>>, vector<128x128xbf16>
    %cst = arith.constant dense<0.000000e+00> : vector<80x128xf32>
    %4 = tpu.matmul %2, %3, %cst {dimension_numbers = #tpu.dot_dimension_numbers<[1], [0], [0], [1], [0, 0, 1, 1], [], []>} : vector<80x128xbf16>, vector<128x128xbf16>, vector<80x128xf32> -> vector<80x128xf32>
    %c0_4 = arith.constant 0 : index
    %c0_5 = arith.constant 0 : index
    %5 = vector.load %arg7[%c0_4, %c0_5] : memref<80x128xf32, #tpu.memory_space<vmem>>, vector<80x128xf32>
    tpu.vector_store %arg7[%c0_4, %c0_5], %4 {strides = array<i32>} : memref<80x128xf32, #tpu.memory_space<vmem>>, vector<80x128xf32>,
    %6 = vector.extract_strided_slice %1 {offsets = [1, 0], sizes = [80, 128], strides = [1, 1]} : vector<110x128xbf16> to vector<80x128xbf16>
    %c128 = arith.constant 128 : index
    %c0_6 = arith.constant 0 : index
    %7 = vector.load %arg3[%c128, %c0_6] : memref<1152x128xbf16, #tpu.memory_space<vmem>>, vector<128x128xbf16>
    %cst_7 = arith.constant dense<0.000000e+00> : vector<80x128xf32>
    %8 = tpu.matmul %6, %7, %cst_7 {dimension_numbers = #tpu.dot_dimension_numbers<[1], [0], [0], [1], [0, 0, 1, 1], [], []>} : vector<80x128xbf16>, vector<128x128xbf16>, vector<80x128xf32> -> vector<80x128xf32>
    %c0_8 = arith.constant 0 : index
    %c0_9 = arith.constant 0 : index
    %9 = vector.load %arg7[%c0_8, %c0_9] : memref<80x128xf32, #tpu.memory_space<vmem>>, vector<80x128xf32>
    %10 = arith.addf %9, %8 : vector<80x128xf32>
    %c0_10 = arith.constant 0 : index
    %c0_11 = arith.constant 0 : index
    %11 = vector.load %arg7[%c0_10, %c0_11] : memref<80x128xf32, #tpu.memory_space<vmem>>, vector<80x128xf32>
    tpu.vector_store %arg7[%c0_10, %c0_11], %10 {strides = array<i32>} : memref<80x128xf32, #tpu.memory_space<vmem>>, vector<80x128xf32>,
    %12 = vector.extract_strided_slice %1 {offsets = [2, 0], sizes = [80, 128], strides = [1, 1]} : vector<110x128xbf16> to vector<80x128xbf16>
    %c256 = arith.constant 256 : index
    %c0_12 = arith.constant 0 : index
    %13 = vector.load %arg3[%c256, %c0_12] : memref<1152x128xbf16, #tpu.memory_space<vmem>>, vector<128x128xbf16>
    %cst_13 = arith.constant dense<0.000000e+00> : vector<80x128xf32>
    %14 = tpu.matmul %12, %13, %cst_13 {dimension_numbers = #tpu.dot_dimension_numbers<[1], [0], [0], [1], [0, 0, 1, 1], [], []>} : vector<80x128xbf16>, vector<128x128xbf16>, vector<80x128xf32> -> vector<80x128xf32>
    %c0_14 = arith.constant 0 : index
    %c0_15 = arith.constant 0 : index
    %15 = vector.load %arg7[%c0_14, %c0_15] : memref<80x128xf32, #tpu.memory_space<vmem>>, vector<80x128xf32>
    %16 = arith.addf %15, %14 : vector<80x128xf32>
    %c0_16 = arith.constant 0 : index
    %c0_17 = arith.constant 0 : index
    %17 = vector.load %arg7[%c0_16, %c0_17] : memref<80x128xf32, #tpu.memory_space<vmem>>, vector<80x128xf32>
    tpu.vector_store %arg7[%c0_16, %c0_17], %16 {strides = array<i32>} : memref<80x128xf32, #tpu.memory_space<vmem>>, vector<80x128xf32>,
    %18 = vector.extract_strided_slice %1 {offsets = [10, 0], sizes = [80, 128], strides = [1, 1]} : vector<110x128xbf16> to vector<80x128xbf16>
    %c384 = arith.constant 384 : index
    %c0_18 = arith.constant 0 : index
    %19 = vector.load %arg3[%c384, %c0_18] : memref<1152x128xbf16, #tpu.memory_space<vmem>>, vector<128x128xbf16>
    %cst_19 = arith.constant dense<0.000000e+00> : vector<80x128xf32>
    %20 = tpu.matmul %18, %19, %cst_19 {dimension_numbers = #tpu.dot_dimension_numbers<[1], [0], [0], [1], [0, 0, 1, 1], [], []>} : vector<80x128xbf16>, vector<128x128xbf16>, vector<80x128xf32> -> vector<80x128xf32>
    %c0_20 = arith.constant 0 : index
    %c0_21 = arith.constant 0 : index
    %21 = vector.load %arg7[%c0_20, %c0_21] : memref<80x128xf32, #tpu.memory_space<vmem>>, vector<80x128xf32>
    %22 = arith.addf %21, %20 : vector<80x128xf32>
    %c0_22 = arith.constant 0 : index
    %c0_23 = arith.constant 0 : index
    %23 = vector.load %arg7[%c0_22, %c0_23] : memref<80x128xf32, #tpu.memory_space<vmem>>, vector<80x128xf32>
    tpu.vector_store %arg7[%c0_22, %c0_23], %22 {strides = array<i32>} : memref<80x128xf32, #tpu.memory_space<vmem>>, vector<80x128xf32>,
    %24 = vector.extract_strided_slice %1 {offsets = [11, 0], sizes = [80, 128], strides = [1, 1]} : vector<110x128xbf16> to vector<80x128xbf16>
    %c512 = arith.constant 512 : index
    %c0_24 = arith.constant 0 : index
    %25 = vector.load %arg3[%c512, %c0_24] : memref<1152x128xbf16, #tpu.memory_space<vmem>>, vector<128x128xbf16>
    %cst_25 = arith.constant dense<0.000000e+00> : vector<80x128xf32>
    %26 = tpu.matmul %24, %25, %cst_25 {dimension_numbers = #tpu.dot_dimension_numbers<[1], [0], [0], [1], [0, 0, 1, 1], [], []>} : vector<80x128xbf16>, vector<128x128xbf16>, vector<80x128xf32> -> vector<80x128xf32>
    %c0_26 = arith.constant 0 : index
    %c0_27 = arith.constant 0 : index
    %27 = vector.load %arg7[%c0_26, %c0_27] : memref<80x128xf32, #tpu.memory_space<vmem>>, vector<80x128xf32>
    %28 = arith.addf %27, %26 : vector<80x128xf32>
    %c0_28 = arith.constant 0 : index
    %c0_29 = arith.constant 0 : index
    %29 = vector.load %arg7[%c0_28, %c0_29] : memref<80x128xf32, #tpu.memory_space<vmem>>, vector<80x128xf32>
    tpu.vector_store %arg7[%c0_28, %c0_29], %28 {strides = array<i32>} : memref<80x128xf32, #tpu.memory_space<vmem>>, vector<80x128xf32>,
    %30 = vector.extract_strided_slice %1 {offsets = [12, 0], sizes = [80, 128], strides = [1, 1]} : vector<110x128xbf16> to vector<80x128xbf16>
    %c640 = arith.constant 640 : index
    %c0_30 = arith.constant 0 : index
    %31 = vector.load %arg3[%c640, %c0_30] : memref<1152x128xbf16, #tpu.memory_space<vmem>>, vector<128x128xbf16>
    %cst_31 = arith.constant dense<0.000000e+00> : vector<80x128xf32>
    %32 = tpu.matmul %30, %31, %cst_31 {dimension_numbers = #tpu.dot_dimension_numbers<[1], [0], [0], [1], [0, 0, 1, 1], [], []>} : vector<80x128xbf16>, vector<128x128xbf16>, vector<80x128xf32> -> vector<80x128xf32>
    %c0_32 = arith.constant 0 : index
    %c0_33 = arith.constant 0 : index
    %33 = vector.load %arg7[%c0_32, %c0_33] : memref<80x128xf32, #tpu.memory_space<vmem>>, vector<80x128xf32>
    %34 = arith.addf %33, %32 : vector<80x128xf32>
    %c0_34 = arith.constant 0 : index
    %c0_35 = arith.constant 0 : index
    %35 = vector.load %arg7[%c0_34, %c0_35] : memref<80x128xf32, #tpu.memory_space<vmem>>, vector<80x128xf32>
    tpu.vector_store %arg7[%c0_34, %c0_35], %34 {strides = array<i32>} : memref<80x128xf32, #tpu.memory_space<vmem>>, vector<80x128xf32>,
    %36 = vector.extract_strided_slice %1 {offsets = [20, 0], sizes = [80, 128], strides = [1, 1]} : vector<110x128xbf16> to vector<80x128xbf16>
    %c768 = arith.constant 768 : index
    %c0_36 = arith.constant 0 : index
    %37 = vector.load %arg3[%c768, %c0_36] : memref<1152x128xbf16, #tpu.memory_space<vmem>>, vector<128x128xbf16>
    %cst_37 = arith.constant dense<0.000000e+00> : vector<80x128xf32>
    %38 = tpu.matmul %36, %37, %cst_37 {dimension_numbers = #tpu.dot_dimension_numbers<[1], [0], [0], [1], [0, 0, 1, 1], [], []>} : vector<80x128xbf16>, vector<128x128xbf16>, vector<80x128xf32> -> vector<80x128xf32>
    %c0_38 = arith.constant 0 : index
    %c0_39 = arith.constant 0 : index
    %39 = vector.load %arg7[%c0_38, %c0_39] : memref<80x128xf32, #tpu.memory_space<vmem>>, vector<80x128xf32>
    %40 = arith.addf %39, %38 : vector<80x128xf32>
    %c0_40 = arith.constant 0 : index
    %c0_41 = arith.constant 0 : index
    %41 = vector.load %arg7[%c0_40, %c0_41] : memref<80x128xf32, #tpu.memory_space<vmem>>, vector<80x128xf32>
    tpu.vector_store %arg7[%c0_40, %c0_41], %40 {strides = array<i32>} : memref<80x128xf32, #tpu.memory_space<vmem>>, vector<80x128xf32>,
    %42 = vector.extract_strided_slice %1 {offsets = [21, 0], sizes = [80, 128], strides = [1, 1]} : vector<110x128xbf16> to vector<80x128xbf16>
    %c896 = arith.constant 896 : index
    %c0_42 = arith.constant 0 : index
    %43 = vector.load %arg3[%c896, %c0_42] : memref<1152x128xbf16, #tpu.memory_space<vmem>>, vector<128x128xbf16>
    %cst_43 = arith.constant dense<0.000000e+00> : vector<80x128xf32>
    %44 = tpu.matmul %42, %43, %cst_43 {dimension_numbers = #tpu.dot_dimension_numbers<[1], [0], [0], [1], [0, 0, 1, 1], [], []>} : vector<80x128xbf16>, vector<128x128xbf16>, vector<80x128xf32> -> vector<80x128xf32>
    %c0_44 = arith.constant 0 : index
    %c0_45 = arith.constant 0 : index
    %45 = vector.load %arg7[%c0_44, %c0_45] : memref<80x128xf32, #tpu.memory_space<vmem>>, vector<80x128xf32>
    %46 = arith.addf %45, %44 : vector<80x128xf32>
    %c0_46 = arith.constant 0 : index
    %c0_47 = arith.constant 0 : index
    %47 = vector.load %arg7[%c0_46, %c0_47] : memref<80x128xf32, #tpu.memory_space<vmem>>, vector<80x128xf32>
    tpu.vector_store %arg7[%c0_46, %c0_47], %46 {strides = array<i32>} : memref<80x128xf32, #tpu.memory_space<vmem>>, vector<80x128xf32>,
    %48 = vector.extract_strided_slice %1 {offsets = [22, 0], sizes = [80, 128], strides = [1, 1]} : vector<110x128xbf16> to vector<80x128xbf16>
    %c1024 = arith.constant 1024 : index
    %c0_48 = arith.constant 0 : index
    %49 = vector.load %arg3[%c1024, %c0_48] : memref<1152x128xbf16, #tpu.memory_space<vmem>>, vector<128x128xbf16>
    %cst_49 = arith.constant dense<0.000000e+00> : vector<80x128xf32>
    %50 = tpu.matmul %48, %49, %cst_49 {dimension_numbers = #tpu.dot_dimension_numbers<[1], [0], [0], [1], [0, 0, 1, 1], [], []>} : vector<80x128xbf16>, vector<128x128xbf16>, vector<80x128xf32> -> vector<80x128xf32>
    %c0_50 = arith.constant 0 : index
    %c0_51 = arith.constant 0 : index
    %51 = vector.load %arg7[%c0_50, %c0_51] : memref<80x128xf32, #tpu.memory_space<vmem>>, vector<80x128xf32>
    %52 = arith.addf %51, %50 : vector<80x128xf32>
    %c0_52 = arith.constant 0 : index
    %c0_53 = arith.constant 0 : index
    %53 = vector.load %arg7[%c0_52, %c0_53] : memref<80x128xf32, #tpu.memory_space<vmem>>, vector<80x128xf32>
    tpu.vector_store %arg7[%c0_52, %c0_53], %52 {strides = array<i32>} : memref<80x128xf32, #tpu.memory_space<vmem>>, vector<80x128xf32>,
    %c0_54 = arith.constant 0 : index
    %c0_55 = arith.constant 0 : index
    %54 = vector.load %arg7[%c0_54, %c0_55] : memref<80x128xf32, #tpu.memory_space<vmem>>, vector<80x128xf32>
    %c0_56 = arith.constant 0 : index
    %c0_57 = arith.constant 0 : index
    %55 = vector.load %arg4[%c0_56, %c0_57] : memref<1x128xf32, #tpu.memory_space<vmem>>, vector<1x128xf32>
    %56 = vector.broadcast %55 : vector<1x128xf32> to vector<80x128xf32>
    %57 = arith.addf %54, %56 : vector<80x128xf32>
    %c0_58 = arith.constant 0 : index
    %c0_59 = arith.constant 0 : index
    %c0_60 = arith.constant 0 : index
    %58 = vector.load %arg5[%c0_58, %c0_59, %c0_60] : memref<1x80x128xf32, #tpu.memory_space<vmem>>, vector<1x80x128xf32>
    %59 = vector.shape_cast %58 : vector<1x80x128xf32> to vector<80x128xf32>
    %60 = arith.addf %57, %59 : vector<80x128xf32>
    %c0_61 = arith.constant 0 : index
    %c0_62 = arith.constant 0 : index
    %c0_63 = arith.constant 0 : index
    %61 = vector.load %arg6[%c0_61, %c0_62, %c0_63] : memref<1x80x128xf32, #tpu.memory_space<vmem>>, vector<1x80x128xf32>
    %62 = vector.shape_cast %61 : vector<1x80x128xf32> to vector<80x128xf32>
    %63 = vector.shape_cast %60 : vector<80x128xf32> to vector<1x80x128xf32>
    tpu.vector_store %arg6[%c0_61, %c0_62, %c0_63], %63 {strides = array<i32>} : memref<1x80x128xf32, #tpu.memory_space<vmem>>, vector<1x80x128xf32>,
    return
  }
  func.func @transform_0(%arg0: i32, %arg1: i32) -> (i32, i32, i32) {
    %c0_i32 = arith.constant 0 : i32
    %c0_i32_0 = arith.constant 0 : i32
    %c0_i32_1 = arith.constant 0 : i32
    return %arg0, %c0_i32, %c0_i32_0 : i32, i32, i32
  }
  func.func @transform_1(%arg0: i32, %arg1: i32) -> (i32, i32) {
    %c0_i32 = arith.constant 0 : i32
    %c0_i32_0 = arith.constant 0 : i32
    return %c0_i32, %arg1 : i32, i32
  }
  func.func @transform_2(%arg0: i32, %arg1: i32) -> (i32, i32) {
    %c0_i32 = arith.constant 0 : i32
    %c0_i32_0 = arith.constant 0 : i32
    return %c0_i32, %arg1 : i32, i32
  }
  func.func @transform_3(%arg0: i32, %arg1: i32) -> (i32, i32, i32) {
    %c0_i32 = arith.constant 0 : i32
    %c0_i32_0 = arith.constant 0 : i32
    return %arg0, %c0_i32, %arg1 : i32, i32, i32
  }
  func.func @transform_4(%arg0: i32, %arg1: i32) -> (i32, i32, i32) {
    %c0_i32 = arith.constant 0 : i32
    %c0_i32_0 = arith.constant 0 : i32
    return %arg0, %c0_i32, %arg1 : i32, i32, i32
  }
}

</mosaic_0001>

<llo_original>
// kernel: network_block_forward.4
$region0: #{network_block_forward.4}
  #allocation0 [shape = 'u32[]', space=smem, size = 0x4, offset = 0x4, fixed_abs, tag = 'smem constant byte address 0x4 - core index']
  #allocation1 [shape = 'u32[72,128]{1,0:T(1,128)}', space=vmem, size = 0x9000, scoped, tag = 'internal scratch']
  #allocation2 [shape = 'f32[72,128]{1,0:T(8,128)}', space=vmem, size = 0x9000, scoped, tag = 'scratch operand']
  %s0 = inlined_call_operand.vmem [shape: bf16[2,360,128], index: 0, kind: input, shape index: {}]
  %s1 = inlined_call_operand.vmem [shape: bf16[1152,128], index: 1, kind: input, shape index: {}]
  %s2 = inlined_call_operand.vmem [shape: f32[1,128], index: 2, kind: input, shape index: {}]
  %s3 = inlined_call_operand.vmem [shape: f32[1,128], index: 3, kind: input, shape index: {}]
  %s4 = inlined_call_operand.vmem [shape: f32[1,128], index: 4, kind: input, shape index: {}]
  %s5 = inlined_call_operand.vmem [shape: f32[1,128], index: 5, kind: input, shape index: {}]
  %s6 = inlined_call_operand.vmem [shape: f32[1,128], index: 6, kind: input, shape index: {}]
  %s7 = inlined_call_operand.vmem [shape: bf16[2,72,128], index: 7, kind: output, shape index: {}]
  %s8 = sld [smem:[#allocation0]]
  $region61: #{network_block_forward.4} parent=0
    _
  %s10 = ssub.s32 1, %s8
  %s11 = scalar_select 0, %s10, %s8
  loop: start=0, step=1, limit=4
  $region2: #{network_block_forward.4} parent=0 // loop_pre_header
    _
  $region3: #{network_block_forward.4} parent=0 // loop_header
    %s13 = sphi 0, %s17
    %p14 = scmp.ge.s32.totalorder %s13, 4
    %s20 = sphi 0, %s32
    %s21 = sphi 0, %s28
    %s22 = sphi 0, %s20
    %s23 = sphi 0, %s21
    %s24 = sphi 0, %s22
    %s25 = sphi 0, %s23
    %s35 = sphi 0, %s37
    %s38 = sphi 0, %s35
    %s39 = sphi 0, %s38
    %s55 = sphi 0, %s39
    %s61 = sphi 0, %s63
    %s64 = sphi 0, %s61
    %s65 = sphi 0, %s64
    %s81 = sphi 0, %s65
    %s87 = sphi 0, %s89
    %s90 = sphi 0, %s87
    %s91 = sphi 0, %s90
    %s107 = sphi 0, %s91
    %s113 = sphi 0, %s115
    %s116 = sphi 0, %s113
    %s117 = sphi 0, %s116
    %s133 = sphi 0, %s117
    %s139 = sphi 0, %s141
    %s142 = sphi 0, %s139
    %s143 = sphi 0, %s142
    %s159 = sphi 0, %s143
    %s163 = sphi 0, %s163
    %s165 = sphi 0, %s163
    %s166 = sphi 0, %s165
    %s180 = sphi 0, %s166
    %s184 = sphi 0, %s184
    %s186 = sphi 0, %s184
    %s187 = sphi 0, %s186
    %s201 = sphi 0, %s187
    %s209 = sphi 0, %s211
    %s212 = sphi 0, %s209
    %s213 = sphi 0, %s212
    %s229 = sphi 0, %s213
  $region4: #{network_block_forward.4} parent=0 // loop_header_branch
    %16 = sbr.rel (%p14) target = $region8
  $region5: #{network_block_forward.4} parent=0 // loop_body
    %s18 = ssub.s32 %s13, 1
    %s19 = ssub.s32 %s13, 2
    %s26 = sadd.s32 1, %s21
    %p27 = scmp.ge.s32.totalorder %s26, 1
    %s28 = scalar_select %p27, 0, %s26
    %s29 = sadd.s32 1, %s20
    %s30 = scalar_select %p27, %s29, %s20
    %p31 = scmp.ge.s32.totalorder %s30, 2
    %s32 = scalar_select %p31, 0, %s30
    %s33 = ssub.s32 %s20, %s32
    %p34 = scmp.eq.s32.totalorder %s33, 0
    %s36 = sadd.s32 %s35, 1
    %s37 = scalar_select %p34, %s35, %s36
    %p40 = pneg %p34
    %p41 = scmp.eq.s32.totalorder %s13, 1
    %p42 = por %p40, %p41
    %p43 = scmp.ne.s32.totalorder %s35, %s38
    %p44 = scmp.eq.s32.totalorder %s13, 0
    %p45 = por %p43, %p44
    %p46 = scmp.ne.s32.totalorder %s35, %s38
    %p47 = scmp.eq.s32.totalorder %s18, 1
    %p48 = por %p46, %p47
    %p49 = scmp.ne.s32.totalorder %s38, %s39
    %p50 = scmp.eq.s32.totalorder %s18, 0
    %p51 = por %p49, %p50
    %p52 = scmp.ne.s32.totalorder %s38, %s39
    %p53 = scmp.eq.s32.totalorder %s19, 1
    %p54 = por %p52, %p53
    %p56 = scmp.ne.s32.totalorder %s39, %s55
    %p57 = scmp.eq.s32.totalorder %s19, 0
    %p58 = por %p56, %p57
    %s59 = ssub.s32 %s21, %s28
    %p60 = scmp.eq.s32.totalorder %s59, 0
    %s62 = sadd.s32 %s61, 1
    %s63 = scalar_select %p60, %s61, %s62
    %p66 = pneg %p60
    %p67 = scmp.eq.s32.totalorder %s13, 1
    %p68 = por %p66, %p67
    %p69 = scmp.ne.s32.totalorder %s61, %s64
    %p70 = scmp.eq.s32.totalorder %s13, 0
    %p71 = por %p69, %p70
    %p72 = scmp.ne.s32.totalorder %s61, %s64
    %p73 = scmp.eq.s32.totalorder %s18, 1
    %p74 = por %p72, %p73
    %p75 = scmp.ne.s32.totalorder %s64, %s65
    %p76 = scmp.eq.s32.totalorder %s18, 0
    %p77 = por %p75, %p76
    %p78 = scmp.ne.s32.totalorder %s64, %s65
    %p79 = scmp.eq.s32.totalorder %s19, 1
    %p80 = por %p78, %p79
    %p82 = scmp.ne.s32.totalorder %s65, %s81
    %p83 = scmp.eq.s32.totalorder %s19, 0
    %p84 = por %p82, %p83
    %s85 = ssub.s32 %s21, %s28
    %p86 = scmp.eq.s32.totalorder %s85, 0
    %s88 = sadd.s32 %s87, 1
    %s89 = scalar_select %p86, %s87, %s88
    %p92 = pneg %p86
    %p93 = scmp.eq.s32.totalorder %s13, 1
    %p94 = por %p92, %p93
    %p95 = scmp.ne.s32.totalorder %s87, %s90
    %p96 = scmp.eq.s32.totalorder %s13, 0
    %p97 = por %p95, %p96
    %p98 = scmp.ne.s32.totalorder %s87, %s90
    %p99 = scmp.eq.s32.totalorder %s18, 1
    %p100 = por %p98, %p99
    %p101 = scmp.ne.s32.totalorder %s90, %s91
    %p102 = scmp.eq.s32.totalorder %s18, 0
    %p103 = por %p101, %p102
    %p104 = scmp.ne.s32.totalorder %s90, %s91
    %p105 = scmp.eq.s32.totalorder %s19, 1
    %p106 = por %p104, %p105
    %p108 = scmp.ne.s32.totalorder %s91, %s107
    %p109 = scmp.eq.s32.totalorder %s19, 0
    %p110 = por %p108, %p109
    %s111 = ssub.s32 %s21, %s28
    %p112 = scmp.eq.s32.totalorder %s111, 0
    %s114 = sadd.s32 %s113, 1
    %s115 = scalar_select %p112, %s113, %s114
    %p118 = pneg %p112
    %p119 = scmp.eq.s32.totalorder %s13, 1
    %p120 = por %p118, %p119
    %p121 = scmp.ne.s32.totalorder %s113, %s116
    %p122 = scmp.eq.s32.totalorder %s13, 0
    %p123 = por %p121, %p122
    %p124 = scmp.ne.s32.totalorder %s113, %s116
    %p125 = scmp.eq.s32.totalorder %s18, 1
    %p126 = por %p124, %p125
    %p127 = scmp.ne.s32.totalorder %s116, %s117
    %p128 = scmp.eq.s32.totalorder %s18, 0
    %p129 = por %p127, %p128
    %p130 = scmp.ne.s32.totalorder %s116, %s117
    %p131 = scmp.eq.s32.totalorder %s19, 1
    %p132 = por %p130, %p131
    %p134 = scmp.ne.s32.totalorder %s117, %s133
    %p135 = scmp.eq.s32.totalorder %s19, 0
    %p136 = por %p134, %p135
    %s137 = ssub.s32 %s21, %s28
    %p138 = scmp.eq.s32.totalorder %s137, 0
    %s140 = sadd.s32 %s139, 1
    %s141 = scalar_select %p138, %s139, %s140
    %p144 = pneg %p138
    %p145 = scmp.eq.s32.totalorder %s13, 1
    %p146 = por %p144, %p145
    %p147 = scmp.ne.s32.totalorder %s139, %s142
    %p148 = scmp.eq.s32.totalorder %s13, 0
    %p149 = por %p147, %p148
    %p150 = scmp.ne.s32.totalorder %s139, %s142
    %p151 = scmp.eq.s32.totalorder %s18, 1
    %p152 = por %p150, %p151
    %p153 = scmp.ne.s32.totalorder %s142, %s143
    %p154 = scmp.eq.s32.totalorder %s18, 0
    %p155 = por %p153, %p154
    %p156 = scmp.ne.s32.totalorder %s142, %s143
    %p157 = scmp.eq.s32.totalorder %s19, 1
    %p158 = por %p156, %p157
    %p160 = scmp.ne.s32.totalorder %s143, %s159
    %p161 = scmp.eq.s32.totalorder %s19, 0
    %p162 = por %p160, %p161
    %s164 = sadd.s32 %s163, 1
    %p167 = scmp.eq.s32.totalorder %s13, 1
    %p168 = scmp.ne.s32.totalorder %s163, %s165
    %p169 = scmp.eq.s32.totalorder %s13, 0
    %p170 = por %p168, %p169
    %p171 = scmp.ne.s32.totalorder %s163, %s165
    %p172 = scmp.eq.s32.totalorder %s18, 1
    %p173 = por %p171, %p172
    %p174 = scmp.ne.s32.totalorder %s165, %s166
    %p175 = scmp.eq.s32.totalorder %s18, 0
    %p176 = por %p174, %p175
    %p177 = scmp.ne.s32.totalorder %s165, %s166
    %p178 = scmp.eq.s32.totalorder %s19, 1
    %p179 = por %p177, %p178
    %p181 = scmp.ne.s32.totalorder %s166, %s180
    %p182 = scmp.eq.s32.totalorder %s19, 0
    %p183 = por %p181, %p182
    %s185 = sadd.s32 %s184, 1
    %p188 = scmp.eq.s32.totalorder %s13, 1
    %p189 = scmp.ne.s32.totalorder %s184, %s186
    %p190 = scmp.eq.s32.totalorder %s13, 0
    %p191 = por %p189, %p190
    %p192 = scmp.ne.s32.totalorder %s184, %s186
    %p193 = scmp.eq.s32.totalorder %s18, 1
    %p194 = por %p192, %p193
    %p195 = scmp.ne.s32.totalorder %s186, %s187
    %p196 = scmp.eq.s32.totalorder %s18, 0
    %p197 = por %p195, %p196
    %p198 = scmp.ne.s32.totalorder %s186, %s187
    %p199 = scmp.eq.s32.totalorder %s19, 1
    %p200 = por %p198, %p199
    %p202 = scmp.ne.s32.totalorder %s187, %s201
    %p203 = scmp.eq.s32.totalorder %s19, 0
    %p204 = por %p202, %p203
    %s205 = ssub.s32 %s20, %s32
    %s206 = ssub.s32 %s21, %s28
    %s207 = sor.u32 %s205, %s206
    %p208 = scmp.eq.s32.totalorder %s207, 0
    %s210 = sadd.s32 %s209, 1
    %s211 = scalar_select %p208, %s209, %s210
    %p214 = pneg %p208
    %p215 = scmp.eq.s32.totalorder %s13, 1
    %p216 = por %p214, %p215
    %p217 = scmp.ne.s32.totalorder %s209, %s212
    %p218 = scmp.eq.s32.totalorder %s13, 0
    %p219 = por %p217, %p218
    %p220 = scmp.ne.s32.totalorder %s209, %s212
    %p221 = scmp.eq.s32.totalorder %s18, 1
    %p222 = por %p220, %p221
    %p223 = scmp.ne.s32.totalorder %s212, %s213
    %p224 = scmp.eq.s32.totalorder %s18, 0
    %p225 = por %p223, %p224
    %p226 = scmp.ne.s32.totalorder %s212, %s213
    %p227 = scmp.eq.s32.totalorder %s19, 1
    %p228 = por %p226, %p227
    %p230 = scmp.ne.s32.totalorder %s213, %s229
    %p231 = scmp.eq.s32.totalorder %s19, 0
    %p232 = por %p230, %p231
    %p233 = scmp.le.s32.totalorder 1, %s13
    %p234 = scmp.lt.s32.totalorder %s13, 3
    %p235 = pnand %p233, %p234
    %p236 = pneg %p235
    // Predicated region
    $region9: #{network_block_forward.4} parent=5 // pred_check
      _
    $region10: #{network_block_forward.4} parent=5 // pred_check_branch
      %238 = sbr.rel (%p235) target = $region12
    $region11: #{network_block_forward.4} parent=5 // pred_region
      %s239 = ssub.s32 %s13, 1
      // Predicated region
      $region13: #{network_block_forward.4} parent=11 // pred_check
        %p240 = pneg %p77
      $region14: #{network_block_forward.4} parent=11 // pred_check_branch
        %242 = sbr.rel (%p240) target = $region16
      $region15: #{network_block_forward.4} parent=11 // pred_region
        %p243 = scmp.lt.s32.totalorder %s23, 0
        %s244 = scalar_select %p243, %s23, 0
        %s245 = smul.addr %s244, 4
        %s246 = scalar_lea.vmem %s1, %s245
      $region16: #{network_block_forward.4} parent=11 // pred_fallthru
        _
      // Predicated region
      $region17: #{network_block_forward.4} parent=11 // pred_check
        %p247 = pneg %p103
      $region18: #{network_block_forward.4} parent=11 // pred_check_branch
        %249 = sbr.rel (%p247) target = $region20
      $region19: #{network_block_forward.4} parent=11 // pred_region
        %p250 = scmp.lt.s32.totalorder %s23, 0
        %s251 = scalar_select %p250, %s23, 0
        %s252 = scalar_lea.vmem %s2, %s251
      $region20: #{network_block_forward.4} parent=11 // pred_fallthru
        _
      // Predicated region
      $region21: #{network_block_forward.4} parent=11 // pred_check
        %p253 = pneg %p129
      $region22: #{network_block_forward.4} parent=11 // pred_check_branch
        %255 = sbr.rel (%p253) target = $region24
      $region23: #{network_block_forward.4} parent=11 // pred_region
        %p256 = scmp.lt.s32.totalorder %s23, 0
        %s257 = scalar_select %p256, %s23, 0
        %s258 = scalar_lea.vmem %s3, %s257
      $region24: #{network_block_forward.4} parent=11 // pred_fallthru
        _
      // Predicated region
      $region25: #{network_block_forward.4} parent=11 // pred_check
        %p259 = pneg %p155
      $region26: #{network_block_forward.4} parent=11 // pred_check_branch
        %261 = sbr.rel (%p259) target = $region28
      $region27: #{network_block_forward.4} parent=11 // pred_region
        %p262 = scmp.lt.s32.totalorder %s23, 0
        %s263 = scalar_select %p262, %s23, 0
        %s264 = scalar_lea.vmem %s4, %s263
      $region28: #{network_block_forward.4} parent=11 // pred_fallthru
        _
      // Predicated region
      $region29: #{network_block_forward.4} parent=11 // pred_check
        %p265 = pneg %p176
      $region30: #{network_block_forward.4} parent=11 // pred_check_branch
        %267 = sbr.rel (%p265) target = $region32
      $region31: #{network_block_forward.4} parent=11 // pred_region
        _
      $region32: #{network_block_forward.4} parent=11 // pred_fallthru
        _
      // Predicated region
      $region33: #{network_block_forward.4} parent=11 // pred_check
        %p268 = pneg %p197
      $region34: #{network_block_forward.4} parent=11 // pred_check_branch
        %270 = sbr.rel (%p268) target = $region36
      $region35: #{network_block_forward.4} parent=11 // pred_region
        _
      $region36: #{network_block_forward.4} parent=11 // pred_fallthru
        _
    $region12: #{network_block_forward.4} parent=5 // pred_fallthru
      _
    %p271 = scmp.lt.s32.totalorder %s13, 2
    // Predicated region
    $region37: #{network_block_forward.4} parent=5 // pred_check
      %p272 = pneg %p271
    $region38: #{network_block_forward.4} parent=5 // pred_check_branch
      %274 = sbr.rel (%p272) target = $region40
    $region39: #{network_block_forward.4} parent=5 // pred_region
      // Predicated region
      $region41: #{network_block_forward.4} parent=39 // pred_check
        %p275 = pneg %p45
      $region42: #{network_block_forward.4} parent=39 // pred_check_branch
        %277 = sbr.rel (%p275) target = $region44
      $region43: #{network_block_forward.4} parent=39 // pred_region
        %p278 = scmp.lt.s32.totalorder %s20, 1
        %s279 = scalar_select %p278, %s20, 1
        %s280 = smul.addr %s279, 45
        %s281 = smul.addr %s280, 4
        %s282 = scalar_lea.vmem %s0, %s281
      $region44: #{network_block_forward.4} parent=39 // pred_fallthru
        _
    $region40: #{network_block_forward.4} parent=5 // pred_fallthru
      _
    %p283 = scmp.le.s32.totalorder 1, %s13
    %p284 = scmp.lt.s32.totalorder %s13, 3
    %p285 = pnand %p283, %p284
    %p286 = pneg %p285
    // Predicated region
    $region45: #{network_block_forward.4} parent=5 // pred_check
      _
    $region46: #{network_block_forward.4} parent=5 // pred_check_branch
      %288 = sbr.rel (%p285) target = $region48
    $region47: #{network_block_forward.4} parent=5 // pred_region
      %s289 = ssub.s32 %s13, 1
      %p290 = scmp.lt.s32.totalorder %s22, 1
      %s291 = scalar_select %p290, %s22, 1
      %s292 = smul.addr %s291, 45
      %s293 = smul.addr %s292, 4
      %s294 = scalar_lea.vmem %s0, %s293
      %p295 = pneg %p51
      %p296 = pneg %p48
      %p297 = scmp.lt.s32.totalorder %s23, 0
      %s298 = scalar_select %p297, %s23, 0
      %s299 = smul.addr %s298, 4
      %s300 = scalar_lea.vmem %s1, %s299
      %p301 = pneg %p77
      %p302 = pneg %p74
      %p303 = scmp.lt.s32.totalorder %s23, 0
      %s304 = scalar_select %p303, %s23, 0
      %s305 = scalar_lea.vmem %s2, %s304
      %p306 = pneg %p103
      %p307 = pneg %p100
      %p308 = scmp.lt.s32.totalorder %s23, 0
      %s309 = scalar_select %p308, %s23, 0
      %s310 = scalar_lea.vmem %s3, %s309
      %p311 = pneg %p129
      %p312 = pneg %p126
      %p313 = scmp.lt.s32.totalorder %s23, 0
      %s314 = scalar_select %p313, %s23, 0
      %s315 = scalar_lea.vmem %s4, %s314
      %p316 = pneg %p155
      %p317 = pneg %p152
      %p318 = pneg %p176
      %p319 = pneg %p173
      %p320 = pneg %p197
      %p321 = pneg %p194
      %p322 = pneg %p225
      %p323 = pneg %p222
      %p324 = scmp.lt.s32.totalorder %s22, 1
      %s325 = scalar_select %p324, %s22, 1
      %p326 = scmp.lt.s32.totalorder %s23, 0
      %s327 = scalar_select %p326, %s23, 0
      %s328 = smul.addr %s325, 9
      %s329 = sadd.s32 %s327, %s328
      %s330 = smul.addr %s329, 4
      %s331 = scalar_lea.vmem %s7, %s330
      %p332 = scmp.lt.s32.totalorder %s22, 1
      %s333 = scalar_select %p332, %s22, 1
      %s334 = smul.addr %s333, 45
      %s335 = smul.addr %s334, 4
      %s336 = scalar_lea.vmem %s0, %s335
      %p337 = scmp.lt.s32.totalorder %s23, 0
      %s338 = scalar_select %p337, %s23, 0
      %s339 = smul.addr %s338, 4
      %s340 = scalar_lea.vmem %s1, %s339
      %p341 = scmp.lt.s32.totalorder %s23, 0
      %s342 = scalar_select %p341, %s23, 0
      %s343 = scalar_lea.vmem %s2, %s342
      %p344 = scmp.lt.s32.totalorder %s23, 0
      %s345 = scalar_select %p344, %s23, 0
      %s346 = scalar_lea.vmem %s3, %s345
      %p347 = scmp.lt.s32.totalorder %s23, 0
      %s348 = scalar_select %p347, %s23, 0
      %s349 = scalar_lea.vmem %s4, %s348
      %p350 = scmp.lt.s32.totalorder %s22, 1
      %s351 = scalar_select %p350, %s22, 1
      %p352 = scmp.lt.s32.totalorder %s23, 0
      %s353 = scalar_select %p352, %s23, 0
      %s354 = smul.addr %s351, 9
      %s355 = sadd.s32 %s353, %s354
      %s356 = smul.addr %s355, 4
      %s357 = scalar_lea.vmem %s7, %s356
      %v358 = vld [vmem:[%s336] sm:$0xf]
      %v359 = vld [vmem:[%s336 + $0x4] sm:$0xf]
      %v360 = vld [vmem:[%s336 + $0x8] sm:$0xf]
      %v361 = vld [vmem:[%s336 + $0xc] sm:$0xf]
      %v362 = vld [vmem:[%s336 + $0x10] sm:$0xf]
      %v363 = vld [vmem:[%s336 + $0x14] sm:$0xf]
      %v364 = vld [vmem:[%s336 + $0x18] sm:$0xf]
      %v365 = vld [vmem:[%s336 + $0x1c] sm:$0xf]
      %v366 = vld [vmem:[%s336 + $0x20] sm:$0xf]
      %v367 = vld [vmem:[%s336 + $0x24] sm:$0xf]
      %v368 = vld [vmem:[%s336 + $0x28] sm:$0xf]
      %v369 = vld [vmem:[%s336 + $0x2c] sm:$0xf]
      %v370 = vld [vmem:[%s336 + $0x30] sm:$0xf]
      %v371 = vld [vmem:[%s336 + $0x34] sm:$0xf]
      %v372 = vld [vmem:[%s336 + $0x38] sm:$0xf]
      %v373 = vld [vmem:[%s336 + $0x3c] sm:$0xf]
      %v374 = vld [vmem:[%s336 + $0x40] sm:$0xf]
      %v375 = vld [vmem:[%s336 + $0x44] sm:$0xf]
      %v376 = vld [vmem:[%s336 + $0x48] sm:$0xf]
      %v377 = vld [vmem:[%s336 + $0x4c] sm:$0xf]
      %v378 = vld [vmem:[%s336 + $0x50] sm:$0xf]
      %v379 = vld [vmem:[%s336 + $0x54] sm:$0xf]
      %v380 = vld [vmem:[%s336 + $0x58] sm:$0xf]
      %v381 = vld [vmem:[%s336 + $0x5c] sm:$0xf]
      %v382 = vld [vmem:[%s336 + $0x60] sm:$0xf]
      %v383 = vld [vmem:[%s336 + $0x64] sm:$0xf]
      %v384 = vld [vmem:[%s336 + $0x68] sm:$0xf]
      %v385 = vld [vmem:[%s336 + $0x6c] sm:$0xf]
      %v386 = vld [vmem:[%s336 + $0x70] sm:$0xf]
      %v387 = vld [vmem:[%s336 + $0x74] sm:$0xf]
      %v388 = vld [vmem:[%s336 + $0x78] sm:$0xf]
      %v389 = vld [vmem:[%s336 + $0x7c] sm:$0xf]
      %v390 = vld [vmem:[%s336 + $0x84] sm:$0xf]
      %v391 = vld [vmem:[%s336 + $0x88] sm:$0xf]
      %v392 = vld [vmem:[%s336 + $0x8c] sm:$0xf]
      %v393 = vld [vmem:[%s336 + $0x90] sm:$0xf]
      %v394 = vld [vmem:[%s336 + $0x94] sm:$0xf]
      %v395 = vld [vmem:[%s336 + $0x98] sm:$0xf]
      %v396 = vld [vmem:[%s336 + $0x9c] sm:$0xf]
      %v397 = vld [vmem:[%s336 + $0xa0] sm:$0xf]
      %v398 = vld [vmem:[%s336 + $0xa4] sm:$0xf]
      %v399 = vld [vmem:[%s336 + $0xa8] sm:$0xf]
      %v400 = vunpack.c.l.bf16 %v358
      %v401 = vunpack.c.l.bf16 %v359
      %v402 = vunpack.c.l.bf16 %v360
      %v403 = vunpack.c.l.bf16 %v361
      %v404 = vunpack.c.l.bf16 %v362
      %v405 = vunpack.c.l.bf16 %v363
      %v406 = vunpack.c.l.bf16 %v364
      %v407 = vunpack.c.l.bf16 %v365
      %v408 = vunpack.c.l.bf16 %v366
      %v409 = vunpack.c.l.bf16 %v367
      %v410 = vunpack.c.l.bf16 %v368
      %v411 = vunpack.c.l.bf16 %v369
      %v412 = vunpack.c.l.bf16 %v370
      %v413 = vunpack.c.l.bf16 %v371
      %v414 = vunpack.c.l.bf16 %v372
      %v415 = vunpack.c.l.bf16 %v373
      %v416 = vunpack.c.l.bf16 %v374
      %v417 = vunpack.c.l.bf16 %v375
      %v418 = vunpack.c.l.bf16 %v376
      %v419 = vunpack.c.l.bf16 %v377
      %v420 = vunpack.c.l.bf16 %v378
      %v421 = vunpack.c.l.bf16 %v379
      %v422 = vunpack.c.l.bf16 %v380
      %v423 = vunpack.c.l.bf16 %v381
      %v424 = vunpack.c.l.bf16 %v382
      %v425 = vunpack.c.l.bf16 %v383
      %v426 = vunpack.c.l.bf16 %v384
      %v427 = vunpack.c.l.bf16 %v385
      %v428 = vunpack.c.l.bf16 %v386
      %v429 = vunpack.c.l.bf16 %v387
      %v430 = vunpack.c.l.bf16 %v388
      %v431 = vunpack.c.l.bf16 %v389
      %v432 = vunpack.c.l.bf16 %v390
      %v433 = vunpack.c.l.bf16 %v391
      %v434 = vunpack.c.l.bf16 %v392
      %v435 = vunpack.c.l.bf16 %v393
      %v436 = vunpack.c.l.bf16 %v394
      %v437 = vunpack.c.l.bf16 %v395
      %v438 = vunpack.c.l.bf16 %v396
      %v439 = vunpack.c.l.bf16 %v397
      %v440 = vunpack.c.l.bf16 %v398
      %v441 = vunpack.c.l.bf16 %v399
      %v442 = vld [vmem:[%s5] sm:$0x1]
      %v444 = vperm.slane %v442, 0
      %v446 = vmul.f32 %v400, %v444
      %v447 = vmul.f32 %v401, %v444
      %v448 = vmul.f32 %v402, %v444
      %v449 = vmul.f32 %v403, %v444
      %v450 = vmul.f32 %v404, %v444
      %v451 = vmul.f32 %v405, %v444
      %v452 = vmul.f32 %v406, %v444
      %v453 = vmul.f32 %v407, %v444
      %v454 = vmul.f32 %v408, %v444
      %v455 = vmul.f32 %v409, %v444
      %v456 = vmul.f32 %v410, %v444
      %v457 = vmul.f32 %v411, %v444
      %v458 = vmul.f32 %v412, %v444
      %v459 = vmul.f32 %v413, %v444
      %v460 = vmul.f32 %v414, %v444
      %v461 = vmul.f32 %v415, %v444
      %v462 = vmul.f32 %v416, %v444
      %v463 = vmul.f32 %v417, %v444
      %v464 = vmul.f32 %v418, %v444
      %v465 = vmul.f32 %v419, %v444
      %v466 = vmul.f32 %v420, %v444
      %v467 = vmul.f32 %v421, %v444
      %v468 = vmul.f32 %v422, %v444
      %v469 = vmul.f32 %v423, %v444
      %v470 = vmul.f32 %v424, %v444
      %v471 = vmul.f32 %v425, %v444
      %v472 = vmul.f32 %v426, %v444
      %v473 = vmul.f32 %v427, %v444
      %v474 = vmul.f32 %v428, %v444
      %v475 = vmul.f32 %v429, %v444
      %v476 = vmul.f32 %v430, %v444
      %v477 = vmul.f32 %v431, %v444
      %v478 = vmul.f32 %v432, %v444
      %v479 = vmul.f32 %v433, %v444
      %v480 = vmul.f32 %v434, %v444
      %v481 = vmul.f32 %v435, %v444
      %v482 = vmul.f32 %v436, %v444
      %v483 = vmul.f32 %v437, %v444
      %v484 = vmul.f32 %v438, %v444
      %v485 = vmul.f32 %v439, %v444
      %v486 = vmul.f32 %v440, %v444
      %v487 = vmul.f32 %v441, %v444
      %v488 = vld [vmem:[%s6] sm:$0x1]
      %v490 = vperm.slane %v488, 0
      %v492 = vadd.f32 %v446, %v490
      %v493 = vadd.f32 %v447, %v490
      %v494 = vadd.f32 %v448, %v490
      %v495 = vadd.f32 %v449, %v490
      %v496 = vadd.f32 %v450, %v490
      %v497 = vadd.f32 %v451, %v490
      %v498 = vadd.f32 %v452, %v490
      %v499 = vadd.f32 %v453, %v490
      %v500 = vadd.f32 %v454, %v490
      %v501 = vadd.f32 %v455, %v490
      %v502 = vadd.f32 %v456, %v490
      %v503 = vadd.f32 %v457, %v490
      %v504 = vadd.f32 %v458, %v490
      %v505 = vadd.f32 %v459, %v490
      %v506 = vadd.f32 %v460, %v490
      %v507 = vadd.f32 %v461, %v490
      %v508 = vadd.f32 %v462, %v490
      %v509 = vadd.f32 %v463, %v490
      %v510 = vadd.f32 %v464, %v490
      %v511 = vadd.f32 %v465, %v490
      %v512 = vadd.f32 %v466, %v490
      %v513 = vadd.f32 %v467, %v490
      %v514 = vadd.f32 %v468, %v490
      %v515 = vadd.f32 %v469, %v490
      %v516 = vadd.f32 %v470, %v490
      %v517 = vadd.f32 %v471, %v490
      %v518 = vadd.f32 %v472, %v490
      %v519 = vadd.f32 %v473, %v490
      %v520 = vadd.f32 %v474, %v490
      %v521 = vadd.f32 %v475, %v490
      %v522 = vadd.f32 %v476, %v490
      %v523 = vadd.f32 %v477, %v490
      %v524 = vadd.f32 %v478, %v490
      %v525 = vadd.f32 %v479, %v490
      %v526 = vadd.f32 %v480, %v490
      %v527 = vadd.f32 %v481, %v490
      %v528 = vadd.f32 %v482, %v490
      %v529 = vadd.f32 %v483, %v490
      %v530 = vadd.f32 %v484, %v490
      %v531 = vadd.f32 %v485, %v490
      %v532 = vadd.f32 %v486, %v490
      %v533 = vadd.f32 %v487, %v490
      %vm534 = vcmp.gt.f32.partialorder %v492, 0.0
      %vm535 = vcmp.gt.f32.partialorder %v493, 0.0
      %vm536 = vcmp.gt.f32.partialorder %v494, 0.0
      %vm537 = vcmp.gt.f32.partialorder %v495, 0.0
      %vm538 = vcmp.gt.f32.partialorder %v496, 0.0
      %vm539 = vcmp.gt.f32.partialorder %v497, 0.0
      %vm540 = vcmp.gt.f32.partialorder %v498, 0.0
      %vm541 = vcmp.gt.f32.partialorder %v499, 0.0
      %vm542 = vcmp.gt.f32.partialorder %v500, 0.0
      %vm543 = vcmp.gt.f32.partialorder %v501, 0.0
      %vm544 = vcmp.gt.f32.partialorder %v502, 0.0
      %vm545 = vcmp.gt.f32.partialorder %v503, 0.0
      %vm546 = vcmp.gt.f32.partialorder %v504, 0.0
      %vm547 = vcmp.gt.f32.partialorder %v505, 0.0
      %vm548 = vcmp.gt.f32.partialorder %v506, 0.0
      %vm549 = vcmp.gt.f32.partialorder %v507, 0.0
      %vm550 = vcmp.gt.f32.partialorder %v508, 0.0
      %vm551 = vcmp.gt.f32.partialorder %v509, 0.0
      %vm552 = vcmp.gt.f32.partialorder %v510, 0.0
      %vm553 = vcmp.gt.f32.partialorder %v511, 0.0
      %vm554 = vcmp.gt.f32.partialorder %v512, 0.0
      %vm555 = vcmp.gt.f32.partialorder %v513, 0.0
      %vm556 = vcmp.gt.f32.partialorder %v514, 0.0
      %vm557 = vcmp.gt.f32.partialorder %v515, 0.0
      %vm558 = vcmp.gt.f32.partialorder %v516, 0.0
      %vm559 = vcmp.gt.f32.partialorder %v517, 0.0
      %vm560 = vcmp.gt.f32.partialorder %v518, 0.0
      %vm561 = vcmp.gt.f32.partialorder %v519, 0.0
      %vm562 = vcmp.gt.f32.partialorder %v520, 0.0
      %vm563 = vcmp.gt.f32.partialorder %v521, 0.0
      %vm564 = vcmp.gt.f32.partialorder %v522, 0.0
      %vm565 = vcmp.gt.f32.partialorder %v523, 0.0
      %vm566 = vcmp.gt.f32.partialorder %v524, 0.0
      %vm567 = vcmp.gt.f32.partialorder %v525, 0.0
      %vm568 = vcmp.gt.f32.partialorder %v526, 0.0
      %vm569 = vcmp.gt.f32.partialorder %v527, 0.0
      %vm570 = vcmp.gt.f32.partialorder %v528, 0.0
      %vm571 = vcmp.gt.f32.partialorder %v529, 0.0
      %vm572 = vcmp.gt.f32.partialorder %v530, 0.0
      %vm573 = vcmp.gt.f32.partialorder %v531, 0.0
      %vm574 = vcmp.gt.f32.partialorder %v532, 0.0
      %vm575 = vcmp.gt.f32.partialorder %v533, 0.0
      %v576 = vmul.f32 %v492, 0.1
      %v577 = vmul.f32 %v493, 0.1
      %v578 = vmul.f32 %v494, 0.1
      %v579 = vmul.f32 %v495, 0.1
      %v580 = vmul.f32 %v496, 0.1
      %v581 = vmul.f32 %v497, 0.1
      %v582 = vmul.f32 %v498, 0.1
      %v583 = vmul.f32 %v499, 0.1
      %v584 = vmul.f32 %v500, 0.1
      %v585 = vmul.f32 %v501, 0.1
      %v586 = vmul.f32 %v502, 0.1
      %v587 = vmul.f32 %v503, 0.1
      %v588 = vmul.f32 %v504, 0.1
      %v589 = vmul.f32 %v505, 0.1
      %v590 = vmul.f32 %v506, 0.1
      %v591 = vmul.f32 %v507, 0.1
      %v592 = vmul.f32 %v508, 0.1
      %v593 = vmul.f32 %v509, 0.1
      %v594 = vmul.f32 %v510, 0.1
      %v595 = vmul.f32 %v511, 0.1
      %v596 = vmul.f32 %v512, 0.1
      %v597 = vmul.f32 %v513, 0.1
      %v598 = vmul.f32 %v514, 0.1
      %v599 = vmul.f32 %v515, 0.1
      %v600 = vmul.f32 %v516, 0.1
      %v601 = vmul.f32 %v517, 0.1
      %v602 = vmul.f32 %v518, 0.1
      %v603 = vmul.f32 %v519, 0.1
      %v604 = vmul.f32 %v520, 0.1
      %v605 = vmul.f32 %v521, 0.1
      %v606 = vmul.f32 %v522, 0.1
      %v607 = vmul.f32 %v523, 0.1
      %v608 = vmul.f32 %v524, 0.1
      %v609 = vmul.f32 %v525, 0.1
      %v610 = vmul.f32 %v526, 0.1
      %v611 = vmul.f32 %v527, 0.1
      %v612 = vmul.f32 %v528, 0.1
      %v613 = vmul.f32 %v529, 0.1
      %v614 = vmul.f32 %v530, 0.1
      %v615 = vmul.f32 %v531, 0.1
      %v616 = vmul.f32 %v532, 0.1
      %v617 = vmul.f32 %v533, 0.1
      %v618 = vsel %vm534, %v492, %v576
      %v619 = vsel %vm535, %v493, %v577
      %v620 = vsel %vm536, %v494, %v578
      %v621 = vsel %vm537, %v495, %v579
      %v622 = vsel %vm538, %v496, %v580
      %v623 = vsel %vm539, %v497, %v581
      %v624 = vsel %vm540, %v498, %v582
      %v625 = vsel %vm541, %v499, %v583
      %v626 = vsel %vm542, %v500, %v584
      %v627 = vsel %vm543, %v501, %v585
      %v628 = vsel %vm544, %v502, %v586
      %v629 = vsel %vm545, %v503, %v587
      %v630 = vsel %vm546, %v504, %v588
      %v631 = vsel %vm547, %v505, %v589
      %v632 = vsel %vm548, %v506, %v590
      %v633 = vsel %vm549, %v507, %v591
      %v634 = vsel %vm550, %v508, %v592
      %v635 = vsel %vm551, %v509, %v593
      %v636 = vsel %vm552, %v510, %v594
      %v637 = vsel %vm553, %v511, %v595
      %v638 = vsel %vm554, %v512, %v596
      %v639 = vsel %vm555, %v513, %v597
      %v640 = vsel %vm556, %v514, %v598
      %v641 = vsel %vm557, %v515, %v599
      %v642 = vsel %vm558, %v516, %v600
      %v643 = vsel %vm559, %v517, %v601
      %v644 = vsel %vm560, %v518, %v602
      %v645 = vsel %vm561, %v519, %v603
      %v646 = vsel %vm562, %v520, %v604
      %v647 = vsel %vm563, %v521, %v605
      %v648 = vsel %vm564, %v522, %v606
      %v649 = vsel %vm565, %v523, %v607
      %v650 = vsel %vm566, %v524, %v608
      %v651 = vsel %vm567, %v525, %v609
      %v652 = vsel %vm568, %v526, %v610
      %v653 = vsel %vm569, %v527, %v611
      %v654 = vsel %vm570, %v528, %v612
      %v655 = vsel %vm571, %v529, %v613
      %v656 = vsel %vm572, %v530, %v614
      %v657 = vsel %vm573, %v531, %v615
      %v658 = vsel %vm574, %v532, %v616
      %v659 = vsel %vm575, %v533, %v617
      %v660 = vpack.c.bf16 %v618, %v618
      %v661 = vpack.c.bf16 %v619, %v619
      %v662 = vpack.c.bf16 %v620, %v620
      %v663 = vpack.c.bf16 %v621, %v621
      %v664 = vpack.c.bf16 %v622, %v622
      %v665 = vpack.c.bf16 %v623, %v623
      %v666 = vpack.c.bf16 %v624, %v624
      %v667 = vpack.c.bf16 %v625, %v625
      %v668 = vpack.c.bf16 %v626, %v626
      %v669 = vpack.c.bf16 %v627, %v627
      %v670 = vpack.c.bf16 %v628, %v628
      %v671 = vpack.c.bf16 %v629, %v629
      %v672 = vpack.c.bf16 %v630, %v630
      %v673 = vpack.c.bf16 %v631, %v631
      %v674 = vpack.c.bf16 %v632, %v632
      %v675 = vpack.c.bf16 %v633, %v633
      %v676 = vpack.c.bf16 %v634, %v634
      %v677 = vpack.c.bf16 %v635, %v635
      %v678 = vpack.c.bf16 %v636, %v636
      %v679 = vpack.c.bf16 %v637, %v637
      %v680 = vpack.c.bf16 %v638, %v638
      %v681 = vpack.c.bf16 %v639, %v639
      %v682 = vpack.c.bf16 %v640, %v640
      %v683 = vpack.c.bf16 %v641, %v641
      %v684 = vpack.c.bf16 %v642, %v642
      %v685 = vpack.c.bf16 %v643, %v643
      %v686 = vpack.c.bf16 %v644, %v644
      %v687 = vpack.c.bf16 %v645, %v645
      %v688 = vpack.c.bf16 %v646, %v646
      %v689 = vpack.c.bf16 %v647, %v647
      %v690 = vpack.c.bf16 %v648, %v648
      %v691 = vpack.c.bf16 %v649, %v649
      %v692 = vpack.c.bf16 %v650, %v650
      %v693 = vpack.c.bf16 %v651, %v651
      %v694 = vpack.c.bf16 %v652, %v652
      %v695 = vpack.c.bf16 %v653, %v653
      %v696 = vpack.c.bf16 %v654, %v654
      %v697 = vpack.c.bf16 %v655, %v655
      %v698 = vpack.c.bf16 %v656, %v656
      %v699 = vpack.c.bf16 %v657, %v657
      %v700 = vpack.c.bf16 %v658, %v658
      %v701 = vpack.c.bf16 %v659, %v659
      %v702 = vld [vmem:[%s340] sm:$0xf]
      %v703 = vld [vmem:[%s340 + $0x4] sm:$0xf]
      %v704 = vld [vmem:[%s340 + $0x8] sm:$0xf]
      %v705 = vld [vmem:[%s340 + $0xc] sm:$0xf]
      %v706 = vld [vmem:[%s340 + $0x10] sm:$0xf]
      %v707 = vld [vmem:[%s340 + $0x14] sm:$0xf]
      %v708 = vld [vmem:[%s340 + $0x18] sm:$0xf]
      %v709 = vld [vmem:[%s340 + $0x1c] sm:$0xf]
      %v710 = vld [vmem:[%s340 + $0x20] sm:$0xf]
      %v711 = vld [vmem:[%s340 + $0x24] sm:$0xf]
      %v712 = vld [vmem:[%s340 + $0x28] sm:$0xf]
      %v713 = vld [vmem:[%s340 + $0x2c] sm:$0xf]
      %v714 = vld [vmem:[%s340 + $0x30] sm:$0xf]
      %v715 = vld [vmem:[%s340 + $0x34] sm:$0xf]
      %v716 = vld [vmem:[%s340 + $0x38] sm:$0xf]
      %v717 = vld [vmem:[%s340 + $0x3c] sm:$0xf]
      %v727 = vunpack.c.l.b16 %v660
      %v728 = vunpack.c.l.b16 %v661
      %v729 = vunpack.c.l.b16 %v662
      %v730 = vunpack.c.l.b16 %v663
      %v731 = vunpack.c.l.b16 %v664
      %v732 = vunpack.c.l.b16 %v665
      %v733 = vunpack.c.l.b16 %v666
      %v734 = vunpack.c.l.b16 %v667
      %v735 = vunpack.c.l.b16 %v668
      %v736 = vpack.c.b16 %v728, %v727
      %v737 = vpack.c.b16 %v730, %v729
      %v738 = vpack.c.b16 %v732, %v731
      %v739 = vpack.c.b16 %v734, %v733
      %v740 = vpack.c.b16 %v735, %v735
      %v762 = vunpack.c.l.b16 %v702
      %v763 = vunpack.c.l.b16 %v703
      %v764 = vunpack.c.l.b16 %v704
      %v765 = vunpack.c.l.b16 %v705
      %v766 = vunpack.c.l.b16 %v706
      %v767 = vunpack.c.l.b16 %v707
      %v768 = vunpack.c.l.b16 %v708
      %v769 = vunpack.c.l.b16 %v709
      %v770 = vunpack.c.l.b16 %v710
      %v771 = vunpack.c.l.b16 %v711
      %v772 = vunpack.c.l.b16 %v712
      %v773 = vunpack.c.l.b16 %v713
      %v774 = vunpack.c.l.b16 %v714
      %v775 = vunpack.c.l.b16 %v715
      %v776 = vunpack.c.l.b16 %v716
      %v777 = vunpack.c.l.b16 %v717
      %v778 = vpack.c.b16 %v763, %v762
      %v779 = vpack.c.b16 %v765, %v764
      %v780 = vpack.c.b16 %v767, %v766
      %v781 = vpack.c.b16 %v769, %v768
      %v782 = vpack.c.b16 %v771, %v770
      %v783 = vpack.c.b16 %v773, %v772
      %v784 = vpack.c.b16 %v775, %v774
      %v785 = vpack.c.b16 %v777, %v776
      %794 = vmatpush.bf16.msra.mxu0 %v785
      %795 = vmatpush.bf16.msra.mxu0 %v784
      %796 = vmatpush.bf16.msra.mxu0 %v783
      %797 = vmatpush.bf16.msra.mxu0 %v782
      %798 = vmatpush.bf16.msra.mxu0 %v781
      %799 = vmatpush.bf16.msra.mxu0 %v780
      %800 = vmatpush.bf16.msra.mxu0 %v779
      %801 = vmatpush.bf16.msra.mxu0 %v778
      %802 = vmatmul.bf16.gmra.mxu0 %v736
      %v803 = vpop.f32.mrf.mxu0
      %v804 = vadd.f32 0.0, %v803
      %v805 = vpop.f32.mrf.mxu0
      %v806 = vadd.f32 0.0, %v805
      %807 = vmatmul.bf16.gmra.mxu0 %v737
      %v808 = vpop.f32.mrf.mxu0
      %v809 = vadd.f32 0.0, %v808
      %v810 = vpop.f32.mrf.mxu0
      %v811 = vadd.f32 0.0, %v810
      %812 = vmatmul.bf16.gmra.mxu0 %v738
      %v813 = vpop.f32.mrf.mxu0
      %v814 = vadd.f32 0.0, %v813
      %v815 = vpop.f32.mrf.mxu0
      %v816 = vadd.f32 0.0, %v815
      %817 = vmatmul.bf16.gmra.mxu0 %v739
      %v818 = vpop.f32.mrf.mxu0
      %v819 = vadd.f32 0.0, %v818
      %v820 = vpop.f32.mrf.mxu0
      %v821 = vadd.f32 0.0, %v820
      %822 = vmatmul.bf16.gmra.mxu0 %v740
      %v823 = vpop.f32.mrf.mxu0
      %v824 = vadd.f32 0.0, %v823
      %v825 = vpop.f32.mrf.mxu0
      %826 = vdwg.mxu0
      %827 = vst [vmem:[#allocation2] sm:$0xff] %v804
      %828 = vst [vmem:[#allocation2 + $0x8] sm:$0xff] %v806
      %829 = vst [vmem:[#allocation2 + $0x10] sm:$0xff] %v809
      %830 = vst [vmem:[#allocation2 + $0x18] sm:$0xff] %v811
      %831 = vst [vmem:[#allocation2 + $0x20] sm:$0xff] %v814
      %832 = vst [vmem:[#allocation2 + $0x28] sm:$0xff] %v816
      %833 = vst [vmem:[#allocation2 + $0x30] sm:$0xff] %v819
      %834 = vst [vmem:[#allocation2 + $0x38] sm:$0xff] %v821
      %835 = vst [vmem:[#allocation2 + $0x40] sm:$0xff] %v824
      %v836 = vld [vmem:[%s340 + $0x40] sm:$0xf]
      %v837 = vld [vmem:[%s340 + $0x44] sm:$0xf]
      %v838 = vld [vmem:[%s340 + $0x48] sm:$0xf]
      %v839 = vld [vmem:[%s340 + $0x4c] sm:$0xf]
      %v840 = vld [vmem:[%s340 + $0x50] sm:$0xf]
      %v841 = vld [vmem:[%s340 + $0x54] sm:$0xf]
      %v842 = vld [vmem:[%s340 + $0x58] sm:$0xf]
      %v843 = vld [vmem:[%s340 + $0x5c] sm:$0xf]
      %v844 = vld [vmem:[%s340 + $0x60] sm:$0xf]
      %v845 = vld [vmem:[%s340 + $0x64] sm:$0xf]
      %v846 = vld [vmem:[%s340 + $0x68] sm:$0xf]
      %v847 = vld [vmem:[%s340 + $0x6c] sm:$0xf]
      %v848 = vld [vmem:[%s340 + $0x70] sm:$0xf]
      %v849 = vld [vmem:[%s340 + $0x74] sm:$0xf]
      %v850 = vld [vmem:[%s340 + $0x78] sm:$0xf]
      %v851 = vld [vmem:[%s340 + $0x7c] sm:$0xf]
      %v862 = vunpack.c.l.b16 %v671
      %v863 = vunpack.c.l.b16 %v672
      %v864 = vunpack.c.l.b16 %v673
      %v865 = vunpack.c.l.b16 %v674
      %v866 = vunpack.c.l.b16 %v675
      %v867 = vunpack.c.l.b16 %v676
      %v868 = vunpack.c.l.b16 %v677
      %v869 = vunpack.c.l.b16 %v678
      %v870 = vunpack.c.l.b16 %v679
      %v871 = vunpack.c.l.b16 %v680
      %v872 = vpack.c.b16 %v863, %v862
      %v873 = vpack.c.b16 %v865, %v864
      %v874 = vpack.c.b16 %v867, %v866
      %v875 = vpack.c.b16 %v869, %v868
      %v876 = vpack.c.b16 %v871, %v870
      %vm877 = vcmask 1046528
      %v878 = vrot.slane %v872, 1
      %v879 = vrot.slane %v873, 1
      %v880 = vsel %vm877, %v878, %v879
      %v881 = vrot.slane %v874, 1
      %v882 = vsel %vm877, %v879, %v881
      %v883 = vrot.slane %v875, 1
      %v884 = vsel %vm877, %v881, %v883
      %v885 = vrot.slane %v876, 1
      %v886 = vsel %vm877, %v883, %v885
      %v908 = vunpack.c.l.b16 %v836
      %v909 = vunpack.c.l.b16 %v837
      %v910 = vunpack.c.l.b16 %v838
      %v911 = vunpack.c.l.b16 %v839
      %v912 = vunpack.c.l.b16 %v840
      %v913 = vunpack.c.l.b16 %v841
      %v914 = vunpack.c.l.b16 %v842
      %v915 = vunpack.c.l.b16 %v843
      %v916 = vunpack.c.l.b16 %v844
      %v917 = vunpack.c.l.b16 %v845
      %v918 = vunpack.c.l.b16 %v846
      %v919 = vunpack.c.l.b16 %v847
      %v920 = vunpack.c.l.b16 %v848
      %v921 = vunpack.c.l.b16 %v849
      %v922 = vunpack.c.l.b16 %v850
      %v923 = vunpack.c.l.b16 %v851
      %v924 = vpack.c.b16 %v909, %v908
      %v925 = vpack.c.b16 %v911, %v910
      %v926 = vpack.c.b16 %v913, %v912
      %v927 = vpack.c.b16 %v915, %v914
      %v928 = vpack.c.b16 %v917, %v916
      %v929 = vpack.c.b16 %v919, %v918
      %v930 = vpack.c.b16 %v921, %v920
      %v931 = vpack.c.b16 %v923, %v922
      %940 = vmatpush.bf16.msra.mxu0 %v931
      %941 = vmatpush.bf16.msra.mxu0 %v930
      %942 = vmatpush.bf16.msra.mxu0 %v929
      %943 = vmatpush.bf16.msra.mxu0 %v928
      %944 = vmatpush.bf16.msra.mxu0 %v927
      %945 = vmatpush.bf16.msra.mxu0 %v926
      %946 = vmatpush.bf16.msra.mxu0 %v925
      %947 = vmatpush.bf16.msra.mxu0 %v924
      %948 = vmatmul.bf16.gmra.mxu0 %v880
      %v949 = vpop.f32.mrf.mxu0
      %v950 = vadd.f32 0.0, %v949
      %v951 = vpop.f32.mrf.mxu0
      %v952 = vadd.f32 0.0, %v951
      %953 = vmatmul.bf16.gmra.mxu0 %v882
      %v954 = vpop.f32.mrf.mxu0
      %v955 = vadd.f32 0.0, %v954
      %v956 = vpop.f32.mrf.mxu0
      %v957 = vadd.f32 0.0, %v956
      %958 = vmatmul.bf16.gmra.mxu0 %v884
      %v959 = vpop.f32.mrf.mxu0
      %v960 = vadd.f32 0.0, %v959
      %v961 = vpop.f32.mrf.mxu0
      %v962 = vadd.f32 0.0, %v961
      %963 = vmatmul.bf16.gmra.mxu0 %v886
      %v964 = vpop.f32.mrf.mxu0
      %v965 = vadd.f32 0.0, %v964
      %v966 = vpop.f32.mrf.mxu0
      %v967 = vadd.f32 0.0, %v966
      %968 = vmatmul.bf16.gmra.mxu0 %v885
      %v969 = vpop.f32.mrf.mxu0
      %v970 = vadd.f32 0.0, %v969
      %v971 = vpop.f32.mrf.mxu0
      %972 = vdwg.mxu0
      %v973 = vld [vmem:[#allocation2] sm:$0xff]
      %v974 = vld [vmem:[#allocation2 + $0x8] sm:$0xff]
      %v975 = vld [vmem:[#allocation2 + $0x10] sm:$0xff]
      %v976 = vld [vmem:[#allocation2 + $0x18] sm:$0xff]
      %v977 = vld [vmem:[#allocation2 + $0x20] sm:$0xff]
      %v978 = vld [vmem:[#allocation2 + $0x28] sm:$0xff]
      %v979 = vld [vmem:[#allocation2 + $0x30] sm:$0xff]
      %v980 = vld [vmem:[#allocation2 + $0x38] sm:$0xff]
      %v981 = vld [vmem:[#allocation2 + $0x40] sm:$0xff]
      %v982 = vadd.f32 %v973, %v950
      %v983 = vadd.f32 %v974, %v952
      %v984 = vadd.f32 %v975, %v955
      %v985 = vadd.f32 %v976, %v957
      %v986 = vadd.f32 %v977, %v960
      %v987 = vadd.f32 %v978, %v962
      %v988 = vadd.f32 %v979, %v965
      %v989 = vadd.f32 %v980, %v967
      %v990 = vadd.f32 %v981, %v970
      %991 = vst [vmem:[#allocation2] sm:$0xff] %v982
      %992 = vst [vmem:[#allocation2 + $0x8] sm:$0xff] %v983
      %993 = vst [vmem:[#allocation2 + $0x10] sm:$0xff] %v984
      %994 = vst [vmem:[#allocation2 + $0x18] sm:$0xff] %v985
      %995 = vst [vmem:[#allocation2 + $0x20] sm:$0xff] %v986
      %996 = vst [vmem:[#allocation2 + $0x28] sm:$0xff] %v987
      %997 = vst [vmem:[#allocation2 + $0x30] sm:$0xff] %v988
      %998 = vst [vmem:[#allocation2 + $0x38] sm:$0xff] %v989
      %999 = vst [vmem:[#allocation2 + $0x40] sm:$0xff] %v990
      %v1000 = vld [vmem:[%s340 + $0x80] sm:$0xf]
      %v1001 = vld [vmem:[%s340 + $0x84] sm:$0xf]
      %v1002 = vld [vmem:[%s340 + $0x88] sm:$0xf]
      %v1003 = vld [vmem:[%s340 + $0x8c] sm:$0xf]
      %v1004 = vld [vmem:[%s340 + $0x90] sm:$0xf]
      %v1005 = vld [vmem:[%s340 + $0x94] sm:$0xf]
      %v1006 = vld [vmem:[%s340 + $0x98] sm:$0xf]
      %v1007 = vld [vmem:[%s340 + $0x9c] sm:$0xf]
      %v1008 = vld [vmem:[%s340 + $0xa0] sm:$0xf]
      %v1009 = vld [vmem:[%s340 + $0xa4] sm:$0xf]
      %v1010 = vld [vmem:[%s340 + $0xa8] sm:$0xf]
      %v1011 = vld [vmem:[%s340 + $0xac] sm:$0xf]
      %v1012 = vld [vmem:[%s340 + $0xb0] sm:$0xf]
      %v1013 = vld [vmem:[%s340 + $0xb4] sm:$0xf]
      %v1014 = vld [vmem:[%s340 + $0xb8] sm:$0xf]
      %v1015 = vld [vmem:[%s340 + $0xbc] sm:$0xf]
      %v1017 = vunpack.c.l.b16 %v669
      %v1018 = vpack.c.b16 %v1017, %v735
      %vm1019 = vsmask.f32 7424
      %v1021 = vshrl.u32 %v736, 16
      %v1023 = vshll.u32 %v736, 16
      %v1025 = vrot.slane %v1023, 1
      %v1026 = vor.u32 %v1021, %v1025
      %v1028 = vshll.u32 %v737, 16
      %v1030 = vrot.slane %v1028, 1
      %v1031 = vsel %vm1019, %v1026, %v1030
      %v1032 = vshrl.u32 %v737, 16
      %v1034 = vor.u32 %v1032, %v1030
      %v1036 = vshll.u32 %v738, 16
      %v1038 = vrot.slane %v1036, 1
      %v1039 = vsel %vm1019, %v1034, %v1038
      %v1040 = vshrl.u32 %v738, 16
      %v1042 = vor.u32 %v1040, %v1038
      %v1044 = vshll.u32 %v739, 16
      %v1046 = vrot.slane %v1044, 1
      %v1047 = vsel %vm1019, %v1042, %v1046
      %v1048 = vshrl.u32 %v739, 16
      %v1050 = vor.u32 %v1048, %v1046
      %v1052 = vshll.u32 %v1018, 16
      %v1054 = vrot.slane %v1052, 1
      %v1055 = vsel %vm1019, %v1050, %v1054
      %v1056 = vshrl.u32 %v1018, 16
      %v1058 = vor.u32 %v1056, %v1054
      %v1080 = vunpack.c.l.b16 %v1000
      %v1081 = vunpack.c.l.b16 %v1001
      %v1082 = vunpack.c.l.b16 %v1002
      %v1083 = vunpack.c.l.b16 %v1003
      %v1084 = vunpack.c.l.b16 %v1004
      %v1085 = vunpack.c.l.b16 %v1005
      %v1086 = vunpack.c.l.b16 %v1006
      %v1087 = vunpack.c.l.b16 %v1007
      %v1088 = vunpack.c.l.b16 %v1008
      %v1089 = vunpack.c.l.b16 %v1009
      %v1090 = vunpack.c.l.b16 %v1010
      %v1091 = vunpack.c.l.b16 %v1011
      %v1092 = vunpack.c.l.b16 %v1012
      %v1093 = vunpack.c.l.b16 %v1013
      %v1094 = vunpack.c.l.b16 %v1014
      %v1095 = vunpack.c.l.b16 %v1015
      %v1096 = vpack.c.b16 %v1081, %v1080
      %v1097 = vpack.c.b16 %v1083, %v1082
      %v1098 = vpack.c.b16 %v1085, %v1084
      %v1099 = vpack.c.b16 %v1087, %v1086
      %v1100 = vpack.c.b16 %v1089, %v1088
      %v1101 = vpack.c.b16 %v1091, %v1090
      %v1102 = vpack.c.b16 %v1093, %v1092
      %v1103 = vpack.c.b16 %v1095, %v1094
      %1112 = vmatpush.bf16.msra.mxu0 %v1103
      %1113 = vmatpush.bf16.msra.mxu0 %v1102
      %1114 = vmatpush.bf16.msra.mxu0 %v1101
      %1115 = vmatpush.bf16.msra.mxu0 %v1100
      %1116 = vmatpush.bf16.msra.mxu0 %v1099
      %1117 = vmatpush.bf16.msra.mxu0 %v1098
      %1118 = vmatpush.bf16.msra.mxu0 %v1097
      %1119 = vmatpush.bf16.msra.mxu0 %v1096
      %1120 = vmatmul.bf16.gmra.mxu0 %v1031
      %v1121 = vpop.f32.mrf.mxu0
      %v1122 = vadd.f32 0.0, %v1121
      %v1123 = vpop.f32.mrf.mxu0
      %v1124 = vadd.f32 0.0, %v1123
      %1125 = vmatmul.bf16.gmra.mxu0 %v1039
      %v1126 = vpop.f32.mrf.mxu0
      %v1127 = vadd.f32 0.0, %v1126
      %v1128 = vpop.f32.mrf.mxu0
      %v1129 = vadd.f32 0.0, %v1128
      %1130 = vmatmul.bf16.gmra.mxu0 %v1047
      %v1131 = vpop.f32.mrf.mxu0
      %v1132 = vadd.f32 0.0, %v1131
      %v1133 = vpop.f32.mrf.mxu0
      %v1134 = vadd.f32 0.0, %v1133
      %1135 = vmatmul.bf16.gmra.mxu0 %v1055
      %v1136 = vpop.f32.mrf.mxu0
      %v1137 = vadd.f32 0.0, %v1136
      %v1138 = vpop.f32.mrf.mxu0
      %v1139 = vadd.f32 0.0, %v1138
      %1140 = vmatmul.bf16.gmra.mxu0 %v1058
      %v1141 = vpop.f32.mrf.mxu0
      %v1142 = vadd.f32 0.0, %v1141
      %v1143 = vpop.f32.mrf.mxu0
      %1144 = vdwg.mxu0
      %v1145 = vld [vmem:[#allocation2] sm:$0xff]
      %v1146 = vld [vmem:[#allocation2 + $0x8] sm:$0xff]
      %v1147 = vld [vmem:[#allocation2 + $0x10] sm:$0xff]
      %v1148 = vld [vmem:[#allocation2 + $0x18] sm:$0xff]
      %v1149 = vld [vmem:[#allocation2 + $0x20] sm:$0xff]
      %v1150 = vld [vmem:[#allocation2 + $0x28] sm:$0xff]
      %v1151 = vld [vmem:[#allocation2 + $0x30] sm:$0xff]
      %v1152 = vld [vmem:[#allocation2 + $0x38] sm:$0xff]
      %v1153 = vld [vmem:[#allocation2 + $0x40] sm:$0xff]
      %v1154 = vadd.f32 %v1145, %v1122
      %v1155 = vadd.f32 %v1146, %v1124
      %v1156 = vadd.f32 %v1147, %v1127
      %v1157 = vadd.f32 %v1148, %v1129
      %v1158 = vadd.f32 %v1149, %v1132
      %v1159 = vadd.f32 %v1150, %v1134
      %v1160 = vadd.f32 %v1151, %v1137
      %v1161 = vadd.f32 %v1152, %v1139
      %v1162 = vadd.f32 %v1153, %v1142
      %1163 = vst [vmem:[#allocation2] sm:$0xff] %v1154
      %1164 = vst [vmem:[#allocation2 + $0x8] sm:$0xff] %v1155
      %1165 = vst [vmem:[#allocation2 + $0x10] sm:$0xff] %v1156
      %1166 = vst [vmem:[#allocation2 + $0x18] sm:$0xff] %v1157
      %1167 = vst [vmem:[#allocation2 + $0x20] sm:$0xff] %v1158
      %1168 = vst [vmem:[#allocation2 + $0x28] sm:$0xff] %v1159
      %1169 = vst [vmem:[#allocation2 + $0x30] sm:$0xff] %v1160
      %1170 = vst [vmem:[#allocation2 + $0x38] sm:$0xff] %v1161
      %1171 = vst [vmem:[#allocation2 + $0x40] sm:$0xff] %v1162
      %v1172 = vld [vmem:[%s340 + $0xc0] sm:$0xf]
      %v1173 = vld [vmem:[%s340 + $0xc4] sm:$0xf]
      %v1174 = vld [vmem:[%s340 + $0xc8] sm:$0xf]
      %v1175 = vld [vmem:[%s340 + $0xcc] sm:$0xf]
      %v1176 = vld [vmem:[%s340 + $0xd0] sm:$0xf]
      %v1177 = vld [vmem:[%s340 + $0xd4] sm:$0xf]
      %v1178 = vld [vmem:[%s340 + $0xd8] sm:$0xf]
      %v1179 = vld [vmem:[%s340 + $0xdc] sm:$0xf]
      %v1180 = vld [vmem:[%s340 + $0xe0] sm:$0xf]
      %v1181 = vld [vmem:[%s340 + $0xe4] sm:$0xf]
      %v1182 = vld [vmem:[%s340 + $0xe8] sm:$0xf]
      %v1183 = vld [vmem:[%s340 + $0xec] sm:$0xf]
      %v1184 = vld [vmem:[%s340 + $0xf0] sm:$0xf]
      %v1185 = vld [vmem:[%s340 + $0xf4] sm:$0xf]
      %v1186 = vld [vmem:[%s340 + $0xf8] sm:$0xf]
      %v1187 = vld [vmem:[%s340 + $0xfc] sm:$0xf]
      %v1198 = vunpack.c.l.b16 %v682
      %v1199 = vunpack.c.l.b16 %v683
      %v1200 = vunpack.c.l.b16 %v684
      %v1201 = vunpack.c.l.b16 %v685
      %v1202 = vunpack.c.l.b16 %v686
      %v1203 = vunpack.c.l.b16 %v687
      %v1204 = vunpack.c.l.b16 %v688
      %v1205 = vunpack.c.l.b16 %v689
      %v1206 = vunpack.c.l.b16 %v690
      %v1207 = vunpack.c.l.b16 %v691
      %v1208 = vpack.c.b16 %v1199, %v1198
      %v1209 = vpack.c.b16 %v1201, %v1200
      %v1210 = vpack.c.b16 %v1203, %v1202
      %v1211 = vpack.c.b16 %v1205, %v1204
      %v1212 = vpack.c.b16 %v1207, %v1206
      %vm1213 = vcmask 1045504
      %v1214 = vrot.slane %v1208, 2
      %v1215 = vrot.slane %v1209, 2
      %v1216 = vsel %vm1213, %v1214, %v1215
      %v1217 = vrot.slane %v1210, 2
      %v1218 = vsel %vm1213, %v1215, %v1217
      %v1219 = vrot.slane %v1211, 2
      %v1220 = vsel %vm1213, %v1217, %v1219
      %v1221 = vrot.slane %v1212, 2
      %v1222 = vsel %vm1213, %v1219, %v1221
      %v1244 = vunpack.c.l.b16 %v1172
      %v1245 = vunpack.c.l.b16 %v1173
      %v1246 = vunpack.c.l.b16 %v1174
      %v1247 = vunpack.c.l.b16 %v1175
      %v1248 = vunpack.c.l.b16 %v1176
      %v1249 = vunpack.c.l.b16 %v1177
      %v1250 = vunpack.c.l.b16 %v1178
      %v1251 = vunpack.c.l.b16 %v1179
      %v1252 = vunpack.c.l.b16 %v1180
      %v1253 = vunpack.c.l.b16 %v1181
      %v1254 = vunpack.c.l.b16 %v1182
      %v1255 = vunpack.c.l.b16 %v1183
      %v1256 = vunpack.c.l.b16 %v1184
      %v1257 = vunpack.c.l.b16 %v1185
      %v1258 = vunpack.c.l.b16 %v1186
      %v1259 = vunpack.c.l.b16 %v1187
      %v1260 = vpack.c.b16 %v1245, %v1244
      %v1261 = vpack.c.b16 %v1247, %v1246
      %v1262 = vpack.c.b16 %v1249, %v1248
      %v1263 = vpack.c.b16 %v1251, %v1250
      %v1264 = vpack.c.b16 %v1253, %v1252
      %v1265 = vpack.c.b16 %v1255, %v1254
      %v1266 = vpack.c.b16 %v1257, %v1256
      %v1267 = vpack.c.b16 %v1259, %v1258
      %1276 = vmatpush.bf16.msra.mxu0 %v1267
      %1277 = vmatpush.bf16.msra.mxu0 %v1266
      %1278 = vmatpush.bf16.msra.mxu0 %v1265
      %1279 = vmatpush.bf16.msra.mxu0 %v1264
      %1280 = vmatpush.bf16.msra.mxu0 %v1263
      %1281 = vmatpush.bf16.msra.mxu0 %v1262
      %1282 = vmatpush.bf16.msra.mxu0 %v1261
      %1283 = vmatpush.bf16.msra.mxu0 %v1260
      %1284 = vmatmul.bf16.gmra.mxu0 %v1216
      %v1285 = vpop.f32.mrf.mxu0
      %v1286 = vadd.f32 0.0, %v1285
      %v1287 = vpop.f32.mrf.mxu0
      %v1288 = vadd.f32 0.0, %v1287
      %1289 = vmatmul.bf16.gmra.mxu0 %v1218
      %v1290 = vpop.f32.mrf.mxu0
      %v1291 = vadd.f32 0.0, %v1290
      %v1292 = vpop.f32.mrf.mxu0
      %v1293 = vadd.f32 0.0, %v1292
      %1294 = vmatmul.bf16.gmra.mxu0 %v1220
      %v1295 = vpop.f32.mrf.mxu0
      %v1296 = vadd.f32 0.0, %v1295
      %v1297 = vpop.f32.mrf.mxu0
      %v1298 = vadd.f32 0.0, %v1297
      %1299 = vmatmul.bf16.gmra.mxu0 %v1222
      %v1300 = vpop.f32.mrf.mxu0
      %v1301 = vadd.f32 0.0, %v1300
      %v1302 = vpop.f32.mrf.mxu0
      %v1303 = vadd.f32 0.0, %v1302
      %1304 = vmatmul.bf16.gmra.mxu0 %v1221
      %v1305 = vpop.f32.mrf.mxu0
      %v1306 = vadd.f32 0.0, %v1305
      %v1307 = vpop.f32.mrf.mxu0
      %1308 = vdwg.mxu0
      %v1309 = vld [vmem:[#allocation2] sm:$0xff]
      %v1310 = vld [vmem:[#allocation2 + $0x8] sm:$0xff]
      %v1311 = vld [vmem:[#allocation2 + $0x10] sm:$0xff]
      %v1312 = vld [vmem:[#allocation2 + $0x18] sm:$0xff]
      %v1313 = vld [vmem:[#allocation2 + $0x20] sm:$0xff]
      %v1314 = vld [vmem:[#allocation2 + $0x28] sm:$0xff]
      %v1315 = vld [vmem:[#allocation2 + $0x30] sm:$0xff]
      %v1316 = vld [vmem:[#allocation2 + $0x38] sm:$0xff]
      %v1317 = vld [vmem:[#allocation2 + $0x40] sm:$0xff]
      %v1318 = vadd.f32 %v1309, %v1286
      %v1319 = vadd.f32 %v1310, %v1288
      %v1320 = vadd.f32 %v1311, %v1291
      %v1321 = vadd.f32 %v1312, %v1293
      %v1322 = vadd.f32 %v1313, %v1296
      %v1323 = vadd.f32 %v1314, %v1298
      %v1324 = vadd.f32 %v1315, %v1301
      %v1325 = vadd.f32 %v1316, %v1303
      %v1326 = vadd.f32 %v1317, %v1306
      %1327 = vst [vmem:[#allocation2] sm:$0xff] %v1318
      %1328 = vst [vmem:[#allocation2 + $0x8] sm:$0xff] %v1319
      %1329 = vst [vmem:[#allocation2 + $0x10] sm:$0xff] %v1320
      %1330 = vst [vmem:[#allocation2 + $0x18] sm:$0xff] %v1321
      %1331 = vst [vmem:[#allocation2 + $0x20] sm:$0xff] %v1322
      %1332 = vst [vmem:[#allocation2 + $0x28] sm:$0xff] %v1323
      %1333 = vst [vmem:[#allocation2 + $0x30] sm:$0xff] %v1324
      %1334 = vst [vmem:[#allocation2 + $0x38] sm:$0xff] %v1325
      %1335 = vst [vmem:[#allocation2 + $0x40] sm:$0xff] %v1326
      %v1336 = vld [vmem:[%s340 + $0x100] sm:$0xf]
      %v1337 = vld [vmem:[%s340 + $0x104] sm:$0xf]
      %v1338 = vld [vmem:[%s340 + $0x108] sm:$0xf]
      %v1339 = vld [vmem:[%s340 + $0x10c] sm:$0xf]
      %v1340 = vld [vmem:[%s340 + $0x110] sm:$0xf]
      %v1341 = vld [vmem:[%s340 + $0x114] sm:$0xf]
      %v1342 = vld [vmem:[%s340 + $0x118] sm:$0xf]
      %v1343 = vld [vmem:[%s340 + $0x11c] sm:$0xf]
      %v1344 = vld [vmem:[%s340 + $0x120] sm:$0xf]
      %v1345 = vld [vmem:[%s340 + $0x124] sm:$0xf]
      %v1346 = vld [vmem:[%s340 + $0x128] sm:$0xf]
      %v1347 = vld [vmem:[%s340 + $0x12c] sm:$0xf]
      %v1348 = vld [vmem:[%s340 + $0x130] sm:$0xf]
      %v1349 = vld [vmem:[%s340 + $0x134] sm:$0xf]
      %v1350 = vld [vmem:[%s340 + $0x138] sm:$0xf]
      %v1351 = vld [vmem:[%s340 + $0x13c] sm:$0xf]
      %v1362 = vunpack.c.l.b16 %v692
      %v1363 = vunpack.c.l.b16 %v693
      %v1364 = vunpack.c.l.b16 %v694
      %v1365 = vunpack.c.l.b16 %v695
      %v1366 = vunpack.c.l.b16 %v696
      %v1367 = vunpack.c.l.b16 %v697
      %v1368 = vunpack.c.l.b16 %v698
      %v1369 = vunpack.c.l.b16 %v699
      %v1370 = vunpack.c.l.b16 %v700
      %v1371 = vunpack.c.l.b16 %v701
      %v1372 = vpack.c.b16 %v1363, %v1362
      %v1373 = vpack.c.b16 %v1365, %v1364
      %v1374 = vpack.c.b16 %v1367, %v1366
      %v1375 = vpack.c.b16 %v1369, %v1368
      %v1376 = vpack.c.b16 %v1371, %v1370
      %vm1377 = vcmask 1044480
      %v1378 = vrot.slane %v1372, 3
      %v1379 = vrot.slane %v1373, 3
      %v1380 = vsel %vm1377, %v1378, %v1379
      %v1381 = vrot.slane %v1374, 3
      %v1382 = vsel %vm1377, %v1379, %v1381
      %v1383 = vrot.slane %v1375, 3
      %v1384 = vsel %vm1377, %v1381, %v1383
      %v1385 = vrot.slane %v1376, 3
      %v1386 = vsel %vm1377, %v1383, %v1385
      %v1408 = vunpack.c.l.b16 %v1336
      %v1409 = vunpack.c.l.b16 %v1337
      %v1410 = vunpack.c.l.b16 %v1338
      %v1411 = vunpack.c.l.b16 %v1339
      %v1412 = vunpack.c.l.b16 %v1340
      %v1413 = vunpack.c.l.b16 %v1341
      %v1414 = vunpack.c.l.b16 %v1342
      %v1415 = vunpack.c.l.b16 %v1343
      %v1416 = vunpack.c.l.b16 %v1344
      %v1417 = vunpack.c.l.b16 %v1345
      %v1418 = vunpack.c.l.b16 %v1346
      %v1419 = vunpack.c.l.b16 %v1347
      %v1420 = vunpack.c.l.b16 %v1348
      %v1421 = vunpack.c.l.b16 %v1349
      %v1422 = vunpack.c.l.b16 %v1350
      %v1423 = vunpack.c.l.b16 %v1351
      %v1424 = vpack.c.b16 %v1409, %v1408
      %v1425 = vpack.c.b16 %v1411, %v1410
      %v1426 = vpack.c.b16 %v1413, %v1412
      %v1427 = vpack.c.b16 %v1415, %v1414
      %v1428 = vpack.c.b16 %v1417, %v1416
      %v1429 = vpack.c.b16 %v1419, %v1418
      %v1430 = vpack.c.b16 %v1421, %v1420
      %v1431 = vpack.c.b16 %v1423, %v1422
      %1440 = vmatpush.bf16.msra.mxu0 %v1431
      %1441 = vmatpush.bf16.msra.mxu0 %v1430
      %1442 = vmatpush.bf16.msra.mxu0 %v1429
      %1443 = vmatpush.bf16.msra.mxu0 %v1428
      %1444 = vmatpush.bf16.msra.mxu0 %v1427
      %1445 = vmatpush.bf16.msra.mxu0 %v1426
      %1446 = vmatpush.bf16.msra.mxu0 %v1425
      %1447 = vmatpush.bf16.msra.mxu0 %v1424
      %1448 = vmatmul.bf16.gmra.mxu0 %v1380
      %v1449 = vpop.f32.mrf.mxu0
      %v1450 = vadd.f32 0.0, %v1449
      %v1451 = vpop.f32.mrf.mxu0
      %v1452 = vadd.f32 0.0, %v1451
      %1453 = vmatmul.bf16.gmra.mxu0 %v1382
      %v1454 = vpop.f32.mrf.mxu0
      %v1455 = vadd.f32 0.0, %v1454
      %v1456 = vpop.f32.mrf.mxu0
      %v1457 = vadd.f32 0.0, %v1456
      %1458 = vmatmul.bf16.gmra.mxu0 %v1384
      %v1459 = vpop.f32.mrf.mxu0
      %v1460 = vadd.f32 0.0, %v1459
      %v1461 = vpop.f32.mrf.mxu0
      %v1462 = vadd.f32 0.0, %v1461
      %1463 = vmatmul.bf16.gmra.mxu0 %v1386
      %v1464 = vpop.f32.mrf.mxu0
      %v1465 = vadd.f32 0.0, %v1464
      %v1466 = vpop.f32.mrf.mxu0
      %v1467 = vadd.f32 0.0, %v1466
      %1468 = vmatmul.bf16.gmra.mxu0 %v1385
      %v1469 = vpop.f32.mrf.mxu0
      %v1470 = vadd.f32 0.0, %v1469
      %v1471 = vpop.f32.mrf.mxu0
      %1472 = vdwg.mxu0
      %v1473 = vld [vmem:[#allocation2] sm:$0xff]
      %v1474 = vld [vmem:[#allocation2 + $0x8] sm:$0xff]
      %v1475 = vld [vmem:[#allocation2 + $0x10] sm:$0xff]
      %v1476 = vld [vmem:[#allocation2 + $0x18] sm:$0xff]
      %v1477 = vld [vmem:[#allocation2 + $0x20] sm:$0xff]
      %v1478 = vld [vmem:[#allocation2 + $0x28] sm:$0xff]
      %v1479 = vld [vmem:[#allocation2 + $0x30] sm:$0xff]
      %v1480 = vld [vmem:[#allocation2 + $0x38] sm:$0xff]
      %v1481 = vld [vmem:[#allocation2 + $0x40] sm:$0xff]
      %v1482 = vadd.f32 %v1473, %v1450
      %v1483 = vadd.f32 %v1474, %v1452
      %v1484 = vadd.f32 %v1475, %v1455
      %v1485 = vadd.f32 %v1476, %v1457
      %v1486 = vadd.f32 %v1477, %v1460
      %v1487 = vadd.f32 %v1478, %v1462
      %v1488 = vadd.f32 %v1479, %v1465
      %v1489 = vadd.f32 %v1480, %v1467
      %v1490 = vadd.f32 %v1481, %v1470
      %1491 = vst [vmem:[#allocation2] sm:$0xff] %v1482
      %1492 = vst [vmem:[#allocation2 + $0x8] sm:$0xff] %v1483
      %1493 = vst [vmem:[#allocation2 + $0x10] sm:$0xff] %v1484
      %1494 = vst [vmem:[#allocation2 + $0x18] sm:$0xff] %v1485
      %1495 = vst [vmem:[#allocation2 + $0x20] sm:$0xff] %v1486
      %1496 = vst [vmem:[#allocation2 + $0x28] sm:$0xff] %v1487
      %1497 = vst [vmem:[#allocation2 + $0x30] sm:$0xff] %v1488
      %1498 = vst [vmem:[#allocation2 + $0x38] sm:$0xff] %v1489
      %1499 = vst [vmem:[#allocation2 + $0x40] sm:$0xff] %v1490
      %v1500 = vld [vmem:[%s340 + $0x140] sm:$0xf]
      %v1501 = vld [vmem:[%s340 + $0x144] sm:$0xf]
      %v1502 = vld [vmem:[%s340 + $0x148] sm:$0xf]
      %v1503 = vld [vmem:[%s340 + $0x14c] sm:$0xf]
      %v1504 = vld [vmem:[%s340 + $0x150] sm:$0xf]
      %v1505 = vld [vmem:[%s340 + $0x154] sm:$0xf]
      %v1506 = vld [vmem:[%s340 + $0x158] sm:$0xf]
      %v1507 = vld [vmem:[%s340 + $0x15c] sm:$0xf]
      %v1508 = vld [vmem:[%s340 + $0x160] sm:$0xf]
      %v1509 = vld [vmem:[%s340 + $0x164] sm:$0xf]
      %v1510 = vld [vmem:[%s340 + $0x168] sm:$0xf]
      %v1511 = vld [vmem:[%s340 + $0x16c] sm:$0xf]
      %v1512 = vld [vmem:[%s340 + $0x170] sm:$0xf]
      %v1513 = vld [vmem:[%s340 + $0x174] sm:$0xf]
      %v1514 = vld [vmem:[%s340 + $0x178] sm:$0xf]
      %v1515 = vld [vmem:[%s340 + $0x17c] sm:$0xf]
      %vm1516 = vsmask.f32 5376
      %v1518 = vshrl.u32 %v1208, 16
      %v1520 = vrot.slane %v1518, 2
      %v1521 = vshll.u32 %v1208, 16
      %v1523 = vrot.slane %v1521, 3
      %v1524 = vor.u32 %v1520, %v1523
      %v1526 = vshrl.u32 %v1209, 16
      %v1528 = vrot.slane %v1526, 2
      %v1529 = vshll.u32 %v1209, 16
      %v1531 = vrot.slane %v1529, 3
      %v1532 = vor.u32 %v1528, %v1531
      %v1533 = vsel %vm1516, %v1524, %v1532
      %v1535 = vshrl.u32 %v1210, 16
      %v1537 = vrot.slane %v1535, 2
      %v1538 = vshll.u32 %v1210, 16
      %v1540 = vrot.slane %v1538, 3
      %v1541 = vor.u32 %v1537, %v1540
      %v1542 = vsel %vm1516, %v1532, %v1541
      %v1544 = vshrl.u32 %v1211, 16
      %v1546 = vrot.slane %v1544, 2
      %v1547 = vshll.u32 %v1211, 16
      %v1549 = vrot.slane %v1547, 3
      %v1550 = vor.u32 %v1546, %v1549
      %v1551 = vsel %vm1516, %v1541, %v1550
      %v1553 = vshrl.u32 %v1212, 16
      %v1555 = vrot.slane %v1553, 2
      %v1556 = vshll.u32 %v1212, 16
      %v1558 = vrot.slane %v1556, 3
      %v1559 = vor.u32 %v1555, %v1558
      %v1560 = vsel %vm1516, %v1550, %v1559
      %v1582 = vunpack.c.l.b16 %v1500
      %v1583 = vunpack.c.l.b16 %v1501
      %v1584 = vunpack.c.l.b16 %v1502
      %v1585 = vunpack.c.l.b16 %v1503
      %v1586 = vunpack.c.l.b16 %v1504
      %v1587 = vunpack.c.l.b16 %v1505
      %v1588 = vunpack.c.l.b16 %v1506
      %v1589 = vunpack.c.l.b16 %v1507
      %v1590 = vunpack.c.l.b16 %v1508
      %v1591 = vunpack.c.l.b16 %v1509
      %v1592 = vunpack.c.l.b16 %v1510
      %v1593 = vunpack.c.l.b16 %v1511
      %v1594 = vunpack.c.l.b16 %v1512
      %v1595 = vunpack.c.l.b16 %v1513
      %v1596 = vunpack.c.l.b16 %v1514
      %v1597 = vunpack.c.l.b16 %v1515
      %v1598 = vpack.c.b16 %v1583, %v1582
      %v1599 = vpack.c.b16 %v1585, %v1584
      %v1600 = vpack.c.b16 %v1587, %v1586
      %v1601 = vpack.c.b16 %v1589, %v1588
      %v1602 = vpack.c.b16 %v1591, %v1590
      %v1603 = vpack.c.b16 %v1593, %v1592
      %v1604 = vpack.c.b16 %v1595, %v1594
      %v1605 = vpack.c.b16 %v1597, %v1596
      %1614 = vmatpush.bf16.msra.mxu0 %v1605
      %1615 = vmatpush.bf16.msra.mxu0 %v1604
      %1616 = vmatpush.bf16.msra.mxu0 %v1603
      %1617 = vmatpush.bf16.msra.mxu0 %v1602
      %1618 = vmatpush.bf16.msra.mxu0 %v1601
      %1619 = vmatpush.bf16.msra.mxu0 %v1600
      %1620 = vmatpush.bf16.msra.mxu0 %v1599
      %1621 = vmatpush.bf16.msra.mxu0 %v1598
      %1622 = vmatmul.bf16.gmra.mxu0 %v1533
      %v1623 = vpop.f32.mrf.mxu0
      %v1624 = vadd.f32 0.0, %v1623
      %v1625 = vpop.f32.mrf.mxu0
      %v1626 = vadd.f32 0.0, %v1625
      %1627 = vmatmul.bf16.gmra.mxu0 %v1542
      %v1628 = vpop.f32.mrf.mxu0
      %v1629 = vadd.f32 0.0, %v1628
      %v1630 = vpop.f32.mrf.mxu0
      %v1631 = vadd.f32 0.0, %v1630
      %1632 = vmatmul.bf16.gmra.mxu0 %v1551
      %v1633 = vpop.f32.mrf.mxu0
      %v1634 = vadd.f32 0.0, %v1633
      %v1635 = vpop.f32.mrf.mxu0
      %v1636 = vadd.f32 0.0, %v1635
      %1637 = vmatmul.bf16.gmra.mxu0 %v1560
      %v1638 = vpop.f32.mrf.mxu0
      %v1639 = vadd.f32 0.0, %v1638
      %v1640 = vpop.f32.mrf.mxu0
      %v1641 = vadd.f32 0.0, %v1640
      %1642 = vmatmul.bf16.gmra.mxu0 %v1559
      %v1643 = vpop.f32.mrf.mxu0
      %v1644 = vadd.f32 0.0, %v1643
      %v1645 = vpop.f32.mrf.mxu0
      %1646 = vdwg.mxu0
      %v1647 = vld [vmem:[#allocation2] sm:$0xff]
      %v1648 = vld [vmem:[#allocation2 + $0x8] sm:$0xff]
      %v1649 = vld [vmem:[#allocation2 + $0x10] sm:$0xff]
      %v1650 = vld [vmem:[#allocation2 + $0x18] sm:$0xff]
      %v1651 = vld [vmem:[#allocation2 + $0x20] sm:$0xff]
      %v1652 = vld [vmem:[#allocation2 + $0x28] sm:$0xff]
      %v1653 = vld [vmem:[#allocation2 + $0x30] sm:$0xff]
      %v1654 = vld [vmem:[#allocation2 + $0x38] sm:$0xff]
      %v1655 = vld [vmem:[#allocation2 + $0x40] sm:$0xff]
      %v1656 = vadd.f32 %v1647, %v1624
      %v1657 = vadd.f32 %v1648, %v1626
      %v1658 = vadd.f32 %v1649, %v1629
      %v1659 = vadd.f32 %v1650, %v1631
      %v1660 = vadd.f32 %v1651, %v1634
      %v1661 = vadd.f32 %v1652, %v1636
      %v1662 = vadd.f32 %v1653, %v1639
      %v1663 = vadd.f32 %v1654, %v1641
      %v1664 = vadd.f32 %v1655, %v1644
      %1665 = vst [vmem:[#allocation2] sm:$0xff] %v1656
      %1666 = vst [vmem:[#allocation2 + $0x8] sm:$0xff] %v1657
      %1667 = vst [vmem:[#allocation2 + $0x10] sm:$0xff] %v1658
      %1668 = vst [vmem:[#allocation2 + $0x18] sm:$0xff] %v1659
      %1669 = vst [vmem:[#allocation2 + $0x20] sm:$0xff] %v1660
      %1670 = vst [vmem:[#allocation2 + $0x28] sm:$0xff] %v1661
      %1671 = vst [vmem:[#allocation2 + $0x30] sm:$0xff] %v1662
      %1672 = vst [vmem:[#allocation2 + $0x38] sm:$0xff] %v1663
      %1673 = vst [vmem:[#allocation2 + $0x40] sm:$0xff] %v1664
      %v1674 = vld [vmem:[%s340 + $0x180] sm:$0xf]
      %v1675 = vld [vmem:[%s340 + $0x184] sm:$0xf]
      %v1676 = vld [vmem:[%s340 + $0x188] sm:$0xf]
      %v1677 = vld [vmem:[%s340 + $0x18c] sm:$0xf]
      %v1678 = vld [vmem:[%s340 + $0x190] sm:$0xf]
      %v1679 = vld [vmem:[%s340 + $0x194] sm:$0xf]
      %v1680 = vld [vmem:[%s340 + $0x198] sm:$0xf]
      %v1681 = vld [vmem:[%s340 + $0x19c] sm:$0xf]
      %v1682 = vld [vmem:[%s340 + $0x1a0] sm:$0xf]
      %v1683 = vld [vmem:[%s340 + $0x1a4] sm:$0xf]
      %v1684 = vld [vmem:[%s340 + $0x1a8] sm:$0xf]
      %v1685 = vld [vmem:[%s340 + $0x1ac] sm:$0xf]
      %v1686 = vld [vmem:[%s340 + $0x1b0] sm:$0xf]
      %v1687 = vld [vmem:[%s340 + $0x1b4] sm:$0xf]
      %v1688 = vld [vmem:[%s340 + $0x1b8] sm:$0xf]
      %v1689 = vld [vmem:[%s340 + $0x1bc] sm:$0xf]
      %v1691 = vunpack.c.l.b16 %v670
      %v1692 = vpack.c.b16 %v729, %v728
      %v1693 = vpack.c.b16 %v731, %v730
      %v1694 = vpack.c.b16 %v733, %v732
      %v1695 = vpack.c.b16 %v735, %v734
      %v1696 = vpack.c.b16 %v1691, %v1017
      %v1698 = vshrl.u32 %v1692, 16
      %v1700 = vshll.u32 %v1692, 16
      %v1702 = vrot.slane %v1700, 1
      %v1703 = vor.u32 %v1698, %v1702
      %v1705 = vshll.u32 %v1693, 16
      %v1707 = vrot.slane %v1705, 1
      %v1708 = vsel %vm1019, %v1703, %v1707
      %v1709 = vshrl.u32 %v1693, 16
      %v1711 = vor.u32 %v1709, %v1707
      %v1713 = vshll.u32 %v1694, 16
      %v1715 = vrot.slane %v1713, 1
      %v1716 = vsel %vm1019, %v1711, %v1715
      %v1717 = vshrl.u32 %v1694, 16
      %v1719 = vor.u32 %v1717, %v1715
      %v1721 = vshll.u32 %v1695, 16
      %v1723 = vrot.slane %v1721, 1
      %v1724 = vsel %vm1019, %v1719, %v1723
      %v1725 = vshrl.u32 %v1695, 16
      %v1727 = vor.u32 %v1725, %v1723
      %v1729 = vshll.u32 %v1696, 16
      %v1731 = vrot.slane %v1729, 1
      %v1732 = vsel %vm1019, %v1727, %v1731
      %v1733 = vshrl.u32 %v1696, 16
      %v1735 = vor.u32 %v1733, %v1731
      %v1757 = vunpack.c.l.b16 %v1674
      %v1758 = vunpack.c.l.b16 %v1675
      %v1759 = vunpack.c.l.b16 %v1676
      %v1760 = vunpack.c.l.b16 %v1677
      %v1761 = vunpack.c.l.b16 %v1678
      %v1762 = vunpack.c.l.b16 %v1679
      %v1763 = vunpack.c.l.b16 %v1680
      %v1764 = vunpack.c.l.b16 %v1681
      %v1765 = vunpack.c.l.b16 %v1682
      %v1766 = vunpack.c.l.b16 %v1683
      %v1767 = vunpack.c.l.b16 %v1684
      %v1768 = vunpack.c.l.b16 %v1685
      %v1769 = vunpack.c.l.b16 %v1686
      %v1770 = vunpack.c.l.b16 %v1687
      %v1771 = vunpack.c.l.b16 %v1688
      %v1772 = vunpack.c.l.b16 %v1689
      %v1773 = vpack.c.b16 %v1758, %v1757
      %v1774 = vpack.c.b16 %v1760, %v1759
      %v1775 = vpack.c.b16 %v1762, %v1761
      %v1776 = vpack.c.b16 %v1764, %v1763
      %v1777 = vpack.c.b16 %v1766, %v1765
      %v1778 = vpack.c.b16 %v1768, %v1767
      %v1779 = vpack.c.b16 %v1770, %v1769
      %v1780 = vpack.c.b16 %v1772, %v1771
      %1789 = vmatpush.bf16.msra.mxu0 %v1780
      %1790 = vmatpush.bf16.msra.mxu0 %v1779
      %1791 = vmatpush.bf16.msra.mxu0 %v1778
      %1792 = vmatpush.bf16.msra.mxu0 %v1777
      %1793 = vmatpush.bf16.msra.mxu0 %v1776
      %1794 = vmatpush.bf16.msra.mxu0 %v1775
      %1795 = vmatpush.bf16.msra.mxu0 %v1774
      %1796 = vmatpush.bf16.msra.mxu0 %v1773
      %1797 = vmatmul.bf16.gmra.mxu0 %v1708
      %v1798 = vpop.f32.mrf.mxu0
      %v1799 = vadd.f32 0.0, %v1798
      %v1800 = vpop.f32.mrf.mxu0
      %v1801 = vadd.f32 0.0, %v1800
      %1802 = vmatmul.bf16.gmra.mxu0 %v1716
      %v1803 = vpop.f32.mrf.mxu0
      %v1804 = vadd.f32 0.0, %v1803
      %v1805 = vpop.f32.mrf.mxu0
      %v1806 = vadd.f32 0.0, %v1805
      %1807 = vmatmul.bf16.gmra.mxu0 %v1724
      %v1808 = vpop.f32.mrf.mxu0
      %v1809 = vadd.f32 0.0, %v1808
      %v1810 = vpop.f32.mrf.mxu0
      %v1811 = vadd.f32 0.0, %v1810
      %1812 = vmatmul.bf16.gmra.mxu0 %v1732
      %v1813 = vpop.f32.mrf.mxu0
      %v1814 = vadd.f32 0.0, %v1813
      %v1815 = vpop.f32.mrf.mxu0
      %v1816 = vadd.f32 0.0, %v1815
      %1817 = vmatmul.bf16.gmra.mxu0 %v1735
      %v1818 = vpop.f32.mrf.mxu0
      %v1819 = vadd.f32 0.0, %v1818
      %v1820 = vpop.f32.mrf.mxu0
      %1821 = vdwg.mxu0
      %v1822 = vld [vmem:[#allocation2] sm:$0xff]
      %v1823 = vld [vmem:[#allocation2 + $0x8] sm:$0xff]
      %v1824 = vld [vmem:[#allocation2 + $0x10] sm:$0xff]
      %v1825 = vld [vmem:[#allocation2 + $0x18] sm:$0xff]
      %v1826 = vld [vmem:[#allocation2 + $0x20] sm:$0xff]
      %v1827 = vld [vmem:[#allocation2 + $0x28] sm:$0xff]
      %v1828 = vld [vmem:[#allocation2 + $0x30] sm:$0xff]
      %v1829 = vld [vmem:[#allocation2 + $0x38] sm:$0xff]
      %v1830 = vld [vmem:[#allocation2 + $0x40] sm:$0xff]
      %v1831 = vadd.f32 %v1822, %v1799
      %v1832 = vadd.f32 %v1823, %v1801
      %v1833 = vadd.f32 %v1824, %v1804
      %v1834 = vadd.f32 %v1825, %v1806
      %v1835 = vadd.f32 %v1826, %v1809
      %v1836 = vadd.f32 %v1827, %v1811
      %v1837 = vadd.f32 %v1828, %v1814
      %v1838 = vadd.f32 %v1829, %v1816
      %v1839 = vadd.f32 %v1830, %v1819
      %1840 = vst [vmem:[#allocation2] sm:$0xff] %v1831
      %1841 = vst [vmem:[#allocation2 + $0x8] sm:$0xff] %v1832
      %1842 = vst [vmem:[#allocation2 + $0x10] sm:$0xff] %v1833
      %1843 = vst [vmem:[#allocation2 + $0x18] sm:$0xff] %v1834
      %1844 = vst [vmem:[#allocation2 + $0x20] sm:$0xff] %v1835
      %1845 = vst [vmem:[#allocation2 + $0x28] sm:$0xff] %v1836
      %1846 = vst [vmem:[#allocation2 + $0x30] sm:$0xff] %v1837
      %1847 = vst [vmem:[#allocation2 + $0x38] sm:$0xff] %v1838
      %1848 = vst [vmem:[#allocation2 + $0x40] sm:$0xff] %v1839
      %v1849 = vld [vmem:[%s340 + $0x1c0] sm:$0xf]
      %v1850 = vld [vmem:[%s340 + $0x1c4] sm:$0xf]
      %v1851 = vld [vmem:[%s340 + $0x1c8] sm:$0xf]
      %v1852 = vld [vmem:[%s340 + $0x1cc] sm:$0xf]
      %v1853 = vld [vmem:[%s340 + $0x1d0] sm:$0xf]
      %v1854 = vld [vmem:[%s340 + $0x1d4] sm:$0xf]
      %v1855 = vld [vmem:[%s340 + $0x1d8] sm:$0xf]
      %v1856 = vld [vmem:[%s340 + $0x1dc] sm:$0xf]
      %v1857 = vld [vmem:[%s340 + $0x1e0] sm:$0xf]
      %v1858 = vld [vmem:[%s340 + $0x1e4] sm:$0xf]
      %v1859 = vld [vmem:[%s340 + $0x1e8] sm:$0xf]
      %v1860 = vld [vmem:[%s340 + $0x1ec] sm:$0xf]
      %v1861 = vld [vmem:[%s340 + $0x1f0] sm:$0xf]
      %v1862 = vld [vmem:[%s340 + $0x1f4] sm:$0xf]
      %v1863 = vld [vmem:[%s340 + $0x1f8] sm:$0xf]
      %v1864 = vld [vmem:[%s340 + $0x1fc] sm:$0xf]
      %v1866 = vunpack.c.l.b16 %v681
      %v1867 = vpack.c.b16 %v864, %v863
      %v1868 = vpack.c.b16 %v866, %v865
      %v1869 = vpack.c.b16 %v868, %v867
      %v1870 = vpack.c.b16 %v870, %v869
      %v1871 = vpack.c.b16 %v1866, %v871
      %vm1872 = vsmask.f32 6400
      %v1874 = vshrl.u32 %v1867, 16
      %v1876 = vrot.slane %v1874, 1
      %v1877 = vshll.u32 %v1867, 16
      %v1879 = vrot.slane %v1877, 2
      %v1880 = vor.u32 %v1876, %v1879
      %v1882 = vshrl.u32 %v1868, 16
      %v1884 = vrot.slane %v1882, 1
      %v1885 = vshll.u32 %v1868, 16
      %v1887 = vrot.slane %v1885, 2
      %v1888 = vor.u32 %v1884, %v1887
      %v1889 = vsel %vm1872, %v1880, %v1888
      %v1891 = vshrl.u32 %v1869, 16
      %v1893 = vrot.slane %v1891, 1
      %v1894 = vshll.u32 %v1869, 16
      %v1896 = vrot.slane %v1894, 2
      %v1897 = vor.u32 %v1893, %v1896
      %v1898 = vsel %vm1872, %v1888, %v1897
      %v1900 = vshrl.u32 %v1870, 16
      %v1902 = vrot.slane %v1900, 1
      %v1903 = vshll.u32 %v1870, 16
      %v1905 = vrot.slane %v1903, 2
      %v1906 = vor.u32 %v1902, %v1905
      %v1907 = vsel %vm1872, %v1897, %v1906
      %v1909 = vshrl.u32 %v1871, 16
      %v1911 = vrot.slane %v1909, 1
      %v1912 = vshll.u32 %v1871, 16
      %v1914 = vrot.slane %v1912, 2
      %v1915 = vor.u32 %v1911, %v1914
      %v1916 = vsel %vm1872, %v1906, %v1915
      %v1938 = vunpack.c.l.b16 %v1849
      %v1939 = vunpack.c.l.b16 %v1850
      %v1940 = vunpack.c.l.b16 %v1851
      %v1941 = vunpack.c.l.b16 %v1852
      %v1942 = vunpack.c.l.b16 %v1853
      %v1943 = vunpack.c.l.b16 %v1854
      %v1944 = vunpack.c.l.b16 %v1855
      %v1945 = vunpack.c.l.b16 %v1856
      %v1946 = vunpack.c.l.b16 %v1857
      %v1947 = vunpack.c.l.b16 %v1858
      %v1948 = vunpack.c.l.b16 %v1859
      %v1949 = vunpack.c.l.b16 %v1860
      %v1950 = vunpack.c.l.b16 %v1861
      %v1951 = vunpack.c.l.b16 %v1862
      %v1952 = vunpack.c.l.b16 %v1863
      %v1953 = vunpack.c.l.b16 %v1864
      %v1954 = vpack.c.b16 %v1939, %v1938
      %v1955 = vpack.c.b16 %v1941, %v1940
      %v1956 = vpack.c.b16 %v1943, %v1942
      %v1957 = vpack.c.b16 %v1945, %v1944
      %v1958 = vpack.c.b16 %v1947, %v1946
      %v1959 = vpack.c.b16 %v1949, %v1948
      %v1960 = vpack.c.b16 %v1951, %v1950
      %v1961 = vpack.c.b16 %v1953, %v1952
      %1970 = vmatpush.bf16.msra.mxu0 %v1961
      %1971 = vmatpush.bf16.msra.mxu0 %v1960
      %1972 = vmatpush.bf16.msra.mxu0 %v1959
      %1973 = vmatpush.bf16.msra.mxu0 %v1958
      %1974 = vmatpush.bf16.msra.mxu0 %v1957
      %1975 = vmatpush.bf16.msra.mxu0 %v1956
      %1976 = vmatpush.bf16.msra.mxu0 %v1955
      %1977 = vmatpush.bf16.msra.mxu0 %v1954
      %1978 = vmatmul.bf16.gmra.mxu0 %v1889
      %v1979 = vpop.f32.mrf.mxu0
      %v1980 = vadd.f32 0.0, %v1979
      %v1981 = vpop.f32.mrf.mxu0
      %v1982 = vadd.f32 0.0, %v1981
      %1983 = vmatmul.bf16.gmra.mxu0 %v1898
      %v1984 = vpop.f32.mrf.mxu0
      %v1985 = vadd.f32 0.0, %v1984
      %v1986 = vpop.f32.mrf.mxu0
      %v1987 = vadd.f32 0.0, %v1986
      %1988 = vmatmul.bf16.gmra.mxu0 %v1907
      %v1989 = vpop.f32.mrf.mxu0
      %v1990 = vadd.f32 0.0, %v1989
      %v1991 = vpop.f32.mrf.mxu0
      %v1992 = vadd.f32 0.0, %v1991
      %1993 = vmatmul.bf16.gmra.mxu0 %v1916
      %v1994 = vpop.f32.mrf.mxu0
      %v1995 = vadd.f32 0.0, %v1994
      %v1996 = vpop.f32.mrf.mxu0
      %v1997 = vadd.f32 0.0, %v1996
      %1998 = vmatmul.bf16.gmra.mxu0 %v1915
      %v1999 = vpop.f32.mrf.mxu0
      %v2000 = vadd.f32 0.0, %v1999
      %v2001 = vpop.f32.mrf.mxu0
      %2002 = vdwg.mxu0
      %v2003 = vld [vmem:[#allocation2] sm:$0xff]
      %v2004 = vld [vmem:[#allocation2 + $0x8] sm:$0xff]
      %v2005 = vld [vmem:[#allocation2 + $0x10] sm:$0xff]
      %v2006 = vld [vmem:[#allocation2 + $0x18] sm:$0xff]
      %v2007 = vld [vmem:[#allocation2 + $0x20] sm:$0xff]
      %v2008 = vld [vmem:[#allocation2 + $0x28] sm:$0xff]
      %v2009 = vld [vmem:[#allocation2 + $0x30] sm:$0xff]
      %v2010 = vld [vmem:[#allocation2 + $0x38] sm:$0xff]
      %v2011 = vld [vmem:[#allocation2 + $0x40] sm:$0xff]
      %v2012 = vadd.f32 %v2003, %v1980
      %v2013 = vadd.f32 %v2004, %v1982
      %v2014 = vadd.f32 %v2005, %v1985
      %v2015 = vadd.f32 %v2006, %v1987
      %v2016 = vadd.f32 %v2007, %v1990
      %v2017 = vadd.f32 %v2008, %v1992
      %v2018 = vadd.f32 %v2009, %v1995
      %v2019 = vadd.f32 %v2010, %v1997
      %v2020 = vadd.f32 %v2011, %v2000
      %2021 = vst [vmem:[#allocation2] sm:$0xff] %v2012
      %2022 = vst [vmem:[#allocation2 + $0x8] sm:$0xff] %v2013
      %2023 = vst [vmem:[#allocation2 + $0x10] sm:$0xff] %v2014
      %2024 = vst [vmem:[#allocation2 + $0x18] sm:$0xff] %v2015
      %2025 = vst [vmem:[#allocation2 + $0x20] sm:$0xff] %v2016
      %2026 = vst [vmem:[#allocation2 + $0x28] sm:$0xff] %v2017
      %2027 = vst [vmem:[#allocation2 + $0x30] sm:$0xff] %v2018
      %2028 = vst [vmem:[#allocation2 + $0x38] sm:$0xff] %v2019
      %2029 = vst [vmem:[#allocation2 + $0x40] sm:$0xff] %v2020
      %v2030 = vld [vmem:[%s340 + $0x200] sm:$0xf]
      %v2031 = vld [vmem:[%s340 + $0x204] sm:$0xf]
      %v2032 = vld [vmem:[%s340 + $0x208] sm:$0xf]
      %v2033 = vld [vmem:[%s340 + $0x20c] sm:$0xf]
      %v2034 = vld [vmem:[%s340 + $0x210] sm:$0xf]
      %v2035 = vld [vmem:[%s340 + $0x214] sm:$0xf]
      %v2036 = vld [vmem:[%s340 + $0x218] sm:$0xf]
      %v2037 = vld [vmem:[%s340 + $0x21c] sm:$0xf]
      %v2038 = vld [vmem:[%s340 + $0x220] sm:$0xf]
      %v2039 = vld [vmem:[%s340 + $0x224] sm:$0xf]
      %v2040 = vld [vmem:[%s340 + $0x228] sm:$0xf]
      %v2041 = vld [vmem:[%s340 + $0x22c] sm:$0xf]
      %v2042 = vld [vmem:[%s340 + $0x230] sm:$0xf]
      %v2043 = vld [vmem:[%s340 + $0x234] sm:$0xf]
      %v2044 = vld [vmem:[%s340 + $0x238] sm:$0xf]
      %v2045 = vld [vmem:[%s340 + $0x23c] sm:$0xf]
      %v2046 = vrot.slane %v1692, 1
      %v2047 = vrot.slane %v1693, 1
      %v2048 = vsel %vm877, %v2046, %v2047
      %v2049 = vrot.slane %v1694, 1
      %v2050 = vsel %vm877, %v2047, %v2049
      %v2051 = vrot.slane %v1695, 1
      %v2052 = vsel %vm877, %v2049, %v2051
      %v2053 = vrot.slane %v1696, 1
      %v2054 = vsel %vm877, %v2051, %v2053
      %v2076 = vunpack.c.l.b16 %v2030
      %v2077 = vunpack.c.l.b16 %v2031
      %v2078 = vunpack.c.l.b16 %v2032
      %v2079 = vunpack.c.l.b16 %v2033
      %v2080 = vunpack.c.l.b16 %v2034
      %v2081 = vunpack.c.l.b16 %v2035
      %v2082 = vunpack.c.l.b16 %v2036
      %v2083 = vunpack.c.l.b16 %v2037
      %v2084 = vunpack.c.l.b16 %v2038
      %v2085 = vunpack.c.l.b16 %v2039
      %v2086 = vunpack.c.l.b16 %v2040
      %v2087 = vunpack.c.l.b16 %v2041
      %v2088 = vunpack.c.l.b16 %v2042
      %v2089 = vunpack.c.l.b16 %v2043
      %v2090 = vunpack.c.l.b16 %v2044
      %v2091 = vunpack.c.l.b16 %v2045
      %v2092 = vpack.c.b16 %v2077, %v2076
      %v2093 = vpack.c.b16 %v2079, %v2078
      %v2094 = vpack.c.b16 %v2081, %v2080
      %v2095 = vpack.c.b16 %v2083, %v2082
      %v2096 = vpack.c.b16 %v2085, %v2084
      %v2097 = vpack.c.b16 %v2087, %v2086
      %v2098 = vpack.c.b16 %v2089, %v2088
      %v2099 = vpack.c.b16 %v2091, %v2090
      %2108 = vmatpush.bf16.msra.mxu0 %v2099
      %2109 = vmatpush.bf16.msra.mxu0 %v2098
      %2110 = vmatpush.bf16.msra.mxu0 %v2097
      %2111 = vmatpush.bf16.msra.mxu0 %v2096
      %2112 = vmatpush.bf16.msra.mxu0 %v2095
      %2113 = vmatpush.bf16.msra.mxu0 %v2094
      %2114 = vmatpush.bf16.msra.mxu0 %v2093
      %2115 = vmatpush.bf16.msra.mxu0 %v2092
      %2116 = vmatmul.bf16.gmra.mxu0 %v2048
      %v2117 = vpop.f32.mrf.mxu0
      %v2118 = vadd.f32 0.0, %v2117
      %v2119 = vpop.f32.mrf.mxu0
      %v2120 = vadd.f32 0.0, %v2119
      %2121 = vmatmul.bf16.gmra.mxu0 %v2050
      %v2122 = vpop.f32.mrf.mxu0
      %v2123 = vadd.f32 0.0, %v2122
      %v2124 = vpop.f32.mrf.mxu0
      %v2125 = vadd.f32 0.0, %v2124
      %2126 = vmatmul.bf16.gmra.mxu0 %v2052
      %v2127 = vpop.f32.mrf.mxu0
      %v2128 = vadd.f32 0.0, %v2127
      %v2129 = vpop.f32.mrf.mxu0
      %v2130 = vadd.f32 0.0, %v2129
      %2131 = vmatmul.bf16.gmra.mxu0 %v2054
      %v2132 = vpop.f32.mrf.mxu0
      %v2133 = vadd.f32 0.0, %v2132
      %v2134 = vpop.f32.mrf.mxu0
      %v2135 = vadd.f32 0.0, %v2134
      %2136 = vmatmul.bf16.gmra.mxu0 %v2053
      %v2137 = vpop.f32.mrf.mxu0
      %v2138 = vadd.f32 0.0, %v2137
      %v2139 = vpop.f32.mrf.mxu0
      %2140 = vdwg.mxu0
      %v2141 = vld [vmem:[#allocation2] sm:$0xff]
      %v2142 = vld [vmem:[#allocation2 + $0x8] sm:$0xff]
      %v2143 = vld [vmem:[#allocation2 + $0x10] sm:$0xff]
      %v2144 = vld [vmem:[#allocation2 + $0x18] sm:$0xff]
      %v2145 = vld [vmem:[#allocation2 + $0x20] sm:$0xff]
      %v2146 = vld [vmem:[#allocation2 + $0x28] sm:$0xff]
      %v2147 = vld [vmem:[#allocation2 + $0x30] sm:$0xff]
      %v2148 = vld [vmem:[#allocation2 + $0x38] sm:$0xff]
      %v2149 = vld [vmem:[#allocation2 + $0x40] sm:$0xff]
      %v2150 = vadd.f32 %v2141, %v2118
      %v2151 = vadd.f32 %v2142, %v2120
      %v2152 = vadd.f32 %v2143, %v2123
      %v2153 = vadd.f32 %v2144, %v2125
      %v2154 = vadd.f32 %v2145, %v2128
      %v2155 = vadd.f32 %v2146, %v2130
      %v2156 = vadd.f32 %v2147, %v2133
      %v2157 = vadd.f32 %v2148, %v2135
      %v2158 = vadd.f32 %v2149, %v2138
      %2159 = vst [vmem:[#allocation2] sm:$0xff] %v2150
      %2160 = vst [vmem:[#allocation2 + $0x8] sm:$0xff] %v2151
      %2161 = vst [vmem:[#allocation2 + $0x10] sm:$0xff] %v2152
      %2162 = vst [vmem:[#allocation2 + $0x18] sm:$0xff] %v2153
      %2163 = vst [vmem:[#allocation2 + $0x20] sm:$0xff] %v2154
      %2164 = vst [vmem:[#allocation2 + $0x28] sm:$0xff] %v2155
      %2165 = vst [vmem:[#allocation2 + $0x30] sm:$0xff] %v2156
      %2166 = vst [vmem:[#allocation2 + $0x38] sm:$0xff] %v2157
      %2167 = vst [vmem:[#allocation2 + $0x40] sm:$0xff] %v2158
      %v2168 = vld [vmem:[#allocation2] sm:$0xff]
      %v2169 = vld [vmem:[#allocation2 + $0x8] sm:$0xff]
      %v2170 = vld [vmem:[#allocation2 + $0x10] sm:$0xff]
      %v2171 = vld [vmem:[#allocation2 + $0x18] sm:$0xff]
      %v2172 = vld [vmem:[#allocation2 + $0x20] sm:$0xff]
      %v2173 = vld [vmem:[#allocation2 + $0x28] sm:$0xff]
      %v2174 = vld [vmem:[#allocation2 + $0x30] sm:$0xff]
      %v2175 = vld [vmem:[#allocation2 + $0x38] sm:$0xff]
      %v2176 = vld [vmem:[#allocation2 + $0x40] sm:$0xff]
      %v2177 = vld [vmem:[%s343] sm:$0x1]
      %v2179 = vperm.slane %v2177, 0
      %v2181 = vadd.f32 %v2168, %v2179
      %v2182 = vadd.f32 %v2169, %v2179
      %v2183 = vadd.f32 %v2170, %v2179
      %v2184 = vadd.f32 %v2171, %v2179
      %v2185 = vadd.f32 %v2172, %v2179
      %v2186 = vadd.f32 %v2173, %v2179
      %v2187 = vadd.f32 %v2174, %v2179
      %v2188 = vadd.f32 %v2175, %v2179
      %v2189 = vadd.f32 %v2176, %v2179
      %v2190 = vld [vmem:[%s346] sm:$0x1]
      %v2192 = vperm.slane %v2190, 0
      %v2194 = vmul.f32 %v2181, %v2192
      %v2195 = vmul.f32 %v2182, %v2192
      %v2196 = vmul.f32 %v2183, %v2192
      %v2197 = vmul.f32 %v2184, %v2192
      %v2198 = vmul.f32 %v2185, %v2192
      %v2199 = vmul.f32 %v2186, %v2192
      %v2200 = vmul.f32 %v2187, %v2192
      %v2201 = vmul.f32 %v2188, %v2192
      %v2202 = vmul.f32 %v2189, %v2192
      %v2203 = vld [vmem:[%s349] sm:$0x1]
      %v2205 = vperm.slane %v2203, 0
      %v2207 = vadd.f32 %v2194, %v2205
      %v2208 = vadd.f32 %v2195, %v2205
      %v2209 = vadd.f32 %v2196, %v2205
      %v2210 = vadd.f32 %v2197, %v2205
      %v2211 = vadd.f32 %v2198, %v2205
      %v2212 = vadd.f32 %v2199, %v2205
      %v2213 = vadd.f32 %v2200, %v2205
      %v2214 = vadd.f32 %v2201, %v2205
      %v2215 = vadd.f32 %v2202, %v2205
      %vm2216 = vcmp.gt.f32.partialorder %v2207, 0.0
      %vm2217 = vcmp.gt.f32.partialorder %v2208, 0.0
      %vm2218 = vcmp.gt.f32.partialorder %v2209, 0.0
      %vm2219 = vcmp.gt.f32.partialorder %v2210, 0.0
      %vm2220 = vcmp.gt.f32.partialorder %v2211, 0.0
      %vm2221 = vcmp.gt.f32.partialorder %v2212, 0.0
      %vm2222 = vcmp.gt.f32.partialorder %v2213, 0.0
      %vm2223 = vcmp.gt.f32.partialorder %v2214, 0.0
      %vm2224 = vcmp.gt.f32.partialorder %v2215, 0.0
      %v2225 = vmul.f32 %v2207, 0.1
      %v2226 = vmul.f32 %v2208, 0.1
      %v2227 = vmul.f32 %v2209, 0.1
      %v2228 = vmul.f32 %v2210, 0.1
      %v2229 = vmul.f32 %v2211, 0.1
      %v2230 = vmul.f32 %v2212, 0.1
      %v2231 = vmul.f32 %v2213, 0.1
      %v2232 = vmul.f32 %v2214, 0.1
      %v2233 = vmul.f32 %v2215, 0.1
      %v2234 = vsel %vm2216, %v2207, %v2225
      %v2235 = vsel %vm2217, %v2208, %v2226
      %v2236 = vsel %vm2218, %v2209, %v2227
      %v2237 = vsel %vm2219, %v2210, %v2228
      %v2238 = vsel %vm2220, %v2211, %v2229
      %v2239 = vsel %vm2221, %v2212, %v2230
      %v2240 = vsel %vm2222, %v2213, %v2231
      %v2241 = vsel %vm2223, %v2214, %v2232
      %v2242 = vsel %vm2224, %v2215, %v2233
      %v2243 = vpack.c.bf16 %v2234, %v2234
      %v2244 = vpack.c.bf16 %v2235, %v2235
      %v2245 = vpack.c.bf16 %v2236, %v2236
      %v2246 = vpack.c.bf16 %v2237, %v2237
      %v2247 = vpack.c.bf16 %v2238, %v2238
      %v2248 = vpack.c.bf16 %v2239, %v2239
      %v2249 = vpack.c.bf16 %v2240, %v2240
      %v2250 = vpack.c.bf16 %v2241, %v2241
      %v2251 = vpack.c.bf16 %v2242, %v2242
      %2252 = vst [vmem:[%s357] sm:$0xf] %v2243
      %2253 = vst [vmem:[%s357 + $0x4] sm:$0xf] %v2244
      %2254 = vst [vmem:[%s357 + $0x8] sm:$0xf] %v2245
      %2255 = vst [vmem:[%s357 + $0xc] sm:$0xf] %v2246
      %2256 = vst [vmem:[%s357 + $0x10] sm:$0xf] %v2247
      %2257 = vst [vmem:[%s357 + $0x14] sm:$0xf] %v2248
      %2258 = vst [vmem:[%s357 + $0x18] sm:$0xf] %v2249
      %2259 = vst [vmem:[%s357 + $0x1c] sm:$0xf] %v2250
      %2260 = vst [vmem:[%s357 + $0x20] sm:$0xf] %v2251
      %p2261 = scmp.lt.s32.totalorder %s22, 1
      %s2262 = scalar_select %p2261, %s22, 1
      %p2263 = scmp.lt.s32.totalorder %s23, 0
      %s2264 = scalar_select %p2263, %s23, 0
      %s2265 = smul.addr %s2262, 9
      %s2266 = sadd.s32 %s2264, %s2265
      %s2267 = smul.addr %s2266, 4
      %s2268 = scalar_lea.vmem %s7, %s2267
      // Predicated region
      $region49: #{network_block_forward.4} parent=47 // pred_check
        %p2269 = pneg %p222
      $region50: #{network_block_forward.4} parent=47 // pred_check_branch
        %2271 = sbr.rel (%p2269) target = $region52
      $region51: #{network_block_forward.4} parent=47 // pred_region
        _
      $region52: #{network_block_forward.4} parent=47 // pred_fallthru
        _
    $region48: #{network_block_forward.4} parent=5 // pred_fallthru
      _
    %p2272 = scmp.le.s32.totalorder 2, %s13
    // Predicated region
    $region53: #{network_block_forward.4} parent=5 // pred_check
      %p2273 = pneg %p2272
    $region54: #{network_block_forward.4} parent=5 // pred_check_branch
      %2275 = sbr.rel (%p2273) target = $region56
    $region55: #{network_block_forward.4} parent=5 // pred_region
      %s2276 = ssub.s32 %s13, 2
      // Predicated region
      $region57: #{network_block_forward.4} parent=55 // pred_check
        %p2277 = pneg %p228
      $region58: #{network_block_forward.4} parent=55 // pred_check_branch
        %2279 = sbr.rel (%p2277) target = $region60
      $region59: #{network_block_forward.4} parent=55 // pred_region
        %p2280 = scmp.lt.s32.totalorder %s24, 1
        %s2281 = scalar_select %p2280, %s24, 1
        %p2282 = scmp.lt.s32.totalorder %s25, 0
        %s2283 = scalar_select %p2282, %s25, 0
        %s2284 = smul.addr %s2281, 9
        %s2285 = sadd.s32 %s2283, %s2284
        %s2286 = smul.addr %s2285, 4
        %s2287 = scalar_lea.vmem %s7, %s2286
      $region60: #{network_block_forward.4} parent=55 // pred_fallthru
        _
    $region56: #{network_block_forward.4} parent=5 // pred_fallthru
      _
  $region6: #{network_block_forward.4} parent=0 // loop_footer
    %s17 = sadd.s32 1, %s13
  $region7: #{network_block_forward.4} parent=0 // loop_footer_branch
    %12 = sbr.rel target = $region3
  $region8: #{network_block_forward.4} parent=0 // loop_exit
    _

// kernel: network_block_forward.5
$region0: #{network_block_forward.5}
  #allocation0 [shape = 'u32[]', space=smem, size = 0x4, offset = 0x4, fixed_abs, tag = 'smem constant byte address 0x4 - core index']
  #allocation1 [shape = 'u32[72,128]{1,0:T(1,128)}', space=vmem, size = 0x9000, scoped, tag = 'internal scratch']
  #allocation2 [shape = 'f32[80,128]{1,0:T(8,128)}', space=vmem, size = 0xa000, scoped, tag = 'scratch operand']
  %s0 = inlined_call_operand.vmem [shape: bf16[2,110,128], index: 0, kind: input, shape index: {}]
  %s1 = inlined_call_operand.vmem [shape: bf16[1152,128], index: 1, kind: input, shape index: {}]
  %s2 = inlined_call_operand.vmem [shape: f32[1,128], index: 2, kind: input, shape index: {}]
  %s3 = inlined_call_operand.vmem [shape: bf16[2,80,128], index: 3, kind: input, shape index: {}]
  %s4 = inlined_call_operand.vmem [shape: bf16[128,128], index: 4, kind: input, shape index: {}]
  %s5 = inlined_call_operand.vmem [shape: f32[1,128], index: 5, kind: input, shape index: {}]
  %s6 = inlined_call_operand.vmem [shape: f32[1,128], index: 6, kind: input, shape index: {}]
  %s7 = inlined_call_operand.vmem [shape: f32[1,128], index: 7, kind: input, shape index: {}]
  %s8 = inlined_call_operand.vmem [shape: f32[2,80,128], index: 8, kind: output, shape index: {}]
  %s9 = sld [smem:[#allocation0]]
  $region65: #{network_block_forward.5} parent=0
    _
  %s11 = ssub.s32 1, %s9
  %s12 = scalar_select 0, %s11, %s9
  loop: start=0, step=1, limit=4
  $region2: #{network_block_forward.5} parent=0 // loop_pre_header
    _
  $region3: #{network_block_forward.5} parent=0 // loop_header
    %s14 = sphi 0, %s18
    %p15 = scmp.ge.s32.totalorder %s14, 4
    %s21 = sphi 0, %s33
    %s22 = sphi 0, %s29
    %s23 = sphi 0, %s21
    %s24 = sphi 0, %s22
    %s25 = sphi 0, %s23
    %s26 = sphi 0, %s24
    %s36 = sphi 0, %s38
    %s39 = sphi 0, %s36
    %s40 = sphi 0, %s39
    %s56 = sphi 0, %s40
    %s62 = sphi 0, %s64
    %s65 = sphi 0, %s62
    %s66 = sphi 0, %s65
    %s82 = sphi 0, %s66
    %s88 = sphi 0, %s90
    %s91 = sphi 0, %s88
    %s92 = sphi 0, %s91
    %s108 = sphi 0, %s92
    %s114 = sphi 0, %s116
    %s117 = sphi 0, %s114
    %s118 = sphi 0, %s117
    %s134 = sphi 0, %s118
    %s140 = sphi 0, %s142
    %s143 = sphi 0, %s140
    %s144 = sphi 0, %s143
    %s160 = sphi 0, %s144
    %s166 = sphi 0, %s168
    %s169 = sphi 0, %s166
    %s170 = sphi 0, %s169
    %s186 = sphi 0, %s170
    %s190 = sphi 0, %s190
    %s192 = sphi 0, %s190
    %s193 = sphi 0, %s192
    %s207 = sphi 0, %s193
    %s211 = sphi 0, %s211
    %s213 = sphi 0, %s211
    %s214 = sphi 0, %s213
    %s228 = sphi 0, %s214
    %s236 = sphi 0, %s238
    %s239 = sphi 0, %s236
    %s240 = sphi 0, %s239
    %s256 = sphi 0, %s240
  $region4: #{network_block_forward.5} parent=0 // loop_header_branch
    %17 = sbr.rel (%p15) target = $region8
  $region5: #{network_block_forward.5} parent=0 // loop_body
    %s19 = ssub.s32 %s14, 1
    %s20 = ssub.s32 %s14, 2
    %s27 = sadd.s32 1, %s22
    %p28 = scmp.ge.s32.totalorder %s27, 1
    %s29 = scalar_select %p28, 0, %s27
    %s30 = sadd.s32 1, %s21
    %s31 = scalar_select %p28, %s30, %s21
    %p32 = scmp.ge.s32.totalorder %s31, 2
    %s33 = scalar_select %p32, 0, %s31
    %s34 = ssub.s32 %s21, %s33
    %p35 = scmp.eq.s32.totalorder %s34, 0
    %s37 = sadd.s32 %s36, 1
    %s38 = scalar_select %p35, %s36, %s37
    %p41 = pneg %p35
    %p42 = scmp.eq.s32.totalorder %s14, 1
    %p43 = por %p41, %p42
    %p44 = scmp.ne.s32.totalorder %s36, %s39
    %p45 = scmp.eq.s32.totalorder %s14, 0
    %p46 = por %p44, %p45
    %p47 = scmp.ne.s32.totalorder %s36, %s39
    %p48 = scmp.eq.s32.totalorder %s19, 1
    %p49 = por %p47, %p48
    %p50 = scmp.ne.s32.totalorder %s39, %s40
    %p51 = scmp.eq.s32.totalorder %s19, 0
    %p52 = por %p50, %p51
    %p53 = scmp.ne.s32.totalorder %s39, %s40
    %p54 = scmp.eq.s32.totalorder %s20, 1
    %p55 = por %p53, %p54
    %p57 = scmp.ne.s32.totalorder %s40, %s56
    %p58 = scmp.eq.s32.totalorder %s20, 0
    %p59 = por %p57, %p58
    %s60 = ssub.s32 %s22, %s29
    %p61 = scmp.eq.s32.totalorder %s60, 0
    %s63 = sadd.s32 %s62, 1
    %s64 = scalar_select %p61, %s62, %s63
    %p67 = pneg %p61
    %p68 = scmp.eq.s32.totalorder %s14, 1
    %p69 = por %p67, %p68
    %p70 = scmp.ne.s32.totalorder %s62, %s65
    %p71 = scmp.eq.s32.totalorder %s14, 0
    %p72 = por %p70, %p71
    %p73 = scmp.ne.s32.totalorder %s62, %s65
    %p74 = scmp.eq.s32.totalorder %s19, 1
    %p75 = por %p73, %p74
    %p76 = scmp.ne.s32.totalorder %s65, %s66
    %p77 = scmp.eq.s32.totalorder %s19, 0
    %p78 = por %p76, %p77
    %p79 = scmp.ne.s32.totalorder %s65, %s66
    %p80 = scmp.eq.s32.totalorder %s20, 1
    %p81 = por %p79, %p80
    %p83 = scmp.ne.s32.totalorder %s66, %s82
    %p84 = scmp.eq.s32.totalorder %s20, 0
    %p85 = por %p83, %p84
    %s86 = ssub.s32 %s22, %s29
    %p87 = scmp.eq.s32.totalorder %s86, 0
    %s89 = sadd.s32 %s88, 1
    %s90 = scalar_select %p87, %s88, %s89
    %p93 = pneg %p87
    %p94 = scmp.eq.s32.totalorder %s14, 1
    %p95 = por %p93, %p94
    %p96 = scmp.ne.s32.totalorder %s88, %s91
    %p97 = scmp.eq.s32.totalorder %s14, 0
    %p98 = por %p96, %p97
    %p99 = scmp.ne.s32.totalorder %s88, %s91
    %p100 = scmp.eq.s32.totalorder %s19, 1
    %p101 = por %p99, %p100
    %p102 = scmp.ne.s32.totalorder %s91, %s92
    %p103 = scmp.eq.s32.totalorder %s19, 0
    %p104 = por %p102, %p103
    %p105 = scmp.ne.s32.totalorder %s91, %s92
    %p106 = scmp.eq.s32.totalorder %s20, 1
    %p107 = por %p105, %p106
    %p109 = scmp.ne.s32.totalorder %s92, %s108
    %p110 = scmp.eq.s32.totalorder %s20, 0
    %p111 = por %p109, %p110
    %s112 = ssub.s32 %s21, %s33
    %p113 = scmp.eq.s32.totalorder %s112, 0
    %s115 = sadd.s32 %s114, 1
    %s116 = scalar_select %p113, %s114, %s115
    %p119 = pneg %p113
    %p120 = scmp.eq.s32.totalorder %s14, 1
    %p121 = por %p119, %p120
    %p122 = scmp.ne.s32.totalorder %s114, %s117
    %p123 = scmp.eq.s32.totalorder %s14, 0
    %p124 = por %p122, %p123
    %p125 = scmp.ne.s32.totalorder %s114, %s117
    %p126 = scmp.eq.s32.totalorder %s19, 1
    %p127 = por %p125, %p126
    %p128 = scmp.ne.s32.totalorder %s117, %s118
    %p129 = scmp.eq.s32.totalorder %s19, 0
    %p130 = por %p128, %p129
    %p131 = scmp.ne.s32.totalorder %s117, %s118
    %p132 = scmp.eq.s32.totalorder %s20, 1
    %p133 = por %p131, %p132
    %p135 = scmp.ne.s32.totalorder %s118, %s134
    %p136 = scmp.eq.s32.totalorder %s20, 0
    %p137 = por %p135, %p136
    %s138 = ssub.s32 %s22, %s29
    %p139 = scmp.eq.s32.totalorder %s138, 0
    %s141 = sadd.s32 %s140, 1
    %s142 = scalar_select %p139, %s140, %s141
    %p145 = pneg %p139
    %p146 = scmp.eq.s32.totalorder %s14, 1
    %p147 = por %p145, %p146
    %p148 = scmp.ne.s32.totalorder %s140, %s143
    %p149 = scmp.eq.s32.totalorder %s14, 0
    %p150 = por %p148, %p149
    %p151 = scmp.ne.s32.totalorder %s140, %s143
    %p152 = scmp.eq.s32.totalorder %s19, 1
    %p153 = por %p151, %p152
    %p154 = scmp.ne.s32.totalorder %s143, %s144
    %p155 = scmp.eq.s32.totalorder %s19, 0
    %p156 = por %p154, %p155
    %p157 = scmp.ne.s32.totalorder %s143, %s144
    %p158 = scmp.eq.s32.totalorder %s20, 1
    %p159 = por %p157, %p158
    %p161 = scmp.ne.s32.totalorder %s144, %s160
    %p162 = scmp.eq.s32.totalorder %s20, 0
    %p163 = por %p161, %p162
    %s164 = ssub.s32 %s22, %s29
    %p165 = scmp.eq.s32.totalorder %s164, 0
    %s167 = sadd.s32 %s166, 1
    %s168 = scalar_select %p165, %s166, %s167
    %p171 = pneg %p165
    %p172 = scmp.eq.s32.totalorder %s14, 1
    %p173 = por %p171, %p172
    %p174 = scmp.ne.s32.totalorder %s166, %s169
    %p175 = scmp.eq.s32.totalorder %s14, 0
    %p176 = por %p174, %p175
    %p177 = scmp.ne.s32.totalorder %s166, %s169
    %p178 = scmp.eq.s32.totalorder %s19, 1
    %p179 = por %p177, %p178
    %p180 = scmp.ne.s32.totalorder %s169, %s170
    %p181 = scmp.eq.s32.totalorder %s19, 0
    %p182 = por %p180, %p181
    %p183 = scmp.ne.s32.totalorder %s169, %s170
    %p184 = scmp.eq.s32.totalorder %s20, 1
    %p185 = por %p183, %p184
    %p187 = scmp.ne.s32.totalorder %s170, %s186
    %p188 = scmp.eq.s32.totalorder %s20, 0
    %p189 = por %p187, %p188
    %s191 = sadd.s32 %s190, 1
    %p194 = scmp.eq.s32.totalorder %s14, 1
    %p195 = scmp.ne.s32.totalorder %s190, %s192
    %p196 = scmp.eq.s32.totalorder %s14, 0
    %p197 = por %p195, %p196
    %p198 = scmp.ne.s32.totalorder %s190, %s192
    %p199 = scmp.eq.s32.totalorder %s19, 1
    %p200 = por %p198, %p199
    %p201 = scmp.ne.s32.totalorder %s192, %s193
    %p202 = scmp.eq.s32.totalorder %s19, 0
    %p203 = por %p201, %p202
    %p204 = scmp.ne.s32.totalorder %s192, %s193
    %p205 = scmp.eq.s32.totalorder %s20, 1
    %p206 = por %p204, %p205
    %p208 = scmp.ne.s32.totalorder %s193, %s207
    %p209 = scmp.eq.s32.totalorder %s20, 0
    %p210 = por %p208, %p209
    %s212 = sadd.s32 %s211, 1
    %p215 = scmp.eq.s32.totalorder %s14, 1
    %p216 = scmp.ne.s32.totalorder %s211, %s213
    %p217 = scmp.eq.s32.totalorder %s14, 0
    %p218 = por %p216, %p217
    %p219 = scmp.ne.s32.totalorder %s211, %s213
    %p220 = scmp.eq.s32.totalorder %s19, 1
    %p221 = por %p219, %p220
    %p222 = scmp.ne.s32.totalorder %s213, %s214
    %p223 = scmp.eq.s32.totalorder %s19, 0
    %p224 = por %p222, %p223
    %p225 = scmp.ne.s32.totalorder %s213, %s214
    %p226 = scmp.eq.s32.totalorder %s20, 1
    %p227 = por %p225, %p226
    %p229 = scmp.ne.s32.totalorder %s214, %s228
    %p230 = scmp.eq.s32.totalorder %s20, 0
    %p231 = por %p229, %p230
    %s232 = ssub.s32 %s21, %s33
    %s233 = ssub.s32 %s22, %s29
    %s234 = sor.u32 %s232, %s233
    %p235 = scmp.eq.s32.totalorder %s234, 0
    %s237 = sadd.s32 %s236, 1
    %s238 = scalar_select %p235, %s236, %s237
    %p241 = pneg %p235
    %p242 = scmp.eq.s32.totalorder %s14, 1
    %p243 = por %p241, %p242
    %p244 = scmp.ne.s32.totalorder %s236, %s239
    %p245 = scmp.eq.s32.totalorder %s14, 0
    %p246 = por %p244, %p245
    %p247 = scmp.ne.s32.totalorder %s236, %s239
    %p248 = scmp.eq.s32.totalorder %s19, 1
    %p249 = por %p247, %p248
    %p250 = scmp.ne.s32.totalorder %s239, %s240
    %p251 = scmp.eq.s32.totalorder %s19, 0
    %p252 = por %p250, %p251
    %p253 = scmp.ne.s32.totalorder %s239, %s240
    %p254 = scmp.eq.s32.totalorder %s20, 1
    %p255 = por %p253, %p254
    %p257 = scmp.ne.s32.totalorder %s240, %s256
    %p258 = scmp.eq.s32.totalorder %s20, 0
    %p259 = por %p257, %p258
    %p260 = scmp.le.s32.totalorder 1, %s14
    %p261 = scmp.lt.s32.totalorder %s14, 3
    %p262 = pnand %p260, %p261
    %p263 = pneg %p262
    // Predicated region
    $region9: #{network_block_forward.5} parent=5 // pred_check
      _
    $region10: #{network_block_forward.5} parent=5 // pred_check_branch
      %265 = sbr.rel (%p262) target = $region12
    $region11: #{network_block_forward.5} parent=5 // pred_region
      %s266 = ssub.s32 %s14, 1
      // Predicated region
      $region13: #{network_block_forward.5} parent=11 // pred_check
        %p267 = pneg %p78
      $region14: #{network_block_forward.5} parent=11 // pred_check_branch
        %269 = sbr.rel (%p267) target = $region16
      $region15: #{network_block_forward.5} parent=11 // pred_region
        %p270 = scmp.lt.s32.totalorder %s24, 0
        %s271 = scalar_select %p270, %s24, 0
        %s272 = smul.addr %s271, 4
        %s273 = scalar_lea.vmem %s1, %s272
      $region16: #{network_block_forward.5} parent=11 // pred_fallthru
        _
      // Predicated region
      $region17: #{network_block_forward.5} parent=11 // pred_check
        %p274 = pneg %p104
      $region18: #{network_block_forward.5} parent=11 // pred_check_branch
        %276 = sbr.rel (%p274) target = $region20
      $region19: #{network_block_forward.5} parent=11 // pred_region
        %p277 = scmp.lt.s32.totalorder %s24, 0
        %s278 = scalar_select %p277, %s24, 0
        %s279 = scalar_lea.vmem %s2, %s278
      $region20: #{network_block_forward.5} parent=11 // pred_fallthru
        _
      // Predicated region
      $region21: #{network_block_forward.5} parent=11 // pred_check
        %p280 = pneg %p156
      $region22: #{network_block_forward.5} parent=11 // pred_check_branch
        %282 = sbr.rel (%p280) target = $region24
      $region23: #{network_block_forward.5} parent=11 // pred_region
        %p283 = scmp.lt.s32.totalorder %s24, 0
        %s284 = scalar_select %p283, %s24, 0
        %s285 = smul.addr %s284, 4
        %s286 = scalar_lea.vmem %s4, %s285
      $region24: #{network_block_forward.5} parent=11 // pred_fallthru
        _
      // Predicated region
      $region25: #{network_block_forward.5} parent=11 // pred_check
        %p287 = pneg %p182
      $region26: #{network_block_forward.5} parent=11 // pred_check_branch
        %289 = sbr.rel (%p287) target = $region28
      $region27: #{network_block_forward.5} parent=11 // pred_region
        %p290 = scmp.lt.s32.totalorder %s24, 0
        %s291 = scalar_select %p290, %s24, 0
        %s292 = scalar_lea.vmem %s5, %s291
      $region28: #{network_block_forward.5} parent=11 // pred_fallthru
        _
      // Predicated region
      $region29: #{network_block_forward.5} parent=11 // pred_check
        %p293 = pneg %p203
      $region30: #{network_block_forward.5} parent=11 // pred_check_branch
        %295 = sbr.rel (%p293) target = $region32
      $region31: #{network_block_forward.5} parent=11 // pred_region
        _
      $region32: #{network_block_forward.5} parent=11 // pred_fallthru
        _
      // Predicated region
      $region33: #{network_block_forward.5} parent=11 // pred_check
        %p296 = pneg %p224
      $region34: #{network_block_forward.5} parent=11 // pred_check_branch
        %298 = sbr.rel (%p296) target = $region36
      $region35: #{network_block_forward.5} parent=11 // pred_region
        _
      $region36: #{network_block_forward.5} parent=11 // pred_fallthru
        _
    $region12: #{network_block_forward.5} parent=5 // pred_fallthru
      _
    %p299 = scmp.lt.s32.totalorder %s14, 2
    // Predicated region
    $region37: #{network_block_forward.5} parent=5 // pred_check
      %p300 = pneg %p299
    $region38: #{network_block_forward.5} parent=5 // pred_check_branch
      %302 = sbr.rel (%p300) target = $region40
    $region39: #{network_block_forward.5} parent=5 // pred_region
      // Predicated region
      $region41: #{network_block_forward.5} parent=39 // pred_check
        %p303 = pneg %p46
      $region42: #{network_block_forward.5} parent=39 // pred_check_branch
        %305 = sbr.rel (%p303) target = $region44
      $region43: #{network_block_forward.5} parent=39 // pred_region
        %p306 = scmp.lt.s32.totalorder %s21, 1
        %s307 = scalar_select %p306, %s21, 1
        %s308 = smul.addr %s307, 14
        %s309 = smul.addr %s308, 4
        %s310 = scalar_lea.vmem %s0, %s309
      $region44: #{network_block_forward.5} parent=39 // pred_fallthru
        _
      // Predicated region
      $region45: #{network_block_forward.5} parent=39 // pred_check
        %p311 = pneg %p124
      $region46: #{network_block_forward.5} parent=39 // pred_check_branch
        %313 = sbr.rel (%p311) target = $region48
      $region47: #{network_block_forward.5} parent=39 // pred_region
        %p314 = scmp.lt.s32.totalorder %s21, 1
        %s315 = scalar_select %p314, %s21, 1
        %s316 = smul.addr %s315, 10
        %s317 = smul.addr %s316, 4
        %s318 = scalar_lea.vmem %s3, %s317
      $region48: #{network_block_forward.5} parent=39 // pred_fallthru
        _
    $region40: #{network_block_forward.5} parent=5 // pred_fallthru
      _
    %p319 = scmp.le.s32.totalorder 1, %s14
    %p320 = scmp.lt.s32.totalorder %s14, 3
    %p321 = pnand %p319, %p320
    %p322 = pneg %p321
    // Predicated region
    $region49: #{network_block_forward.5} parent=5 // pred_check
      _
    $region50: #{network_block_forward.5} parent=5 // pred_check_branch
      %324 = sbr.rel (%p321) target = $region52
    $region51: #{network_block_forward.5} parent=5 // pred_region
      %s325 = ssub.s32 %s14, 1
      %p326 = scmp.lt.s32.totalorder %s23, 1
      %s327 = scalar_select %p326, %s23, 1
      %s328 = smul.addr %s327, 14
      %s329 = smul.addr %s328, 4
      %s330 = scalar_lea.vmem %s0, %s329
      %p331 = pneg %p52
      %p332 = pneg %p49
      %p333 = scmp.lt.s32.totalorder %s24, 0
      %s334 = scalar_select %p333, %s24, 0
      %s335 = smul.addr %s334, 4
      %s336 = scalar_lea.vmem %s1, %s335
      %p337 = pneg %p78
      %p338 = pneg %p75
      %p339 = scmp.lt.s32.totalorder %s24, 0
      %s340 = scalar_select %p339, %s24, 0
      %s341 = scalar_lea.vmem %s2, %s340
      %p342 = pneg %p104
      %p343 = pneg %p101
      %p344 = scmp.lt.s32.totalorder %s23, 1
      %s345 = scalar_select %p344, %s23, 1
      %s346 = smul.addr %s345, 10
      %s347 = smul.addr %s346, 4
      %s348 = scalar_lea.vmem %s3, %s347
      %p349 = pneg %p130
      %p350 = pneg %p127
      %p351 = scmp.lt.s32.totalorder %s24, 0
      %s352 = scalar_select %p351, %s24, 0
      %s353 = smul.addr %s352, 4
      %s354 = scalar_lea.vmem %s4, %s353
      %p355 = pneg %p156
      %p356 = pneg %p153
      %p357 = scmp.lt.s32.totalorder %s24, 0
      %s358 = scalar_select %p357, %s24, 0
      %s359 = scalar_lea.vmem %s5, %s358
      %p360 = pneg %p182
      %p361 = pneg %p179
      %p362 = pneg %p203
      %p363 = pneg %p200
      %p364 = pneg %p224
      %p365 = pneg %p221
      %p366 = pneg %p252
      %p367 = pneg %p249
      %p368 = scmp.lt.s32.totalorder %s23, 1
      %s369 = scalar_select %p368, %s23, 1
      %p370 = scmp.lt.s32.totalorder %s24, 0
      %s371 = scalar_select %p370, %s24, 0
      %s372 = smul.addr %s369, 10
      %s373 = sadd.s32 %s371, %s372
      %s374 = smul.addr %s373, 8
      %s375 = scalar_lea.vmem %s8, %s374
      %p376 = scmp.lt.s32.totalorder %s23, 1
      %s377 = scalar_select %p376, %s23, 1
      %s378 = smul.addr %s377, 14
      %s379 = smul.addr %s378, 4
      %s380 = scalar_lea.vmem %s0, %s379
      %p381 = scmp.lt.s32.totalorder %s24, 0
      %s382 = scalar_select %p381, %s24, 0
      %s383 = smul.addr %s382, 4
      %s384 = scalar_lea.vmem %s1, %s383
      %p385 = scmp.lt.s32.totalorder %s24, 0
      %s386 = scalar_select %p385, %s24, 0
      %s387 = scalar_lea.vmem %s2, %s386
      %p388 = scmp.lt.s32.totalorder %s23, 1
      %s389 = scalar_select %p388, %s23, 1
      %s390 = smul.addr %s389, 10
      %s391 = smul.addr %s390, 4
      %s392 = scalar_lea.vmem %s3, %s391
      %p393 = scmp.lt.s32.totalorder %s24, 0
      %s394 = scalar_select %p393, %s24, 0
      %s395 = smul.addr %s394, 4
      %s396 = scalar_lea.vmem %s4, %s395
      %p397 = scmp.lt.s32.totalorder %s24, 0
      %s398 = scalar_select %p397, %s24, 0
      %s399 = scalar_lea.vmem %s5, %s398
      %p400 = scmp.lt.s32.totalorder %s23, 1
      %s401 = scalar_select %p400, %s23, 1
      %p402 = scmp.lt.s32.totalorder %s24, 0
      %s403 = scalar_select %p402, %s24, 0
      %s404 = smul.addr %s401, 10
      %s405 = sadd.s32 %s403, %s404
      %s406 = smul.addr %s405, 8
      %s407 = scalar_lea.vmem %s8, %s406
      %v408 = vld [vmem:[%s380] sm:$0xf]
      %v409 = vld [vmem:[%s380 + $0x4] sm:$0xf]
      %v410 = vld [vmem:[%s380 + $0x8] sm:$0xf]
      %v411 = vld [vmem:[%s380 + $0xc] sm:$0xf]
      %v412 = vld [vmem:[%s380 + $0x10] sm:$0xf]
      %v413 = vld [vmem:[%s380 + $0x14] sm:$0xf]
      %v414 = vld [vmem:[%s380 + $0x18] sm:$0xf]
      %v415 = vld [vmem:[%s380 + $0x1c] sm:$0xf]
      %v416 = vld [vmem:[%s380 + $0x20] sm:$0xf]
      %v417 = vld [vmem:[%s380 + $0x24] sm:$0xf]
      %v418 = vld [vmem:[%s380 + $0x28] sm:$0xf]
      %v419 = vld [vmem:[%s380 + $0x2c] sm:$0xf]
      %v420 = vld [vmem:[%s380 + $0x30] sm:$0xf]
      %v421 = vld [vmem:[%s384] sm:$0xf]
      %v422 = vld [vmem:[%s384 + $0x4] sm:$0xf]
      %v423 = vld [vmem:[%s384 + $0x8] sm:$0xf]
      %v424 = vld [vmem:[%s384 + $0xc] sm:$0xf]
      %v425 = vld [vmem:[%s384 + $0x10] sm:$0xf]
      %v426 = vld [vmem:[%s384 + $0x14] sm:$0xf]
      %v427 = vld [vmem:[%s384 + $0x18] sm:$0xf]
      %v428 = vld [vmem:[%s384 + $0x1c] sm:$0xf]
      %v429 = vld [vmem:[%s384 + $0x20] sm:$0xf]
      %v430 = vld [vmem:[%s384 + $0x24] sm:$0xf]
      %v431 = vld [vmem:[%s384 + $0x28] sm:$0xf]
      %v432 = vld [vmem:[%s384 + $0x2c] sm:$0xf]
      %v433 = vld [vmem:[%s384 + $0x30] sm:$0xf]
      %v434 = vld [vmem:[%s384 + $0x34] sm:$0xf]
      %v435 = vld [vmem:[%s384 + $0x38] sm:$0xf]
      %v436 = vld [vmem:[%s384 + $0x3c] sm:$0xf]
      %v447 = vunpack.c.l.b16 %v408
      %v448 = vunpack.c.l.b16 %v409
      %v449 = vunpack.c.l.b16 %v410
      %v450 = vunpack.c.l.b16 %v411
      %v451 = vunpack.c.l.b16 %v412
      %v452 = vunpack.c.l.b16 %v413
      %v453 = vunpack.c.l.b16 %v414
      %v454 = vunpack.c.l.b16 %v415
      %v455 = vunpack.c.l.b16 %v416
      %v456 = vunpack.c.l.b16 %v417
      %v457 = vpack.c.b16 %v448, %v447
      %v458 = vpack.c.b16 %v450, %v449
      %v459 = vpack.c.b16 %v452, %v451
      %v460 = vpack.c.b16 %v454, %v453
      %v461 = vpack.c.b16 %v456, %v455
      %v483 = vunpack.c.l.b16 %v421
      %v484 = vunpack.c.l.b16 %v422
      %v485 = vunpack.c.l.b16 %v423
      %v486 = vunpack.c.l.b16 %v424
      %v487 = vunpack.c.l.b16 %v425
      %v488 = vunpack.c.l.b16 %v426
      %v489 = vunpack.c.l.b16 %v427
      %v490 = vunpack.c.l.b16 %v428
      %v491 = vunpack.c.l.b16 %v429
      %v492 = vunpack.c.l.b16 %v430
      %v493 = vunpack.c.l.b16 %v431
      %v494 = vunpack.c.l.b16 %v432
      %v495 = vunpack.c.l.b16 %v433
      %v496 = vunpack.c.l.b16 %v434
      %v497 = vunpack.c.l.b16 %v435
      %v498 = vunpack.c.l.b16 %v436
      %v499 = vpack.c.b16 %v484, %v483
      %v500 = vpack.c.b16 %v486, %v485
      %v501 = vpack.c.b16 %v488, %v487
      %v502 = vpack.c.b16 %v490, %v489
      %v503 = vpack.c.b16 %v492, %v491
      %v504 = vpack.c.b16 %v494, %v493
      %v505 = vpack.c.b16 %v496, %v495
      %v506 = vpack.c.b16 %v498, %v497
      %515 = vmatpush.bf16.msra.mxu0 %v506
      %516 = vmatpush.bf16.msra.mxu0 %v505
      %517 = vmatpush.bf16.msra.mxu0 %v504
      %518 = vmatpush.bf16.msra.mxu0 %v503
      %519 = vmatpush.bf16.msra.mxu0 %v502
      %520 = vmatpush.bf16.msra.mxu0 %v501
      %521 = vmatpush.bf16.msra.mxu0 %v500
      %522 = vmatpush.bf16.msra.mxu0 %v499
      %523 = vmatmul.bf16.gmra.mxu0 %v457
      %v524 = vpop.f32.mrf.mxu0
      %v525 = vadd.f32 0.0, %v524
      %v526 = vpop.f32.mrf.mxu0
      %v527 = vadd.f32 0.0, %v526
      %528 = vmatmul.bf16.gmra.mxu0 %v458
      %v529 = vpop.f32.mrf.mxu0
      %v530 = vadd.f32 0.0, %v529
      %v531 = vpop.f32.mrf.mxu0
      %v532 = vadd.f32 0.0, %v531
      %533 = vmatmul.bf16.gmra.mxu0 %v459
      %v534 = vpop.f32.mrf.mxu0
      %v535 = vadd.f32 0.0, %v534
      %v536 = vpop.f32.mrf.mxu0
      %v537 = vadd.f32 0.0, %v536
      %538 = vmatmul.bf16.gmra.mxu0 %v460
      %v539 = vpop.f32.mrf.mxu0
      %v540 = vadd.f32 0.0, %v539
      %v541 = vpop.f32.mrf.mxu0
      %v542 = vadd.f32 0.0, %v541
      %543 = vmatmul.bf16.gmra.mxu0 %v461
      %v544 = vpop.f32.mrf.mxu0
      %v545 = vadd.f32 0.0, %v544
      %v546 = vpop.f32.mrf.mxu0
      %v547 = vadd.f32 0.0, %v546
      %548 = vdwg.mxu0
      %549 = vst [vmem:[#allocation2] sm:$0xff] %v525
      %550 = vst [vmem:[#allocation2 + $0x8] sm:$0xff] %v527
      %551 = vst [vmem:[#allocation2 + $0x10] sm:$0xff] %v530
      %552 = vst [vmem:[#allocation2 + $0x18] sm:$0xff] %v532
      %553 = vst [vmem:[#allocation2 + $0x20] sm:$0xff] %v535
      %554 = vst [vmem:[#allocation2 + $0x28] sm:$0xff] %v537
      %555 = vst [vmem:[#allocation2 + $0x30] sm:$0xff] %v540
      %556 = vst [vmem:[#allocation2 + $0x38] sm:$0xff] %v542
      %557 = vst [vmem:[#allocation2 + $0x40] sm:$0xff] %v545
      %558 = vst [vmem:[#allocation2 + $0x48] sm:$0xff] %v547
      %v559 = vld [vmem:[%s384 + $0x40] sm:$0xf]
      %v560 = vld [vmem:[%s384 + $0x44] sm:$0xf]
      %v561 = vld [vmem:[%s384 + $0x48] sm:$0xf]
      %v562 = vld [vmem:[%s384 + $0x4c] sm:$0xf]
      %v563 = vld [vmem:[%s384 + $0x50] sm:$0xf]
      %v564 = vld [vmem:[%s384 + $0x54] sm:$0xf]
      %v565 = vld [vmem:[%s384 + $0x58] sm:$0xf]
      %v566 = vld [vmem:[%s384 + $0x5c] sm:$0xf]
      %v567 = vld [vmem:[%s384 + $0x60] sm:$0xf]
      %v568 = vld [vmem:[%s384 + $0x64] sm:$0xf]
      %v569 = vld [vmem:[%s384 + $0x68] sm:$0xf]
      %v570 = vld [vmem:[%s384 + $0x6c] sm:$0xf]
      %v571 = vld [vmem:[%s384 + $0x70] sm:$0xf]
      %v572 = vld [vmem:[%s384 + $0x74] sm:$0xf]
      %v573 = vld [vmem:[%s384 + $0x78] sm:$0xf]
      %v574 = vld [vmem:[%s384 + $0x7c] sm:$0xf]
      %v576 = vunpack.c.l.b16 %v418
      %v577 = vpack.c.b16 %v576, %v576
      %vm578 = vsmask.f32 7424
      %v580 = vshrl.u32 %v457, 16
      %v582 = vshll.u32 %v457, 16
      %v584 = vrot.slane %v582, 1
      %v585 = vor.u32 %v580, %v584
      %v587 = vshll.u32 %v458, 16
      %v589 = vrot.slane %v587, 1
      %v590 = vsel %vm578, %v585, %v589
      %v591 = vshrl.u32 %v458, 16
      %v593 = vor.u32 %v591, %v589
      %v595 = vshll.u32 %v459, 16
      %v597 = vrot.slane %v595, 1
      %v598 = vsel %vm578, %v593, %v597
      %v599 = vshrl.u32 %v459, 16
      %v601 = vor.u32 %v599, %v597
      %v603 = vshll.u32 %v460, 16
      %v605 = vrot.slane %v603, 1
      %v606 = vsel %vm578, %v601, %v605
      %v607 = vshrl.u32 %v460, 16
      %v609 = vor.u32 %v607, %v605
      %v611 = vshll.u32 %v461, 16
      %v613 = vrot.slane %v611, 1
      %v614 = vsel %vm578, %v609, %v613
      %v615 = vshrl.u32 %v461, 16
      %v617 = vor.u32 %v615, %v613
      %v619 = vshll.u32 %v577, 16
      %v621 = vrot.slane %v619, 1
      %v622 = vsel %vm578, %v617, %v621
      %v644 = vunpack.c.l.b16 %v559
      %v645 = vunpack.c.l.b16 %v560
      %v646 = vunpack.c.l.b16 %v561
      %v647 = vunpack.c.l.b16 %v562
      %v648 = vunpack.c.l.b16 %v563
      %v649 = vunpack.c.l.b16 %v564
      %v650 = vunpack.c.l.b16 %v565
      %v651 = vunpack.c.l.b16 %v566
      %v652 = vunpack.c.l.b16 %v567
      %v653 = vunpack.c.l.b16 %v568
      %v654 = vunpack.c.l.b16 %v569
      %v655 = vunpack.c.l.b16 %v570
      %v656 = vunpack.c.l.b16 %v571
      %v657 = vunpack.c.l.b16 %v572
      %v658 = vunpack.c.l.b16 %v573
      %v659 = vunpack.c.l.b16 %v574
      %v660 = vpack.c.b16 %v645, %v644
      %v661 = vpack.c.b16 %v647, %v646
      %v662 = vpack.c.b16 %v649, %v648
      %v663 = vpack.c.b16 %v651, %v650
      %v664 = vpack.c.b16 %v653, %v652
      %v665 = vpack.c.b16 %v655, %v654
      %v666 = vpack.c.b16 %v657, %v656
      %v667 = vpack.c.b16 %v659, %v658
      %676 = vmatpush.bf16.msra.mxu0 %v667
      %677 = vmatpush.bf16.msra.mxu0 %v666
      %678 = vmatpush.bf16.msra.mxu0 %v665
      %679 = vmatpush.bf16.msra.mxu0 %v664
      %680 = vmatpush.bf16.msra.mxu0 %v663
      %681 = vmatpush.bf16.msra.mxu0 %v662
      %682 = vmatpush.bf16.msra.mxu0 %v661
      %683 = vmatpush.bf16.msra.mxu0 %v660
      %684 = vmatmul.bf16.gmra.mxu0 %v590
      %v685 = vpop.f32.mrf.mxu0
      %v686 = vadd.f32 0.0, %v685
      %v687 = vpop.f32.mrf.mxu0
      %v688 = vadd.f32 0.0, %v687
      %689 = vmatmul.bf16.gmra.mxu0 %v598
      %v690 = vpop.f32.mrf.mxu0
      %v691 = vadd.f32 0.0, %v690
      %v692 = vpop.f32.mrf.mxu0
      %v693 = vadd.f32 0.0, %v692
      %694 = vmatmul.bf16.gmra.mxu0 %v606
      %v695 = vpop.f32.mrf.mxu0
      %v696 = vadd.f32 0.0, %v695
      %v697 = vpop.f32.mrf.mxu0
      %v698 = vadd.f32 0.0, %v697
      %699 = vmatmul.bf16.gmra.mxu0 %v614
      %v700 = vpop.f32.mrf.mxu0
      %v701 = vadd.f32 0.0, %v700
      %v702 = vpop.f32.mrf.mxu0
      %v703 = vadd.f32 0.0, %v702
      %704 = vmatmul.bf16.gmra.mxu0 %v622
      %v705 = vpop.f32.mrf.mxu0
      %v706 = vadd.f32 0.0, %v705
      %v707 = vpop.f32.mrf.mxu0
      %v708 = vadd.f32 0.0, %v707
      %709 = vdwg.mxu0
      %v710 = vld [vmem:[#allocation2] sm:$0xff]
      %v711 = vld [vmem:[#allocation2 + $0x8] sm:$0xff]
      %v712 = vld [vmem:[#allocation2 + $0x10] sm:$0xff]
      %v713 = vld [vmem:[#allocation2 + $0x18] sm:$0xff]
      %v714 = vld [vmem:[#allocation2 + $0x20] sm:$0xff]
      %v715 = vld [vmem:[#allocation2 + $0x28] sm:$0xff]
      %v716 = vld [vmem:[#allocation2 + $0x30] sm:$0xff]
      %v717 = vld [vmem:[#allocation2 + $0x38] sm:$0xff]
      %v718 = vld [vmem:[#allocation2 + $0x40] sm:$0xff]
      %v719 = vld [vmem:[#allocation2 + $0x48] sm:$0xff]
      %v720 = vadd.f32 %v710, %v686
      %v721 = vadd.f32 %v711, %v688
      %v722 = vadd.f32 %v712, %v691
      %v723 = vadd.f32 %v713, %v693
      %v724 = vadd.f32 %v714, %v696
      %v725 = vadd.f32 %v715, %v698
      %v726 = vadd.f32 %v716, %v701
      %v727 = vadd.f32 %v717, %v703
      %v728 = vadd.f32 %v718, %v706
      %v729 = vadd.f32 %v719, %v708
      %730 = vst [vmem:[#allocation2] sm:$0xff] %v720
      %731 = vst [vmem:[#allocation2 + $0x8] sm:$0xff] %v721
      %732 = vst [vmem:[#allocation2 + $0x10] sm:$0xff] %v722
      %733 = vst [vmem:[#allocation2 + $0x18] sm:$0xff] %v723
      %734 = vst [vmem:[#allocation2 + $0x20] sm:$0xff] %v724
      %735 = vst [vmem:[#allocation2 + $0x28] sm:$0xff] %v725
      %736 = vst [vmem:[#allocation2 + $0x30] sm:$0xff] %v726
      %737 = vst [vmem:[#allocation2 + $0x38] sm:$0xff] %v727
      %738 = vst [vmem:[#allocation2 + $0x40] sm:$0xff] %v728
      %739 = vst [vmem:[#allocation2 + $0x48] sm:$0xff] %v729
      %v740 = vld [vmem:[%s384 + $0x80] sm:$0xf]
      %v741 = vld [vmem:[%s384 + $0x84] sm:$0xf]
      %v742 = vld [vmem:[%s384 + $0x88] sm:$0xf]
      %v743 = vld [vmem:[%s384 + $0x8c] sm:$0xf]
      %v744 = vld [vmem:[%s384 + $0x90] sm:$0xf]
      %v745 = vld [vmem:[%s384 + $0x94] sm:$0xf]
      %v746 = vld [vmem:[%s384 + $0x98] sm:$0xf]
      %v747 = vld [vmem:[%s384 + $0x9c] sm:$0xf]
      %v748 = vld [vmem:[%s384 + $0xa0] sm:$0xf]
      %v749 = vld [vmem:[%s384 + $0xa4] sm:$0xf]
      %v750 = vld [vmem:[%s384 + $0xa8] sm:$0xf]
      %v751 = vld [vmem:[%s384 + $0xac] sm:$0xf]
      %v752 = vld [vmem:[%s384 + $0xb0] sm:$0xf]
      %v753 = vld [vmem:[%s384 + $0xb4] sm:$0xf]
      %v754 = vld [vmem:[%s384 + $0xb8] sm:$0xf]
      %v755 = vld [vmem:[%s384 + $0xbc] sm:$0xf]
      %vm756 = vcmask 1046528
      %v757 = vrot.slane %v457, 1
      %v758 = vrot.slane %v458, 1
      %v759 = vsel %vm756, %v757, %v758
      %v760 = vrot.slane %v459, 1
      %v761 = vsel %vm756, %v758, %v760
      %v762 = vrot.slane %v460, 1
      %v763 = vsel %vm756, %v760, %v762
      %v764 = vrot.slane %v461, 1
      %v765 = vsel %vm756, %v762, %v764
      %v766 = vrot.slane %v577, 1
      %v767 = vsel %vm756, %v764, %v766
      %v789 = vunpack.c.l.b16 %v740
      %v790 = vunpack.c.l.b16 %v741
      %v791 = vunpack.c.l.b16 %v742
      %v792 = vunpack.c.l.b16 %v743
      %v793 = vunpack.c.l.b16 %v744
      %v794 = vunpack.c.l.b16 %v745
      %v795 = vunpack.c.l.b16 %v746
      %v796 = vunpack.c.l.b16 %v747
      %v797 = vunpack.c.l.b16 %v748
      %v798 = vunpack.c.l.b16 %v749
      %v799 = vunpack.c.l.b16 %v750
      %v800 = vunpack.c.l.b16 %v751
      %v801 = vunpack.c.l.b16 %v752
      %v802 = vunpack.c.l.b16 %v753
      %v803 = vunpack.c.l.b16 %v754
      %v804 = vunpack.c.l.b16 %v755
      %v805 = vpack.c.b16 %v790, %v789
      %v806 = vpack.c.b16 %v792, %v791
      %v807 = vpack.c.b16 %v794, %v793
      %v808 = vpack.c.b16 %v796, %v795
      %v809 = vpack.c.b16 %v798, %v797
      %v810 = vpack.c.b16 %v800, %v799
      %v811 = vpack.c.b16 %v802, %v801
      %v812 = vpack.c.b16 %v804, %v803
      %821 = vmatpush.bf16.msra.mxu0 %v812
      %822 = vmatpush.bf16.msra.mxu0 %v811
      %823 = vmatpush.bf16.msra.mxu0 %v810
      %824 = vmatpush.bf16.msra.mxu0 %v809
      %825 = vmatpush.bf16.msra.mxu0 %v808
      %826 = vmatpush.bf16.msra.mxu0 %v807
      %827 = vmatpush.bf16.msra.mxu0 %v806
      %828 = vmatpush.bf16.msra.mxu0 %v805
      %829 = vmatmul.bf16.gmra.mxu0 %v759
      %v830 = vpop.f32.mrf.mxu0
      %v831 = vadd.f32 0.0, %v830
      %v832 = vpop.f32.mrf.mxu0
      %v833 = vadd.f32 0.0, %v832
      %834 = vmatmul.bf16.gmra.mxu0 %v761
      %v835 = vpop.f32.mrf.mxu0
      %v836 = vadd.f32 0.0, %v835
      %v837 = vpop.f32.mrf.mxu0
      %v838 = vadd.f32 0.0, %v837
      %839 = vmatmul.bf16.gmra.mxu0 %v763
      %v840 = vpop.f32.mrf.mxu0
      %v841 = vadd.f32 0.0, %v840
      %v842 = vpop.f32.mrf.mxu0
      %v843 = vadd.f32 0.0, %v842
      %844 = vmatmul.bf16.gmra.mxu0 %v765
      %v845 = vpop.f32.mrf.mxu0
      %v846 = vadd.f32 0.0, %v845
      %v847 = vpop.f32.mrf.mxu0
      %v848 = vadd.f32 0.0, %v847
      %849 = vmatmul.bf16.gmra.mxu0 %v767
      %v850 = vpop.f32.mrf.mxu0
      %v851 = vadd.f32 0.0, %v850
      %v852 = vpop.f32.mrf.mxu0
      %v853 = vadd.f32 0.0, %v852
      %854 = vdwg.mxu0
      %v855 = vld [vmem:[#allocation2] sm:$0xff]
      %v856 = vld [vmem:[#allocation2 + $0x8] sm:$0xff]
      %v857 = vld [vmem:[#allocation2 + $0x10] sm:$0xff]
      %v858 = vld [vmem:[#allocation2 + $0x18] sm:$0xff]
      %v859 = vld [vmem:[#allocation2 + $0x20] sm:$0xff]
      %v860 = vld [vmem:[#allocation2 + $0x28] sm:$0xff]
      %v861 = vld [vmem:[#allocation2 + $0x30] sm:$0xff]
      %v862 = vld [vmem:[#allocation2 + $0x38] sm:$0xff]
      %v863 = vld [vmem:[#allocation2 + $0x40] sm:$0xff]
      %v864 = vld [vmem:[#allocation2 + $0x48] sm:$0xff]
      %v865 = vadd.f32 %v855, %v831
      %v866 = vadd.f32 %v856, %v833
      %v867 = vadd.f32 %v857, %v836
      %v868 = vadd.f32 %v858, %v838
      %v869 = vadd.f32 %v859, %v841
      %v870 = vadd.f32 %v860, %v843
      %v871 = vadd.f32 %v861, %v846
      %v872 = vadd.f32 %v862, %v848
      %v873 = vadd.f32 %v863, %v851
      %v874 = vadd.f32 %v864, %v853
      %875 = vst [vmem:[#allocation2] sm:$0xff] %v865
      %876 = vst [vmem:[#allocation2 + $0x8] sm:$0xff] %v866
      %877 = vst [vmem:[#allocation2 + $0x10] sm:$0xff] %v867
      %878 = vst [vmem:[#allocation2 + $0x18] sm:$0xff] %v868
      %879 = vst [vmem:[#allocation2 + $0x20] sm:$0xff] %v869
      %880 = vst [vmem:[#allocation2 + $0x28] sm:$0xff] %v870
      %881 = vst [vmem:[#allocation2 + $0x30] sm:$0xff] %v871
      %882 = vst [vmem:[#allocation2 + $0x38] sm:$0xff] %v872
      %883 = vst [vmem:[#allocation2 + $0x40] sm:$0xff] %v873
      %884 = vst [vmem:[#allocation2 + $0x48] sm:$0xff] %v874
      %v885 = vld [vmem:[%s384 + $0xc0] sm:$0xf]
      %v886 = vld [vmem:[%s384 + $0xc4] sm:$0xf]
      %v887 = vld [vmem:[%s384 + $0xc8] sm:$0xf]
      %v888 = vld [vmem:[%s384 + $0xcc] sm:$0xf]
      %v889 = vld [vmem:[%s384 + $0xd0] sm:$0xf]
      %v890 = vld [vmem:[%s384 + $0xd4] sm:$0xf]
      %v891 = vld [vmem:[%s384 + $0xd8] sm:$0xf]
      %v892 = vld [vmem:[%s384 + $0xdc] sm:$0xf]
      %v893 = vld [vmem:[%s384 + $0xe0] sm:$0xf]
      %v894 = vld [vmem:[%s384 + $0xe4] sm:$0xf]
      %v895 = vld [vmem:[%s384 + $0xe8] sm:$0xf]
      %v896 = vld [vmem:[%s384 + $0xec] sm:$0xf]
      %v897 = vld [vmem:[%s384 + $0xf0] sm:$0xf]
      %v898 = vld [vmem:[%s384 + $0xf4] sm:$0xf]
      %v899 = vld [vmem:[%s384 + $0xf8] sm:$0xf]
      %v900 = vld [vmem:[%s384 + $0xfc] sm:$0xf]
      %v902 = vunpack.c.l.b16 %v419
      %v903 = vpack.c.b16 %v449, %v448
      %v904 = vpack.c.b16 %v451, %v450
      %v905 = vpack.c.b16 %v453, %v452
      %v906 = vpack.c.b16 %v455, %v454
      %v907 = vpack.c.b16 %v576, %v456
      %v908 = vpack.c.b16 %v902, %v902
      %v909 = vrot.slane %v903, 1
      %v910 = vrot.slane %v904, 1
      %v911 = vsel %vm756, %v909, %v910
      %v912 = vrot.slane %v905, 1
      %v913 = vsel %vm756, %v910, %v912
      %v914 = vrot.slane %v906, 1
      %v915 = vsel %vm756, %v912, %v914
      %v916 = vrot.slane %v907, 1
      %v917 = vsel %vm756, %v914, %v916
      %v918 = vrot.slane %v908, 1
      %v919 = vsel %vm756, %v916, %v918
      %v941 = vunpack.c.l.b16 %v885
      %v942 = vunpack.c.l.b16 %v886
      %v943 = vunpack.c.l.b16 %v887
      %v944 = vunpack.c.l.b16 %v888
      %v945 = vunpack.c.l.b16 %v889
      %v946 = vunpack.c.l.b16 %v890
      %v947 = vunpack.c.l.b16 %v891
      %v948 = vunpack.c.l.b16 %v892
      %v949 = vunpack.c.l.b16 %v893
      %v950 = vunpack.c.l.b16 %v894
      %v951 = vunpack.c.l.b16 %v895
      %v952 = vunpack.c.l.b16 %v896
      %v953 = vunpack.c.l.b16 %v897
      %v954 = vunpack.c.l.b16 %v898
      %v955 = vunpack.c.l.b16 %v899
      %v956 = vunpack.c.l.b16 %v900
      %v957 = vpack.c.b16 %v942, %v941
      %v958 = vpack.c.b16 %v944, %v943
      %v959 = vpack.c.b16 %v946, %v945
      %v960 = vpack.c.b16 %v948, %v947
      %v961 = vpack.c.b16 %v950, %v949
      %v962 = vpack.c.b16 %v952, %v951
      %v963 = vpack.c.b16 %v954, %v953
      %v964 = vpack.c.b16 %v956, %v955
      %973 = vmatpush.bf16.msra.mxu0 %v964
      %974 = vmatpush.bf16.msra.mxu0 %v963
      %975 = vmatpush.bf16.msra.mxu0 %v962
      %976 = vmatpush.bf16.msra.mxu0 %v961
      %977 = vmatpush.bf16.msra.mxu0 %v960
      %978 = vmatpush.bf16.msra.mxu0 %v959
      %979 = vmatpush.bf16.msra.mxu0 %v958
      %980 = vmatpush.bf16.msra.mxu0 %v957
      %981 = vmatmul.bf16.gmra.mxu0 %v911
      %v982 = vpop.f32.mrf.mxu0
      %v983 = vadd.f32 0.0, %v982
      %v984 = vpop.f32.mrf.mxu0
      %v985 = vadd.f32 0.0, %v984
      %986 = vmatmul.bf16.gmra.mxu0 %v913
      %v987 = vpop.f32.mrf.mxu0
      %v988 = vadd.f32 0.0, %v987
      %v989 = vpop.f32.mrf.mxu0
      %v990 = vadd.f32 0.0, %v989
      %991 = vmatmul.bf16.gmra.mxu0 %v915
      %v992 = vpop.f32.mrf.mxu0
      %v993 = vadd.f32 0.0, %v992
      %v994 = vpop.f32.mrf.mxu0
      %v995 = vadd.f32 0.0, %v994
      %996 = vmatmul.bf16.gmra.mxu0 %v917
      %v997 = vpop.f32.mrf.mxu0
      %v998 = vadd.f32 0.0, %v997
      %v999 = vpop.f32.mrf.mxu0
      %v1000 = vadd.f32 0.0, %v999
      %1001 = vmatmul.bf16.gmra.mxu0 %v919
      %v1002 = vpop.f32.mrf.mxu0
      %v1003 = vadd.f32 0.0, %v1002
      %v1004 = vpop.f32.mrf.mxu0
      %v1005 = vadd.f32 0.0, %v1004
      %1006 = vdwg.mxu0
      %v1007 = vld [vmem:[#allocation2] sm:$0xff]
      %v1008 = vld [vmem:[#allocation2 + $0x8] sm:$0xff]
      %v1009 = vld [vmem:[#allocation2 + $0x10] sm:$0xff]
      %v1010 = vld [vmem:[#allocation2 + $0x18] sm:$0xff]
      %v1011 = vld [vmem:[#allocation2 + $0x20] sm:$0xff]
      %v1012 = vld [vmem:[#allocation2 + $0x28] sm:$0xff]
      %v1013 = vld [vmem:[#allocation2 + $0x30] sm:$0xff]
      %v1014 = vld [vmem:[#allocation2 + $0x38] sm:$0xff]
      %v1015 = vld [vmem:[#allocation2 + $0x40] sm:$0xff]
      %v1016 = vld [vmem:[#allocation2 + $0x48] sm:$0xff]
      %v1017 = vadd.f32 %v1007, %v983
      %v1018 = vadd.f32 %v1008, %v985
      %v1019 = vadd.f32 %v1009, %v988
      %v1020 = vadd.f32 %v1010, %v990
      %v1021 = vadd.f32 %v1011, %v993
      %v1022 = vadd.f32 %v1012, %v995
      %v1023 = vadd.f32 %v1013, %v998
      %v1024 = vadd.f32 %v1014, %v1000
      %v1025 = vadd.f32 %v1015, %v1003
      %v1026 = vadd.f32 %v1016, %v1005
      %1027 = vst [vmem:[#allocation2] sm:$0xff] %v1017
      %1028 = vst [vmem:[#allocation2 + $0x8] sm:$0xff] %v1018
      %1029 = vst [vmem:[#allocation2 + $0x10] sm:$0xff] %v1019
      %1030 = vst [vmem:[#allocation2 + $0x18] sm:$0xff] %v1020
      %1031 = vst [vmem:[#allocation2 + $0x20] sm:$0xff] %v1021
      %1032 = vst [vmem:[#allocation2 + $0x28] sm:$0xff] %v1022
      %1033 = vst [vmem:[#allocation2 + $0x30] sm:$0xff] %v1023
      %1034 = vst [vmem:[#allocation2 + $0x38] sm:$0xff] %v1024
      %1035 = vst [vmem:[#allocation2 + $0x40] sm:$0xff] %v1025
      %1036 = vst [vmem:[#allocation2 + $0x48] sm:$0xff] %v1026
      %v1037 = vld [vmem:[%s384 + $0x100] sm:$0xf]
      %v1038 = vld [vmem:[%s384 + $0x104] sm:$0xf]
      %v1039 = vld [vmem:[%s384 + $0x108] sm:$0xf]
      %v1040 = vld [vmem:[%s384 + $0x10c] sm:$0xf]
      %v1041 = vld [vmem:[%s384 + $0x110] sm:$0xf]
      %v1042 = vld [vmem:[%s384 + $0x114] sm:$0xf]
      %v1043 = vld [vmem:[%s384 + $0x118] sm:$0xf]
      %v1044 = vld [vmem:[%s384 + $0x11c] sm:$0xf]
      %v1045 = vld [vmem:[%s384 + $0x120] sm:$0xf]
      %v1046 = vld [vmem:[%s384 + $0x124] sm:$0xf]
      %v1047 = vld [vmem:[%s384 + $0x128] sm:$0xf]
      %v1048 = vld [vmem:[%s384 + $0x12c] sm:$0xf]
      %v1049 = vld [vmem:[%s384 + $0x130] sm:$0xf]
      %v1050 = vld [vmem:[%s384 + $0x134] sm:$0xf]
      %v1051 = vld [vmem:[%s384 + $0x138] sm:$0xf]
      %v1052 = vld [vmem:[%s384 + $0x13c] sm:$0xf]
      %vm1053 = vsmask.f32 6400
      %v1055 = vshrl.u32 %v903, 16
      %v1057 = vrot.slane %v1055, 1
      %v1058 = vshll.u32 %v903, 16
      %v1060 = vrot.slane %v1058, 2
      %v1061 = vor.u32 %v1057, %v1060
      %v1063 = vshrl.u32 %v904, 16
      %v1065 = vrot.slane %v1063, 1
      %v1066 = vshll.u32 %v904, 16
      %v1068 = vrot.slane %v1066, 2
      %v1069 = vor.u32 %v1065, %v1068
      %v1070 = vsel %vm1053, %v1061, %v1069
      %v1072 = vshrl.u32 %v905, 16
      %v1074 = vrot.slane %v1072, 1
      %v1075 = vshll.u32 %v905, 16
      %v1077 = vrot.slane %v1075, 2
      %v1078 = vor.u32 %v1074, %v1077
      %v1079 = vsel %vm1053, %v1069, %v1078
      %v1081 = vshrl.u32 %v906, 16
      %v1083 = vrot.slane %v1081, 1
      %v1084 = vshll.u32 %v906, 16
      %v1086 = vrot.slane %v1084, 2
      %v1087 = vor.u32 %v1083, %v1086
      %v1088 = vsel %vm1053, %v1078, %v1087
      %v1090 = vshrl.u32 %v907, 16
      %v1092 = vrot.slane %v1090, 1
      %v1093 = vshll.u32 %v907, 16
      %v1095 = vrot.slane %v1093, 2
      %v1096 = vor.u32 %v1092, %v1095
      %v1097 = vsel %vm1053, %v1087, %v1096
      %v1099 = vshrl.u32 %v908, 16
      %v1101 = vrot.slane %v1099, 1
      %v1102 = vshll.u32 %v908, 16
      %v1104 = vrot.slane %v1102, 2
      %v1105 = vor.u32 %v1101, %v1104
      %v1106 = vsel %vm1053, %v1096, %v1105
      %v1128 = vunpack.c.l.b16 %v1037
      %v1129 = vunpack.c.l.b16 %v1038
      %v1130 = vunpack.c.l.b16 %v1039
      %v1131 = vunpack.c.l.b16 %v1040
      %v1132 = vunpack.c.l.b16 %v1041
      %v1133 = vunpack.c.l.b16 %v1042
      %v1134 = vunpack.c.l.b16 %v1043
      %v1135 = vunpack.c.l.b16 %v1044
      %v1136 = vunpack.c.l.b16 %v1045
      %v1137 = vunpack.c.l.b16 %v1046
      %v1138 = vunpack.c.l.b16 %v1047
      %v1139 = vunpack.c.l.b16 %v1048
      %v1140 = vunpack.c.l.b16 %v1049
      %v1141 = vunpack.c.l.b16 %v1050
      %v1142 = vunpack.c.l.b16 %v1051
      %v1143 = vunpack.c.l.b16 %v1052
      %v1144 = vpack.c.b16 %v1129, %v1128
      %v1145 = vpack.c.b16 %v1131, %v1130
      %v1146 = vpack.c.b16 %v1133, %v1132
      %v1147 = vpack.c.b16 %v1135, %v1134
      %v1148 = vpack.c.b16 %v1137, %v1136
      %v1149 = vpack.c.b16 %v1139, %v1138
      %v1150 = vpack.c.b16 %v1141, %v1140
      %v1151 = vpack.c.b16 %v1143, %v1142
      %1160 = vmatpush.bf16.msra.mxu0 %v1151
      %1161 = vmatpush.bf16.msra.mxu0 %v1150
      %1162 = vmatpush.bf16.msra.mxu0 %v1149
      %1163 = vmatpush.bf16.msra.mxu0 %v1148
      %1164 = vmatpush.bf16.msra.mxu0 %v1147
      %1165 = vmatpush.bf16.msra.mxu0 %v1146
      %1166 = vmatpush.bf16.msra.mxu0 %v1145
      %1167 = vmatpush.bf16.msra.mxu0 %v1144
      %1168 = vmatmul.bf16.gmra.mxu0 %v1070
      %v1169 = vpop.f32.mrf.mxu0
      %v1170 = vadd.f32 0.0, %v1169
      %v1171 = vpop.f32.mrf.mxu0
      %v1172 = vadd.f32 0.0, %v1171
      %1173 = vmatmul.bf16.gmra.mxu0 %v1079
      %v1174 = vpop.f32.mrf.mxu0
      %v1175 = vadd.f32 0.0, %v1174
      %v1176 = vpop.f32.mrf.mxu0
      %v1177 = vadd.f32 0.0, %v1176
      %1178 = vmatmul.bf16.gmra.mxu0 %v1088
      %v1179 = vpop.f32.mrf.mxu0
      %v1180 = vadd.f32 0.0, %v1179
      %v1181 = vpop.f32.mrf.mxu0
      %v1182 = vadd.f32 0.0, %v1181
      %1183 = vmatmul.bf16.gmra.mxu0 %v1097
      %v1184 = vpop.f32.mrf.mxu0
      %v1185 = vadd.f32 0.0, %v1184
      %v1186 = vpop.f32.mrf.mxu0
      %v1187 = vadd.f32 0.0, %v1186
      %1188 = vmatmul.bf16.gmra.mxu0 %v1106
      %v1189 = vpop.f32.mrf.mxu0
      %v1190 = vadd.f32 0.0, %v1189
      %v1191 = vpop.f32.mrf.mxu0
      %v1192 = vadd.f32 0.0, %v1191
      %1193 = vdwg.mxu0
      %v1194 = vld [vmem:[#allocation2] sm:$0xff]
      %v1195 = vld [vmem:[#allocation2 + $0x8] sm:$0xff]
      %v1196 = vld [vmem:[#allocation2 + $0x10] sm:$0xff]
      %v1197 = vld [vmem:[#allocation2 + $0x18] sm:$0xff]
      %v1198 = vld [vmem:[#allocation2 + $0x20] sm:$0xff]
      %v1199 = vld [vmem:[#allocation2 + $0x28] sm:$0xff]
      %v1200 = vld [vmem:[#allocation2 + $0x30] sm:$0xff]
      %v1201 = vld [vmem:[#allocation2 + $0x38] sm:$0xff]
      %v1202 = vld [vmem:[#allocation2 + $0x40] sm:$0xff]
      %v1203 = vld [vmem:[#allocation2 + $0x48] sm:$0xff]
      %v1204 = vadd.f32 %v1194, %v1170
      %v1205 = vadd.f32 %v1195, %v1172
      %v1206 = vadd.f32 %v1196, %v1175
      %v1207 = vadd.f32 %v1197, %v1177
      %v1208 = vadd.f32 %v1198, %v1180
      %v1209 = vadd.f32 %v1199, %v1182
      %v1210 = vadd.f32 %v1200, %v1185
      %v1211 = vadd.f32 %v1201, %v1187
      %v1212 = vadd.f32 %v1202, %v1190
      %v1213 = vadd.f32 %v1203, %v1192
      %1214 = vst [vmem:[#allocation2] sm:$0xff] %v1204
      %1215 = vst [vmem:[#allocation2 + $0x8] sm:$0xff] %v1205
      %1216 = vst [vmem:[#allocation2 + $0x10] sm:$0xff] %v1206
      %1217 = vst [vmem:[#allocation2 + $0x18] sm:$0xff] %v1207
      %1218 = vst [vmem:[#allocation2 + $0x20] sm:$0xff] %v1208
      %1219 = vst [vmem:[#allocation2 + $0x28] sm:$0xff] %v1209
      %1220 = vst [vmem:[#allocation2 + $0x30] sm:$0xff] %v1210
      %1221 = vst [vmem:[#allocation2 + $0x38] sm:$0xff] %v1211
      %1222 = vst [vmem:[#allocation2 + $0x40] sm:$0xff] %v1212
      %1223 = vst [vmem:[#allocation2 + $0x48] sm:$0xff] %v1213
      %v1224 = vld [vmem:[%s384 + $0x140] sm:$0xf]
      %v1225 = vld [vmem:[%s384 + $0x144] sm:$0xf]
      %v1226 = vld [vmem:[%s384 + $0x148] sm:$0xf]
      %v1227 = vld [vmem:[%s384 + $0x14c] sm:$0xf]
      %v1228 = vld [vmem:[%s384 + $0x150] sm:$0xf]
      %v1229 = vld [vmem:[%s384 + $0x154] sm:$0xf]
      %v1230 = vld [vmem:[%s384 + $0x158] sm:$0xf]
      %v1231 = vld [vmem:[%s384 + $0x15c] sm:$0xf]
      %v1232 = vld [vmem:[%s384 + $0x160] sm:$0xf]
      %v1233 = vld [vmem:[%s384 + $0x164] sm:$0xf]
      %v1234 = vld [vmem:[%s384 + $0x168] sm:$0xf]
      %v1235 = vld [vmem:[%s384 + $0x16c] sm:$0xf]
      %v1236 = vld [vmem:[%s384 + $0x170] sm:$0xf]
      %v1237 = vld [vmem:[%s384 + $0x174] sm:$0xf]
      %v1238 = vld [vmem:[%s384 + $0x178] sm:$0xf]
      %v1239 = vld [vmem:[%s384 + $0x17c] sm:$0xf]
      %vm1240 = vcmask 1045504
      %v1241 = vrot.slane %v903, 2
      %v1242 = vrot.slane %v904, 2
      %v1243 = vsel %vm1240, %v1241, %v1242
      %v1244 = vrot.slane %v905, 2
      %v1245 = vsel %vm1240, %v1242, %v1244
      %v1246 = vrot.slane %v906, 2
      %v1247 = vsel %vm1240, %v1244, %v1246
      %v1248 = vrot.slane %v907, 2
      %v1249 = vsel %vm1240, %v1246, %v1248
      %v1250 = vrot.slane %v908, 2
      %v1251 = vsel %vm1240, %v1248, %v1250
      %v1273 = vunpack.c.l.b16 %v1224
      %v1274 = vunpack.c.l.b16 %v1225
      %v1275 = vunpack.c.l.b16 %v1226
      %v1276 = vunpack.c.l.b16 %v1227
      %v1277 = vunpack.c.l.b16 %v1228
      %v1278 = vunpack.c.l.b16 %v1229
      %v1279 = vunpack.c.l.b16 %v1230
      %v1280 = vunpack.c.l.b16 %v1231
      %v1281 = vunpack.c.l.b16 %v1232
      %v1282 = vunpack.c.l.b16 %v1233
      %v1283 = vunpack.c.l.b16 %v1234
      %v1284 = vunpack.c.l.b16 %v1235
      %v1285 = vunpack.c.l.b16 %v1236
      %v1286 = vunpack.c.l.b16 %v1237
      %v1287 = vunpack.c.l.b16 %v1238
      %v1288 = vunpack.c.l.b16 %v1239
      %v1289 = vpack.c.b16 %v1274, %v1273
      %v1290 = vpack.c.b16 %v1276, %v1275
      %v1291 = vpack.c.b16 %v1278, %v1277
      %v1292 = vpack.c.b16 %v1280, %v1279
      %v1293 = vpack.c.b16 %v1282, %v1281
      %v1294 = vpack.c.b16 %v1284, %v1283
      %v1295 = vpack.c.b16 %v1286, %v1285
      %v1296 = vpack.c.b16 %v1288, %v1287
      %1305 = vmatpush.bf16.msra.mxu0 %v1296
      %1306 = vmatpush.bf16.msra.mxu0 %v1295
      %1307 = vmatpush.bf16.msra.mxu0 %v1294
      %1308 = vmatpush.bf16.msra.mxu0 %v1293
      %1309 = vmatpush.bf16.msra.mxu0 %v1292
      %1310 = vmatpush.bf16.msra.mxu0 %v1291
      %1311 = vmatpush.bf16.msra.mxu0 %v1290
      %1312 = vmatpush.bf16.msra.mxu0 %v1289
      %1313 = vmatmul.bf16.gmra.mxu0 %v1243
      %v1314 = vpop.f32.mrf.mxu0
      %v1315 = vadd.f32 0.0, %v1314
      %v1316 = vpop.f32.mrf.mxu0
      %v1317 = vadd.f32 0.0, %v1316
      %1318 = vmatmul.bf16.gmra.mxu0 %v1245
      %v1319 = vpop.f32.mrf.mxu0
      %v1320 = vadd.f32 0.0, %v1319
      %v1321 = vpop.f32.mrf.mxu0
      %v1322 = vadd.f32 0.0, %v1321
      %1323 = vmatmul.bf16.gmra.mxu0 %v1247
      %v1324 = vpop.f32.mrf.mxu0
      %v1325 = vadd.f32 0.0, %v1324
      %v1326 = vpop.f32.mrf.mxu0
      %v1327 = vadd.f32 0.0, %v1326
      %1328 = vmatmul.bf16.gmra.mxu0 %v1249
      %v1329 = vpop.f32.mrf.mxu0
      %v1330 = vadd.f32 0.0, %v1329
      %v1331 = vpop.f32.mrf.mxu0
      %v1332 = vadd.f32 0.0, %v1331
      %1333 = vmatmul.bf16.gmra.mxu0 %v1251
      %v1334 = vpop.f32.mrf.mxu0
      %v1335 = vadd.f32 0.0, %v1334
      %v1336 = vpop.f32.mrf.mxu0
      %v1337 = vadd.f32 0.0, %v1336
      %1338 = vdwg.mxu0
      %v1339 = vld [vmem:[#allocation2] sm:$0xff]
      %v1340 = vld [vmem:[#allocation2 + $0x8] sm:$0xff]
      %v1341 = vld [vmem:[#allocation2 + $0x10] sm:$0xff]
      %v1342 = vld [vmem:[#allocation2 + $0x18] sm:$0xff]
      %v1343 = vld [vmem:[#allocation2 + $0x20] sm:$0xff]
      %v1344 = vld [vmem:[#allocation2 + $0x28] sm:$0xff]
      %v1345 = vld [vmem:[#allocation2 + $0x30] sm:$0xff]
      %v1346 = vld [vmem:[#allocation2 + $0x38] sm:$0xff]
      %v1347 = vld [vmem:[#allocation2 + $0x40] sm:$0xff]
      %v1348 = vld [vmem:[#allocation2 + $0x48] sm:$0xff]
      %v1349 = vadd.f32 %v1339, %v1315
      %v1350 = vadd.f32 %v1340, %v1317
      %v1351 = vadd.f32 %v1341, %v1320
      %v1352 = vadd.f32 %v1342, %v1322
      %v1353 = vadd.f32 %v1343, %v1325
      %v1354 = vadd.f32 %v1344, %v1327
      %v1355 = vadd.f32 %v1345, %v1330
      %v1356 = vadd.f32 %v1346, %v1332
      %v1357 = vadd.f32 %v1347, %v1335
      %v1358 = vadd.f32 %v1348, %v1337
      %1359 = vst [vmem:[#allocation2] sm:$0xff] %v1349
      %1360 = vst [vmem:[#allocation2 + $0x8] sm:$0xff] %v1350
      %1361 = vst [vmem:[#allocation2 + $0x10] sm:$0xff] %v1351
      %1362 = vst [vmem:[#allocation2 + $0x18] sm:$0xff] %v1352
      %1363 = vst [vmem:[#allocation2 + $0x20] sm:$0xff] %v1353
      %1364 = vst [vmem:[#allocation2 + $0x28] sm:$0xff] %v1354
      %1365 = vst [vmem:[#allocation2 + $0x30] sm:$0xff] %v1355
      %1366 = vst [vmem:[#allocation2 + $0x38] sm:$0xff] %v1356
      %1367 = vst [vmem:[#allocation2 + $0x40] sm:$0xff] %v1357
      %1368 = vst [vmem:[#allocation2 + $0x48] sm:$0xff] %v1358
      %v1369 = vld [vmem:[%s384 + $0x180] sm:$0xf]
      %v1370 = vld [vmem:[%s384 + $0x184] sm:$0xf]
      %v1371 = vld [vmem:[%s384 + $0x188] sm:$0xf]
      %v1372 = vld [vmem:[%s384 + $0x18c] sm:$0xf]
      %v1373 = vld [vmem:[%s384 + $0x190] sm:$0xf]
      %v1374 = vld [vmem:[%s384 + $0x194] sm:$0xf]
      %v1375 = vld [vmem:[%s384 + $0x198] sm:$0xf]
      %v1376 = vld [vmem:[%s384 + $0x19c] sm:$0xf]
      %v1377 = vld [vmem:[%s384 + $0x1a0] sm:$0xf]
      %v1378 = vld [vmem:[%s384 + $0x1a4] sm:$0xf]
      %v1379 = vld [vmem:[%s384 + $0x1a8] sm:$0xf]
      %v1380 = vld [vmem:[%s384 + $0x1ac] sm:$0xf]
      %v1381 = vld [vmem:[%s384 + $0x1b0] sm:$0xf]
      %v1382 = vld [vmem:[%s384 + $0x1b4] sm:$0xf]
      %v1383 = vld [vmem:[%s384 + $0x1b8] sm:$0xf]
      %v1384 = vld [vmem:[%s384 + $0x1bc] sm:$0xf]
      %v1386 = vunpack.c.l.b16 %v420
      %v1387 = vpack.c.b16 %v902, %v576
      %v1388 = vpack.c.b16 %v1386, %v1386
      %v1389 = vrot.slane %v458, 2
      %v1390 = vrot.slane %v459, 2
      %v1391 = vsel %vm1240, %v1389, %v1390
      %v1392 = vrot.slane %v460, 2
      %v1393 = vsel %vm1240, %v1390, %v1392
      %v1394 = vrot.slane %v461, 2
      %v1395 = vsel %vm1240, %v1392, %v1394
      %v1396 = vrot.slane %v1387, 2
      %v1397 = vsel %vm1240, %v1394, %v1396
      %v1398 = vrot.slane %v1388, 2
      %v1399 = vsel %vm1240, %v1396, %v1398
      %v1421 = vunpack.c.l.b16 %v1369
      %v1422 = vunpack.c.l.b16 %v1370
      %v1423 = vunpack.c.l.b16 %v1371
      %v1424 = vunpack.c.l.b16 %v1372
      %v1425 = vunpack.c.l.b16 %v1373
      %v1426 = vunpack.c.l.b16 %v1374
      %v1427 = vunpack.c.l.b16 %v1375
      %v1428 = vunpack.c.l.b16 %v1376
      %v1429 = vunpack.c.l.b16 %v1377
      %v1430 = vunpack.c.l.b16 %v1378
      %v1431 = vunpack.c.l.b16 %v1379
      %v1432 = vunpack.c.l.b16 %v1380
      %v1433 = vunpack.c.l.b16 %v1381
      %v1434 = vunpack.c.l.b16 %v1382
      %v1435 = vunpack.c.l.b16 %v1383
      %v1436 = vunpack.c.l.b16 %v1384
      %v1437 = vpack.c.b16 %v1422, %v1421
      %v1438 = vpack.c.b16 %v1424, %v1423
      %v1439 = vpack.c.b16 %v1426, %v1425
      %v1440 = vpack.c.b16 %v1428, %v1427
      %v1441 = vpack.c.b16 %v1430, %v1429
      %v1442 = vpack.c.b16 %v1432, %v1431
      %v1443 = vpack.c.b16 %v1434, %v1433
      %v1444 = vpack.c.b16 %v1436, %v1435
      %1453 = vmatpush.bf16.msra.mxu0 %v1444
      %1454 = vmatpush.bf16.msra.mxu0 %v1443
      %1455 = vmatpush.bf16.msra.mxu0 %v1442
      %1456 = vmatpush.bf16.msra.mxu0 %v1441
      %1457 = vmatpush.bf16.msra.mxu0 %v1440
      %1458 = vmatpush.bf16.msra.mxu0 %v1439
      %1459 = vmatpush.bf16.msra.mxu0 %v1438
      %1460 = vmatpush.bf16.msra.mxu0 %v1437
      %1461 = vmatmul.bf16.gmra.mxu0 %v1391
      %v1462 = vpop.f32.mrf.mxu0
      %v1463 = vadd.f32 0.0, %v1462
      %v1464 = vpop.f32.mrf.mxu0
      %v1465 = vadd.f32 0.0, %v1464
      %1466 = vmatmul.bf16.gmra.mxu0 %v1393
      %v1467 = vpop.f32.mrf.mxu0
      %v1468 = vadd.f32 0.0, %v1467
      %v1469 = vpop.f32.mrf.mxu0
      %v1470 = vadd.f32 0.0, %v1469
      %1471 = vmatmul.bf16.gmra.mxu0 %v1395
      %v1472 = vpop.f32.mrf.mxu0
      %v1473 = vadd.f32 0.0, %v1472
      %v1474 = vpop.f32.mrf.mxu0
      %v1475 = vadd.f32 0.0, %v1474
      %1476 = vmatmul.bf16.gmra.mxu0 %v1397
      %v1477 = vpop.f32.mrf.mxu0
      %v1478 = vadd.f32 0.0, %v1477
      %v1479 = vpop.f32.mrf.mxu0
      %v1480 = vadd.f32 0.0, %v1479
      %1481 = vmatmul.bf16.gmra.mxu0 %v1399
      %v1482 = vpop.f32.mrf.mxu0
      %v1483 = vadd.f32 0.0, %v1482
      %v1484 = vpop.f32.mrf.mxu0
      %v1485 = vadd.f32 0.0, %v1484
      %1486 = vdwg.mxu0
      %v1487 = vld [vmem:[#allocation2] sm:$0xff]
      %v1488 = vld [vmem:[#allocation2 + $0x8] sm:$0xff]
      %v1489 = vld [vmem:[#allocation2 + $0x10] sm:$0xff]
      %v1490 = vld [vmem:[#allocation2 + $0x18] sm:$0xff]
      %v1491 = vld [vmem:[#allocation2 + $0x20] sm:$0xff]
      %v1492 = vld [vmem:[#allocation2 + $0x28] sm:$0xff]
      %v1493 = vld [vmem:[#allocation2 + $0x30] sm:$0xff]
      %v1494 = vld [vmem:[#allocation2 + $0x38] sm:$0xff]
      %v1495 = vld [vmem:[#allocation2 + $0x40] sm:$0xff]
      %v1496 = vld [vmem:[#allocation2 + $0x48] sm:$0xff]
      %v1497 = vadd.f32 %v1487, %v1463
      %v1498 = vadd.f32 %v1488, %v1465
      %v1499 = vadd.f32 %v1489, %v1468
      %v1500 = vadd.f32 %v1490, %v1470
      %v1501 = vadd.f32 %v1491, %v1473
      %v1502 = vadd.f32 %v1492, %v1475
      %v1503 = vadd.f32 %v1493, %v1478
      %v1504 = vadd.f32 %v1494, %v1480
      %v1505 = vadd.f32 %v1495, %v1483
      %v1506 = vadd.f32 %v1496, %v1485
      %1507 = vst [vmem:[#allocation2] sm:$0xff] %v1497
      %1508 = vst [vmem:[#allocation2 + $0x8] sm:$0xff] %v1498
      %1509 = vst [vmem:[#allocation2 + $0x10] sm:$0xff] %v1499
      %1510 = vst [vmem:[#allocation2 + $0x18] sm:$0xff] %v1500
      %1511 = vst [vmem:[#allocation2 + $0x20] sm:$0xff] %v1501
      %1512 = vst [vmem:[#allocation2 + $0x28] sm:$0xff] %v1502
      %1513 = vst [vmem:[#allocation2 + $0x30] sm:$0xff] %v1503
      %1514 = vst [vmem:[#allocation2 + $0x38] sm:$0xff] %v1504
      %1515 = vst [vmem:[#allocation2 + $0x40] sm:$0xff] %v1505
      %1516 = vst [vmem:[#allocation2 + $0x48] sm:$0xff] %v1506
      %v1517 = vld [vmem:[%s384 + $0x1c0] sm:$0xf]
      %v1518 = vld [vmem:[%s384 + $0x1c4] sm:$0xf]
      %v1519 = vld [vmem:[%s384 + $0x1c8] sm:$0xf]
      %v1520 = vld [vmem:[%s384 + $0x1cc] sm:$0xf]
      %v1521 = vld [vmem:[%s384 + $0x1d0] sm:$0xf]
      %v1522 = vld [vmem:[%s384 + $0x1d4] sm:$0xf]
      %v1523 = vld [vmem:[%s384 + $0x1d8] sm:$0xf]
      %v1524 = vld [vmem:[%s384 + $0x1dc] sm:$0xf]
      %v1525 = vld [vmem:[%s384 + $0x1e0] sm:$0xf]
      %v1526 = vld [vmem:[%s384 + $0x1e4] sm:$0xf]
      %v1527 = vld [vmem:[%s384 + $0x1e8] sm:$0xf]
      %v1528 = vld [vmem:[%s384 + $0x1ec] sm:$0xf]
      %v1529 = vld [vmem:[%s384 + $0x1f0] sm:$0xf]
      %v1530 = vld [vmem:[%s384 + $0x1f4] sm:$0xf]
      %v1531 = vld [vmem:[%s384 + $0x1f8] sm:$0xf]
      %v1532 = vld [vmem:[%s384 + $0x1fc] sm:$0xf]
      %vm1533 = vsmask.f32 5376
      %v1534 = vrot.slane %v591, 2
      %v1535 = vrot.slane %v587, 3
      %v1536 = vor.u32 %v1534, %v1535
      %v1537 = vrot.slane %v599, 2
      %v1538 = vrot.slane %v595, 3
      %v1539 = vor.u32 %v1537, %v1538
      %v1540 = vsel %vm1533, %v1536, %v1539
      %v1541 = vrot.slane %v607, 2
      %v1542 = vrot.slane %v603, 3
      %v1543 = vor.u32 %v1541, %v1542
      %v1544 = vsel %vm1533, %v1539, %v1543
      %v1545 = vrot.slane %v615, 2
      %v1546 = vrot.slane %v611, 3
      %v1547 = vor.u32 %v1545, %v1546
      %v1548 = vsel %vm1533, %v1543, %v1547
      %v1550 = vshrl.u32 %v1387, 16
      %v1552 = vrot.slane %v1550, 2
      %v1553 = vshll.u32 %v1387, 16
      %v1555 = vrot.slane %v1553, 3
      %v1556 = vor.u32 %v1552, %v1555
      %v1557 = vsel %vm1533, %v1547, %v1556
      %v1559 = vshrl.u32 %v1388, 16
      %v1561 = vrot.slane %v1559, 2
      %v1562 = vshll.u32 %v1388, 16
      %v1564 = vrot.slane %v1562, 3
      %v1565 = vor.u32 %v1561, %v1564
      %v1566 = vsel %vm1533, %v1556, %v1565
      %v1588 = vunpack.c.l.b16 %v1517
      %v1589 = vunpack.c.l.b16 %v1518
      %v1590 = vunpack.c.l.b16 %v1519
      %v1591 = vunpack.c.l.b16 %v1520
      %v1592 = vunpack.c.l.b16 %v1521
      %v1593 = vunpack.c.l.b16 %v1522
      %v1594 = vunpack.c.l.b16 %v1523
      %v1595 = vunpack.c.l.b16 %v1524
      %v1596 = vunpack.c.l.b16 %v1525
      %v1597 = vunpack.c.l.b16 %v1526
      %v1598 = vunpack.c.l.b16 %v1527
      %v1599 = vunpack.c.l.b16 %v1528
      %v1600 = vunpack.c.l.b16 %v1529
      %v1601 = vunpack.c.l.b16 %v1530
      %v1602 = vunpack.c.l.b16 %v1531
      %v1603 = vunpack.c.l.b16 %v1532
      %v1604 = vpack.c.b16 %v1589, %v1588
      %v1605 = vpack.c.b16 %v1591, %v1590
      %v1606 = vpack.c.b16 %v1593, %v1592
      %v1607 = vpack.c.b16 %v1595, %v1594
      %v1608 = vpack.c.b16 %v1597, %v1596
      %v1609 = vpack.c.b16 %v1599, %v1598
      %v1610 = vpack.c.b16 %v1601, %v1600
      %v1611 = vpack.c.b16 %v1603, %v1602
      %1620 = vmatpush.bf16.msra.mxu0 %v1611
      %1621 = vmatpush.bf16.msra.mxu0 %v1610
      %1622 = vmatpush.bf16.msra.mxu0 %v1609
      %1623 = vmatpush.bf16.msra.mxu0 %v1608
      %1624 = vmatpush.bf16.msra.mxu0 %v1607
      %1625 = vmatpush.bf16.msra.mxu0 %v1606
      %1626 = vmatpush.bf16.msra.mxu0 %v1605
      %1627 = vmatpush.bf16.msra.mxu0 %v1604
      %1628 = vmatmul.bf16.gmra.mxu0 %v1540
      %v1629 = vpop.f32.mrf.mxu0
      %v1630 = vadd.f32 0.0, %v1629
      %v1631 = vpop.f32.mrf.mxu0
      %v1632 = vadd.f32 0.0, %v1631
      %1633 = vmatmul.bf16.gmra.mxu0 %v1544
      %v1634 = vpop.f32.mrf.mxu0
      %v1635 = vadd.f32 0.0, %v1634
      %v1636 = vpop.f32.mrf.mxu0
      %v1637 = vadd.f32 0.0, %v1636
      %1638 = vmatmul.bf16.gmra.mxu0 %v1548
      %v1639 = vpop.f32.mrf.mxu0
      %v1640 = vadd.f32 0.0, %v1639
      %v1641 = vpop.f32.mrf.mxu0
      %v1642 = vadd.f32 0.0, %v1641
      %1643 = vmatmul.bf16.gmra.mxu0 %v1557
      %v1644 = vpop.f32.mrf.mxu0
      %v1645 = vadd.f32 0.0, %v1644
      %v1646 = vpop.f32.mrf.mxu0
      %v1647 = vadd.f32 0.0, %v1646
      %1648 = vmatmul.bf16.gmra.mxu0 %v1566
      %v1649 = vpop.f32.mrf.mxu0
      %v1650 = vadd.f32 0.0, %v1649
      %v1651 = vpop.f32.mrf.mxu0
      %v1652 = vadd.f32 0.0, %v1651
      %1653 = vdwg.mxu0
      %v1654 = vld [vmem:[#allocation2] sm:$0xff]
      %v1655 = vld [vmem:[#allocation2 + $0x8] sm:$0xff]
      %v1656 = vld [vmem:[#allocation2 + $0x10] sm:$0xff]
      %v1657 = vld [vmem:[#allocation2 + $0x18] sm:$0xff]
      %v1658 = vld [vmem:[#allocation2 + $0x20] sm:$0xff]
      %v1659 = vld [vmem:[#allocation2 + $0x28] sm:$0xff]
      %v1660 = vld [vmem:[#allocation2 + $0x30] sm:$0xff]
      %v1661 = vld [vmem:[#allocation2 + $0x38] sm:$0xff]
      %v1662 = vld [vmem:[#allocation2 + $0x40] sm:$0xff]
      %v1663 = vld [vmem:[#allocation2 + $0x48] sm:$0xff]
      %v1664 = vadd.f32 %v1654, %v1630
      %v1665 = vadd.f32 %v1655, %v1632
      %v1666 = vadd.f32 %v1656, %v1635
      %v1667 = vadd.f32 %v1657, %v1637
      %v1668 = vadd.f32 %v1658, %v1640
      %v1669 = vadd.f32 %v1659, %v1642
      %v1670 = vadd.f32 %v1660, %v1645
      %v1671 = vadd.f32 %v1661, %v1647
      %v1672 = vadd.f32 %v1662, %v1650
      %v1673 = vadd.f32 %v1663, %v1652
      %1674 = vst [vmem:[#allocation2] sm:$0xff] %v1664
      %1675 = vst [vmem:[#allocation2 + $0x8] sm:$0xff] %v1665
      %1676 = vst [vmem:[#allocation2 + $0x10] sm:$0xff] %v1666
      %1677 = vst [vmem:[#allocation2 + $0x18] sm:$0xff] %v1667
      %1678 = vst [vmem:[#allocation2 + $0x20] sm:$0xff] %v1668
      %1679 = vst [vmem:[#allocation2 + $0x28] sm:$0xff] %v1669
      %1680 = vst [vmem:[#allocation2 + $0x30] sm:$0xff] %v1670
      %1681 = vst [vmem:[#allocation2 + $0x38] sm:$0xff] %v1671
      %1682 = vst [vmem:[#allocation2 + $0x40] sm:$0xff] %v1672
      %1683 = vst [vmem:[#allocation2 + $0x48] sm:$0xff] %v1673
      %v1684 = vld [vmem:[%s384 + $0x200] sm:$0xf]
      %v1685 = vld [vmem:[%s384 + $0x204] sm:$0xf]
      %v1686 = vld [vmem:[%s384 + $0x208] sm:$0xf]
      %v1687 = vld [vmem:[%s384 + $0x20c] sm:$0xf]
      %v1688 = vld [vmem:[%s384 + $0x210] sm:$0xf]
      %v1689 = vld [vmem:[%s384 + $0x214] sm:$0xf]
      %v1690 = vld [vmem:[%s384 + $0x218] sm:$0xf]
      %v1691 = vld [vmem:[%s384 + $0x21c] sm:$0xf]
      %v1692 = vld [vmem:[%s384 + $0x220] sm:$0xf]
      %v1693 = vld [vmem:[%s384 + $0x224] sm:$0xf]
      %v1694 = vld [vmem:[%s384 + $0x228] sm:$0xf]
      %v1695 = vld [vmem:[%s384 + $0x22c] sm:$0xf]
      %v1696 = vld [vmem:[%s384 + $0x230] sm:$0xf]
      %v1697 = vld [vmem:[%s384 + $0x234] sm:$0xf]
      %v1698 = vld [vmem:[%s384 + $0x238] sm:$0xf]
      %v1699 = vld [vmem:[%s384 + $0x23c] sm:$0xf]
      %vm1700 = vcmask 1044480
      %v1701 = vrot.slane %v458, 3
      %v1702 = vrot.slane %v459, 3
      %v1703 = vsel %vm1700, %v1701, %v1702
      %v1704 = vrot.slane %v460, 3
      %v1705 = vsel %vm1700, %v1702, %v1704
      %v1706 = vrot.slane %v461, 3
      %v1707 = vsel %vm1700, %v1704, %v1706
      %v1708 = vrot.slane %v1387, 3
      %v1709 = vsel %vm1700, %v1706, %v1708
      %v1710 = vrot.slane %v1388, 3
      %v1711 = vsel %vm1700, %v1708, %v1710
      %v1733 = vunpack.c.l.b16 %v1684
      %v1734 = vunpack.c.l.b16 %v1685
      %v1735 = vunpack.c.l.b16 %v1686
      %v1736 = vunpack.c.l.b16 %v1687
      %v1737 = vunpack.c.l.b16 %v1688
      %v1738 = vunpack.c.l.b16 %v1689
      %v1739 = vunpack.c.l.b16 %v1690
      %v1740 = vunpack.c.l.b16 %v1691
      %v1741 = vunpack.c.l.b16 %v1692
      %v1742 = vunpack.c.l.b16 %v1693
      %v1743 = vunpack.c.l.b16 %v1694
      %v1744 = vunpack.c.l.b16 %v1695
      %v1745 = vunpack.c.l.b16 %v1696
      %v1746 = vunpack.c.l.b16 %v1697
      %v1747 = vunpack.c.l.b16 %v1698
      %v1748 = vunpack.c.l.b16 %v1699
      %v1749 = vpack.c.b16 %v1734, %v1733
      %v1750 = vpack.c.b16 %v1736, %v1735
      %v1751 = vpack.c.b16 %v1738, %v1737
      %v1752 = vpack.c.b16 %v1740, %v1739
      %v1753 = vpack.c.b16 %v1742, %v1741
      %v1754 = vpack.c.b16 %v1744, %v1743
      %v1755 = vpack.c.b16 %v1746, %v1745
      %v1756 = vpack.c.b16 %v1748, %v1747
      %1765 = vmatpush.bf16.msra.mxu0 %v1756
      %1766 = vmatpush.bf16.msra.mxu0 %v1755
      %1767 = vmatpush.bf16.msra.mxu0 %v1754
      %1768 = vmatpush.bf16.msra.mxu0 %v1753
      %1769 = vmatpush.bf16.msra.mxu0 %v1752
      %1770 = vmatpush.bf16.msra.mxu0 %v1751
      %1771 = vmatpush.bf16.msra.mxu0 %v1750
      %1772 = vmatpush.bf16.msra.mxu0 %v1749
      %1773 = vmatmul.bf16.gmra.mxu0 %v1703
      %v1774 = vpop.f32.mrf.mxu0
      %v1775 = vadd.f32 0.0, %v1774
      %v1776 = vpop.f32.mrf.mxu0
      %v1777 = vadd.f32 0.0, %v1776
      %1778 = vmatmul.bf16.gmra.mxu0 %v1705
      %v1779 = vpop.f32.mrf.mxu0
      %v1780 = vadd.f32 0.0, %v1779
      %v1781 = vpop.f32.mrf.mxu0
      %v1782 = vadd.f32 0.0, %v1781
      %1783 = vmatmul.bf16.gmra.mxu0 %v1707
      %v1784 = vpop.f32.mrf.mxu0
      %v1785 = vadd.f32 0.0, %v1784
      %v1786 = vpop.f32.mrf.mxu0
      %v1787 = vadd.f32 0.0, %v1786
      %1788 = vmatmul.bf16.gmra.mxu0 %v1709
      %v1789 = vpop.f32.mrf.mxu0
      %v1790 = vadd.f32 0.0, %v1789
      %v1791 = vpop.f32.mrf.mxu0
      %v1792 = vadd.f32 0.0, %v1791
      %1793 = vmatmul.bf16.gmra.mxu0 %v1711
      %v1794 = vpop.f32.mrf.mxu0
      %v1795 = vadd.f32 0.0, %v1794
      %v1796 = vpop.f32.mrf.mxu0
      %v1797 = vadd.f32 0.0, %v1796
      %1798 = vdwg.mxu0
      %v1799 = vld [vmem:[#allocation2] sm:$0xff]
      %v1800 = vld [vmem:[#allocation2 + $0x8] sm:$0xff]
      %v1801 = vld [vmem:[#allocation2 + $0x10] sm:$0xff]
      %v1802 = vld [vmem:[#allocation2 + $0x18] sm:$0xff]
      %v1803 = vld [vmem:[#allocation2 + $0x20] sm:$0xff]
      %v1804 = vld [vmem:[#allocation2 + $0x28] sm:$0xff]
      %v1805 = vld [vmem:[#allocation2 + $0x30] sm:$0xff]
      %v1806 = vld [vmem:[#allocation2 + $0x38] sm:$0xff]
      %v1807 = vld [vmem:[#allocation2 + $0x40] sm:$0xff]
      %v1808 = vld [vmem:[#allocation2 + $0x48] sm:$0xff]
      %v1809 = vadd.f32 %v1799, %v1775
      %v1810 = vadd.f32 %v1800, %v1777
      %v1811 = vadd.f32 %v1801, %v1780
      %v1812 = vadd.f32 %v1802, %v1782
      %v1813 = vadd.f32 %v1803, %v1785
      %v1814 = vadd.f32 %v1804, %v1787
      %v1815 = vadd.f32 %v1805, %v1790
      %v1816 = vadd.f32 %v1806, %v1792
      %v1817 = vadd.f32 %v1807, %v1795
      %v1818 = vadd.f32 %v1808, %v1797
      %1819 = vst [vmem:[#allocation2] sm:$0xff] %v1809
      %1820 = vst [vmem:[#allocation2 + $0x8] sm:$0xff] %v1810
      %1821 = vst [vmem:[#allocation2 + $0x10] sm:$0xff] %v1811
      %1822 = vst [vmem:[#allocation2 + $0x18] sm:$0xff] %v1812
      %1823 = vst [vmem:[#allocation2 + $0x20] sm:$0xff] %v1813
      %1824 = vst [vmem:[#allocation2 + $0x28] sm:$0xff] %v1814
      %1825 = vst [vmem:[#allocation2 + $0x30] sm:$0xff] %v1815
      %1826 = vst [vmem:[#allocation2 + $0x38] sm:$0xff] %v1816
      %1827 = vst [vmem:[#allocation2 + $0x40] sm:$0xff] %v1817
      %1828 = vst [vmem:[#allocation2 + $0x48] sm:$0xff] %v1818
      %v1829 = vld [vmem:[#allocation2] sm:$0xff]
      %v1830 = vld [vmem:[#allocation2 + $0x8] sm:$0xff]
      %v1831 = vld [vmem:[#allocation2 + $0x10] sm:$0xff]
      %v1832 = vld [vmem:[#allocation2 + $0x18] sm:$0xff]
      %v1833 = vld [vmem:[#allocation2 + $0x20] sm:$0xff]
      %v1834 = vld [vmem:[#allocation2 + $0x28] sm:$0xff]
      %v1835 = vld [vmem:[#allocation2 + $0x30] sm:$0xff]
      %v1836 = vld [vmem:[#allocation2 + $0x38] sm:$0xff]
      %v1837 = vld [vmem:[#allocation2 + $0x40] sm:$0xff]
      %v1838 = vld [vmem:[#allocation2 + $0x48] sm:$0xff]
      %v1839 = vld [vmem:[%s387] sm:$0x1]
      %v1841 = vperm.slane %v1839, 0
      %v1843 = vadd.f32 %v1829, %v1841
      %v1844 = vadd.f32 %v1830, %v1841
      %v1845 = vadd.f32 %v1831, %v1841
      %v1846 = vadd.f32 %v1832, %v1841
      %v1847 = vadd.f32 %v1833, %v1841
      %v1848 = vadd.f32 %v1834, %v1841
      %v1849 = vadd.f32 %v1835, %v1841
      %v1850 = vadd.f32 %v1836, %v1841
      %v1851 = vadd.f32 %v1837, %v1841
      %v1852 = vadd.f32 %v1838, %v1841
      %v1853 = vld [vmem:[%s392] sm:$0xf]
      %v1854 = vld [vmem:[%s392 + $0x4] sm:$0xf]
      %v1855 = vld [vmem:[%s392 + $0x8] sm:$0xf]
      %v1856 = vld [vmem:[%s392 + $0xc] sm:$0xf]
      %v1857 = vld [vmem:[%s392 + $0x10] sm:$0xf]
      %v1858 = vld [vmem:[%s392 + $0x14] sm:$0xf]
      %v1859 = vld [vmem:[%s392 + $0x18] sm:$0xf]
      %v1860 = vld [vmem:[%s392 + $0x1c] sm:$0xf]
      %v1861 = vld [vmem:[%s392 + $0x20] sm:$0xf]
      %v1862 = vld [vmem:[%s392 + $0x24] sm:$0xf]
      %v1863 = vunpack.c.l.bf16 %v1853
      %v1864 = vunpack.c.l.bf16 %v1854
      %v1865 = vunpack.c.l.bf16 %v1855
      %v1866 = vunpack.c.l.bf16 %v1856
      %v1867 = vunpack.c.l.bf16 %v1857
      %v1868 = vunpack.c.l.bf16 %v1858
      %v1869 = vunpack.c.l.bf16 %v1859
      %v1870 = vunpack.c.l.bf16 %v1860
      %v1871 = vunpack.c.l.bf16 %v1861
      %v1872 = vunpack.c.l.bf16 %v1862
      %v1873 = vld [vmem:[%s6] sm:$0x1]
      %v1875 = vperm.slane %v1873, 0
      %v1877 = vmul.f32 %v1863, %v1875
      %v1878 = vmul.f32 %v1864, %v1875
      %v1879 = vmul.f32 %v1865, %v1875
      %v1880 = vmul.f32 %v1866, %v1875
      %v1881 = vmul.f32 %v1867, %v1875
      %v1882 = vmul.f32 %v1868, %v1875
      %v1883 = vmul.f32 %v1869, %v1875
      %v1884 = vmul.f32 %v1870, %v1875
      %v1885 = vmul.f32 %v1871, %v1875
      %v1886 = vmul.f32 %v1872, %v1875
      %v1887 = vld [vmem:[%s7] sm:$0x1]
      %v1889 = vperm.slane %v1887, 0
      %v1891 = vadd.f32 %v1877, %v1889
      %v1892 = vadd.f32 %v1878, %v1889
      %v1893 = vadd.f32 %v1879, %v1889
      %v1894 = vadd.f32 %v1880, %v1889
      %v1895 = vadd.f32 %v1881, %v1889
      %v1896 = vadd.f32 %v1882, %v1889
      %v1897 = vadd.f32 %v1883, %v1889
      %v1898 = vadd.f32 %v1884, %v1889
      %v1899 = vadd.f32 %v1885, %v1889
      %v1900 = vadd.f32 %v1886, %v1889
      %vm1901 = vcmp.gt.f32.partialorder %v1891, 0.0
      %vm1902 = vcmp.gt.f32.partialorder %v1892, 0.0
      %vm1903 = vcmp.gt.f32.partialorder %v1893, 0.0
      %vm1904 = vcmp.gt.f32.partialorder %v1894, 0.0
      %vm1905 = vcmp.gt.f32.partialorder %v1895, 0.0
      %vm1906 = vcmp.gt.f32.partialorder %v1896, 0.0
      %vm1907 = vcmp.gt.f32.partialorder %v1897, 0.0
      %vm1908 = vcmp.gt.f32.partialorder %v1898, 0.0
      %vm1909 = vcmp.gt.f32.partialorder %v1899, 0.0
      %vm1910 = vcmp.gt.f32.partialorder %v1900, 0.0
      %v1911 = vmul.f32 %v1891, 0.1
      %v1912 = vmul.f32 %v1892, 0.1
      %v1913 = vmul.f32 %v1893, 0.1
      %v1914 = vmul.f32 %v1894, 0.1
      %v1915 = vmul.f32 %v1895, 0.1
      %v1916 = vmul.f32 %v1896, 0.1
      %v1917 = vmul.f32 %v1897, 0.1
      %v1918 = vmul.f32 %v1898, 0.1
      %v1919 = vmul.f32 %v1899, 0.1
      %v1920 = vmul.f32 %v1900, 0.1
      %v1921 = vsel %vm1901, %v1891, %v1911
      %v1922 = vsel %vm1902, %v1892, %v1912
      %v1923 = vsel %vm1903, %v1893, %v1913
      %v1924 = vsel %vm1904, %v1894, %v1914
      %v1925 = vsel %vm1905, %v1895, %v1915
      %v1926 = vsel %vm1906, %v1896, %v1916
      %v1927 = vsel %vm1907, %v1897, %v1917
      %v1928 = vsel %vm1908, %v1898, %v1918
      %v1929 = vsel %vm1909, %v1899, %v1919
      %v1930 = vsel %vm1910, %v1900, %v1920
      %v1931 = vpack.c.bf16 %v1922, %v1921
      %v1932 = vpack.c.bf16 %v1924, %v1923
      %v1933 = vpack.c.bf16 %v1926, %v1925
      %v1934 = vpack.c.bf16 %v1928, %v1927
      %v1935 = vpack.c.bf16 %v1930, %v1929
      %v1936 = vld [vmem:[%s396] sm:$0xf]
      %v1937 = vld [vmem:[%s396 + $0x4] sm:$0xf]
      %v1938 = vld [vmem:[%s396 + $0x8] sm:$0xf]
      %v1939 = vld [vmem:[%s396 + $0xc] sm:$0xf]
      %v1940 = vld [vmem:[%s396 + $0x10] sm:$0xf]
      %v1941 = vld [vmem:[%s396 + $0x14] sm:$0xf]
      %v1942 = vld [vmem:[%s396 + $0x18] sm:$0xf]
      %v1943 = vld [vmem:[%s396 + $0x1c] sm:$0xf]
      %v1944 = vld [vmem:[%s396 + $0x20] sm:$0xf]
      %v1945 = vld [vmem:[%s396 + $0x24] sm:$0xf]
      %v1946 = vld [vmem:[%s396 + $0x28] sm:$0xf]
      %v1947 = vld [vmem:[%s396 + $0x2c] sm:$0xf]
      %v1948 = vld [vmem:[%s396 + $0x30] sm:$0xf]
      %v1949 = vld [vmem:[%s396 + $0x34] sm:$0xf]
      %v1950 = vld [vmem:[%s396 + $0x38] sm:$0xf]
      %v1951 = vld [vmem:[%s396 + $0x3c] sm:$0xf]
      %v1968 = vunpack.c.l.b16 %v1936
      %v1969 = vunpack.c.l.b16 %v1937
      %v1970 = vunpack.c.l.b16 %v1938
      %v1971 = vunpack.c.l.b16 %v1939
      %v1972 = vunpack.c.l.b16 %v1940
      %v1973 = vunpack.c.l.b16 %v1941
      %v1974 = vunpack.c.l.b16 %v1942
      %v1975 = vunpack.c.l.b16 %v1943
      %v1976 = vunpack.c.l.b16 %v1944
      %v1977 = vunpack.c.l.b16 %v1945
      %v1978 = vunpack.c.l.b16 %v1946
      %v1979 = vunpack.c.l.b16 %v1947
      %v1980 = vunpack.c.l.b16 %v1948
      %v1981 = vunpack.c.l.b16 %v1949
      %v1982 = vunpack.c.l.b16 %v1950
      %v1983 = vunpack.c.l.b16 %v1951
      %v1984 = vpack.c.b16 %v1969, %v1968
      %v1985 = vpack.c.b16 %v1971, %v1970
      %v1986 = vpack.c.b16 %v1973, %v1972
      %v1987 = vpack.c.b16 %v1975, %v1974
      %v1988 = vpack.c.b16 %v1977, %v1976
      %v1989 = vpack.c.b16 %v1979, %v1978
      %v1990 = vpack.c.b16 %v1981, %v1980
      %v1991 = vpack.c.b16 %v1983, %v1982
      %2000 = vmatpush.bf16.msra.mxu0 %v1991
      %2001 = vmatpush.bf16.msra.mxu0 %v1990
      %2002 = vmatpush.bf16.msra.mxu0 %v1989
      %2003 = vmatpush.bf16.msra.mxu0 %v1988
      %2004 = vmatpush.bf16.msra.mxu0 %v1987
      %2005 = vmatpush.bf16.msra.mxu0 %v1986
      %2006 = vmatpush.bf16.msra.mxu0 %v1985
      %2007 = vmatpush.bf16.msra.mxu0 %v1984
      %2008 = vmatmul.bf16.gmra.mxu0 %v1931
      %v2009 = vpop.f32.mrf.mxu0
      %v2010 = vadd.f32 0.0, %v2009
      %v2011 = vpop.f32.mrf.mxu0
      %v2012 = vadd.f32 0.0, %v2011
      %2013 = vmatmul.bf16.gmra.mxu0 %v1932
      %v2014 = vpop.f32.mrf.mxu0
      %v2015 = vadd.f32 0.0, %v2014
      %v2016 = vpop.f32.mrf.mxu0
      %v2017 = vadd.f32 0.0, %v2016
      %2018 = vmatmul.bf16.gmra.mxu0 %v1933
      %v2019 = vpop.f32.mrf.mxu0
      %v2020 = vadd.f32 0.0, %v2019
      %v2021 = vpop.f32.mrf.mxu0
      %v2022 = vadd.f32 0.0, %v2021
      %2023 = vmatmul.bf16.gmra.mxu0 %v1934
      %v2024 = vpop.f32.mrf.mxu0
      %v2025 = vadd.f32 0.0, %v2024
      %v2026 = vpop.f32.mrf.mxu0
      %v2027 = vadd.f32 0.0, %v2026
      %2028 = vmatmul.bf16.gmra.mxu0 %v1935
      %v2029 = vpop.f32.mrf.mxu0
      %v2030 = vadd.f32 0.0, %v2029
      %v2031 = vpop.f32.mrf.mxu0
      %v2032 = vadd.f32 0.0, %v2031
      %2033 = vdwg.mxu0
      %v2034 = vadd.f32 %v1843, %v2010
      %v2035 = vadd.f32 %v1844, %v2012
      %v2036 = vadd.f32 %v1845, %v2015
      %v2037 = vadd.f32 %v1846, %v2017
      %v2038 = vadd.f32 %v1847, %v2020
      %v2039 = vadd.f32 %v1848, %v2022
      %v2040 = vadd.f32 %v1849, %v2025
      %v2041 = vadd.f32 %v1850, %v2027
      %v2042 = vadd.f32 %v1851, %v2030
      %v2043 = vadd.f32 %v1852, %v2032
      %v2044 = vld [vmem:[%s399] sm:$0x1]
      %v2046 = vperm.slane %v2044, 0
      %v2048 = vadd.f32 %v2034, %v2046
      %v2049 = vadd.f32 %v2035, %v2046
      %v2050 = vadd.f32 %v2036, %v2046
      %v2051 = vadd.f32 %v2037, %v2046
      %v2052 = vadd.f32 %v2038, %v2046
      %v2053 = vadd.f32 %v2039, %v2046
      %v2054 = vadd.f32 %v2040, %v2046
      %v2055 = vadd.f32 %v2041, %v2046
      %v2056 = vadd.f32 %v2042, %v2046
      %v2057 = vadd.f32 %v2043, %v2046
      %2058 = vst [vmem:[%s407] sm:$0xff] %v2048
      %2059 = vst [vmem:[%s407 + $0x8] sm:$0xff] %v2049
      %2060 = vst [vmem:[%s407 + $0x10] sm:$0xff] %v2050
      %2061 = vst [vmem:[%s407 + $0x18] sm:$0xff] %v2051
      %2062 = vst [vmem:[%s407 + $0x20] sm:$0xff] %v2052
      %2063 = vst [vmem:[%s407 + $0x28] sm:$0xff] %v2053
      %2064 = vst [vmem:[%s407 + $0x30] sm:$0xff] %v2054
      %2065 = vst [vmem:[%s407 + $0x38] sm:$0xff] %v2055
      %2066 = vst [vmem:[%s407 + $0x40] sm:$0xff] %v2056
      %2067 = vst [vmem:[%s407 + $0x48] sm:$0xff] %v2057
      %p2068 = scmp.lt.s32.totalorder %s23, 1
      %s2069 = scalar_select %p2068, %s23, 1
      %p2070 = scmp.lt.s32.totalorder %s24, 0
      %s2071 = scalar_select %p2070, %s24, 0
      %s2072 = smul.addr %s2069, 10
      %s2073 = sadd.s32 %s2071, %s2072
      %s2074 = smul.addr %s2073, 8
      %s2075 = scalar_lea.vmem %s8, %s2074
      // Predicated region
      $region53: #{network_block_forward.5} parent=51 // pred_check
        %p2076 = pneg %p249
      $region54: #{network_block_forward.5} parent=51 // pred_check_branch
        %2078 = sbr.rel (%p2076) target = $region56
      $region55: #{network_block_forward.5} parent=51 // pred_region
        _
      $region56: #{network_block_forward.5} parent=51 // pred_fallthru
        _
    $region52: #{network_block_forward.5} parent=5 // pred_fallthru
      _
    %p2079 = scmp.le.s32.totalorder 2, %s14
    // Predicated region
    $region57: #{network_block_forward.5} parent=5 // pred_check
      %p2080 = pneg %p2079
    $region58: #{network_block_forward.5} parent=5 // pred_check_branch
      %2082 = sbr.rel (%p2080) target = $region60
    $region59: #{network_block_forward.5} parent=5 // pred_region
      %s2083 = ssub.s32 %s14, 2
      // Predicated region
      $region61: #{network_block_forward.5} parent=59 // pred_check
        %p2084 = pneg %p255
      $region62: #{network_block_forward.5} parent=59 // pred_check_branch
        %2086 = sbr.rel (%p2084) target = $region64
      $region63: #{network_block_forward.5} parent=59 // pred_region
        %p2087 = scmp.lt.s32.totalorder %s25, 1
        %s2088 = scalar_select %p2087, %s25, 1
        %p2089 = scmp.lt.s32.totalorder %s26, 0
        %s2090 = scalar_select %p2089, %s26, 0
        %s2091 = smul.addr %s2088, 10
        %s2092 = sadd.s32 %s2090, %s2091
        %s2093 = smul.addr %s2092, 8
        %s2094 = scalar_lea.vmem %s8, %s2093
      $region64: #{network_block_forward.5} parent=59 // pred_fallthru
        _
    $region60: #{network_block_forward.5} parent=5 // pred_fallthru
      _
  $region6: #{network_block_forward.5} parent=0 // loop_footer
    %s18 = sadd.s32 1, %s14
  $region7: #{network_block_forward.5} parent=0 // loop_footer_branch
    %13 = sbr.rel target = $region3
  $region8: #{network_block_forward.5} parent=0 // loop_exit
    _

// kernel: network_block_forward.6
$region0: #{network_block_forward.6}
  #allocation0 [shape = 'u32[]', space=smem, size = 0x4, offset = 0x4, fixed_abs, tag = 'smem constant byte address 0x4 - core index']
  #allocation1 [shape = 'u32[72,128]{1,0:T(1,128)}', space=vmem, size = 0x9000, scoped, tag = 'internal scratch']
  #allocation2 [shape = 'f32[80,128]{1,0:T(8,128)}', space=vmem, size = 0xa000, scoped, tag = 'scratch operand']
  %s0 = inlined_call_operand.vmem [shape: bf16[2,110,128], index: 0, kind: input, shape index: {}]
  %s1 = inlined_call_operand.vmem [shape: bf16[1152,128], index: 1, kind: input, shape index: {}]
  %s2 = inlined_call_operand.vmem [shape: f32[1,128], index: 2, kind: input, shape index: {}]
  %s3 = inlined_call_operand.vmem [shape: f32[1,128], index: 3, kind: input, shape index: {}]
  %s4 = inlined_call_operand.vmem [shape: f32[1,128], index: 4, kind: input, shape index: {}]
  %s5 = inlined_call_operand.vmem [shape: f32[1,128], index: 5, kind: input, shape index: {}]
  %s6 = inlined_call_operand.vmem [shape: f32[1,128], index: 6, kind: input, shape index: {}]
  %s7 = inlined_call_operand.vmem [shape: bf16[2,80,128], index: 7, kind: output, shape index: {}]
  %s8 = sld [smem:[#allocation0]]
  $region61: #{network_block_forward.6} parent=0
    _
  %s10 = ssub.s32 1, %s8
  %s11 = scalar_select 0, %s10, %s8
  loop: start=0, step=1, limit=4
  $region2: #{network_block_forward.6} parent=0 // loop_pre_header
    _
  $region3: #{network_block_forward.6} parent=0 // loop_header
    %s13 = sphi 0, %s17
    %p14 = scmp.ge.s32.totalorder %s13, 4
    %s20 = sphi 0, %s32
    %s21 = sphi 0, %s28
    %s22 = sphi 0, %s20
    %s23 = sphi 0, %s21
    %s24 = sphi 0, %s22
    %s25 = sphi 0, %s23
    %s35 = sphi 0, %s37
    %s38 = sphi 0, %s35
    %s39 = sphi 0, %s38
    %s55 = sphi 0, %s39
    %s61 = sphi 0, %s63
    %s64 = sphi 0, %s61
    %s65 = sphi 0, %s64
    %s81 = sphi 0, %s65
    %s87 = sphi 0, %s89
    %s90 = sphi 0, %s87
    %s91 = sphi 0, %s90
    %s107 = sphi 0, %s91
    %s113 = sphi 0, %s115
    %s116 = sphi 0, %s113
    %s117 = sphi 0, %s116
    %s133 = sphi 0, %s117
    %s139 = sphi 0, %s141
    %s142 = sphi 0, %s139
    %s143 = sphi 0, %s142
    %s159 = sphi 0, %s143
    %s163 = sphi 0, %s163
    %s165 = sphi 0, %s163
    %s166 = sphi 0, %s165
    %s180 = sphi 0, %s166
    %s184 = sphi 0, %s184
    %s186 = sphi 0, %s184
    %s187 = sphi 0, %s186
    %s201 = sphi 0, %s187
    %s209 = sphi 0, %s211
    %s212 = sphi 0, %s209
    %s213 = sphi 0, %s212
    %s229 = sphi 0, %s213
  $region4: #{network_block_forward.6} parent=0 // loop_header_branch
    %16 = sbr.rel (%p14) target = $region8
  $region5: #{network_block_forward.6} parent=0 // loop_body
    %s18 = ssub.s32 %s13, 1
    %s19 = ssub.s32 %s13, 2
    %s26 = sadd.s32 1, %s21
    %p27 = scmp.ge.s32.totalorder %s26, 1
    %s28 = scalar_select %p27, 0, %s26
    %s29 = sadd.s32 1, %s20
    %s30 = scalar_select %p27, %s29, %s20
    %p31 = scmp.ge.s32.totalorder %s30, 2
    %s32 = scalar_select %p31, 0, %s30
    %s33 = ssub.s32 %s20, %s32
    %p34 = scmp.eq.s32.totalorder %s33, 0
    %s36 = sadd.s32 %s35, 1
    %s37 = scalar_select %p34, %s35, %s36
    %p40 = pneg %p34
    %p41 = scmp.eq.s32.totalorder %s13, 1
    %p42 = por %p40, %p41
    %p43 = scmp.ne.s32.totalorder %s35, %s38
    %p44 = scmp.eq.s32.totalorder %s13, 0
    %p45 = por %p43, %p44
    %p46 = scmp.ne.s32.totalorder %s35, %s38
    %p47 = scmp.eq.s32.totalorder %s18, 1
    %p48 = por %p46, %p47
    %p49 = scmp.ne.s32.totalorder %s38, %s39
    %p50 = scmp.eq.s32.totalorder %s18, 0
    %p51 = por %p49, %p50
    %p52 = scmp.ne.s32.totalorder %s38, %s39
    %p53 = scmp.eq.s32.totalorder %s19, 1
    %p54 = por %p52, %p53
    %p56 = scmp.ne.s32.totalorder %s39, %s55
    %p57 = scmp.eq.s32.totalorder %s19, 0
    %p58 = por %p56, %p57
    %s59 = ssub.s32 %s21, %s28
    %p60 = scmp.eq.s32.totalorder %s59, 0
    %s62 = sadd.s32 %s61, 1
    %s63 = scalar_select %p60, %s61, %s62
    %p66 = pneg %p60
    %p67 = scmp.eq.s32.totalorder %s13, 1
    %p68 = por %p66, %p67
    %p69 = scmp.ne.s32.totalorder %s61, %s64
    %p70 = scmp.eq.s32.totalorder %s13, 0
    %p71 = por %p69, %p70
    %p72 = scmp.ne.s32.totalorder %s61, %s64
    %p73 = scmp.eq.s32.totalorder %s18, 1
    %p74 = por %p72, %p73
    %p75 = scmp.ne.s32.totalorder %s64, %s65
    %p76 = scmp.eq.s32.totalorder %s18, 0
    %p77 = por %p75, %p76
    %p78 = scmp.ne.s32.totalorder %s64, %s65
    %p79 = scmp.eq.s32.totalorder %s19, 1
    %p80 = por %p78, %p79
    %p82 = scmp.ne.s32.totalorder %s65, %s81
    %p83 = scmp.eq.s32.totalorder %s19, 0
    %p84 = por %p82, %p83
    %s85 = ssub.s32 %s21, %s28
    %p86 = scmp.eq.s32.totalorder %s85, 0
    %s88 = sadd.s32 %s87, 1
    %s89 = scalar_select %p86, %s87, %s88
    %p92 = pneg %p86
    %p93 = scmp.eq.s32.totalorder %s13, 1
    %p94 = por %p92, %p93
    %p95 = scmp.ne.s32.totalorder %s87, %s90
    %p96 = scmp.eq.s32.totalorder %s13, 0
    %p97 = por %p95, %p96
    %p98 = scmp.ne.s32.totalorder %s87, %s90
    %p99 = scmp.eq.s32.totalorder %s18, 1
    %p100 = por %p98, %p99
    %p101 = scmp.ne.s32.totalorder %s90, %s91
    %p102 = scmp.eq.s32.totalorder %s18, 0
    %p103 = por %p101, %p102
    %p104 = scmp.ne.s32.totalorder %s90, %s91
    %p105 = scmp.eq.s32.totalorder %s19, 1
    %p106 = por %p104, %p105
    %p108 = scmp.ne.s32.totalorder %s91, %s107
    %p109 = scmp.eq.s32.totalorder %s19, 0
    %p110 = por %p108, %p109
    %s111 = ssub.s32 %s21, %s28
    %p112 = scmp.eq.s32.totalorder %s111, 0
    %s114 = sadd.s32 %s113, 1
    %s115 = scalar_select %p112, %s113, %s114
    %p118 = pneg %p112
    %p119 = scmp.eq.s32.totalorder %s13, 1
    %p120 = por %p118, %p119
    %p121 = scmp.ne.s32.totalorder %s113, %s116
    %p122 = scmp.eq.s32.totalorder %s13, 0
    %p123 = por %p121, %p122
    %p124 = scmp.ne.s32.totalorder %s113, %s116
    %p125 = scmp.eq.s32.totalorder %s18, 1
    %p126 = por %p124, %p125
    %p127 = scmp.ne.s32.totalorder %s116, %s117
    %p128 = scmp.eq.s32.totalorder %s18, 0
    %p129 = por %p127, %p128
    %p130 = scmp.ne.s32.totalorder %s116, %s117
    %p131 = scmp.eq.s32.totalorder %s19, 1
    %p132 = por %p130, %p131
    %p134 = scmp.ne.s32.totalorder %s117, %s133
    %p135 = scmp.eq.s32.totalorder %s19, 0
    %p136 = por %p134, %p135
    %s137 = ssub.s32 %s21, %s28
    %p138 = scmp.eq.s32.totalorder %s137, 0
    %s140 = sadd.s32 %s139, 1
    %s141 = scalar_select %p138, %s139, %s140
    %p144 = pneg %p138
    %p145 = scmp.eq.s32.totalorder %s13, 1
    %p146 = por %p144, %p145
    %p147 = scmp.ne.s32.totalorder %s139, %s142
    %p148 = scmp.eq.s32.totalorder %s13, 0
    %p149 = por %p147, %p148
    %p150 = scmp.ne.s32.totalorder %s139, %s142
    %p151 = scmp.eq.s32.totalorder %s18, 1
    %p152 = por %p150, %p151
    %p153 = scmp.ne.s32.totalorder %s142, %s143
    %p154 = scmp.eq.s32.totalorder %s18, 0
    %p155 = por %p153, %p154
    %p156 = scmp.ne.s32.totalorder %s142, %s143
    %p157 = scmp.eq.s32.totalorder %s19, 1
    %p158 = por %p156, %p157
    %p160 = scmp.ne.s32.totalorder %s143, %s159
    %p161 = scmp.eq.s32.totalorder %s19, 0
    %p162 = por %p160, %p161
    %s164 = sadd.s32 %s163, 1
    %p167 = scmp.eq.s32.totalorder %s13, 1
    %p168 = scmp.ne.s32.totalorder %s163, %s165
    %p169 = scmp.eq.s32.totalorder %s13, 0
    %p170 = por %p168, %p169
    %p171 = scmp.ne.s32.totalorder %s163, %s165
    %p172 = scmp.eq.s32.totalorder %s18, 1
    %p173 = por %p171, %p172
    %p174 = scmp.ne.s32.totalorder %s165, %s166
    %p175 = scmp.eq.s32.totalorder %s18, 0
    %p176 = por %p174, %p175
    %p177 = scmp.ne.s32.totalorder %s165, %s166
    %p178 = scmp.eq.s32.totalorder %s19, 1
    %p179 = por %p177, %p178
    %p181 = scmp.ne.s32.totalorder %s166, %s180
    %p182 = scmp.eq.s32.totalorder %s19, 0
    %p183 = por %p181, %p182
    %s185 = sadd.s32 %s184, 1
    %p188 = scmp.eq.s32.totalorder %s13, 1
    %p189 = scmp.ne.s32.totalorder %s184, %s186
    %p190 = scmp.eq.s32.totalorder %s13, 0
    %p191 = por %p189, %p190
    %p192 = scmp.ne.s32.totalorder %s184, %s186
    %p193 = scmp.eq.s32.totalorder %s18, 1
    %p194 = por %p192, %p193
    %p195 = scmp.ne.s32.totalorder %s186, %s187
    %p196 = scmp.eq.s32.totalorder %s18, 0
    %p197 = por %p195, %p196
    %p198 = scmp.ne.s32.totalorder %s186, %s187
    %p199 = scmp.eq.s32.totalorder %s19, 1
    %p200 = por %p198, %p199
    %p202 = scmp.ne.s32.totalorder %s187, %s201
    %p203 = scmp.eq.s32.totalorder %s19, 0
    %p204 = por %p202, %p203
    %s205 = ssub.s32 %s20, %s32
    %s206 = ssub.s32 %s21, %s28
    %s207 = sor.u32 %s205, %s206
    %p208 = scmp.eq.s32.totalorder %s207, 0
    %s210 = sadd.s32 %s209, 1
    %s211 = scalar_select %p208, %s209, %s210
    %p214 = pneg %p208
    %p215 = scmp.eq.s32.totalorder %s13, 1
    %p216 = por %p214, %p215
    %p217 = scmp.ne.s32.totalorder %s209, %s212
    %p218 = scmp.eq.s32.totalorder %s13, 0
    %p219 = por %p217, %p218
    %p220 = scmp.ne.s32.totalorder %s209, %s212
    %p221 = scmp.eq.s32.totalorder %s18, 1
    %p222 = por %p220, %p221
    %p223 = scmp.ne.s32.totalorder %s212, %s213
    %p224 = scmp.eq.s32.totalorder %s18, 0
    %p225 = por %p223, %p224
    %p226 = scmp.ne.s32.totalorder %s212, %s213
    %p227 = scmp.eq.s32.totalorder %s19, 1
    %p228 = por %p226, %p227
    %p230 = scmp.ne.s32.totalorder %s213, %s229
    %p231 = scmp.eq.s32.totalorder %s19, 0
    %p232 = por %p230, %p231
    %p233 = scmp.le.s32.totalorder 1, %s13
    %p234 = scmp.lt.s32.totalorder %s13, 3
    %p235 = pnand %p233, %p234
    %p236 = pneg %p235
    // Predicated region
    $region9: #{network_block_forward.6} parent=5 // pred_check
      _
    $region10: #{network_block_forward.6} parent=5 // pred_check_branch
      %238 = sbr.rel (%p235) target = $region12
    $region11: #{network_block_forward.6} parent=5 // pred_region
      %s239 = ssub.s32 %s13, 1
      // Predicated region
      $region13: #{network_block_forward.6} parent=11 // pred_check
        %p240 = pneg %p77
      $region14: #{network_block_forward.6} parent=11 // pred_check_branch
        %242 = sbr.rel (%p240) target = $region16
      $region15: #{network_block_forward.6} parent=11 // pred_region
        %p243 = scmp.lt.s32.totalorder %s23, 0
        %s244 = scalar_select %p243, %s23, 0
        %s245 = smul.addr %s244, 4
        %s246 = scalar_lea.vmem %s1, %s245
      $region16: #{network_block_forward.6} parent=11 // pred_fallthru
        _
      // Predicated region
      $region17: #{network_block_forward.6} parent=11 // pred_check
        %p247 = pneg %p103
      $region18: #{network_block_forward.6} parent=11 // pred_check_branch
        %249 = sbr.rel (%p247) target = $region20
      $region19: #{network_block_forward.6} parent=11 // pred_region
        %p250 = scmp.lt.s32.totalorder %s23, 0
        %s251 = scalar_select %p250, %s23, 0
        %s252 = scalar_lea.vmem %s2, %s251
      $region20: #{network_block_forward.6} parent=11 // pred_fallthru
        _
      // Predicated region
      $region21: #{network_block_forward.6} parent=11 // pred_check
        %p253 = pneg %p129
      $region22: #{network_block_forward.6} parent=11 // pred_check_branch
        %255 = sbr.rel (%p253) target = $region24
      $region23: #{network_block_forward.6} parent=11 // pred_region
        %p256 = scmp.lt.s32.totalorder %s23, 0
        %s257 = scalar_select %p256, %s23, 0
        %s258 = scalar_lea.vmem %s3, %s257
      $region24: #{network_block_forward.6} parent=11 // pred_fallthru
        _
      // Predicated region
      $region25: #{network_block_forward.6} parent=11 // pred_check
        %p259 = pneg %p155
      $region26: #{network_block_forward.6} parent=11 // pred_check_branch
        %261 = sbr.rel (%p259) target = $region28
      $region27: #{network_block_forward.6} parent=11 // pred_region
        %p262 = scmp.lt.s32.totalorder %s23, 0
        %s263 = scalar_select %p262, %s23, 0
        %s264 = scalar_lea.vmem %s4, %s263
      $region28: #{network_block_forward.6} parent=11 // pred_fallthru
        _
      // Predicated region
      $region29: #{network_block_forward.6} parent=11 // pred_check
        %p265 = pneg %p176
      $region30: #{network_block_forward.6} parent=11 // pred_check_branch
        %267 = sbr.rel (%p265) target = $region32
      $region31: #{network_block_forward.6} parent=11 // pred_region
        _
      $region32: #{network_block_forward.6} parent=11 // pred_fallthru
        _
      // Predicated region
      $region33: #{network_block_forward.6} parent=11 // pred_check
        %p268 = pneg %p197
      $region34: #{network_block_forward.6} parent=11 // pred_check_branch
        %270 = sbr.rel (%p268) target = $region36
      $region35: #{network_block_forward.6} parent=11 // pred_region
        _
      $region36: #{network_block_forward.6} parent=11 // pred_fallthru
        _
    $region12: #{network_block_forward.6} parent=5 // pred_fallthru
      _
    %p271 = scmp.lt.s32.totalorder %s13, 2
    // Predicated region
    $region37: #{network_block_forward.6} parent=5 // pred_check
      %p272 = pneg %p271
    $region38: #{network_block_forward.6} parent=5 // pred_check_branch
      %274 = sbr.rel (%p272) target = $region40
    $region39: #{network_block_forward.6} parent=5 // pred_region
      // Predicated region
      $region41: #{network_block_forward.6} parent=39 // pred_check
        %p275 = pneg %p45
      $region42: #{network_block_forward.6} parent=39 // pred_check_branch
        %277 = sbr.rel (%p275) target = $region44
      $region43: #{network_block_forward.6} parent=39 // pred_region
        %p278 = scmp.lt.s32.totalorder %s20, 1
        %s279 = scalar_select %p278, %s20, 1
        %s280 = smul.addr %s279, 14
        %s281 = smul.addr %s280, 4
        %s282 = scalar_lea.vmem %s0, %s281
      $region44: #{network_block_forward.6} parent=39 // pred_fallthru
        _
    $region40: #{network_block_forward.6} parent=5 // pred_fallthru
      _
    %p283 = scmp.le.s32.totalorder 1, %s13
    %p284 = scmp.lt.s32.totalorder %s13, 3
    %p285 = pnand %p283, %p284
    %p286 = pneg %p285
    // Predicated region
    $region45: #{network_block_forward.6} parent=5 // pred_check
      _
    $region46: #{network_block_forward.6} parent=5 // pred_check_branch
      %288 = sbr.rel (%p285) target = $region48
    $region47: #{network_block_forward.6} parent=5 // pred_region
      %s289 = ssub.s32 %s13, 1
      %p290 = scmp.lt.s32.totalorder %s22, 1
      %s291 = scalar_select %p290, %s22, 1
      %s292 = smul.addr %s291, 14
      %s293 = smul.addr %s292, 4
      %s294 = scalar_lea.vmem %s0, %s293
      %p295 = pneg %p51
      %p296 = pneg %p48
      %p297 = scmp.lt.s32.totalorder %s23, 0
      %s298 = scalar_select %p297, %s23, 0
      %s299 = smul.addr %s298, 4
      %s300 = scalar_lea.vmem %s1, %s299
      %p301 = pneg %p77
      %p302 = pneg %p74
      %p303 = scmp.lt.s32.totalorder %s23, 0
      %s304 = scalar_select %p303, %s23, 0
      %s305 = scalar_lea.vmem %s2, %s304
      %p306 = pneg %p103
      %p307 = pneg %p100
      %p308 = scmp.lt.s32.totalorder %s23, 0
      %s309 = scalar_select %p308, %s23, 0
      %s310 = scalar_lea.vmem %s3, %s309
      %p311 = pneg %p129
      %p312 = pneg %p126
      %p313 = scmp.lt.s32.totalorder %s23, 0
      %s314 = scalar_select %p313, %s23, 0
      %s315 = scalar_lea.vmem %s4, %s314
      %p316 = pneg %p155
      %p317 = pneg %p152
      %p318 = pneg %p176
      %p319 = pneg %p173
      %p320 = pneg %p197
      %p321 = pneg %p194
      %p322 = pneg %p225
      %p323 = pneg %p222
      %p324 = scmp.lt.s32.totalorder %s22, 1
      %s325 = scalar_select %p324, %s22, 1
      %p326 = scmp.lt.s32.totalorder %s23, 0
      %s327 = scalar_select %p326, %s23, 0
      %s328 = smul.addr %s325, 10
      %s329 = sadd.s32 %s327, %s328
      %s330 = smul.addr %s329, 4
      %s331 = scalar_lea.vmem %s7, %s330
      %p332 = scmp.lt.s32.totalorder %s22, 1
      %s333 = scalar_select %p332, %s22, 1
      %s334 = smul.addr %s333, 14
      %s335 = smul.addr %s334, 4
      %s336 = scalar_lea.vmem %s0, %s335
      %p337 = scmp.lt.s32.totalorder %s23, 0
      %s338 = scalar_select %p337, %s23, 0
      %s339 = smul.addr %s338, 4
      %s340 = scalar_lea.vmem %s1, %s339
      %p341 = scmp.lt.s32.totalorder %s23, 0
      %s342 = scalar_select %p341, %s23, 0
      %s343 = scalar_lea.vmem %s2, %s342
      %p344 = scmp.lt.s32.totalorder %s23, 0
      %s345 = scalar_select %p344, %s23, 0
      %s346 = scalar_lea.vmem %s3, %s345
      %p347 = scmp.lt.s32.totalorder %s23, 0
      %s348 = scalar_select %p347, %s23, 0
      %s349 = scalar_lea.vmem %s4, %s348
      %p350 = scmp.lt.s32.totalorder %s22, 1
      %s351 = scalar_select %p350, %s22, 1
      %p352 = scmp.lt.s32.totalorder %s23, 0
      %s353 = scalar_select %p352, %s23, 0
      %s354 = smul.addr %s351, 10
      %s355 = sadd.s32 %s353, %s354
      %s356 = smul.addr %s355, 4
      %s357 = scalar_lea.vmem %s7, %s356
      %v358 = vld [vmem:[%s336] sm:$0xf]
      %v359 = vld [vmem:[%s336 + $0x4] sm:$0xf]
      %v360 = vld [vmem:[%s336 + $0x8] sm:$0xf]
      %v361 = vld [vmem:[%s336 + $0xc] sm:$0xf]
      %v362 = vld [vmem:[%s336 + $0x10] sm:$0xf]
      %v363 = vld [vmem:[%s336 + $0x14] sm:$0xf]
      %v364 = vld [vmem:[%s336 + $0x18] sm:$0xf]
      %v365 = vld [vmem:[%s336 + $0x1c] sm:$0xf]
      %v366 = vld [vmem:[%s336 + $0x20] sm:$0xf]
      %v367 = vld [vmem:[%s336 + $0x24] sm:$0xf]
      %v368 = vld [vmem:[%s336 + $0x28] sm:$0xf]
      %v369 = vld [vmem:[%s336 + $0x2c] sm:$0xf]
      %v370 = vld [vmem:[%s336 + $0x30] sm:$0xf]
      %v371 = vunpack.c.l.bf16 %v358
      %v372 = vunpack.c.l.bf16 %v359
      %v373 = vunpack.c.l.bf16 %v360
      %v374 = vunpack.c.l.bf16 %v361
      %v375 = vunpack.c.l.bf16 %v362
      %v376 = vunpack.c.l.bf16 %v363
      %v377 = vunpack.c.l.bf16 %v364
      %v378 = vunpack.c.l.bf16 %v365
      %v379 = vunpack.c.l.bf16 %v366
      %v380 = vunpack.c.l.bf16 %v367
      %v381 = vunpack.c.l.bf16 %v368
      %v382 = vunpack.c.l.bf16 %v369
      %v383 = vunpack.c.l.bf16 %v370
      %v384 = vld [vmem:[%s5] sm:$0x1]
      %v386 = vperm.slane %v384, 0
      %v388 = vmul.f32 %v371, %v386
      %v389 = vmul.f32 %v372, %v386
      %v390 = vmul.f32 %v373, %v386
      %v391 = vmul.f32 %v374, %v386
      %v392 = vmul.f32 %v375, %v386
      %v393 = vmul.f32 %v376, %v386
      %v394 = vmul.f32 %v377, %v386
      %v395 = vmul.f32 %v378, %v386
      %v396 = vmul.f32 %v379, %v386
      %v397 = vmul.f32 %v380, %v386
      %v398 = vmul.f32 %v381, %v386
      %v399 = vmul.f32 %v382, %v386
      %v400 = vmul.f32 %v383, %v386
      %v401 = vld [vmem:[%s6] sm:$0x1]
      %v403 = vperm.slane %v401, 0
      %v405 = vadd.f32 %v388, %v403
      %v406 = vadd.f32 %v389, %v403
      %v407 = vadd.f32 %v390, %v403
      %v408 = vadd.f32 %v391, %v403
      %v409 = vadd.f32 %v392, %v403
      %v410 = vadd.f32 %v393, %v403
      %v411 = vadd.f32 %v394, %v403
      %v412 = vadd.f32 %v395, %v403
      %v413 = vadd.f32 %v396, %v403
      %v414 = vadd.f32 %v397, %v403
      %v415 = vadd.f32 %v398, %v403
      %v416 = vadd.f32 %v399, %v403
      %v417 = vadd.f32 %v400, %v403
      %vm418 = vcmp.gt.f32.partialorder %v405, 0.0
      %vm419 = vcmp.gt.f32.partialorder %v406, 0.0
      %vm420 = vcmp.gt.f32.partialorder %v407, 0.0
      %vm421 = vcmp.gt.f32.partialorder %v408, 0.0
      %vm422 = vcmp.gt.f32.partialorder %v409, 0.0
      %vm423 = vcmp.gt.f32.partialorder %v410, 0.0
      %vm424 = vcmp.gt.f32.partialorder %v411, 0.0
      %vm425 = vcmp.gt.f32.partialorder %v412, 0.0
      %vm426 = vcmp.gt.f32.partialorder %v413, 0.0
      %vm427 = vcmp.gt.f32.partialorder %v414, 0.0
      %vm428 = vcmp.gt.f32.partialorder %v415, 0.0
      %vm429 = vcmp.gt.f32.partialorder %v416, 0.0
      %vm430 = vcmp.gt.f32.partialorder %v417, 0.0
      %v431 = vmul.f32 %v405, 0.1
      %v432 = vmul.f32 %v406, 0.1
      %v433 = vmul.f32 %v407, 0.1
      %v434 = vmul.f32 %v408, 0.1
      %v435 = vmul.f32 %v409, 0.1
      %v436 = vmul.f32 %v410, 0.1
      %v437 = vmul.f32 %v411, 0.1
      %v438 = vmul.f32 %v412, 0.1
      %v439 = vmul.f32 %v413, 0.1
      %v440 = vmul.f32 %v414, 0.1
      %v441 = vmul.f32 %v415, 0.1
      %v442 = vmul.f32 %v416, 0.1
      %v443 = vmul.f32 %v417, 0.1
      %v444 = vsel %vm418, %v405, %v431
      %v445 = vsel %vm419, %v406, %v432
      %v446 = vsel %vm420, %v407, %v433
      %v447 = vsel %vm421, %v408, %v434
      %v448 = vsel %vm422, %v409, %v435
      %v449 = vsel %vm423, %v410, %v436
      %v450 = vsel %vm424, %v411, %v437
      %v451 = vsel %vm425, %v412, %v438
      %v452 = vsel %vm426, %v413, %v439
      %v453 = vsel %vm427, %v414, %v440
      %v454 = vsel %vm428, %v415, %v441
      %v455 = vsel %vm429, %v416, %v442
      %v456 = vsel %vm430, %v417, %v443
      %v457 = vpack.c.bf16 %v444, %v444
      %v458 = vpack.c.bf16 %v445, %v445
      %v459 = vpack.c.bf16 %v446, %v446
      %v460 = vpack.c.bf16 %v447, %v447
      %v461 = vpack.c.bf16 %v448, %v448
      %v462 = vpack.c.bf16 %v449, %v449
      %v463 = vpack.c.bf16 %v450, %v450
      %v464 = vpack.c.bf16 %v451, %v451
      %v465 = vpack.c.bf16 %v452, %v452
      %v466 = vpack.c.bf16 %v453, %v453
      %v467 = vpack.c.bf16 %v454, %v454
      %v468 = vpack.c.bf16 %v455, %v455
      %v469 = vpack.c.bf16 %v456, %v456
      %v470 = vld [vmem:[%s340] sm:$0xf]
      %v471 = vld [vmem:[%s340 + $0x4] sm:$0xf]
      %v472 = vld [vmem:[%s340 + $0x8] sm:$0xf]
      %v473 = vld [vmem:[%s340 + $0xc] sm:$0xf]
      %v474 = vld [vmem:[%s340 + $0x10] sm:$0xf]
      %v475 = vld [vmem:[%s340 + $0x14] sm:$0xf]
      %v476 = vld [vmem:[%s340 + $0x18] sm:$0xf]
      %v477 = vld [vmem:[%s340 + $0x1c] sm:$0xf]
      %v478 = vld [vmem:[%s340 + $0x20] sm:$0xf]
      %v479 = vld [vmem:[%s340 + $0x24] sm:$0xf]
      %v480 = vld [vmem:[%s340 + $0x28] sm:$0xf]
      %v481 = vld [vmem:[%s340 + $0x2c] sm:$0xf]
      %v482 = vld [vmem:[%s340 + $0x30] sm:$0xf]
      %v483 = vld [vmem:[%s340 + $0x34] sm:$0xf]
      %v484 = vld [vmem:[%s340 + $0x38] sm:$0xf]
      %v485 = vld [vmem:[%s340 + $0x3c] sm:$0xf]
      %v496 = vunpack.c.l.b16 %v457
      %v497 = vunpack.c.l.b16 %v458
      %v498 = vunpack.c.l.b16 %v459
      %v499 = vunpack.c.l.b16 %v460
      %v500 = vunpack.c.l.b16 %v461
      %v501 = vunpack.c.l.b16 %v462
      %v502 = vunpack.c.l.b16 %v463
      %v503 = vunpack.c.l.b16 %v464
      %v504 = vunpack.c.l.b16 %v465
      %v505 = vunpack.c.l.b16 %v466
      %v506 = vpack.c.b16 %v497, %v496
      %v507 = vpack.c.b16 %v499, %v498
      %v508 = vpack.c.b16 %v501, %v500
      %v509 = vpack.c.b16 %v503, %v502
      %v510 = vpack.c.b16 %v505, %v504
      %v532 = vunpack.c.l.b16 %v470
      %v533 = vunpack.c.l.b16 %v471
      %v534 = vunpack.c.l.b16 %v472
      %v535 = vunpack.c.l.b16 %v473
      %v536 = vunpack.c.l.b16 %v474
      %v537 = vunpack.c.l.b16 %v475
      %v538 = vunpack.c.l.b16 %v476
      %v539 = vunpack.c.l.b16 %v477
      %v540 = vunpack.c.l.b16 %v478
      %v541 = vunpack.c.l.b16 %v479
      %v542 = vunpack.c.l.b16 %v480
      %v543 = vunpack.c.l.b16 %v481
      %v544 = vunpack.c.l.b16 %v482
      %v545 = vunpack.c.l.b16 %v483
      %v546 = vunpack.c.l.b16 %v484
      %v547 = vunpack.c.l.b16 %v485
      %v548 = vpack.c.b16 %v533, %v532
      %v549 = vpack.c.b16 %v535, %v534
      %v550 = vpack.c.b16 %v537, %v536
      %v551 = vpack.c.b16 %v539, %v538
      %v552 = vpack.c.b16 %v541, %v540
      %v553 = vpack.c.b16 %v543, %v542
      %v554 = vpack.c.b16 %v545, %v544
      %v555 = vpack.c.b16 %v547, %v546
      %564 = vmatpush.bf16.msra.mxu0 %v555
      %565 = vmatpush.bf16.msra.mxu0 %v554
      %566 = vmatpush.bf16.msra.mxu0 %v553
      %567 = vmatpush.bf16.msra.mxu0 %v552
      %568 = vmatpush.bf16.msra.mxu0 %v551
      %569 = vmatpush.bf16.msra.mxu0 %v550
      %570 = vmatpush.bf16.msra.mxu0 %v549
      %571 = vmatpush.bf16.msra.mxu0 %v548
      %572 = vmatmul.bf16.gmra.mxu0 %v506
      %v573 = vpop.f32.mrf.mxu0
      %v574 = vadd.f32 0.0, %v573
      %v575 = vpop.f32.mrf.mxu0
      %v576 = vadd.f32 0.0, %v575
      %577 = vmatmul.bf16.gmra.mxu0 %v507
      %v578 = vpop.f32.mrf.mxu0
      %v579 = vadd.f32 0.0, %v578
      %v580 = vpop.f32.mrf.mxu0
      %v581 = vadd.f32 0.0, %v580
      %582 = vmatmul.bf16.gmra.mxu0 %v508
      %v583 = vpop.f32.mrf.mxu0
      %v584 = vadd.f32 0.0, %v583
      %v585 = vpop.f32.mrf.mxu0
      %v586 = vadd.f32 0.0, %v585
      %587 = vmatmul.bf16.gmra.mxu0 %v509
      %v588 = vpop.f32.mrf.mxu0
      %v589 = vadd.f32 0.0, %v588
      %v590 = vpop.f32.mrf.mxu0
      %v591 = vadd.f32 0.0, %v590
      %592 = vmatmul.bf16.gmra.mxu0 %v510
      %v593 = vpop.f32.mrf.mxu0
      %v594 = vadd.f32 0.0, %v593
      %v595 = vpop.f32.mrf.mxu0
      %v596 = vadd.f32 0.0, %v595
      %597 = vdwg.mxu0
      %598 = vst [vmem:[#allocation2] sm:$0xff] %v574
      %599 = vst [vmem:[#allocation2 + $0x8] sm:$0xff] %v576
      %600 = vst [vmem:[#allocation2 + $0x10] sm:$0xff] %v579
      %601 = vst [vmem:[#allocation2 + $0x18] sm:$0xff] %v581
      %602 = vst [vmem:[#allocation2 + $0x20] sm:$0xff] %v584
      %603 = vst [vmem:[#allocation2 + $0x28] sm:$0xff] %v586
      %604 = vst [vmem:[#allocation2 + $0x30] sm:$0xff] %v589
      %605 = vst [vmem:[#allocation2 + $0x38] sm:$0xff] %v591
      %606 = vst [vmem:[#allocation2 + $0x40] sm:$0xff] %v594
      %607 = vst [vmem:[#allocation2 + $0x48] sm:$0xff] %v596
      %v608 = vld [vmem:[%s340 + $0x40] sm:$0xf]
      %v609 = vld [vmem:[%s340 + $0x44] sm:$0xf]
      %v610 = vld [vmem:[%s340 + $0x48] sm:$0xf]
      %v611 = vld [vmem:[%s340 + $0x4c] sm:$0xf]
      %v612 = vld [vmem:[%s340 + $0x50] sm:$0xf]
      %v613 = vld [vmem:[%s340 + $0x54] sm:$0xf]
      %v614 = vld [vmem:[%s340 + $0x58] sm:$0xf]
      %v615 = vld [vmem:[%s340 + $0x5c] sm:$0xf]
      %v616 = vld [vmem:[%s340 + $0x60] sm:$0xf]
      %v617 = vld [vmem:[%s340 + $0x64] sm:$0xf]
      %v618 = vld [vmem:[%s340 + $0x68] sm:$0xf]
      %v619 = vld [vmem:[%s340 + $0x6c] sm:$0xf]
      %v620 = vld [vmem:[%s340 + $0x70] sm:$0xf]
      %v621 = vld [vmem:[%s340 + $0x74] sm:$0xf]
      %v622 = vld [vmem:[%s340 + $0x78] sm:$0xf]
      %v623 = vld [vmem:[%s340 + $0x7c] sm:$0xf]
      %v625 = vunpack.c.l.b16 %v467
      %v626 = vpack.c.b16 %v625, %v625
      %vm627 = vsmask.f32 7424
      %v629 = vshrl.u32 %v506, 16
      %v631 = vshll.u32 %v506, 16
      %v633 = vrot.slane %v631, 1
      %v634 = vor.u32 %v629, %v633
      %v636 = vshll.u32 %v507, 16
      %v638 = vrot.slane %v636, 1
      %v639 = vsel %vm627, %v634, %v638
      %v640 = vshrl.u32 %v507, 16
      %v642 = vor.u32 %v640, %v638
      %v644 = vshll.u32 %v508, 16
      %v646 = vrot.slane %v644, 1
      %v647 = vsel %vm627, %v642, %v646
      %v648 = vshrl.u32 %v508, 16
      %v650 = vor.u32 %v648, %v646
      %v652 = vshll.u32 %v509, 16
      %v654 = vrot.slane %v652, 1
      %v655 = vsel %vm627, %v650, %v654
      %v656 = vshrl.u32 %v509, 16
      %v658 = vor.u32 %v656, %v654
      %v660 = vshll.u32 %v510, 16
      %v662 = vrot.slane %v660, 1
      %v663 = vsel %vm627, %v658, %v662
      %v664 = vshrl.u32 %v510, 16
      %v666 = vor.u32 %v664, %v662
      %v668 = vshll.u32 %v626, 16
      %v670 = vrot.slane %v668, 1
      %v671 = vsel %vm627, %v666, %v670
      %v693 = vunpack.c.l.b16 %v608
      %v694 = vunpack.c.l.b16 %v609
      %v695 = vunpack.c.l.b16 %v610
      %v696 = vunpack.c.l.b16 %v611
      %v697 = vunpack.c.l.b16 %v612
      %v698 = vunpack.c.l.b16 %v613
      %v699 = vunpack.c.l.b16 %v614
      %v700 = vunpack.c.l.b16 %v615
      %v701 = vunpack.c.l.b16 %v616
      %v702 = vunpack.c.l.b16 %v617
      %v703 = vunpack.c.l.b16 %v618
      %v704 = vunpack.c.l.b16 %v619
      %v705 = vunpack.c.l.b16 %v620
      %v706 = vunpack.c.l.b16 %v621
      %v707 = vunpack.c.l.b16 %v622
      %v708 = vunpack.c.l.b16 %v623
      %v709 = vpack.c.b16 %v694, %v693
      %v710 = vpack.c.b16 %v696, %v695
      %v711 = vpack.c.b16 %v698, %v697
      %v712 = vpack.c.b16 %v700, %v699
      %v713 = vpack.c.b16 %v702, %v701
      %v714 = vpack.c.b16 %v704, %v703
      %v715 = vpack.c.b16 %v706, %v705
      %v716 = vpack.c.b16 %v708, %v707
      %725 = vmatpush.bf16.msra.mxu0 %v716
      %726 = vmatpush.bf16.msra.mxu0 %v715
      %727 = vmatpush.bf16.msra.mxu0 %v714
      %728 = vmatpush.bf16.msra.mxu0 %v713
      %729 = vmatpush.bf16.msra.mxu0 %v712
      %730 = vmatpush.bf16.msra.mxu0 %v711
      %731 = vmatpush.bf16.msra.mxu0 %v710
      %732 = vmatpush.bf16.msra.mxu0 %v709
      %733 = vmatmul.bf16.gmra.mxu0 %v639
      %v734 = vpop.f32.mrf.mxu0
      %v735 = vadd.f32 0.0, %v734
      %v736 = vpop.f32.mrf.mxu0
      %v737 = vadd.f32 0.0, %v736
      %738 = vmatmul.bf16.gmra.mxu0 %v647
      %v739 = vpop.f32.mrf.mxu0
      %v740 = vadd.f32 0.0, %v739
      %v741 = vpop.f32.mrf.mxu0
      %v742 = vadd.f32 0.0, %v741
      %743 = vmatmul.bf16.gmra.mxu0 %v655
      %v744 = vpop.f32.mrf.mxu0
      %v745 = vadd.f32 0.0, %v744
      %v746 = vpop.f32.mrf.mxu0
      %v747 = vadd.f32 0.0, %v746
      %748 = vmatmul.bf16.gmra.mxu0 %v663
      %v749 = vpop.f32.mrf.mxu0
      %v750 = vadd.f32 0.0, %v749
      %v751 = vpop.f32.mrf.mxu0
      %v752 = vadd.f32 0.0, %v751
      %753 = vmatmul.bf16.gmra.mxu0 %v671
      %v754 = vpop.f32.mrf.mxu0
      %v755 = vadd.f32 0.0, %v754
      %v756 = vpop.f32.mrf.mxu0
      %v757 = vadd.f32 0.0, %v756
      %758 = vdwg.mxu0
      %v759 = vld [vmem:[#allocation2] sm:$0xff]
      %v760 = vld [vmem:[#allocation2 + $0x8] sm:$0xff]
      %v761 = vld [vmem:[#allocation2 + $0x10] sm:$0xff]
      %v762 = vld [vmem:[#allocation2 + $0x18] sm:$0xff]
      %v763 = vld [vmem:[#allocation2 + $0x20] sm:$0xff]
      %v764 = vld [vmem:[#allocation2 + $0x28] sm:$0xff]
      %v765 = vld [vmem:[#allocation2 + $0x30] sm:$0xff]
      %v766 = vld [vmem:[#allocation2 + $0x38] sm:$0xff]
      %v767 = vld [vmem:[#allocation2 + $0x40] sm:$0xff]
      %v768 = vld [vmem:[#allocation2 + $0x48] sm:$0xff]
      %v769 = vadd.f32 %v759, %v735
      %v770 = vadd.f32 %v760, %v737
      %v771 = vadd.f32 %v761, %v740
      %v772 = vadd.f32 %v762, %v742
      %v773 = vadd.f32 %v763, %v745
      %v774 = vadd.f32 %v764, %v747
      %v775 = vadd.f32 %v765, %v750
      %v776 = vadd.f32 %v766, %v752
      %v777 = vadd.f32 %v767, %v755
      %v778 = vadd.f32 %v768, %v757
      %779 = vst [vmem:[#allocation2] sm:$0xff] %v769
      %780 = vst [vmem:[#allocation2 + $0x8] sm:$0xff] %v770
      %781 = vst [vmem:[#allocation2 + $0x10] sm:$0xff] %v771
      %782 = vst [vmem:[#allocation2 + $0x18] sm:$0xff] %v772
      %783 = vst [vmem:[#allocation2 + $0x20] sm:$0xff] %v773
      %784 = vst [vmem:[#allocation2 + $0x28] sm:$0xff] %v774
      %785 = vst [vmem:[#allocation2 + $0x30] sm:$0xff] %v775
      %786 = vst [vmem:[#allocation2 + $0x38] sm:$0xff] %v776
      %787 = vst [vmem:[#allocation2 + $0x40] sm:$0xff] %v777
      %788 = vst [vmem:[#allocation2 + $0x48] sm:$0xff] %v778
      %v789 = vld [vmem:[%s340 + $0x80] sm:$0xf]
      %v790 = vld [vmem:[%s340 + $0x84] sm:$0xf]
      %v791 = vld [vmem:[%s340 + $0x88] sm:$0xf]
      %v792 = vld [vmem:[%s340 + $0x8c] sm:$0xf]
      %v793 = vld [vmem:[%s340 + $0x90] sm:$0xf]
      %v794 = vld [vmem:[%s340 + $0x94] sm:$0xf]
      %v795 = vld [vmem:[%s340 + $0x98] sm:$0xf]
      %v796 = vld [vmem:[%s340 + $0x9c] sm:$0xf]
      %v797 = vld [vmem:[%s340 + $0xa0] sm:$0xf]
      %v798 = vld [vmem:[%s340 + $0xa4] sm:$0xf]
      %v799 = vld [vmem:[%s340 + $0xa8] sm:$0xf]
      %v800 = vld [vmem:[%s340 + $0xac] sm:$0xf]
      %v801 = vld [vmem:[%s340 + $0xb0] sm:$0xf]
      %v802 = vld [vmem:[%s340 + $0xb4] sm:$0xf]
      %v803 = vld [vmem:[%s340 + $0xb8] sm:$0xf]
      %v804 = vld [vmem:[%s340 + $0xbc] sm:$0xf]
      %vm805 = vcmask 1046528
      %v806 = vrot.slane %v506, 1
      %v807 = vrot.slane %v507, 1
      %v808 = vsel %vm805, %v806, %v807
      %v809 = vrot.slane %v508, 1
      %v810 = vsel %vm805, %v807, %v809
      %v811 = vrot.slane %v509, 1
      %v812 = vsel %vm805, %v809, %v811
      %v813 = vrot.slane %v510, 1
      %v814 = vsel %vm805, %v811, %v813
      %v815 = vrot.slane %v626, 1
      %v816 = vsel %vm805, %v813, %v815
      %v838 = vunpack.c.l.b16 %v789
      %v839 = vunpack.c.l.b16 %v790
      %v840 = vunpack.c.l.b16 %v791
      %v841 = vunpack.c.l.b16 %v792
      %v842 = vunpack.c.l.b16 %v793
      %v843 = vunpack.c.l.b16 %v794
      %v844 = vunpack.c.l.b16 %v795
      %v845 = vunpack.c.l.b16 %v796
      %v846 = vunpack.c.l.b16 %v797
      %v847 = vunpack.c.l.b16 %v798
      %v848 = vunpack.c.l.b16 %v799
      %v849 = vunpack.c.l.b16 %v800
      %v850 = vunpack.c.l.b16 %v801
      %v851 = vunpack.c.l.b16 %v802
      %v852 = vunpack.c.l.b16 %v803
      %v853 = vunpack.c.l.b16 %v804
      %v854 = vpack.c.b16 %v839, %v838
      %v855 = vpack.c.b16 %v841, %v840
      %v856 = vpack.c.b16 %v843, %v842
      %v857 = vpack.c.b16 %v845, %v844
      %v858 = vpack.c.b16 %v847, %v846
      %v859 = vpack.c.b16 %v849, %v848
      %v860 = vpack.c.b16 %v851, %v850
      %v861 = vpack.c.b16 %v853, %v852
      %870 = vmatpush.bf16.msra.mxu0 %v861
      %871 = vmatpush.bf16.msra.mxu0 %v860
      %872 = vmatpush.bf16.msra.mxu0 %v859
      %873 = vmatpush.bf16.msra.mxu0 %v858
      %874 = vmatpush.bf16.msra.mxu0 %v857
      %875 = vmatpush.bf16.msra.mxu0 %v856
      %876 = vmatpush.bf16.msra.mxu0 %v855
      %877 = vmatpush.bf16.msra.mxu0 %v854
      %878 = vmatmul.bf16.gmra.mxu0 %v808
      %v879 = vpop.f32.mrf.mxu0
      %v880 = vadd.f32 0.0, %v879
      %v881 = vpop.f32.mrf.mxu0
      %v882 = vadd.f32 0.0, %v881
      %883 = vmatmul.bf16.gmra.mxu0 %v810
      %v884 = vpop.f32.mrf.mxu0
      %v885 = vadd.f32 0.0, %v884
      %v886 = vpop.f32.mrf.mxu0
      %v887 = vadd.f32 0.0, %v886
      %888 = vmatmul.bf16.gmra.mxu0 %v812
      %v889 = vpop.f32.mrf.mxu0
      %v890 = vadd.f32 0.0, %v889
      %v891 = vpop.f32.mrf.mxu0
      %v892 = vadd.f32 0.0, %v891
      %893 = vmatmul.bf16.gmra.mxu0 %v814
      %v894 = vpop.f32.mrf.mxu0
      %v895 = vadd.f32 0.0, %v894
      %v896 = vpop.f32.mrf.mxu0
      %v897 = vadd.f32 0.0, %v896
      %898 = vmatmul.bf16.gmra.mxu0 %v816
      %v899 = vpop.f32.mrf.mxu0
      %v900 = vadd.f32 0.0, %v899
      %v901 = vpop.f32.mrf.mxu0
      %v902 = vadd.f32 0.0, %v901
      %903 = vdwg.mxu0
      %v904 = vld [vmem:[#allocation2] sm:$0xff]
      %v905 = vld [vmem:[#allocation2 + $0x8] sm:$0xff]
      %v906 = vld [vmem:[#allocation2 + $0x10] sm:$0xff]
      %v907 = vld [vmem:[#allocation2 + $0x18] sm:$0xff]
      %v908 = vld [vmem:[#allocation2 + $0x20] sm:$0xff]
      %v909 = vld [vmem:[#allocation2 + $0x28] sm:$0xff]
      %v910 = vld [vmem:[#allocation2 + $0x30] sm:$0xff]
      %v911 = vld [vmem:[#allocation2 + $0x38] sm:$0xff]
      %v912 = vld [vmem:[#allocation2 + $0x40] sm:$0xff]
      %v913 = vld [vmem:[#allocation2 + $0x48] sm:$0xff]
      %v914 = vadd.f32 %v904, %v880
      %v915 = vadd.f32 %v905, %v882
      %v916 = vadd.f32 %v906, %v885
      %v917 = vadd.f32 %v907, %v887
      %v918 = vadd.f32 %v908, %v890
      %v919 = vadd.f32 %v909, %v892
      %v920 = vadd.f32 %v910, %v895
      %v921 = vadd.f32 %v911, %v897
      %v922 = vadd.f32 %v912, %v900
      %v923 = vadd.f32 %v913, %v902
      %924 = vst [vmem:[#allocation2] sm:$0xff] %v914
      %925 = vst [vmem:[#allocation2 + $0x8] sm:$0xff] %v915
      %926 = vst [vmem:[#allocation2 + $0x10] sm:$0xff] %v916
      %927 = vst [vmem:[#allocation2 + $0x18] sm:$0xff] %v917
      %928 = vst [vmem:[#allocation2 + $0x20] sm:$0xff] %v918
      %929 = vst [vmem:[#allocation2 + $0x28] sm:$0xff] %v919
      %930 = vst [vmem:[#allocation2 + $0x30] sm:$0xff] %v920
      %931 = vst [vmem:[#allocation2 + $0x38] sm:$0xff] %v921
      %932 = vst [vmem:[#allocation2 + $0x40] sm:$0xff] %v922
      %933 = vst [vmem:[#allocation2 + $0x48] sm:$0xff] %v923
      %v934 = vld [vmem:[%s340 + $0xc0] sm:$0xf]
      %v935 = vld [vmem:[%s340 + $0xc4] sm:$0xf]
      %v936 = vld [vmem:[%s340 + $0xc8] sm:$0xf]
      %v937 = vld [vmem:[%s340 + $0xcc] sm:$0xf]
      %v938 = vld [vmem:[%s340 + $0xd0] sm:$0xf]
      %v939 = vld [vmem:[%s340 + $0xd4] sm:$0xf]
      %v940 = vld [vmem:[%s340 + $0xd8] sm:$0xf]
      %v941 = vld [vmem:[%s340 + $0xdc] sm:$0xf]
      %v942 = vld [vmem:[%s340 + $0xe0] sm:$0xf]
      %v943 = vld [vmem:[%s340 + $0xe4] sm:$0xf]
      %v944 = vld [vmem:[%s340 + $0xe8] sm:$0xf]
      %v945 = vld [vmem:[%s340 + $0xec] sm:$0xf]
      %v946 = vld [vmem:[%s340 + $0xf0] sm:$0xf]
      %v947 = vld [vmem:[%s340 + $0xf4] sm:$0xf]
      %v948 = vld [vmem:[%s340 + $0xf8] sm:$0xf]
      %v949 = vld [vmem:[%s340 + $0xfc] sm:$0xf]
      %v951 = vunpack.c.l.b16 %v468
      %v952 = vpack.c.b16 %v498, %v497
      %v953 = vpack.c.b16 %v500, %v499
      %v954 = vpack.c.b16 %v502, %v501
      %v955 = vpack.c.b16 %v504, %v503
      %v956 = vpack.c.b16 %v625, %v505
      %v957 = vpack.c.b16 %v951, %v951
      %v958 = vrot.slane %v952, 1
      %v959 = vrot.slane %v953, 1
      %v960 = vsel %vm805, %v958, %v959
      %v961 = vrot.slane %v954, 1
      %v962 = vsel %vm805, %v959, %v961
      %v963 = vrot.slane %v955, 1
      %v964 = vsel %vm805, %v961, %v963
      %v965 = vrot.slane %v956, 1
      %v966 = vsel %vm805, %v963, %v965
      %v967 = vrot.slane %v957, 1
      %v968 = vsel %vm805, %v965, %v967
      %v990 = vunpack.c.l.b16 %v934
      %v991 = vunpack.c.l.b16 %v935
      %v992 = vunpack.c.l.b16 %v936
      %v993 = vunpack.c.l.b16 %v937
      %v994 = vunpack.c.l.b16 %v938
      %v995 = vunpack.c.l.b16 %v939
      %v996 = vunpack.c.l.b16 %v940
      %v997 = vunpack.c.l.b16 %v941
      %v998 = vunpack.c.l.b16 %v942
      %v999 = vunpack.c.l.b16 %v943
      %v1000 = vunpack.c.l.b16 %v944
      %v1001 = vunpack.c.l.b16 %v945
      %v1002 = vunpack.c.l.b16 %v946
      %v1003 = vunpack.c.l.b16 %v947
      %v1004 = vunpack.c.l.b16 %v948
      %v1005 = vunpack.c.l.b16 %v949
      %v1006 = vpack.c.b16 %v991, %v990
      %v1007 = vpack.c.b16 %v993, %v992
      %v1008 = vpack.c.b16 %v995, %v994
      %v1009 = vpack.c.b16 %v997, %v996
      %v1010 = vpack.c.b16 %v999, %v998
      %v1011 = vpack.c.b16 %v1001, %v1000
      %v1012 = vpack.c.b16 %v1003, %v1002
      %v1013 = vpack.c.b16 %v1005, %v1004
      %1022 = vmatpush.bf16.msra.mxu0 %v1013
      %1023 = vmatpush.bf16.msra.mxu0 %v1012
      %1024 = vmatpush.bf16.msra.mxu0 %v1011
      %1025 = vmatpush.bf16.msra.mxu0 %v1010
      %1026 = vmatpush.bf16.msra.mxu0 %v1009
      %1027 = vmatpush.bf16.msra.mxu0 %v1008
      %1028 = vmatpush.bf16.msra.mxu0 %v1007
      %1029 = vmatpush.bf16.msra.mxu0 %v1006
      %1030 = vmatmul.bf16.gmra.mxu0 %v960
      %v1031 = vpop.f32.mrf.mxu0
      %v1032 = vadd.f32 0.0, %v1031
      %v1033 = vpop.f32.mrf.mxu0
      %v1034 = vadd.f32 0.0, %v1033
      %1035 = vmatmul.bf16.gmra.mxu0 %v962
      %v1036 = vpop.f32.mrf.mxu0
      %v1037 = vadd.f32 0.0, %v1036
      %v1038 = vpop.f32.mrf.mxu0
      %v1039 = vadd.f32 0.0, %v1038
      %1040 = vmatmul.bf16.gmra.mxu0 %v964
      %v1041 = vpop.f32.mrf.mxu0
      %v1042 = vadd.f32 0.0, %v1041
      %v1043 = vpop.f32.mrf.mxu0
      %v1044 = vadd.f32 0.0, %v1043
      %1045 = vmatmul.bf16.gmra.mxu0 %v966
      %v1046 = vpop.f32.mrf.mxu0
      %v1047 = vadd.f32 0.0, %v1046
      %v1048 = vpop.f32.mrf.mxu0
      %v1049 = vadd.f32 0.0, %v1048
      %1050 = vmatmul.bf16.gmra.mxu0 %v968
      %v1051 = vpop.f32.mrf.mxu0
      %v1052 = vadd.f32 0.0, %v1051
      %v1053 = vpop.f32.mrf.mxu0
      %v1054 = vadd.f32 0.0, %v1053
      %1055 = vdwg.mxu0
      %v1056 = vld [vmem:[#allocation2] sm:$0xff]
      %v1057 = vld [vmem:[#allocation2 + $0x8] sm:$0xff]
      %v1058 = vld [vmem:[#allocation2 + $0x10] sm:$0xff]
      %v1059 = vld [vmem:[#allocation2 + $0x18] sm:$0xff]
      %v1060 = vld [vmem:[#allocation2 + $0x20] sm:$0xff]
      %v1061 = vld [vmem:[#allocation2 + $0x28] sm:$0xff]
      %v1062 = vld [vmem:[#allocation2 + $0x30] sm:$0xff]
      %v1063 = vld [vmem:[#allocation2 + $0x38] sm:$0xff]
      %v1064 = vld [vmem:[#allocation2 + $0x40] sm:$0xff]
      %v1065 = vld [vmem:[#allocation2 + $0x48] sm:$0xff]
      %v1066 = vadd.f32 %v1056, %v1032
      %v1067 = vadd.f32 %v1057, %v1034
      %v1068 = vadd.f32 %v1058, %v1037
      %v1069 = vadd.f32 %v1059, %v1039
      %v1070 = vadd.f32 %v1060, %v1042
      %v1071 = vadd.f32 %v1061, %v1044
      %v1072 = vadd.f32 %v1062, %v1047
      %v1073 = vadd.f32 %v1063, %v1049
      %v1074 = vadd.f32 %v1064, %v1052
      %v1075 = vadd.f32 %v1065, %v1054
      %1076 = vst [vmem:[#allocation2] sm:$0xff] %v1066
      %1077 = vst [vmem:[#allocation2 + $0x8] sm:$0xff] %v1067
      %1078 = vst [vmem:[#allocation2 + $0x10] sm:$0xff] %v1068
      %1079 = vst [vmem:[#allocation2 + $0x18] sm:$0xff] %v1069
      %1080 = vst [vmem:[#allocation2 + $0x20] sm:$0xff] %v1070
      %1081 = vst [vmem:[#allocation2 + $0x28] sm:$0xff] %v1071
      %1082 = vst [vmem:[#allocation2 + $0x30] sm:$0xff] %v1072
      %1083 = vst [vmem:[#allocation2 + $0x38] sm:$0xff] %v1073
      %1084 = vst [vmem:[#allocation2 + $0x40] sm:$0xff] %v1074
      %1085 = vst [vmem:[#allocation2 + $0x48] sm:$0xff] %v1075
      %v1086 = vld [vmem:[%s340 + $0x100] sm:$0xf]
      %v1087 = vld [vmem:[%s340 + $0x104] sm:$0xf]
      %v1088 = vld [vmem:[%s340 + $0x108] sm:$0xf]
      %v1089 = vld [vmem:[%s340 + $0x10c] sm:$0xf]
      %v1090 = vld [vmem:[%s340 + $0x110] sm:$0xf]
      %v1091 = vld [vmem:[%s340 + $0x114] sm:$0xf]
      %v1092 = vld [vmem:[%s340 + $0x118] sm:$0xf]
      %v1093 = vld [vmem:[%s340 + $0x11c] sm:$0xf]
      %v1094 = vld [vmem:[%s340 + $0x120] sm:$0xf]
      %v1095 = vld [vmem:[%s340 + $0x124] sm:$0xf]
      %v1096 = vld [vmem:[%s340 + $0x128] sm:$0xf]
      %v1097 = vld [vmem:[%s340 + $0x12c] sm:$0xf]
      %v1098 = vld [vmem:[%s340 + $0x130] sm:$0xf]
      %v1099 = vld [vmem:[%s340 + $0x134] sm:$0xf]
      %v1100 = vld [vmem:[%s340 + $0x138] sm:$0xf]
      %v1101 = vld [vmem:[%s340 + $0x13c] sm:$0xf]
      %vm1102 = vsmask.f32 6400
      %v1104 = vshrl.u32 %v952, 16
      %v1106 = vrot.slane %v1104, 1
      %v1107 = vshll.u32 %v952, 16
      %v1109 = vrot.slane %v1107, 2
      %v1110 = vor.u32 %v1106, %v1109
      %v1112 = vshrl.u32 %v953, 16
      %v1114 = vrot.slane %v1112, 1
      %v1115 = vshll.u32 %v953, 16
      %v1117 = vrot.slane %v1115, 2
      %v1118 = vor.u32 %v1114, %v1117
      %v1119 = vsel %vm1102, %v1110, %v1118
      %v1121 = vshrl.u32 %v954, 16
      %v1123 = vrot.slane %v1121, 1
      %v1124 = vshll.u32 %v954, 16
      %v1126 = vrot.slane %v1124, 2
      %v1127 = vor.u32 %v1123, %v1126
      %v1128 = vsel %vm1102, %v1118, %v1127
      %v1130 = vshrl.u32 %v955, 16
      %v1132 = vrot.slane %v1130, 1
      %v1133 = vshll.u32 %v955, 16
      %v1135 = vrot.slane %v1133, 2
      %v1136 = vor.u32 %v1132, %v1135
      %v1137 = vsel %vm1102, %v1127, %v1136
      %v1139 = vshrl.u32 %v956, 16
      %v1141 = vrot.slane %v1139, 1
      %v1142 = vshll.u32 %v956, 16
      %v1144 = vrot.slane %v1142, 2
      %v1145 = vor.u32 %v1141, %v1144
      %v1146 = vsel %vm1102, %v1136, %v1145
      %v1148 = vshrl.u32 %v957, 16
      %v1150 = vrot.slane %v1148, 1
      %v1151 = vshll.u32 %v957, 16
      %v1153 = vrot.slane %v1151, 2
      %v1154 = vor.u32 %v1150, %v1153
      %v1155 = vsel %vm1102, %v1145, %v1154
      %v1177 = vunpack.c.l.b16 %v1086
      %v1178 = vunpack.c.l.b16 %v1087
      %v1179 = vunpack.c.l.b16 %v1088
      %v1180 = vunpack.c.l.b16 %v1089
      %v1181 = vunpack.c.l.b16 %v1090
      %v1182 = vunpack.c.l.b16 %v1091
      %v1183 = vunpack.c.l.b16 %v1092
      %v1184 = vunpack.c.l.b16 %v1093
      %v1185 = vunpack.c.l.b16 %v1094
      %v1186 = vunpack.c.l.b16 %v1095
      %v1187 = vunpack.c.l.b16 %v1096
      %v1188 = vunpack.c.l.b16 %v1097
      %v1189 = vunpack.c.l.b16 %v1098
      %v1190 = vunpack.c.l.b16 %v1099
      %v1191 = vunpack.c.l.b16 %v1100
      %v1192 = vunpack.c.l.b16 %v1101
      %v1193 = vpack.c.b16 %v1178, %v1177
      %v1194 = vpack.c.b16 %v1180, %v1179
      %v1195 = vpack.c.b16 %v1182, %v1181
      %v1196 = vpack.c.b16 %v1184, %v1183
      %v1197 = vpack.c.b16 %v1186, %v1185
      %v1198 = vpack.c.b16 %v1188, %v1187
      %v1199 = vpack.c.b16 %v1190, %v1189
      %v1200 = vpack.c.b16 %v1192, %v1191
      %1209 = vmatpush.bf16.msra.mxu0 %v1200
      %1210 = vmatpush.bf16.msra.mxu0 %v1199
      %1211 = vmatpush.bf16.msra.mxu0 %v1198
      %1212 = vmatpush.bf16.msra.mxu0 %v1197
      %1213 = vmatpush.bf16.msra.mxu0 %v1196
      %1214 = vmatpush.bf16.msra.mxu0 %v1195
      %1215 = vmatpush.bf16.msra.mxu0 %v1194
      %1216 = vmatpush.bf16.msra.mxu0 %v1193
      %1217 = vmatmul.bf16.gmra.mxu0 %v1119
      %v1218 = vpop.f32.mrf.mxu0
      %v1219 = vadd.f32 0.0, %v1218
      %v1220 = vpop.f32.mrf.mxu0
      %v1221 = vadd.f32 0.0, %v1220
      %1222 = vmatmul.bf16.gmra.mxu0 %v1128
      %v1223 = vpop.f32.mrf.mxu0
      %v1224 = vadd.f32 0.0, %v1223
      %v1225 = vpop.f32.mrf.mxu0
      %v1226 = vadd.f32 0.0, %v1225
      %1227 = vmatmul.bf16.gmra.mxu0 %v1137
      %v1228 = vpop.f32.mrf.mxu0
      %v1229 = vadd.f32 0.0, %v1228
      %v1230 = vpop.f32.mrf.mxu0
      %v1231 = vadd.f32 0.0, %v1230
      %1232 = vmatmul.bf16.gmra.mxu0 %v1146
      %v1233 = vpop.f32.mrf.mxu0
      %v1234 = vadd.f32 0.0, %v1233
      %v1235 = vpop.f32.mrf.mxu0
      %v1236 = vadd.f32 0.0, %v1235
      %1237 = vmatmul.bf16.gmra.mxu0 %v1155
      %v1238 = vpop.f32.mrf.mxu0
      %v1239 = vadd.f32 0.0, %v1238
      %v1240 = vpop.f32.mrf.mxu0
      %v1241 = vadd.f32 0.0, %v1240
      %1242 = vdwg.mxu0
      %v1243 = vld [vmem:[#allocation2] sm:$0xff]
      %v1244 = vld [vmem:[#allocation2 + $0x8] sm:$0xff]
      %v1245 = vld [vmem:[#allocation2 + $0x10] sm:$0xff]
      %v1246 = vld [vmem:[#allocation2 + $0x18] sm:$0xff]
      %v1247 = vld [vmem:[#allocation2 + $0x20] sm:$0xff]
      %v1248 = vld [vmem:[#allocation2 + $0x28] sm:$0xff]
      %v1249 = vld [vmem:[#allocation2 + $0x30] sm:$0xff]
      %v1250 = vld [vmem:[#allocation2 + $0x38] sm:$0xff]
      %v1251 = vld [vmem:[#allocation2 + $0x40] sm:$0xff]
      %v1252 = vld [vmem:[#allocation2 + $0x48] sm:$0xff]
      %v1253 = vadd.f32 %v1243, %v1219
      %v1254 = vadd.f32 %v1244, %v1221
      %v1255 = vadd.f32 %v1245, %v1224
      %v1256 = vadd.f32 %v1246, %v1226
      %v1257 = vadd.f32 %v1247, %v1229
      %v1258 = vadd.f32 %v1248, %v1231
      %v1259 = vadd.f32 %v1249, %v1234
      %v1260 = vadd.f32 %v1250, %v1236
      %v1261 = vadd.f32 %v1251, %v1239
      %v1262 = vadd.f32 %v1252, %v1241
      %1263 = vst [vmem:[#allocation2] sm:$0xff] %v1253
      %1264 = vst [vmem:[#allocation2 + $0x8] sm:$0xff] %v1254
      %1265 = vst [vmem:[#allocation2 + $0x10] sm:$0xff] %v1255
      %1266 = vst [vmem:[#allocation2 + $0x18] sm:$0xff] %v1256
      %1267 = vst [vmem:[#allocation2 + $0x20] sm:$0xff] %v1257
      %1268 = vst [vmem:[#allocation2 + $0x28] sm:$0xff] %v1258
      %1269 = vst [vmem:[#allocation2 + $0x30] sm:$0xff] %v1259
      %1270 = vst [vmem:[#allocation2 + $0x38] sm:$0xff] %v1260
      %1271 = vst [vmem:[#allocation2 + $0x40] sm:$0xff] %v1261
      %1272 = vst [vmem:[#allocation2 + $0x48] sm:$0xff] %v1262
      %v1273 = vld [vmem:[%s340 + $0x140] sm:$0xf]
      %v1274 = vld [vmem:[%s340 + $0x144] sm:$0xf]
      %v1275 = vld [vmem:[%s340 + $0x148] sm:$0xf]
      %v1276 = vld [vmem:[%s340 + $0x14c] sm:$0xf]
      %v1277 = vld [vmem:[%s340 + $0x150] sm:$0xf]
      %v1278 = vld [vmem:[%s340 + $0x154] sm:$0xf]
      %v1279 = vld [vmem:[%s340 + $0x158] sm:$0xf]
      %v1280 = vld [vmem:[%s340 + $0x15c] sm:$0xf]
      %v1281 = vld [vmem:[%s340 + $0x160] sm:$0xf]
      %v1282 = vld [vmem:[%s340 + $0x164] sm:$0xf]
      %v1283 = vld [vmem:[%s340 + $0x168] sm:$0xf]
      %v1284 = vld [vmem:[%s340 + $0x16c] sm:$0xf]
      %v1285 = vld [vmem:[%s340 + $0x170] sm:$0xf]
      %v1286 = vld [vmem:[%s340 + $0x174] sm:$0xf]
      %v1287 = vld [vmem:[%s340 + $0x178] sm:$0xf]
      %v1288 = vld [vmem:[%s340 + $0x17c] sm:$0xf]
      %vm1289 = vcmask 1045504
      %v1290 = vrot.slane %v952, 2
      %v1291 = vrot.slane %v953, 2
      %v1292 = vsel %vm1289, %v1290, %v1291
      %v1293 = vrot.slane %v954, 2
      %v1294 = vsel %vm1289, %v1291, %v1293
      %v1295 = vrot.slane %v955, 2
      %v1296 = vsel %vm1289, %v1293, %v1295
      %v1297 = vrot.slane %v956, 2
      %v1298 = vsel %vm1289, %v1295, %v1297
      %v1299 = vrot.slane %v957, 2
      %v1300 = vsel %vm1289, %v1297, %v1299
      %v1322 = vunpack.c.l.b16 %v1273
      %v1323 = vunpack.c.l.b16 %v1274
      %v1324 = vunpack.c.l.b16 %v1275
      %v1325 = vunpack.c.l.b16 %v1276
      %v1326 = vunpack.c.l.b16 %v1277
      %v1327 = vunpack.c.l.b16 %v1278
      %v1328 = vunpack.c.l.b16 %v1279
      %v1329 = vunpack.c.l.b16 %v1280
      %v1330 = vunpack.c.l.b16 %v1281
      %v1331 = vunpack.c.l.b16 %v1282
      %v1332 = vunpack.c.l.b16 %v1283
      %v1333 = vunpack.c.l.b16 %v1284
      %v1334 = vunpack.c.l.b16 %v1285
      %v1335 = vunpack.c.l.b16 %v1286
      %v1336 = vunpack.c.l.b16 %v1287
      %v1337 = vunpack.c.l.b16 %v1288
      %v1338 = vpack.c.b16 %v1323, %v1322
      %v1339 = vpack.c.b16 %v1325, %v1324
      %v1340 = vpack.c.b16 %v1327, %v1326
      %v1341 = vpack.c.b16 %v1329, %v1328
      %v1342 = vpack.c.b16 %v1331, %v1330
      %v1343 = vpack.c.b16 %v1333, %v1332
      %v1344 = vpack.c.b16 %v1335, %v1334
      %v1345 = vpack.c.b16 %v1337, %v1336
      %1354 = vmatpush.bf16.msra.mxu0 %v1345
      %1355 = vmatpush.bf16.msra.mxu0 %v1344
      %1356 = vmatpush.bf16.msra.mxu0 %v1343
      %1357 = vmatpush.bf16.msra.mxu0 %v1342
      %1358 = vmatpush.bf16.msra.mxu0 %v1341
      %1359 = vmatpush.bf16.msra.mxu0 %v1340
      %1360 = vmatpush.bf16.msra.mxu0 %v1339
      %1361 = vmatpush.bf16.msra.mxu0 %v1338
      %1362 = vmatmul.bf16.gmra.mxu0 %v1292
      %v1363 = vpop.f32.mrf.mxu0
      %v1364 = vadd.f32 0.0, %v1363
      %v1365 = vpop.f32.mrf.mxu0
      %v1366 = vadd.f32 0.0, %v1365
      %1367 = vmatmul.bf16.gmra.mxu0 %v1294
      %v1368 = vpop.f32.mrf.mxu0
      %v1369 = vadd.f32 0.0, %v1368
      %v1370 = vpop.f32.mrf.mxu0
      %v1371 = vadd.f32 0.0, %v1370
      %1372 = vmatmul.bf16.gmra.mxu0 %v1296
      %v1373 = vpop.f32.mrf.mxu0
      %v1374 = vadd.f32 0.0, %v1373
      %v1375 = vpop.f32.mrf.mxu0
      %v1376 = vadd.f32 0.0, %v1375
      %1377 = vmatmul.bf16.gmra.mxu0 %v1298
      %v1378 = vpop.f32.mrf.mxu0
      %v1379 = vadd.f32 0.0, %v1378
      %v1380 = vpop.f32.mrf.mxu0
      %v1381 = vadd.f32 0.0, %v1380
      %1382 = vmatmul.bf16.gmra.mxu0 %v1300
      %v1383 = vpop.f32.mrf.mxu0
      %v1384 = vadd.f32 0.0, %v1383
      %v1385 = vpop.f32.mrf.mxu0
      %v1386 = vadd.f32 0.0, %v1385
      %1387 = vdwg.mxu0
      %v1388 = vld [vmem:[#allocation2] sm:$0xff]
      %v1389 = vld [vmem:[#allocation2 + $0x8] sm:$0xff]
      %v1390 = vld [vmem:[#allocation2 + $0x10] sm:$0xff]
      %v1391 = vld [vmem:[#allocation2 + $0x18] sm:$0xff]
      %v1392 = vld [vmem:[#allocation2 + $0x20] sm:$0xff]
      %v1393 = vld [vmem:[#allocation2 + $0x28] sm:$0xff]
      %v1394 = vld [vmem:[#allocation2 + $0x30] sm:$0xff]
      %v1395 = vld [vmem:[#allocation2 + $0x38] sm:$0xff]
      %v1396 = vld [vmem:[#allocation2 + $0x40] sm:$0xff]
      %v1397 = vld [vmem:[#allocation2 + $0x48] sm:$0xff]
      %v1398 = vadd.f32 %v1388, %v1364
      %v1399 = vadd.f32 %v1389, %v1366
      %v1400 = vadd.f32 %v1390, %v1369
      %v1401 = vadd.f32 %v1391, %v1371
      %v1402 = vadd.f32 %v1392, %v1374
      %v1403 = vadd.f32 %v1393, %v1376
      %v1404 = vadd.f32 %v1394, %v1379
      %v1405 = vadd.f32 %v1395, %v1381
      %v1406 = vadd.f32 %v1396, %v1384
      %v1407 = vadd.f32 %v1397, %v1386
      %1408 = vst [vmem:[#allocation2] sm:$0xff] %v1398
      %1409 = vst [vmem:[#allocation2 + $0x8] sm:$0xff] %v1399
      %1410 = vst [vmem:[#allocation2 + $0x10] sm:$0xff] %v1400
      %1411 = vst [vmem:[#allocation2 + $0x18] sm:$0xff] %v1401
      %1412 = vst [vmem:[#allocation2 + $0x20] sm:$0xff] %v1402
      %1413 = vst [vmem:[#allocation2 + $0x28] sm:$0xff] %v1403
      %1414 = vst [vmem:[#allocation2 + $0x30] sm:$0xff] %v1404
      %1415 = vst [vmem:[#allocation2 + $0x38] sm:$0xff] %v1405
      %1416 = vst [vmem:[#allocation2 + $0x40] sm:$0xff] %v1406
      %1417 = vst [vmem:[#allocation2 + $0x48] sm:$0xff] %v1407
      %v1418 = vld [vmem:[%s340 + $0x180] sm:$0xf]
      %v1419 = vld [vmem:[%s340 + $0x184] sm:$0xf]
      %v1420 = vld [vmem:[%s340 + $0x188] sm:$0xf]
      %v1421 = vld [vmem:[%s340 + $0x18c] sm:$0xf]
      %v1422 = vld [vmem:[%s340 + $0x190] sm:$0xf]
      %v1423 = vld [vmem:[%s340 + $0x194] sm:$0xf]
      %v1424 = vld [vmem:[%s340 + $0x198] sm:$0xf]
      %v1425 = vld [vmem:[%s340 + $0x19c] sm:$0xf]
      %v1426 = vld [vmem:[%s340 + $0x1a0] sm:$0xf]
      %v1427 = vld [vmem:[%s340 + $0x1a4] sm:$0xf]
      %v1428 = vld [vmem:[%s340 + $0x1a8] sm:$0xf]
      %v1429 = vld [vmem:[%s340 + $0x1ac] sm:$0xf]
      %v1430 = vld [vmem:[%s340 + $0x1b0] sm:$0xf]
      %v1431 = vld [vmem:[%s340 + $0x1b4] sm:$0xf]
      %v1432 = vld [vmem:[%s340 + $0x1b8] sm:$0xf]
      %v1433 = vld [vmem:[%s340 + $0x1bc] sm:$0xf]
      %v1435 = vunpack.c.l.b16 %v469
      %v1436 = vpack.c.b16 %v951, %v625
      %v1437 = vpack.c.b16 %v1435, %v1435
      %v1438 = vrot.slane %v507, 2
      %v1439 = vrot.slane %v508, 2
      %v1440 = vsel %vm1289, %v1438, %v1439
      %v1441 = vrot.slane %v509, 2
      %v1442 = vsel %vm1289, %v1439, %v1441
      %v1443 = vrot.slane %v510, 2
      %v1444 = vsel %vm1289, %v1441, %v1443
      %v1445 = vrot.slane %v1436, 2
      %v1446 = vsel %vm1289, %v1443, %v1445
      %v1447 = vrot.slane %v1437, 2
      %v1448 = vsel %vm1289, %v1445, %v1447
      %v1470 = vunpack.c.l.b16 %v1418
      %v1471 = vunpack.c.l.b16 %v1419
      %v1472 = vunpack.c.l.b16 %v1420
      %v1473 = vunpack.c.l.b16 %v1421
      %v1474 = vunpack.c.l.b16 %v1422
      %v1475 = vunpack.c.l.b16 %v1423
      %v1476 = vunpack.c.l.b16 %v1424
      %v1477 = vunpack.c.l.b16 %v1425
      %v1478 = vunpack.c.l.b16 %v1426
      %v1479 = vunpack.c.l.b16 %v1427
      %v1480 = vunpack.c.l.b16 %v1428
      %v1481 = vunpack.c.l.b16 %v1429
      %v1482 = vunpack.c.l.b16 %v1430
      %v1483 = vunpack.c.l.b16 %v1431
      %v1484 = vunpack.c.l.b16 %v1432
      %v1485 = vunpack.c.l.b16 %v1433
      %v1486 = vpack.c.b16 %v1471, %v1470
      %v1487 = vpack.c.b16 %v1473, %v1472
      %v1488 = vpack.c.b16 %v1475, %v1474
      %v1489 = vpack.c.b16 %v1477, %v1476
      %v1490 = vpack.c.b16 %v1479, %v1478
      %v1491 = vpack.c.b16 %v1481, %v1480
      %v1492 = vpack.c.b16 %v1483, %v1482
      %v1493 = vpack.c.b16 %v1485, %v1484
      %1502 = vmatpush.bf16.msra.mxu0 %v1493
      %1503 = vmatpush.bf16.msra.mxu0 %v1492
      %1504 = vmatpush.bf16.msra.mxu0 %v1491
      %1505 = vmatpush.bf16.msra.mxu0 %v1490
      %1506 = vmatpush.bf16.msra.mxu0 %v1489
      %1507 = vmatpush.bf16.msra.mxu0 %v1488
      %1508 = vmatpush.bf16.msra.mxu0 %v1487
      %1509 = vmatpush.bf16.msra.mxu0 %v1486
      %1510 = vmatmul.bf16.gmra.mxu0 %v1440
      %v1511 = vpop.f32.mrf.mxu0
      %v1512 = vadd.f32 0.0, %v1511
      %v1513 = vpop.f32.mrf.mxu0
      %v1514 = vadd.f32 0.0, %v1513
      %1515 = vmatmul.bf16.gmra.mxu0 %v1442
      %v1516 = vpop.f32.mrf.mxu0
      %v1517 = vadd.f32 0.0, %v1516
      %v1518 = vpop.f32.mrf.mxu0
      %v1519 = vadd.f32 0.0, %v1518
      %1520 = vmatmul.bf16.gmra.mxu0 %v1444
      %v1521 = vpop.f32.mrf.mxu0
      %v1522 = vadd.f32 0.0, %v1521
      %v1523 = vpop.f32.mrf.mxu0
      %v1524 = vadd.f32 0.0, %v1523
      %1525 = vmatmul.bf16.gmra.mxu0 %v1446
      %v1526 = vpop.f32.mrf.mxu0
      %v1527 = vadd.f32 0.0, %v1526
      %v1528 = vpop.f32.mrf.mxu0
      %v1529 = vadd.f32 0.0, %v1528
      %1530 = vmatmul.bf16.gmra.mxu0 %v1448
      %v1531 = vpop.f32.mrf.mxu0
      %v1532 = vadd.f32 0.0, %v1531
      %v1533 = vpop.f32.mrf.mxu0
      %v1534 = vadd.f32 0.0, %v1533
      %1535 = vdwg.mxu0
      %v1536 = vld [vmem:[#allocation2] sm:$0xff]
      %v1537 = vld [vmem:[#allocation2 + $0x8] sm:$0xff]
      %v1538 = vld [vmem:[#allocation2 + $0x10] sm:$0xff]
      %v1539 = vld [vmem:[#allocation2 + $0x18] sm:$0xff]
      %v1540 = vld [vmem:[#allocation2 + $0x20] sm:$0xff]
      %v1541 = vld [vmem:[#allocation2 + $0x28] sm:$0xff]
      %v1542 = vld [vmem:[#allocation2 + $0x30] sm:$0xff]
      %v1543 = vld [vmem:[#allocation2 + $0x38] sm:$0xff]
      %v1544 = vld [vmem:[#allocation2 + $0x40] sm:$0xff]
      %v1545 = vld [vmem:[#allocation2 + $0x48] sm:$0xff]
      %v1546 = vadd.f32 %v1536, %v1512
      %v1547 = vadd.f32 %v1537, %v1514
      %v1548 = vadd.f32 %v1538, %v1517
      %v1549 = vadd.f32 %v1539, %v1519
      %v1550 = vadd.f32 %v1540, %v1522
      %v1551 = vadd.f32 %v1541, %v1524
      %v1552 = vadd.f32 %v1542, %v1527
      %v1553 = vadd.f32 %v1543, %v1529
      %v1554 = vadd.f32 %v1544, %v1532
      %v1555 = vadd.f32 %v1545, %v1534
      %1556 = vst [vmem:[#allocation2] sm:$0xff] %v1546
      %1557 = vst [vmem:[#allocation2 + $0x8] sm:$0xff] %v1547
      %1558 = vst [vmem:[#allocation2 + $0x10] sm:$0xff] %v1548
      %1559 = vst [vmem:[#allocation2 + $0x18] sm:$0xff] %v1549
      %1560 = vst [vmem:[#allocation2 + $0x20] sm:$0xff] %v1550
      %1561 = vst [vmem:[#allocation2 + $0x28] sm:$0xff] %v1551
      %1562 = vst [vmem:[#allocation2 + $0x30] sm:$0xff] %v1552
      %1563 = vst [vmem:[#allocation2 + $0x38] sm:$0xff] %v1553
      %1564 = vst [vmem:[#allocation2 + $0x40] sm:$0xff] %v1554
      %1565 = vst [vmem:[#allocation2 + $0x48] sm:$0xff] %v1555
      %v1566 = vld [vmem:[%s340 + $0x1c0] sm:$0xf]
      %v1567 = vld [vmem:[%s340 + $0x1c4] sm:$0xf]
      %v1568 = vld [vmem:[%s340 + $0x1c8] sm:$0xf]
      %v1569 = vld [vmem:[%s340 + $0x1cc] sm:$0xf]
      %v1570 = vld [vmem:[%s340 + $0x1d0] sm:$0xf]
      %v1571 = vld [vmem:[%s340 + $0x1d4] sm:$0xf]
      %v1572 = vld [vmem:[%s340 + $0x1d8] sm:$0xf]
      %v1573 = vld [vmem:[%s340 + $0x1dc] sm:$0xf]
      %v1574 = vld [vmem:[%s340 + $0x1e0] sm:$0xf]
      %v1575 = vld [vmem:[%s340 + $0x1e4] sm:$0xf]
      %v1576 = vld [vmem:[%s340 + $0x1e8] sm:$0xf]
      %v1577 = vld [vmem:[%s340 + $0x1ec] sm:$0xf]
      %v1578 = vld [vmem:[%s340 + $0x1f0] sm:$0xf]
      %v1579 = vld [vmem:[%s340 + $0x1f4] sm:$0xf]
      %v1580 = vld [vmem:[%s340 + $0x1f8] sm:$0xf]
      %v1581 = vld [vmem:[%s340 + $0x1fc] sm:$0xf]
      %vm1582 = vsmask.f32 5376
      %v1583 = vrot.slane %v640, 2
      %v1584 = vrot.slane %v636, 3
      %v1585 = vor.u32 %v1583, %v1584
      %v1586 = vrot.slane %v648, 2
      %v1587 = vrot.slane %v644, 3
      %v1588 = vor.u32 %v1586, %v1587
      %v1589 = vsel %vm1582, %v1585, %v1588
      %v1590 = vrot.slane %v656, 2
      %v1591 = vrot.slane %v652, 3
      %v1592 = vor.u32 %v1590, %v1591
      %v1593 = vsel %vm1582, %v1588, %v1592
      %v1594 = vrot.slane %v664, 2
      %v1595 = vrot.slane %v660, 3
      %v1596 = vor.u32 %v1594, %v1595
      %v1597 = vsel %vm1582, %v1592, %v1596
      %v1599 = vshrl.u32 %v1436, 16
      %v1601 = vrot.slane %v1599, 2
      %v1602 = vshll.u32 %v1436, 16
      %v1604 = vrot.slane %v1602, 3
      %v1605 = vor.u32 %v1601, %v1604
      %v1606 = vsel %vm1582, %v1596, %v1605
      %v1608 = vshrl.u32 %v1437, 16
      %v1610 = vrot.slane %v1608, 2
      %v1611 = vshll.u32 %v1437, 16
      %v1613 = vrot.slane %v1611, 3
      %v1614 = vor.u32 %v1610, %v1613
      %v1615 = vsel %vm1582, %v1605, %v1614
      %v1637 = vunpack.c.l.b16 %v1566
      %v1638 = vunpack.c.l.b16 %v1567
      %v1639 = vunpack.c.l.b16 %v1568
      %v1640 = vunpack.c.l.b16 %v1569
      %v1641 = vunpack.c.l.b16 %v1570
      %v1642 = vunpack.c.l.b16 %v1571
      %v1643 = vunpack.c.l.b16 %v1572
      %v1644 = vunpack.c.l.b16 %v1573
      %v1645 = vunpack.c.l.b16 %v1574
      %v1646 = vunpack.c.l.b16 %v1575
      %v1647 = vunpack.c.l.b16 %v1576
      %v1648 = vunpack.c.l.b16 %v1577
      %v1649 = vunpack.c.l.b16 %v1578
      %v1650 = vunpack.c.l.b16 %v1579
      %v1651 = vunpack.c.l.b16 %v1580
      %v1652 = vunpack.c.l.b16 %v1581
      %v1653 = vpack.c.b16 %v1638, %v1637
      %v1654 = vpack.c.b16 %v1640, %v1639
      %v1655 = vpack.c.b16 %v1642, %v1641
      %v1656 = vpack.c.b16 %v1644, %v1643
      %v1657 = vpack.c.b16 %v1646, %v1645
      %v1658 = vpack.c.b16 %v1648, %v1647
      %v1659 = vpack.c.b16 %v1650, %v1649
      %v1660 = vpack.c.b16 %v1652, %v1651
      %1669 = vmatpush.bf16.msra.mxu0 %v1660
      %1670 = vmatpush.bf16.msra.mxu0 %v1659
      %1671 = vmatpush.bf16.msra.mxu0 %v1658
      %1672 = vmatpush.bf16.msra.mxu0 %v1657
      %1673 = vmatpush.bf16.msra.mxu0 %v1656
      %1674 = vmatpush.bf16.msra.mxu0 %v1655
      %1675 = vmatpush.bf16.msra.mxu0 %v1654
      %1676 = vmatpush.bf16.msra.mxu0 %v1653
      %1677 = vmatmul.bf16.gmra.mxu0 %v1589
      %v1678 = vpop.f32.mrf.mxu0
      %v1679 = vadd.f32 0.0, %v1678
      %v1680 = vpop.f32.mrf.mxu0
      %v1681 = vadd.f32 0.0, %v1680
      %1682 = vmatmul.bf16.gmra.mxu0 %v1593
      %v1683 = vpop.f32.mrf.mxu0
      %v1684 = vadd.f32 0.0, %v1683
      %v1685 = vpop.f32.mrf.mxu0
      %v1686 = vadd.f32 0.0, %v1685
      %1687 = vmatmul.bf16.gmra.mxu0 %v1597
      %v1688 = vpop.f32.mrf.mxu0
      %v1689 = vadd.f32 0.0, %v1688
      %v1690 = vpop.f32.mrf.mxu0
      %v1691 = vadd.f32 0.0, %v1690
      %1692 = vmatmul.bf16.gmra.mxu0 %v1606
      %v1693 = vpop.f32.mrf.mxu0
      %v1694 = vadd.f32 0.0, %v1693
      %v1695 = vpop.f32.mrf.mxu0
      %v1696 = vadd.f32 0.0, %v1695
      %1697 = vmatmul.bf16.gmra.mxu0 %v1615
      %v1698 = vpop.f32.mrf.mxu0
      %v1699 = vadd.f32 0.0, %v1698
      %v1700 = vpop.f32.mrf.mxu0
      %v1701 = vadd.f32 0.0, %v1700
      %1702 = vdwg.mxu0
      %v1703 = vld [vmem:[#allocation2] sm:$0xff]
      %v1704 = vld [vmem:[#allocation2 + $0x8] sm:$0xff]
      %v1705 = vld [vmem:[#allocation2 + $0x10] sm:$0xff]
      %v1706 = vld [vmem:[#allocation2 + $0x18] sm:$0xff]
      %v1707 = vld [vmem:[#allocation2 + $0x20] sm:$0xff]
      %v1708 = vld [vmem:[#allocation2 + $0x28] sm:$0xff]
      %v1709 = vld [vmem:[#allocation2 + $0x30] sm:$0xff]
      %v1710 = vld [vmem:[#allocation2 + $0x38] sm:$0xff]
      %v1711 = vld [vmem:[#allocation2 + $0x40] sm:$0xff]
      %v1712 = vld [vmem:[#allocation2 + $0x48] sm:$0xff]
      %v1713 = vadd.f32 %v1703, %v1679
      %v1714 = vadd.f32 %v1704, %v1681
      %v1715 = vadd.f32 %v1705, %v1684
      %v1716 = vadd.f32 %v1706, %v1686
      %v1717 = vadd.f32 %v1707, %v1689
      %v1718 = vadd.f32 %v1708, %v1691
      %v1719 = vadd.f32 %v1709, %v1694
      %v1720 = vadd.f32 %v1710, %v1696
      %v1721 = vadd.f32 %v1711, %v1699
      %v1722 = vadd.f32 %v1712, %v1701
      %1723 = vst [vmem:[#allocation2] sm:$0xff] %v1713
      %1724 = vst [vmem:[#allocation2 + $0x8] sm:$0xff] %v1714
      %1725 = vst [vmem:[#allocation2 + $0x10] sm:$0xff] %v1715
      %1726 = vst [vmem:[#allocation2 + $0x18] sm:$0xff] %v1716
      %1727 = vst [vmem:[#allocation2 + $0x20] sm:$0xff] %v1717
      %1728 = vst [vmem:[#allocation2 + $0x28] sm:$0xff] %v1718
      %1729 = vst [vmem:[#allocation2 + $0x30] sm:$0xff] %v1719
      %1730 = vst [vmem:[#allocation2 + $0x38] sm:$0xff] %v1720
      %1731 = vst [vmem:[#allocation2 + $0x40] sm:$0xff] %v1721
      %1732 = vst [vmem:[#allocation2 + $0x48] sm:$0xff] %v1722
      %v1733 = vld [vmem:[%s340 + $0x200] sm:$0xf]
      %v1734 = vld [vmem:[%s340 + $0x204] sm:$0xf]
      %v1735 = vld [vmem:[%s340 + $0x208] sm:$0xf]
      %v1736 = vld [vmem:[%s340 + $0x20c] sm:$0xf]
      %v1737 = vld [vmem:[%s340 + $0x210] sm:$0xf]
      %v1738 = vld [vmem:[%s340 + $0x214] sm:$0xf]
      %v1739 = vld [vmem:[%s340 + $0x218] sm:$0xf]
      %v1740 = vld [vmem:[%s340 + $0x21c] sm:$0xf]
      %v1741 = vld [vmem:[%s340 + $0x220] sm:$0xf]
      %v1742 = vld [vmem:[%s340 + $0x224] sm:$0xf]
      %v1743 = vld [vmem:[%s340 + $0x228] sm:$0xf]
      %v1744 = vld [vmem:[%s340 + $0x22c] sm:$0xf]
      %v1745 = vld [vmem:[%s340 + $0x230] sm:$0xf]
      %v1746 = vld [vmem:[%s340 + $0x234] sm:$0xf]
      %v1747 = vld [vmem:[%s340 + $0x238] sm:$0xf]
      %v1748 = vld [vmem:[%s340 + $0x23c] sm:$0xf]
      %vm1749 = vcmask 1044480
      %v1750 = vrot.slane %v507, 3
      %v1751 = vrot.slane %v508, 3
      %v1752 = vsel %vm1749, %v1750, %v1751
      %v1753 = vrot.slane %v509, 3
      %v1754 = vsel %vm1749, %v1751, %v1753
      %v1755 = vrot.slane %v510, 3
      %v1756 = vsel %vm1749, %v1753, %v1755
      %v1757 = vrot.slane %v1436, 3
      %v1758 = vsel %vm1749, %v1755, %v1757
      %v1759 = vrot.slane %v1437, 3
      %v1760 = vsel %vm1749, %v1757, %v1759
      %v1782 = vunpack.c.l.b16 %v1733
      %v1783 = vunpack.c.l.b16 %v1734
      %v1784 = vunpack.c.l.b16 %v1735
      %v1785 = vunpack.c.l.b16 %v1736
      %v1786 = vunpack.c.l.b16 %v1737
      %v1787 = vunpack.c.l.b16 %v1738
      %v1788 = vunpack.c.l.b16 %v1739
      %v1789 = vunpack.c.l.b16 %v1740
      %v1790 = vunpack.c.l.b16 %v1741
      %v1791 = vunpack.c.l.b16 %v1742
      %v1792 = vunpack.c.l.b16 %v1743
      %v1793 = vunpack.c.l.b16 %v1744
      %v1794 = vunpack.c.l.b16 %v1745
      %v1795 = vunpack.c.l.b16 %v1746
      %v1796 = vunpack.c.l.b16 %v1747
      %v1797 = vunpack.c.l.b16 %v1748
      %v1798 = vpack.c.b16 %v1783, %v1782
      %v1799 = vpack.c.b16 %v1785, %v1784
      %v1800 = vpack.c.b16 %v1787, %v1786
      %v1801 = vpack.c.b16 %v1789, %v1788
      %v1802 = vpack.c.b16 %v1791, %v1790
      %v1803 = vpack.c.b16 %v1793, %v1792
      %v1804 = vpack.c.b16 %v1795, %v1794
      %v1805 = vpack.c.b16 %v1797, %v1796
      %1814 = vmatpush.bf16.msra.mxu0 %v1805
      %1815 = vmatpush.bf16.msra.mxu0 %v1804
      %1816 = vmatpush.bf16.msra.mxu0 %v1803
      %1817 = vmatpush.bf16.msra.mxu0 %v1802
      %1818 = vmatpush.bf16.msra.mxu0 %v1801
      %1819 = vmatpush.bf16.msra.mxu0 %v1800
      %1820 = vmatpush.bf16.msra.mxu0 %v1799
      %1821 = vmatpush.bf16.msra.mxu0 %v1798
      %1822 = vmatmul.bf16.gmra.mxu0 %v1752
      %v1823 = vpop.f32.mrf.mxu0
      %v1824 = vadd.f32 0.0, %v1823
      %v1825 = vpop.f32.mrf.mxu0
      %v1826 = vadd.f32 0.0, %v1825
      %1827 = vmatmul.bf16.gmra.mxu0 %v1754
      %v1828 = vpop.f32.mrf.mxu0
      %v1829 = vadd.f32 0.0, %v1828
      %v1830 = vpop.f32.mrf.mxu0
      %v1831 = vadd.f32 0.0, %v1830
      %1832 = vmatmul.bf16.gmra.mxu0 %v1756
      %v1833 = vpop.f32.mrf.mxu0
      %v1834 = vadd.f32 0.0, %v1833
      %v1835 = vpop.f32.mrf.mxu0
      %v1836 = vadd.f32 0.0, %v1835
      %1837 = vmatmul.bf16.gmra.mxu0 %v1758
      %v1838 = vpop.f32.mrf.mxu0
      %v1839 = vadd.f32 0.0, %v1838
      %v1840 = vpop.f32.mrf.mxu0
      %v1841 = vadd.f32 0.0, %v1840
      %1842 = vmatmul.bf16.gmra.mxu0 %v1760
      %v1843 = vpop.f32.mrf.mxu0
      %v1844 = vadd.f32 0.0, %v1843
      %v1845 = vpop.f32.mrf.mxu0
      %v1846 = vadd.f32 0.0, %v1845
      %1847 = vdwg.mxu0
      %v1848 = vld [vmem:[#allocation2] sm:$0xff]
      %v1849 = vld [vmem:[#allocation2 + $0x8] sm:$0xff]
      %v1850 = vld [vmem:[#allocation2 + $0x10] sm:$0xff]
      %v1851 = vld [vmem:[#allocation2 + $0x18] sm:$0xff]
      %v1852 = vld [vmem:[#allocation2 + $0x20] sm:$0xff]
      %v1853 = vld [vmem:[#allocation2 + $0x28] sm:$0xff]
      %v1854 = vld [vmem:[#allocation2 + $0x30] sm:$0xff]
      %v1855 = vld [vmem:[#allocation2 + $0x38] sm:$0xff]
      %v1856 = vld [vmem:[#allocation2 + $0x40] sm:$0xff]
      %v1857 = vld [vmem:[#allocation2 + $0x48] sm:$0xff]
      %v1858 = vadd.f32 %v1848, %v1824
      %v1859 = vadd.f32 %v1849, %v1826
      %v1860 = vadd.f32 %v1850, %v1829
      %v1861 = vadd.f32 %v1851, %v1831
      %v1862 = vadd.f32 %v1852, %v1834
      %v1863 = vadd.f32 %v1853, %v1836
      %v1864 = vadd.f32 %v1854, %v1839
      %v1865 = vadd.f32 %v1855, %v1841
      %v1866 = vadd.f32 %v1856, %v1844
      %v1867 = vadd.f32 %v1857, %v1846
      %1868 = vst [vmem:[#allocation2] sm:$0xff] %v1858
      %1869 = vst [vmem:[#allocation2 + $0x8] sm:$0xff] %v1859
      %1870 = vst [vmem:[#allocation2 + $0x10] sm:$0xff] %v1860
      %1871 = vst [vmem:[#allocation2 + $0x18] sm:$0xff] %v1861
      %1872 = vst [vmem:[#allocation2 + $0x20] sm:$0xff] %v1862
      %1873 = vst [vmem:[#allocation2 + $0x28] sm:$0xff] %v1863
      %1874 = vst [vmem:[#allocation2 + $0x30] sm:$0xff] %v1864
      %1875 = vst [vmem:[#allocation2 + $0x38] sm:$0xff] %v1865
      %1876 = vst [vmem:[#allocation2 + $0x40] sm:$0xff] %v1866
      %1877 = vst [vmem:[#allocation2 + $0x48] sm:$0xff] %v1867
      %v1878 = vld [vmem:[#allocation2] sm:$0xff]
      %v1879 = vld [vmem:[#allocation2 + $0x8] sm:$0xff]
      %v1880 = vld [vmem:[#allocation2 + $0x10] sm:$0xff]
      %v1881 = vld [vmem:[#allocation2 + $0x18] sm:$0xff]
      %v1882 = vld [vmem:[#allocation2 + $0x20] sm:$0xff]
      %v1883 = vld [vmem:[#allocation2 + $0x28] sm:$0xff]
      %v1884 = vld [vmem:[#allocation2 + $0x30] sm:$0xff]
      %v1885 = vld [vmem:[#allocation2 + $0x38] sm:$0xff]
      %v1886 = vld [vmem:[#allocation2 + $0x40] sm:$0xff]
      %v1887 = vld [vmem:[#allocation2 + $0x48] sm:$0xff]
      %v1888 = vld [vmem:[%s343] sm:$0x1]
      %v1890 = vperm.slane %v1888, 0
      %v1892 = vadd.f32 %v1878, %v1890
      %v1893 = vadd.f32 %v1879, %v1890
      %v1894 = vadd.f32 %v1880, %v1890
      %v1895 = vadd.f32 %v1881, %v1890
      %v1896 = vadd.f32 %v1882, %v1890
      %v1897 = vadd.f32 %v1883, %v1890
      %v1898 = vadd.f32 %v1884, %v1890
      %v1899 = vadd.f32 %v1885, %v1890
      %v1900 = vadd.f32 %v1886, %v1890
      %v1901 = vadd.f32 %v1887, %v1890
      %v1902 = vld [vmem:[%s346] sm:$0x1]
      %v1904 = vperm.slane %v1902, 0
      %v1906 = vmul.f32 %v1892, %v1904
      %v1907 = vmul.f32 %v1893, %v1904
      %v1908 = vmul.f32 %v1894, %v1904
      %v1909 = vmul.f32 %v1895, %v1904
      %v1910 = vmul.f32 %v1896, %v1904
      %v1911 = vmul.f32 %v1897, %v1904
      %v1912 = vmul.f32 %v1898, %v1904
      %v1913 = vmul.f32 %v1899, %v1904
      %v1914 = vmul.f32 %v1900, %v1904
      %v1915 = vmul.f32 %v1901, %v1904
      %v1916 = vld [vmem:[%s349] sm:$0x1]
      %v1918 = vperm.slane %v1916, 0
      %v1920 = vadd.f32 %v1906, %v1918
      %v1921 = vadd.f32 %v1907, %v1918
      %v1922 = vadd.f32 %v1908, %v1918
      %v1923 = vadd.f32 %v1909, %v1918
      %v1924 = vadd.f32 %v1910, %v1918
      %v1925 = vadd.f32 %v1911, %v1918
      %v1926 = vadd.f32 %v1912, %v1918
      %v1927 = vadd.f32 %v1913, %v1918
      %v1928 = vadd.f32 %v1914, %v1918
      %v1929 = vadd.f32 %v1915, %v1918
      %vm1930 = vcmp.gt.f32.partialorder %v1920, 0.0
      %vm1931 = vcmp.gt.f32.partialorder %v1921, 0.0
      %vm1932 = vcmp.gt.f32.partialorder %v1922, 0.0
      %vm1933 = vcmp.gt.f32.partialorder %v1923, 0.0
      %vm1934 = vcmp.gt.f32.partialorder %v1924, 0.0
      %vm1935 = vcmp.gt.f32.partialorder %v1925, 0.0
      %vm1936 = vcmp.gt.f32.partialorder %v1926, 0.0
      %vm1937 = vcmp.gt.f32.partialorder %v1927, 0.0
      %vm1938 = vcmp.gt.f32.partialorder %v1928, 0.0
      %vm1939 = vcmp.gt.f32.partialorder %v1929, 0.0
      %v1940 = vmul.f32 %v1920, 0.1
      %v1941 = vmul.f32 %v1921, 0.1
      %v1942 = vmul.f32 %v1922, 0.1
      %v1943 = vmul.f32 %v1923, 0.1
      %v1944 = vmul.f32 %v1924, 0.1
      %v1945 = vmul.f32 %v1925, 0.1
      %v1946 = vmul.f32 %v1926, 0.1
      %v1947 = vmul.f32 %v1927, 0.1
      %v1948 = vmul.f32 %v1928, 0.1
      %v1949 = vmul.f32 %v1929, 0.1
      %v1950 = vsel %vm1930, %v1920, %v1940
      %v1951 = vsel %vm1931, %v1921, %v1941
      %v1952 = vsel %vm1932, %v1922, %v1942
      %v1953 = vsel %vm1933, %v1923, %v1943
      %v1954 = vsel %vm1934, %v1924, %v1944
      %v1955 = vsel %vm1935, %v1925, %v1945
      %v1956 = vsel %vm1936, %v1926, %v1946
      %v1957 = vsel %vm1937, %v1927, %v1947
      %v1958 = vsel %vm1938, %v1928, %v1948
      %v1959 = vsel %vm1939, %v1929, %v1949
      %v1960 = vpack.c.bf16 %v1950, %v1950
      %v1961 = vpack.c.bf16 %v1951, %v1951
      %v1962 = vpack.c.bf16 %v1952, %v1952
      %v1963 = vpack.c.bf16 %v1953, %v1953
      %v1964 = vpack.c.bf16 %v1954, %v1954
      %v1965 = vpack.c.bf16 %v1955, %v1955
      %v1966 = vpack.c.bf16 %v1956, %v1956
      %v1967 = vpack.c.bf16 %v1957, %v1957
      %v1968 = vpack.c.bf16 %v1958, %v1958
      %v1969 = vpack.c.bf16 %v1959, %v1959
      %1970 = vst [vmem:[%s357] sm:$0xf] %v1960
      %1971 = vst [vmem:[%s357 + $0x4] sm:$0xf] %v1961
      %1972 = vst [vmem:[%s357 + $0x8] sm:$0xf] %v1962
      %1973 = vst [vmem:[%s357 + $0xc] sm:$0xf] %v1963
      %1974 = vst [vmem:[%s357 + $0x10] sm:$0xf] %v1964
      %1975 = vst [vmem:[%s357 + $0x14] sm:$0xf] %v1965
      %1976 = vst [vmem:[%s357 + $0x18] sm:$0xf] %v1966
      %1977 = vst [vmem:[%s357 + $0x1c] sm:$0xf] %v1967
      %1978 = vst [vmem:[%s357 + $0x20] sm:$0xf] %v1968
      %1979 = vst [vmem:[%s357 + $0x24] sm:$0xf] %v1969
      %p1980 = scmp.lt.s32.totalorder %s22, 1
      %s1981 = scalar_select %p1980, %s22, 1
      %p1982 = scmp.lt.s32.totalorder %s23, 0
      %s1983 = scalar_select %p1982, %s23, 0
      %s1984 = smul.addr %s1981, 10
      %s1985 = sadd.s32 %s1983, %s1984
      %s1986 = smul.addr %s1985, 4
      %s1987 = scalar_lea.vmem %s7, %s1986
      // Predicated region
      $region49: #{network_block_forward.6} parent=47 // pred_check
        %p1988 = pneg %p222
      $region50: #{network_block_forward.6} parent=47 // pred_check_branch
        %1990 = sbr.rel (%p1988) target = $region52
      $region51: #{network_block_forward.6} parent=47 // pred_region
        _
      $region52: #{network_block_forward.6} parent=47 // pred_fallthru
        _
    $region48: #{network_block_forward.6} parent=5 // pred_fallthru
      _
    %p1991 = scmp.le.s32.totalorder 2, %s13
    // Predicated region
    $region53: #{network_block_forward.6} parent=5 // pred_check
      %p1992 = pneg %p1991
    $region54: #{network_block_forward.6} parent=5 // pred_check_branch
      %1994 = sbr.rel (%p1992) target = $region56
    $region55: #{network_block_forward.6} parent=5 // pred_region
      %s1995 = ssub.s32 %s13, 2
      // Predicated region
      $region57: #{network_block_forward.6} parent=55 // pred_check
        %p1996 = pneg %p228
      $region58: #{network_block_forward.6} parent=55 // pred_check_branch
        %1998 = sbr.rel (%p1996) target = $region60
      $region59: #{network_block_forward.6} parent=55 // pred_region
        %p1999 = scmp.lt.s32.totalorder %s24, 1
        %s2000 = scalar_select %p1999, %s24, 1
        %p2001 = scmp.lt.s32.totalorder %s25, 0
        %s2002 = scalar_select %p2001, %s25, 0
        %s2003 = smul.addr %s2000, 10
        %s2004 = sadd.s32 %s2002, %s2003
        %s2005 = smul.addr %s2004, 4
        %s2006 = scalar_lea.vmem %s7, %s2005
      $region60: #{network_block_forward.6} parent=55 // pred_fallthru
        _
    $region56: #{network_block_forward.6} parent=5 // pred_fallthru
      _
  $region6: #{network_block_forward.6} parent=0 // loop_footer
    %s17 = sadd.s32 1, %s13
  $region7: #{network_block_forward.6} parent=0 // loop_footer_branch
    %12 = sbr.rel target = $region3
  $region8: #{network_block_forward.6} parent=0 // loop_exit
    _

// kernel: network_block_forward.7
$region0: #{network_block_forward.7}
  #allocation0 [shape = 'u32[]', space=smem, size = 0x4, offset = 0x4, fixed_abs, tag = 'smem constant byte address 0x4 - core index']
  #allocation1 [shape = 'u32[72,128]{1,0:T(1,128)}', space=vmem, size = 0x9000, scoped, tag = 'internal scratch']
  #allocation2 [shape = 'f32[80,128]{1,0:T(8,128)}', space=vmem, size = 0xa000, scoped, tag = 'scratch operand']
  %s0 = inlined_call_operand.vmem [shape: bf16[2,110,128], index: 0, kind: input, shape index: {}]
  %s1 = inlined_call_operand.vmem [shape: bf16[1152,128], index: 1, kind: input, shape index: {}]
  %s2 = inlined_call_operand.vmem [shape: f32[1,128], index: 2, kind: input, shape index: {}]
  %s3 = inlined_call_operand.vmem [shape: f32[2,80,128], index: 3, kind: input, shape index: {}]
  %s4 = inlined_call_operand.vmem [shape: f32[2,80,128], index: 4, kind: output, shape index: {}]
  %s5 = sld [smem:[#allocation0]]
  $region49: #{network_block_forward.7} parent=0
    _
  %s7 = ssub.s32 1, %s5
  %s8 = scalar_select 0, %s7, %s5
  loop: start=0, step=1, limit=4
  $region2: #{network_block_forward.7} parent=0 // loop_pre_header
    _
  $region3: #{network_block_forward.7} parent=0 // loop_header
    %s10 = sphi 0, %s14
    %p11 = scmp.ge.s32.totalorder %s10, 4
    %s17 = sphi 0, %s29
    %s18 = sphi 0, %s25
    %s19 = sphi 0, %s17
    %s20 = sphi 0, %s18
    %s21 = sphi 0, %s19
    %s22 = sphi 0, %s20
    %s32 = sphi 0, %s34
    %s35 = sphi 0, %s32
    %s36 = sphi 0, %s35
    %s52 = sphi 0, %s36
    %s58 = sphi 0, %s60
    %s61 = sphi 0, %s58
    %s62 = sphi 0, %s61
    %s78 = sphi 0, %s62
    %s84 = sphi 0, %s86
    %s87 = sphi 0, %s84
    %s88 = sphi 0, %s87
    %s104 = sphi 0, %s88
    %s112 = sphi 0, %s114
    %s115 = sphi 0, %s112
    %s116 = sphi 0, %s115
    %s132 = sphi 0, %s116
    %s140 = sphi 0, %s142
    %s143 = sphi 0, %s140
    %s144 = sphi 0, %s143
    %s160 = sphi 0, %s144
  $region4: #{network_block_forward.7} parent=0 // loop_header_branch
    %13 = sbr.rel (%p11) target = $region8
  $region5: #{network_block_forward.7} parent=0 // loop_body
    %s15 = ssub.s32 %s10, 1
    %s16 = ssub.s32 %s10, 2
    %s23 = sadd.s32 1, %s18
    %p24 = scmp.ge.s32.totalorder %s23, 1
    %s25 = scalar_select %p24, 0, %s23
    %s26 = sadd.s32 1, %s17
    %s27 = scalar_select %p24, %s26, %s17
    %p28 = scmp.ge.s32.totalorder %s27, 2
    %s29 = scalar_select %p28, 0, %s27
    %s30 = ssub.s32 %s17, %s29
    %p31 = scmp.eq.s32.totalorder %s30, 0
    %s33 = sadd.s32 %s32, 1
    %s34 = scalar_select %p31, %s32, %s33
    %p37 = pneg %p31
    %p38 = scmp.eq.s32.totalorder %s10, 1
    %p39 = por %p37, %p38
    %p40 = scmp.ne.s32.totalorder %s32, %s35
    %p41 = scmp.eq.s32.totalorder %s10, 0
    %p42 = por %p40, %p41
    %p43 = scmp.ne.s32.totalorder %s32, %s35
    %p44 = scmp.eq.s32.totalorder %s15, 1
    %p45 = por %p43, %p44
    %p46 = scmp.ne.s32.totalorder %s35, %s36
    %p47 = scmp.eq.s32.totalorder %s15, 0
    %p48 = por %p46, %p47
    %p49 = scmp.ne.s32.totalorder %s35, %s36
    %p50 = scmp.eq.s32.totalorder %s16, 1
    %p51 = por %p49, %p50
    %p53 = scmp.ne.s32.totalorder %s36, %s52
    %p54 = scmp.eq.s32.totalorder %s16, 0
    %p55 = por %p53, %p54
    %s56 = ssub.s32 %s18, %s25
    %p57 = scmp.eq.s32.totalorder %s56, 0
    %s59 = sadd.s32 %s58, 1
    %s60 = scalar_select %p57, %s58, %s59
    %p63 = pneg %p57
    %p64 = scmp.eq.s32.totalorder %s10, 1
    %p65 = por %p63, %p64
    %p66 = scmp.ne.s32.totalorder %s58, %s61
    %p67 = scmp.eq.s32.totalorder %s10, 0
    %p68 = por %p66, %p67
    %p69 = scmp.ne.s32.totalorder %s58, %s61
    %p70 = scmp.eq.s32.totalorder %s15, 1
    %p71 = por %p69, %p70
    %p72 = scmp.ne.s32.totalorder %s61, %s62
    %p73 = scmp.eq.s32.totalorder %s15, 0
    %p74 = por %p72, %p73
    %p75 = scmp.ne.s32.totalorder %s61, %s62
    %p76 = scmp.eq.s32.totalorder %s16, 1
    %p77 = por %p75, %p76
    %p79 = scmp.ne.s32.totalorder %s62, %s78
    %p80 = scmp.eq.s32.totalorder %s16, 0
    %p81 = por %p79, %p80
    %s82 = ssub.s32 %s18, %s25
    %p83 = scmp.eq.s32.totalorder %s82, 0
    %s85 = sadd.s32 %s84, 1
    %s86 = scalar_select %p83, %s84, %s85
    %p89 = pneg %p83
    %p90 = scmp.eq.s32.totalorder %s10, 1
    %p91 = por %p89, %p90
    %p92 = scmp.ne.s32.totalorder %s84, %s87
    %p93 = scmp.eq.s32.totalorder %s10, 0
    %p94 = por %p92, %p93
    %p95 = scmp.ne.s32.totalorder %s84, %s87
    %p96 = scmp.eq.s32.totalorder %s15, 1
    %p97 = por %p95, %p96
    %p98 = scmp.ne.s32.totalorder %s87, %s88
    %p99 = scmp.eq.s32.totalorder %s15, 0
    %p100 = por %p98, %p99
    %p101 = scmp.ne.s32.totalorder %s87, %s88
    %p102 = scmp.eq.s32.totalorder %s16, 1
    %p103 = por %p101, %p102
    %p105 = scmp.ne.s32.totalorder %s88, %s104
    %p106 = scmp.eq.s32.totalorder %s16, 0
    %p107 = por %p105, %p106
    %s108 = ssub.s32 %s17, %s29
    %s109 = ssub.s32 %s18, %s25
    %s110 = sor.u32 %s108, %s109
    %p111 = scmp.eq.s32.totalorder %s110, 0
    %s113 = sadd.s32 %s112, 1
    %s114 = scalar_select %p111, %s112, %s113
    %p117 = pneg %p111
    %p118 = scmp.eq.s32.totalorder %s10, 1
    %p119 = por %p117, %p118
    %p120 = scmp.ne.s32.totalorder %s112, %s115
    %p121 = scmp.eq.s32.totalorder %s10, 0
    %p122 = por %p120, %p121
    %p123 = scmp.ne.s32.totalorder %s112, %s115
    %p124 = scmp.eq.s32.totalorder %s15, 1
    %p125 = por %p123, %p124
    %p126 = scmp.ne.s32.totalorder %s115, %s116
    %p127 = scmp.eq.s32.totalorder %s15, 0
    %p128 = por %p126, %p127
    %p129 = scmp.ne.s32.totalorder %s115, %s116
    %p130 = scmp.eq.s32.totalorder %s16, 1
    %p131 = por %p129, %p130
    %p133 = scmp.ne.s32.totalorder %s116, %s132
    %p134 = scmp.eq.s32.totalorder %s16, 0
    %p135 = por %p133, %p134
    %s136 = ssub.s32 %s17, %s29
    %s137 = ssub.s32 %s18, %s25
    %s138 = sor.u32 %s136, %s137
    %p139 = scmp.eq.s32.totalorder %s138, 0
    %s141 = sadd.s32 %s140, 1
    %s142 = scalar_select %p139, %s140, %s141
    %p145 = pneg %p139
    %p146 = scmp.eq.s32.totalorder %s10, 1
    %p147 = por %p145, %p146
    %p148 = scmp.ne.s32.totalorder %s140, %s143
    %p149 = scmp.eq.s32.totalorder %s10, 0
    %p150 = por %p148, %p149
    %p151 = scmp.ne.s32.totalorder %s140, %s143
    %p152 = scmp.eq.s32.totalorder %s15, 1
    %p153 = por %p151, %p152
    %p154 = scmp.ne.s32.totalorder %s143, %s144
    %p155 = scmp.eq.s32.totalorder %s15, 0
    %p156 = por %p154, %p155
    %p157 = scmp.ne.s32.totalorder %s143, %s144
    %p158 = scmp.eq.s32.totalorder %s16, 1
    %p159 = por %p157, %p158
    %p161 = scmp.ne.s32.totalorder %s144, %s160
    %p162 = scmp.eq.s32.totalorder %s16, 0
    %p163 = por %p161, %p162
    %p164 = scmp.le.s32.totalorder 1, %s10
    %p165 = scmp.lt.s32.totalorder %s10, 3
    %p166 = pnand %p164, %p165
    %p167 = pneg %p166
    // Predicated region
    $region9: #{network_block_forward.7} parent=5 // pred_check
      _
    $region10: #{network_block_forward.7} parent=5 // pred_check_branch
      %169 = sbr.rel (%p166) target = $region12
    $region11: #{network_block_forward.7} parent=5 // pred_region
      %s170 = ssub.s32 %s10, 1
      // Predicated region
      $region13: #{network_block_forward.7} parent=11 // pred_check
        %p171 = pneg %p74
      $region14: #{network_block_forward.7} parent=11 // pred_check_branch
        %173 = sbr.rel (%p171) target = $region16
      $region15: #{network_block_forward.7} parent=11 // pred_region
        %p174 = scmp.lt.s32.totalorder %s20, 0
        %s175 = scalar_select %p174, %s20, 0
        %s176 = smul.addr %s175, 4
        %s177 = scalar_lea.vmem %s1, %s176
      $region16: #{network_block_forward.7} parent=11 // pred_fallthru
        _
      // Predicated region
      $region17: #{network_block_forward.7} parent=11 // pred_check
        %p178 = pneg %p100
      $region18: #{network_block_forward.7} parent=11 // pred_check_branch
        %180 = sbr.rel (%p178) target = $region20
      $region19: #{network_block_forward.7} parent=11 // pred_region
        %p181 = scmp.lt.s32.totalorder %s20, 0
        %s182 = scalar_select %p181, %s20, 0
        %s183 = scalar_lea.vmem %s2, %s182
      $region20: #{network_block_forward.7} parent=11 // pred_fallthru
        _
    $region12: #{network_block_forward.7} parent=5 // pred_fallthru
      _
    %p184 = scmp.lt.s32.totalorder %s10, 2
    // Predicated region
    $region21: #{network_block_forward.7} parent=5 // pred_check
      %p185 = pneg %p184
    $region22: #{network_block_forward.7} parent=5 // pred_check_branch
      %187 = sbr.rel (%p185) target = $region24
    $region23: #{network_block_forward.7} parent=5 // pred_region
      // Predicated region
      $region25: #{network_block_forward.7} parent=23 // pred_check
        %p188 = pneg %p42
      $region26: #{network_block_forward.7} parent=23 // pred_check_branch
        %190 = sbr.rel (%p188) target = $region28
      $region27: #{network_block_forward.7} parent=23 // pred_region
        %p191 = scmp.lt.s32.totalorder %s17, 1
        %s192 = scalar_select %p191, %s17, 1
        %s193 = smul.addr %s192, 14
        %s194 = smul.addr %s193, 4
        %s195 = scalar_lea.vmem %s0, %s194
      $region28: #{network_block_forward.7} parent=23 // pred_fallthru
        _
      // Predicated region
      $region29: #{network_block_forward.7} parent=23 // pred_check
        %p196 = pneg %p122
      $region30: #{network_block_forward.7} parent=23 // pred_check_branch
        %198 = sbr.rel (%p196) target = $region32
      $region31: #{network_block_forward.7} parent=23 // pred_region
        %p199 = scmp.lt.s32.totalorder %s17, 1
        %s200 = scalar_select %p199, %s17, 1
        %p201 = scmp.lt.s32.totalorder %s18, 0
        %s202 = scalar_select %p201, %s18, 0
        %s203 = smul.addr %s200, 10
        %s204 = sadd.s32 %s202, %s203
        %s205 = smul.addr %s204, 8
        %s206 = scalar_lea.vmem %s3, %s205
      $region32: #{network_block_forward.7} parent=23 // pred_fallthru
        _
    $region24: #{network_block_forward.7} parent=5 // pred_fallthru
      _
    %p207 = scmp.le.s32.totalorder 1, %s10
    %p208 = scmp.lt.s32.totalorder %s10, 3
    %p209 = pnand %p207, %p208
    %p210 = pneg %p209
    // Predicated region
    $region33: #{network_block_forward.7} parent=5 // pred_check
      _
    $region34: #{network_block_forward.7} parent=5 // pred_check_branch
      %212 = sbr.rel (%p209) target = $region36
    $region35: #{network_block_forward.7} parent=5 // pred_region
      %s213 = ssub.s32 %s10, 1
      %p214 = scmp.lt.s32.totalorder %s19, 1
      %s215 = scalar_select %p214, %s19, 1
      %s216 = smul.addr %s215, 14
      %s217 = smul.addr %s216, 4
      %s218 = scalar_lea.vmem %s0, %s217
      %p219 = pneg %p48
      %p220 = pneg %p45
      %p221 = scmp.lt.s32.totalorder %s20, 0
      %s222 = scalar_select %p221, %s20, 0
      %s223 = smul.addr %s222, 4
      %s224 = scalar_lea.vmem %s1, %s223
      %p225 = pneg %p74
      %p226 = pneg %p71
      %p227 = scmp.lt.s32.totalorder %s20, 0
      %s228 = scalar_select %p227, %s20, 0
      %s229 = scalar_lea.vmem %s2, %s228
      %p230 = pneg %p100
      %p231 = pneg %p97
      %p232 = scmp.lt.s32.totalorder %s19, 1
      %s233 = scalar_select %p232, %s19, 1
      %p234 = scmp.lt.s32.totalorder %s20, 0
      %s235 = scalar_select %p234, %s20, 0
      %s236 = smul.addr %s233, 10
      %s237 = sadd.s32 %s235, %s236
      %s238 = smul.addr %s237, 8
      %s239 = scalar_lea.vmem %s3, %s238
      %p240 = pneg %p128
      %p241 = pneg %p125
      %p242 = pneg %p156
      %p243 = pneg %p153
      %p244 = scmp.lt.s32.totalorder %s19, 1
      %s245 = scalar_select %p244, %s19, 1
      %p246 = scmp.lt.s32.totalorder %s20, 0
      %s247 = scalar_select %p246, %s20, 0
      %s248 = smul.addr %s245, 10
      %s249 = sadd.s32 %s247, %s248
      %s250 = smul.addr %s249, 8
      %s251 = scalar_lea.vmem %s4, %s250
      %p252 = scmp.lt.s32.totalorder %s19, 1
      %s253 = scalar_select %p252, %s19, 1
      %s254 = smul.addr %s253, 14
      %s255 = smul.addr %s254, 4
      %s256 = scalar_lea.vmem %s0, %s255
      %p257 = scmp.lt.s32.totalorder %s20, 0
      %s258 = scalar_select %p257, %s20, 0
      %s259 = smul.addr %s258, 4
      %s260 = scalar_lea.vmem %s1, %s259
      %p261 = scmp.lt.s32.totalorder %s20, 0
      %s262 = scalar_select %p261, %s20, 0
      %s263 = scalar_lea.vmem %s2, %s262
      %p264 = scmp.lt.s32.totalorder %s19, 1
      %s265 = scalar_select %p264, %s19, 1
      %p266 = scmp.lt.s32.totalorder %s20, 0
      %s267 = scalar_select %p266, %s20, 0
      %s268 = smul.addr %s265, 10
      %s269 = sadd.s32 %s267, %s268
      %s270 = smul.addr %s269, 8
      %s271 = scalar_lea.vmem %s3, %s270
      %p272 = scmp.lt.s32.totalorder %s19, 1
      %s273 = scalar_select %p272, %s19, 1
      %p274 = scmp.lt.s32.totalorder %s20, 0
      %s275 = scalar_select %p274, %s20, 0
      %s276 = smul.addr %s273, 10
      %s277 = sadd.s32 %s275, %s276
      %s278 = smul.addr %s277, 8
      %s279 = scalar_lea.vmem %s4, %s278
      %v280 = vld [vmem:[%s256] sm:$0xf]
      %v281 = vld [vmem:[%s256 + $0x4] sm:$0xf]
      %v282 = vld [vmem:[%s256 + $0x8] sm:$0xf]
      %v283 = vld [vmem:[%s256 + $0xc] sm:$0xf]
      %v284 = vld [vmem:[%s256 + $0x10] sm:$0xf]
      %v285 = vld [vmem:[%s256 + $0x14] sm:$0xf]
      %v286 = vld [vmem:[%s256 + $0x18] sm:$0xf]
      %v287 = vld [vmem:[%s256 + $0x1c] sm:$0xf]
      %v288 = vld [vmem:[%s256 + $0x20] sm:$0xf]
      %v289 = vld [vmem:[%s256 + $0x24] sm:$0xf]
      %v290 = vld [vmem:[%s256 + $0x28] sm:$0xf]
      %v291 = vld [vmem:[%s256 + $0x2c] sm:$0xf]
      %v292 = vld [vmem:[%s256 + $0x30] sm:$0xf]
      %v293 = vld [vmem:[%s260] sm:$0xf]
      %v294 = vld [vmem:[%s260 + $0x4] sm:$0xf]
      %v295 = vld [vmem:[%s260 + $0x8] sm:$0xf]
      %v296 = vld [vmem:[%s260 + $0xc] sm:$0xf]
      %v297 = vld [vmem:[%s260 + $0x10] sm:$0xf]
      %v298 = vld [vmem:[%s260 + $0x14] sm:$0xf]
      %v299 = vld [vmem:[%s260 + $0x18] sm:$0xf]
      %v300 = vld [vmem:[%s260 + $0x1c] sm:$0xf]
      %v301 = vld [vmem:[%s260 + $0x20] sm:$0xf]
      %v302 = vld [vmem:[%s260 + $0x24] sm:$0xf]
      %v303 = vld [vmem:[%s260 + $0x28] sm:$0xf]
      %v304 = vld [vmem:[%s260 + $0x2c] sm:$0xf]
      %v305 = vld [vmem:[%s260 + $0x30] sm:$0xf]
      %v306 = vld [vmem:[%s260 + $0x34] sm:$0xf]
      %v307 = vld [vmem:[%s260 + $0x38] sm:$0xf]
      %v308 = vld [vmem:[%s260 + $0x3c] sm:$0xf]
      %v319 = vunpack.c.l.b16 %v280
      %v320 = vunpack.c.l.b16 %v281
      %v321 = vunpack.c.l.b16 %v282
      %v322 = vunpack.c.l.b16 %v283
      %v323 = vunpack.c.l.b16 %v284
      %v324 = vunpack.c.l.b16 %v285
      %v325 = vunpack.c.l.b16 %v286
      %v326 = vunpack.c.l.b16 %v287
      %v327 = vunpack.c.l.b16 %v288
      %v328 = vunpack.c.l.b16 %v289
      %v329 = vpack.c.b16 %v320, %v319
      %v330 = vpack.c.b16 %v322, %v321
      %v331 = vpack.c.b16 %v324, %v323
      %v332 = vpack.c.b16 %v326, %v325
      %v333 = vpack.c.b16 %v328, %v327
      %v355 = vunpack.c.l.b16 %v293
      %v356 = vunpack.c.l.b16 %v294
      %v357 = vunpack.c.l.b16 %v295
      %v358 = vunpack.c.l.b16 %v296
      %v359 = vunpack.c.l.b16 %v297
      %v360 = vunpack.c.l.b16 %v298
      %v361 = vunpack.c.l.b16 %v299
      %v362 = vunpack.c.l.b16 %v300
      %v363 = vunpack.c.l.b16 %v301
      %v364 = vunpack.c.l.b16 %v302
      %v365 = vunpack.c.l.b16 %v303
      %v366 = vunpack.c.l.b16 %v304
      %v367 = vunpack.c.l.b16 %v305
      %v368 = vunpack.c.l.b16 %v306
      %v369 = vunpack.c.l.b16 %v307
      %v370 = vunpack.c.l.b16 %v308
      %v371 = vpack.c.b16 %v356, %v355
      %v372 = vpack.c.b16 %v358, %v357
      %v373 = vpack.c.b16 %v360, %v359
      %v374 = vpack.c.b16 %v362, %v361
      %v375 = vpack.c.b16 %v364, %v363
      %v376 = vpack.c.b16 %v366, %v365
      %v377 = vpack.c.b16 %v368, %v367
      %v378 = vpack.c.b16 %v370, %v369
      %387 = vmatpush.bf16.msra.mxu0 %v378
      %388 = vmatpush.bf16.msra.mxu0 %v377
      %389 = vmatpush.bf16.msra.mxu0 %v376
      %390 = vmatpush.bf16.msra.mxu0 %v375
      %391 = vmatpush.bf16.msra.mxu0 %v374
      %392 = vmatpush.bf16.msra.mxu0 %v373
      %393 = vmatpush.bf16.msra.mxu0 %v372
      %394 = vmatpush.bf16.msra.mxu0 %v371
      %395 = vmatmul.bf16.gmra.mxu0 %v329
      %v396 = vpop.f32.mrf.mxu0
      %v397 = vadd.f32 0.0, %v396
      %v398 = vpop.f32.mrf.mxu0
      %v399 = vadd.f32 0.0, %v398
      %400 = vmatmul.bf16.gmra.mxu0 %v330
      %v401 = vpop.f32.mrf.mxu0
      %v402 = vadd.f32 0.0, %v401
      %v403 = vpop.f32.mrf.mxu0
      %v404 = vadd.f32 0.0, %v403
      %405 = vmatmul.bf16.gmra.mxu0 %v331
      %v406 = vpop.f32.mrf.mxu0
      %v407 = vadd.f32 0.0, %v406
      %v408 = vpop.f32.mrf.mxu0
      %v409 = vadd.f32 0.0, %v408
      %410 = vmatmul.bf16.gmra.mxu0 %v332
      %v411 = vpop.f32.mrf.mxu0
      %v412 = vadd.f32 0.0, %v411
      %v413 = vpop.f32.mrf.mxu0
      %v414 = vadd.f32 0.0, %v413
      %415 = vmatmul.bf16.gmra.mxu0 %v333
      %v416 = vpop.f32.mrf.mxu0
      %v417 = vadd.f32 0.0, %v416
      %v418 = vpop.f32.mrf.mxu0
      %v419 = vadd.f32 0.0, %v418
      %420 = vdwg.mxu0
      %421 = vst [vmem:[#allocation2] sm:$0xff] %v397
      %422 = vst [vmem:[#allocation2 + $0x8] sm:$0xff] %v399
      %423 = vst [vmem:[#allocation2 + $0x10] sm:$0xff] %v402
      %424 = vst [vmem:[#allocation2 + $0x18] sm:$0xff] %v404
      %425 = vst [vmem:[#allocation2 + $0x20] sm:$0xff] %v407
      %426 = vst [vmem:[#allocation2 + $0x28] sm:$0xff] %v409
      %427 = vst [vmem:[#allocation2 + $0x30] sm:$0xff] %v412
      %428 = vst [vmem:[#allocation2 + $0x38] sm:$0xff] %v414
      %429 = vst [vmem:[#allocation2 + $0x40] sm:$0xff] %v417
      %430 = vst [vmem:[#allocation2 + $0x48] sm:$0xff] %v419
      %v431 = vld [vmem:[%s260 + $0x40] sm:$0xf]
      %v432 = vld [vmem:[%s260 + $0x44] sm:$0xf]
      %v433 = vld [vmem:[%s260 + $0x48] sm:$0xf]
      %v434 = vld [vmem:[%s260 + $0x4c] sm:$0xf]
      %v435 = vld [vmem:[%s260 + $0x50] sm:$0xf]
      %v436 = vld [vmem:[%s260 + $0x54] sm:$0xf]
      %v437 = vld [vmem:[%s260 + $0x58] sm:$0xf]
      %v438 = vld [vmem:[%s260 + $0x5c] sm:$0xf]
      %v439 = vld [vmem:[%s260 + $0x60] sm:$0xf]
      %v440 = vld [vmem:[%s260 + $0x64] sm:$0xf]
      %v441 = vld [vmem:[%s260 + $0x68] sm:$0xf]
      %v442 = vld [vmem:[%s260 + $0x6c] sm:$0xf]
      %v443 = vld [vmem:[%s260 + $0x70] sm:$0xf]
      %v444 = vld [vmem:[%s260 + $0x74] sm:$0xf]
      %v445 = vld [vmem:[%s260 + $0x78] sm:$0xf]
      %v446 = vld [vmem:[%s260 + $0x7c] sm:$0xf]
      %v448 = vunpack.c.l.b16 %v290
      %v449 = vpack.c.b16 %v448, %v448
      %vm450 = vsmask.f32 7424
      %v452 = vshrl.u32 %v329, 16
      %v454 = vshll.u32 %v329, 16
      %v456 = vrot.slane %v454, 1
      %v457 = vor.u32 %v452, %v456
      %v459 = vshll.u32 %v330, 16
      %v461 = vrot.slane %v459, 1
      %v462 = vsel %vm450, %v457, %v461
      %v463 = vshrl.u32 %v330, 16
      %v465 = vor.u32 %v463, %v461
      %v467 = vshll.u32 %v331, 16
      %v469 = vrot.slane %v467, 1
      %v470 = vsel %vm450, %v465, %v469
      %v471 = vshrl.u32 %v331, 16
      %v473 = vor.u32 %v471, %v469
      %v475 = vshll.u32 %v332, 16
      %v477 = vrot.slane %v475, 1
      %v478 = vsel %vm450, %v473, %v477
      %v479 = vshrl.u32 %v332, 16
      %v481 = vor.u32 %v479, %v477
      %v483 = vshll.u32 %v333, 16
      %v485 = vrot.slane %v483, 1
      %v486 = vsel %vm450, %v481, %v485
      %v487 = vshrl.u32 %v333, 16
      %v489 = vor.u32 %v487, %v485
      %v491 = vshll.u32 %v449, 16
      %v493 = vrot.slane %v491, 1
      %v494 = vsel %vm450, %v489, %v493
      %v516 = vunpack.c.l.b16 %v431
      %v517 = vunpack.c.l.b16 %v432
      %v518 = vunpack.c.l.b16 %v433
      %v519 = vunpack.c.l.b16 %v434
      %v520 = vunpack.c.l.b16 %v435
      %v521 = vunpack.c.l.b16 %v436
      %v522 = vunpack.c.l.b16 %v437
      %v523 = vunpack.c.l.b16 %v438
      %v524 = vunpack.c.l.b16 %v439
      %v525 = vunpack.c.l.b16 %v440
      %v526 = vunpack.c.l.b16 %v441
      %v527 = vunpack.c.l.b16 %v442
      %v528 = vunpack.c.l.b16 %v443
      %v529 = vunpack.c.l.b16 %v444
      %v530 = vunpack.c.l.b16 %v445
      %v531 = vunpack.c.l.b16 %v446
      %v532 = vpack.c.b16 %v517, %v516
      %v533 = vpack.c.b16 %v519, %v518
      %v534 = vpack.c.b16 %v521, %v520
      %v535 = vpack.c.b16 %v523, %v522
      %v536 = vpack.c.b16 %v525, %v524
      %v537 = vpack.c.b16 %v527, %v526
      %v538 = vpack.c.b16 %v529, %v528
      %v539 = vpack.c.b16 %v531, %v530
      %548 = vmatpush.bf16.msra.mxu0 %v539
      %549 = vmatpush.bf16.msra.mxu0 %v538
      %550 = vmatpush.bf16.msra.mxu0 %v537
      %551 = vmatpush.bf16.msra.mxu0 %v536
      %552 = vmatpush.bf16.msra.mxu0 %v535
      %553 = vmatpush.bf16.msra.mxu0 %v534
      %554 = vmatpush.bf16.msra.mxu0 %v533
      %555 = vmatpush.bf16.msra.mxu0 %v532
      %556 = vmatmul.bf16.gmra.mxu0 %v462
      %v557 = vpop.f32.mrf.mxu0
      %v558 = vadd.f32 0.0, %v557
      %v559 = vpop.f32.mrf.mxu0
      %v560 = vadd.f32 0.0, %v559
      %561 = vmatmul.bf16.gmra.mxu0 %v470
      %v562 = vpop.f32.mrf.mxu0
      %v563 = vadd.f32 0.0, %v562
      %v564 = vpop.f32.mrf.mxu0
      %v565 = vadd.f32 0.0, %v564
      %566 = vmatmul.bf16.gmra.mxu0 %v478
      %v567 = vpop.f32.mrf.mxu0
      %v568 = vadd.f32 0.0, %v567
      %v569 = vpop.f32.mrf.mxu0
      %v570 = vadd.f32 0.0, %v569
      %571 = vmatmul.bf16.gmra.mxu0 %v486
      %v572 = vpop.f32.mrf.mxu0
      %v573 = vadd.f32 0.0, %v572
      %v574 = vpop.f32.mrf.mxu0
      %v575 = vadd.f32 0.0, %v574
      %576 = vmatmul.bf16.gmra.mxu0 %v494
      %v577 = vpop.f32.mrf.mxu0
      %v578 = vadd.f32 0.0, %v577
      %v579 = vpop.f32.mrf.mxu0
      %v580 = vadd.f32 0.0, %v579
      %581 = vdwg.mxu0
      %v582 = vld [vmem:[#allocation2] sm:$0xff]
      %v583 = vld [vmem:[#allocation2 + $0x8] sm:$0xff]
      %v584 = vld [vmem:[#allocation2 + $0x10] sm:$0xff]
      %v585 = vld [vmem:[#allocation2 + $0x18] sm:$0xff]
      %v586 = vld [vmem:[#allocation2 + $0x20] sm:$0xff]
      %v587 = vld [vmem:[#allocation2 + $0x28] sm:$0xff]
      %v588 = vld [vmem:[#allocation2 + $0x30] sm:$0xff]
      %v589 = vld [vmem:[#allocation2 + $0x38] sm:$0xff]
      %v590 = vld [vmem:[#allocation2 + $0x40] sm:$0xff]
      %v591 = vld [vmem:[#allocation2 + $0x48] sm:$0xff]
      %v592 = vadd.f32 %v582, %v558
      %v593 = vadd.f32 %v583, %v560
      %v594 = vadd.f32 %v584, %v563
      %v595 = vadd.f32 %v585, %v565
      %v596 = vadd.f32 %v586, %v568
      %v597 = vadd.f32 %v587, %v570
      %v598 = vadd.f32 %v588, %v573
      %v599 = vadd.f32 %v589, %v575
      %v600 = vadd.f32 %v590, %v578
      %v601 = vadd.f32 %v591, %v580
      %602 = vst [vmem:[#allocation2] sm:$0xff] %v592
      %603 = vst [vmem:[#allocation2 + $0x8] sm:$0xff] %v593
      %604 = vst [vmem:[#allocation2 + $0x10] sm:$0xff] %v594
      %605 = vst [vmem:[#allocation2 + $0x18] sm:$0xff] %v595
      %606 = vst [vmem:[#allocation2 + $0x20] sm:$0xff] %v596
      %607 = vst [vmem:[#allocation2 + $0x28] sm:$0xff] %v597
      %608 = vst [vmem:[#allocation2 + $0x30] sm:$0xff] %v598
      %609 = vst [vmem:[#allocation2 + $0x38] sm:$0xff] %v599
      %610 = vst [vmem:[#allocation2 + $0x40] sm:$0xff] %v600
      %611 = vst [vmem:[#allocation2 + $0x48] sm:$0xff] %v601
      %v612 = vld [vmem:[%s260 + $0x80] sm:$0xf]
      %v613 = vld [vmem:[%s260 + $0x84] sm:$0xf]
      %v614 = vld [vmem:[%s260 + $0x88] sm:$0xf]
      %v615 = vld [vmem:[%s260 + $0x8c] sm:$0xf]
      %v616 = vld [vmem:[%s260 + $0x90] sm:$0xf]
      %v617 = vld [vmem:[%s260 + $0x94] sm:$0xf]
      %v618 = vld [vmem:[%s260 + $0x98] sm:$0xf]
      %v619 = vld [vmem:[%s260 + $0x9c] sm:$0xf]
      %v620 = vld [vmem:[%s260 + $0xa0] sm:$0xf]
      %v621 = vld [vmem:[%s260 + $0xa4] sm:$0xf]
      %v622 = vld [vmem:[%s260 + $0xa8] sm:$0xf]
      %v623 = vld [vmem:[%s260 + $0xac] sm:$0xf]
      %v624 = vld [vmem:[%s260 + $0xb0] sm:$0xf]
      %v625 = vld [vmem:[%s260 + $0xb4] sm:$0xf]
      %v626 = vld [vmem:[%s260 + $0xb8] sm:$0xf]
      %v627 = vld [vmem:[%s260 + $0xbc] sm:$0xf]
      %vm628 = vcmask 1046528
      %v629 = vrot.slane %v329, 1
      %v630 = vrot.slane %v330, 1
      %v631 = vsel %vm628, %v629, %v630
      %v632 = vrot.slane %v331, 1
      %v633 = vsel %vm628, %v630, %v632
      %v634 = vrot.slane %v332, 1
      %v635 = vsel %vm628, %v632, %v634
      %v636 = vrot.slane %v333, 1
      %v637 = vsel %vm628, %v634, %v636
      %v638 = vrot.slane %v449, 1
      %v639 = vsel %vm628, %v636, %v638
      %v661 = vunpack.c.l.b16 %v612
      %v662 = vunpack.c.l.b16 %v613
      %v663 = vunpack.c.l.b16 %v614
      %v664 = vunpack.c.l.b16 %v615
      %v665 = vunpack.c.l.b16 %v616
      %v666 = vunpack.c.l.b16 %v617
      %v667 = vunpack.c.l.b16 %v618
      %v668 = vunpack.c.l.b16 %v619
      %v669 = vunpack.c.l.b16 %v620
      %v670 = vunpack.c.l.b16 %v621
      %v671 = vunpack.c.l.b16 %v622
      %v672 = vunpack.c.l.b16 %v623
      %v673 = vunpack.c.l.b16 %v624
      %v674 = vunpack.c.l.b16 %v625
      %v675 = vunpack.c.l.b16 %v626
      %v676 = vunpack.c.l.b16 %v627
      %v677 = vpack.c.b16 %v662, %v661
      %v678 = vpack.c.b16 %v664, %v663
      %v679 = vpack.c.b16 %v666, %v665
      %v680 = vpack.c.b16 %v668, %v667
      %v681 = vpack.c.b16 %v670, %v669
      %v682 = vpack.c.b16 %v672, %v671
      %v683 = vpack.c.b16 %v674, %v673
      %v684 = vpack.c.b16 %v676, %v675
      %693 = vmatpush.bf16.msra.mxu0 %v684
      %694 = vmatpush.bf16.msra.mxu0 %v683
      %695 = vmatpush.bf16.msra.mxu0 %v682
      %696 = vmatpush.bf16.msra.mxu0 %v681
      %697 = vmatpush.bf16.msra.mxu0 %v680
      %698 = vmatpush.bf16.msra.mxu0 %v679
      %699 = vmatpush.bf16.msra.mxu0 %v678
      %700 = vmatpush.bf16.msra.mxu0 %v677
      %701 = vmatmul.bf16.gmra.mxu0 %v631
      %v702 = vpop.f32.mrf.mxu0
      %v703 = vadd.f32 0.0, %v702
      %v704 = vpop.f32.mrf.mxu0
      %v705 = vadd.f32 0.0, %v704
      %706 = vmatmul.bf16.gmra.mxu0 %v633
      %v707 = vpop.f32.mrf.mxu0
      %v708 = vadd.f32 0.0, %v707
      %v709 = vpop.f32.mrf.mxu0
      %v710 = vadd.f32 0.0, %v709
      %711 = vmatmul.bf16.gmra.mxu0 %v635
      %v712 = vpop.f32.mrf.mxu0
      %v713 = vadd.f32 0.0, %v712
      %v714 = vpop.f32.mrf.mxu0
      %v715 = vadd.f32 0.0, %v714
      %716 = vmatmul.bf16.gmra.mxu0 %v637
      %v717 = vpop.f32.mrf.mxu0
      %v718 = vadd.f32 0.0, %v717
      %v719 = vpop.f32.mrf.mxu0
      %v720 = vadd.f32 0.0, %v719
      %721 = vmatmul.bf16.gmra.mxu0 %v639
      %v722 = vpop.f32.mrf.mxu0
      %v723 = vadd.f32 0.0, %v722
      %v724 = vpop.f32.mrf.mxu0
      %v725 = vadd.f32 0.0, %v724
      %726 = vdwg.mxu0
      %v727 = vld [vmem:[#allocation2] sm:$0xff]
      %v728 = vld [vmem:[#allocation2 + $0x8] sm:$0xff]
      %v729 = vld [vmem:[#allocation2 + $0x10] sm:$0xff]
      %v730 = vld [vmem:[#allocation2 + $0x18] sm:$0xff]
      %v731 = vld [vmem:[#allocation2 + $0x20] sm:$0xff]
      %v732 = vld [vmem:[#allocation2 + $0x28] sm:$0xff]
      %v733 = vld [vmem:[#allocation2 + $0x30] sm:$0xff]
      %v734 = vld [vmem:[#allocation2 + $0x38] sm:$0xff]
      %v735 = vld [vmem:[#allocation2 + $0x40] sm:$0xff]
      %v736 = vld [vmem:[#allocation2 + $0x48] sm:$0xff]
      %v737 = vadd.f32 %v727, %v703
      %v738 = vadd.f32 %v728, %v705
      %v739 = vadd.f32 %v729, %v708
      %v740 = vadd.f32 %v730, %v710
      %v741 = vadd.f32 %v731, %v713
      %v742 = vadd.f32 %v732, %v715
      %v743 = vadd.f32 %v733, %v718
      %v744 = vadd.f32 %v734, %v720
      %v745 = vadd.f32 %v735, %v723
      %v746 = vadd.f32 %v736, %v725
      %747 = vst [vmem:[#allocation2] sm:$0xff] %v737
      %748 = vst [vmem:[#allocation2 + $0x8] sm:$0xff] %v738
      %749 = vst [vmem:[#allocation2 + $0x10] sm:$0xff] %v739
      %750 = vst [vmem:[#allocation2 + $0x18] sm:$0xff] %v740
      %751 = vst [vmem:[#allocation2 + $0x20] sm:$0xff] %v741
      %752 = vst [vmem:[#allocation2 + $0x28] sm:$0xff] %v742
      %753 = vst [vmem:[#allocation2 + $0x30] sm:$0xff] %v743
      %754 = vst [vmem:[#allocation2 + $0x38] sm:$0xff] %v744
      %755 = vst [vmem:[#allocation2 + $0x40] sm:$0xff] %v745
      %756 = vst [vmem:[#allocation2 + $0x48] sm:$0xff] %v746
      %v757 = vld [vmem:[%s260 + $0xc0] sm:$0xf]
      %v758 = vld [vmem:[%s260 + $0xc4] sm:$0xf]
      %v759 = vld [vmem:[%s260 + $0xc8] sm:$0xf]
      %v760 = vld [vmem:[%s260 + $0xcc] sm:$0xf]
      %v761 = vld [vmem:[%s260 + $0xd0] sm:$0xf]
      %v762 = vld [vmem:[%s260 + $0xd4] sm:$0xf]
      %v763 = vld [vmem:[%s260 + $0xd8] sm:$0xf]
      %v764 = vld [vmem:[%s260 + $0xdc] sm:$0xf]
      %v765 = vld [vmem:[%s260 + $0xe0] sm:$0xf]
      %v766 = vld [vmem:[%s260 + $0xe4] sm:$0xf]
      %v767 = vld [vmem:[%s260 + $0xe8] sm:$0xf]
      %v768 = vld [vmem:[%s260 + $0xec] sm:$0xf]
      %v769 = vld [vmem:[%s260 + $0xf0] sm:$0xf]
      %v770 = vld [vmem:[%s260 + $0xf4] sm:$0xf]
      %v771 = vld [vmem:[%s260 + $0xf8] sm:$0xf]
      %v772 = vld [vmem:[%s260 + $0xfc] sm:$0xf]
      %v774 = vunpack.c.l.b16 %v291
      %v775 = vpack.c.b16 %v321, %v320
      %v776 = vpack.c.b16 %v323, %v322
      %v777 = vpack.c.b16 %v325, %v324
      %v778 = vpack.c.b16 %v327, %v326
      %v779 = vpack.c.b16 %v448, %v328
      %v780 = vpack.c.b16 %v774, %v774
      %v781 = vrot.slane %v775, 1
      %v782 = vrot.slane %v776, 1
      %v783 = vsel %vm628, %v781, %v782
      %v784 = vrot.slane %v777, 1
      %v785 = vsel %vm628, %v782, %v784
      %v786 = vrot.slane %v778, 1
      %v787 = vsel %vm628, %v784, %v786
      %v788 = vrot.slane %v779, 1
      %v789 = vsel %vm628, %v786, %v788
      %v790 = vrot.slane %v780, 1
      %v791 = vsel %vm628, %v788, %v790
      %v813 = vunpack.c.l.b16 %v757
      %v814 = vunpack.c.l.b16 %v758
      %v815 = vunpack.c.l.b16 %v759
      %v816 = vunpack.c.l.b16 %v760
      %v817 = vunpack.c.l.b16 %v761
      %v818 = vunpack.c.l.b16 %v762
      %v819 = vunpack.c.l.b16 %v763
      %v820 = vunpack.c.l.b16 %v764
      %v821 = vunpack.c.l.b16 %v765
      %v822 = vunpack.c.l.b16 %v766
      %v823 = vunpack.c.l.b16 %v767
      %v824 = vunpack.c.l.b16 %v768
      %v825 = vunpack.c.l.b16 %v769
      %v826 = vunpack.c.l.b16 %v770
      %v827 = vunpack.c.l.b16 %v771
      %v828 = vunpack.c.l.b16 %v772
      %v829 = vpack.c.b16 %v814, %v813
      %v830 = vpack.c.b16 %v816, %v815
      %v831 = vpack.c.b16 %v818, %v817
      %v832 = vpack.c.b16 %v820, %v819
      %v833 = vpack.c.b16 %v822, %v821
      %v834 = vpack.c.b16 %v824, %v823
      %v835 = vpack.c.b16 %v826, %v825
      %v836 = vpack.c.b16 %v828, %v827
      %845 = vmatpush.bf16.msra.mxu0 %v836
      %846 = vmatpush.bf16.msra.mxu0 %v835
      %847 = vmatpush.bf16.msra.mxu0 %v834
      %848 = vmatpush.bf16.msra.mxu0 %v833
      %849 = vmatpush.bf16.msra.mxu0 %v832
      %850 = vmatpush.bf16.msra.mxu0 %v831
      %851 = vmatpush.bf16.msra.mxu0 %v830
      %852 = vmatpush.bf16.msra.mxu0 %v829
      %853 = vmatmul.bf16.gmra.mxu0 %v783
      %v854 = vpop.f32.mrf.mxu0
      %v855 = vadd.f32 0.0, %v854
      %v856 = vpop.f32.mrf.mxu0
      %v857 = vadd.f32 0.0, %v856
      %858 = vmatmul.bf16.gmra.mxu0 %v785
      %v859 = vpop.f32.mrf.mxu0
      %v860 = vadd.f32 0.0, %v859
      %v861 = vpop.f32.mrf.mxu0
      %v862 = vadd.f32 0.0, %v861
      %863 = vmatmul.bf16.gmra.mxu0 %v787
      %v864 = vpop.f32.mrf.mxu0
      %v865 = vadd.f32 0.0, %v864
      %v866 = vpop.f32.mrf.mxu0
      %v867 = vadd.f32 0.0, %v866
      %868 = vmatmul.bf16.gmra.mxu0 %v789
      %v869 = vpop.f32.mrf.mxu0
      %v870 = vadd.f32 0.0, %v869
      %v871 = vpop.f32.mrf.mxu0
      %v872 = vadd.f32 0.0, %v871
      %873 = vmatmul.bf16.gmra.mxu0 %v791
      %v874 = vpop.f32.mrf.mxu0
      %v875 = vadd.f32 0.0, %v874
      %v876 = vpop.f32.mrf.mxu0
      %v877 = vadd.f32 0.0, %v876
      %878 = vdwg.mxu0
      %v879 = vld [vmem:[#allocation2] sm:$0xff]
      %v880 = vld [vmem:[#allocation2 + $0x8] sm:$0xff]
      %v881 = vld [vmem:[#allocation2 + $0x10] sm:$0xff]
      %v882 = vld [vmem:[#allocation2 + $0x18] sm:$0xff]
      %v883 = vld [vmem:[#allocation2 + $0x20] sm:$0xff]
      %v884 = vld [vmem:[#allocation2 + $0x28] sm:$0xff]
      %v885 = vld [vmem:[#allocation2 + $0x30] sm:$0xff]
      %v886 = vld [vmem:[#allocation2 + $0x38] sm:$0xff]
      %v887 = vld [vmem:[#allocation2 + $0x40] sm:$0xff]
      %v888 = vld [vmem:[#allocation2 + $0x48] sm:$0xff]
      %v889 = vadd.f32 %v879, %v855
      %v890 = vadd.f32 %v880, %v857
      %v891 = vadd.f32 %v881, %v860
      %v892 = vadd.f32 %v882, %v862
      %v893 = vadd.f32 %v883, %v865
      %v894 = vadd.f32 %v884, %v867
      %v895 = vadd.f32 %v885, %v870
      %v896 = vadd.f32 %v886, %v872
      %v897 = vadd.f32 %v887, %v875
      %v898 = vadd.f32 %v888, %v877
      %899 = vst [vmem:[#allocation2] sm:$0xff] %v889
      %900 = vst [vmem:[#allocation2 + $0x8] sm:$0xff] %v890
      %901 = vst [vmem:[#allocation2 + $0x10] sm:$0xff] %v891
      %902 = vst [vmem:[#allocation2 + $0x18] sm:$0xff] %v892
      %903 = vst [vmem:[#allocation2 + $0x20] sm:$0xff] %v893
      %904 = vst [vmem:[#allocation2 + $0x28] sm:$0xff] %v894
      %905 = vst [vmem:[#allocation2 + $0x30] sm:$0xff] %v895
      %906 = vst [vmem:[#allocation2 + $0x38] sm:$0xff] %v896
      %907 = vst [vmem:[#allocation2 + $0x40] sm:$0xff] %v897
      %908 = vst [vmem:[#allocation2 + $0x48] sm:$0xff] %v898
      %v909 = vld [vmem:[%s260 + $0x100] sm:$0xf]
      %v910 = vld [vmem:[%s260 + $0x104] sm:$0xf]
      %v911 = vld [vmem:[%s260 + $0x108] sm:$0xf]
      %v912 = vld [vmem:[%s260 + $0x10c] sm:$0xf]
      %v913 = vld [vmem:[%s260 + $0x110] sm:$0xf]
      %v914 = vld [vmem:[%s260 + $0x114] sm:$0xf]
      %v915 = vld [vmem:[%s260 + $0x118] sm:$0xf]
      %v916 = vld [vmem:[%s260 + $0x11c] sm:$0xf]
      %v917 = vld [vmem:[%s260 + $0x120] sm:$0xf]
      %v918 = vld [vmem:[%s260 + $0x124] sm:$0xf]
      %v919 = vld [vmem:[%s260 + $0x128] sm:$0xf]
      %v920 = vld [vmem:[%s260 + $0x12c] sm:$0xf]
      %v921 = vld [vmem:[%s260 + $0x130] sm:$0xf]
      %v922 = vld [vmem:[%s260 + $0x134] sm:$0xf]
      %v923 = vld [vmem:[%s260 + $0x138] sm:$0xf]
      %v924 = vld [vmem:[%s260 + $0x13c] sm:$0xf]
      %vm925 = vsmask.f32 6400
      %v927 = vshrl.u32 %v775, 16
      %v929 = vrot.slane %v927, 1
      %v930 = vshll.u32 %v775, 16
      %v932 = vrot.slane %v930, 2
      %v933 = vor.u32 %v929, %v932
      %v935 = vshrl.u32 %v776, 16
      %v937 = vrot.slane %v935, 1
      %v938 = vshll.u32 %v776, 16
      %v940 = vrot.slane %v938, 2
      %v941 = vor.u32 %v937, %v940
      %v942 = vsel %vm925, %v933, %v941
      %v944 = vshrl.u32 %v777, 16
      %v946 = vrot.slane %v944, 1
      %v947 = vshll.u32 %v777, 16
      %v949 = vrot.slane %v947, 2
      %v950 = vor.u32 %v946, %v949
      %v951 = vsel %vm925, %v941, %v950
      %v953 = vshrl.u32 %v778, 16
      %v955 = vrot.slane %v953, 1
      %v956 = vshll.u32 %v778, 16
      %v958 = vrot.slane %v956, 2
      %v959 = vor.u32 %v955, %v958
      %v960 = vsel %vm925, %v950, %v959
      %v962 = vshrl.u32 %v779, 16
      %v964 = vrot.slane %v962, 1
      %v965 = vshll.u32 %v779, 16
      %v967 = vrot.slane %v965, 2
      %v968 = vor.u32 %v964, %v967
      %v969 = vsel %vm925, %v959, %v968
      %v971 = vshrl.u32 %v780, 16
      %v973 = vrot.slane %v971, 1
      %v974 = vshll.u32 %v780, 16
      %v976 = vrot.slane %v974, 2
      %v977 = vor.u32 %v973, %v976
      %v978 = vsel %vm925, %v968, %v977
      %v1000 = vunpack.c.l.b16 %v909
      %v1001 = vunpack.c.l.b16 %v910
      %v1002 = vunpack.c.l.b16 %v911
      %v1003 = vunpack.c.l.b16 %v912
      %v1004 = vunpack.c.l.b16 %v913
      %v1005 = vunpack.c.l.b16 %v914
      %v1006 = vunpack.c.l.b16 %v915
      %v1007 = vunpack.c.l.b16 %v916
      %v1008 = vunpack.c.l.b16 %v917
      %v1009 = vunpack.c.l.b16 %v918
      %v1010 = vunpack.c.l.b16 %v919
      %v1011 = vunpack.c.l.b16 %v920
      %v1012 = vunpack.c.l.b16 %v921
      %v1013 = vunpack.c.l.b16 %v922
      %v1014 = vunpack.c.l.b16 %v923
      %v1015 = vunpack.c.l.b16 %v924
      %v1016 = vpack.c.b16 %v1001, %v1000
      %v1017 = vpack.c.b16 %v1003, %v1002
      %v1018 = vpack.c.b16 %v1005, %v1004
      %v1019 = vpack.c.b16 %v1007, %v1006
      %v1020 = vpack.c.b16 %v1009, %v1008
      %v1021 = vpack.c.b16 %v1011, %v1010
      %v1022 = vpack.c.b16 %v1013, %v1012
      %v1023 = vpack.c.b16 %v1015, %v1014
      %1032 = vmatpush.bf16.msra.mxu0 %v1023
      %1033 = vmatpush.bf16.msra.mxu0 %v1022
      %1034 = vmatpush.bf16.msra.mxu0 %v1021
      %1035 = vmatpush.bf16.msra.mxu0 %v1020
      %1036 = vmatpush.bf16.msra.mxu0 %v1019
      %1037 = vmatpush.bf16.msra.mxu0 %v1018
      %1038 = vmatpush.bf16.msra.mxu0 %v1017
      %1039 = vmatpush.bf16.msra.mxu0 %v1016
      %1040 = vmatmul.bf16.gmra.mxu0 %v942
      %v1041 = vpop.f32.mrf.mxu0
      %v1042 = vadd.f32 0.0, %v1041
      %v1043 = vpop.f32.mrf.mxu0
      %v1044 = vadd.f32 0.0, %v1043
      %1045 = vmatmul.bf16.gmra.mxu0 %v951
      %v1046 = vpop.f32.mrf.mxu0
      %v1047 = vadd.f32 0.0, %v1046
      %v1048 = vpop.f32.mrf.mxu0
      %v1049 = vadd.f32 0.0, %v1048
      %1050 = vmatmul.bf16.gmra.mxu0 %v960
      %v1051 = vpop.f32.mrf.mxu0
      %v1052 = vadd.f32 0.0, %v1051
      %v1053 = vpop.f32.mrf.mxu0
      %v1054 = vadd.f32 0.0, %v1053
      %1055 = vmatmul.bf16.gmra.mxu0 %v969
      %v1056 = vpop.f32.mrf.mxu0
      %v1057 = vadd.f32 0.0, %v1056
      %v1058 = vpop.f32.mrf.mxu0
      %v1059 = vadd.f32 0.0, %v1058
      %1060 = vmatmul.bf16.gmra.mxu0 %v978
      %v1061 = vpop.f32.mrf.mxu0
      %v1062 = vadd.f32 0.0, %v1061
      %v1063 = vpop.f32.mrf.mxu0
      %v1064 = vadd.f32 0.0, %v1063
      %1065 = vdwg.mxu0
      %v1066 = vld [vmem:[#allocation2] sm:$0xff]
      %v1067 = vld [vmem:[#allocation2 + $0x8] sm:$0xff]
      %v1068 = vld [vmem:[#allocation2 + $0x10] sm:$0xff]
      %v1069 = vld [vmem:[#allocation2 + $0x18] sm:$0xff]
      %v1070 = vld [vmem:[#allocation2 + $0x20] sm:$0xff]
      %v1071 = vld [vmem:[#allocation2 + $0x28] sm:$0xff]
      %v1072 = vld [vmem:[#allocation2 + $0x30] sm:$0xff]
      %v1073 = vld [vmem:[#allocation2 + $0x38] sm:$0xff]
      %v1074 = vld [vmem:[#allocation2 + $0x40] sm:$0xff]
      %v1075 = vld [vmem:[#allocation2 + $0x48] sm:$0xff]
      %v1076 = vadd.f32 %v1066, %v1042
      %v1077 = vadd.f32 %v1067, %v1044
      %v1078 = vadd.f32 %v1068, %v1047
      %v1079 = vadd.f32 %v1069, %v1049
      %v1080 = vadd.f32 %v1070, %v1052
      %v1081 = vadd.f32 %v1071, %v1054
      %v1082 = vadd.f32 %v1072, %v1057
      %v1083 = vadd.f32 %v1073, %v1059
      %v1084 = vadd.f32 %v1074, %v1062
      %v1085 = vadd.f32 %v1075, %v1064
      %1086 = vst [vmem:[#allocation2] sm:$0xff] %v1076
      %1087 = vst [vmem:[#allocation2 + $0x8] sm:$0xff] %v1077
      %1088 = vst [vmem:[#allocation2 + $0x10] sm:$0xff] %v1078
      %1089 = vst [vmem:[#allocation2 + $0x18] sm:$0xff] %v1079
      %1090 = vst [vmem:[#allocation2 + $0x20] sm:$0xff] %v1080
      %1091 = vst [vmem:[#allocation2 + $0x28] sm:$0xff] %v1081
      %1092 = vst [vmem:[#allocation2 + $0x30] sm:$0xff] %v1082
      %1093 = vst [vmem:[#allocation2 + $0x38] sm:$0xff] %v1083
      %1094 = vst [vmem:[#allocation2 + $0x40] sm:$0xff] %v1084
      %1095 = vst [vmem:[#allocation2 + $0x48] sm:$0xff] %v1085
      %v1096 = vld [vmem:[%s260 + $0x140] sm:$0xf]
      %v1097 = vld [vmem:[%s260 + $0x144] sm:$0xf]
      %v1098 = vld [vmem:[%s260 + $0x148] sm:$0xf]
      %v1099 = vld [vmem:[%s260 + $0x14c] sm:$0xf]
      %v1100 = vld [vmem:[%s260 + $0x150] sm:$0xf]
      %v1101 = vld [vmem:[%s260 + $0x154] sm:$0xf]
      %v1102 = vld [vmem:[%s260 + $0x158] sm:$0xf]
      %v1103 = vld [vmem:[%s260 + $0x15c] sm:$0xf]
      %v1104 = vld [vmem:[%s260 + $0x160] sm:$0xf]
      %v1105 = vld [vmem:[%s260 + $0x164] sm:$0xf]
      %v1106 = vld [vmem:[%s260 + $0x168] sm:$0xf]
      %v1107 = vld [vmem:[%s260 + $0x16c] sm:$0xf]
      %v1108 = vld [vmem:[%s260 + $0x170] sm:$0xf]
      %v1109 = vld [vmem:[%s260 + $0x174] sm:$0xf]
      %v1110 = vld [vmem:[%s260 + $0x178] sm:$0xf]
      %v1111 = vld [vmem:[%s260 + $0x17c] sm:$0xf]
      %vm1112 = vcmask 1045504
      %v1113 = vrot.slane %v775, 2
      %v1114 = vrot.slane %v776, 2
      %v1115 = vsel %vm1112, %v1113, %v1114
      %v1116 = vrot.slane %v777, 2
      %v1117 = vsel %vm1112, %v1114, %v1116
      %v1118 = vrot.slane %v778, 2
      %v1119 = vsel %vm1112, %v1116, %v1118
      %v1120 = vrot.slane %v779, 2
      %v1121 = vsel %vm1112, %v1118, %v1120
      %v1122 = vrot.slane %v780, 2
      %v1123 = vsel %vm1112, %v1120, %v1122
      %v1145 = vunpack.c.l.b16 %v1096
      %v1146 = vunpack.c.l.b16 %v1097
      %v1147 = vunpack.c.l.b16 %v1098
      %v1148 = vunpack.c.l.b16 %v1099
      %v1149 = vunpack.c.l.b16 %v1100
      %v1150 = vunpack.c.l.b16 %v1101
      %v1151 = vunpack.c.l.b16 %v1102
      %v1152 = vunpack.c.l.b16 %v1103
      %v1153 = vunpack.c.l.b16 %v1104
      %v1154 = vunpack.c.l.b16 %v1105
      %v1155 = vunpack.c.l.b16 %v1106
      %v1156 = vunpack.c.l.b16 %v1107
      %v1157 = vunpack.c.l.b16 %v1108
      %v1158 = vunpack.c.l.b16 %v1109
      %v1159 = vunpack.c.l.b16 %v1110
      %v1160 = vunpack.c.l.b16 %v1111
      %v1161 = vpack.c.b16 %v1146, %v1145
      %v1162 = vpack.c.b16 %v1148, %v1147
      %v1163 = vpack.c.b16 %v1150, %v1149
      %v1164 = vpack.c.b16 %v1152, %v1151
      %v1165 = vpack.c.b16 %v1154, %v1153
      %v1166 = vpack.c.b16 %v1156, %v1155
      %v1167 = vpack.c.b16 %v1158, %v1157
      %v1168 = vpack.c.b16 %v1160, %v1159
      %1177 = vmatpush.bf16.msra.mxu0 %v1168
      %1178 = vmatpush.bf16.msra.mxu0 %v1167
      %1179 = vmatpush.bf16.msra.mxu0 %v1166
      %1180 = vmatpush.bf16.msra.mxu0 %v1165
      %1181 = vmatpush.bf16.msra.mxu0 %v1164
      %1182 = vmatpush.bf16.msra.mxu0 %v1163
      %1183 = vmatpush.bf16.msra.mxu0 %v1162
      %1184 = vmatpush.bf16.msra.mxu0 %v1161
      %1185 = vmatmul.bf16.gmra.mxu0 %v1115
      %v1186 = vpop.f32.mrf.mxu0
      %v1187 = vadd.f32 0.0, %v1186
      %v1188 = vpop.f32.mrf.mxu0
      %v1189 = vadd.f32 0.0, %v1188
      %1190 = vmatmul.bf16.gmra.mxu0 %v1117
      %v1191 = vpop.f32.mrf.mxu0
      %v1192 = vadd.f32 0.0, %v1191
      %v1193 = vpop.f32.mrf.mxu0
      %v1194 = vadd.f32 0.0, %v1193
      %1195 = vmatmul.bf16.gmra.mxu0 %v1119
      %v1196 = vpop.f32.mrf.mxu0
      %v1197 = vadd.f32 0.0, %v1196
      %v1198 = vpop.f32.mrf.mxu0
      %v1199 = vadd.f32 0.0, %v1198
      %1200 = vmatmul.bf16.gmra.mxu0 %v1121
      %v1201 = vpop.f32.mrf.mxu0
      %v1202 = vadd.f32 0.0, %v1201
      %v1203 = vpop.f32.mrf.mxu0
      %v1204 = vadd.f32 0.0, %v1203
      %1205 = vmatmul.bf16.gmra.mxu0 %v1123
      %v1206 = vpop.f32.mrf.mxu0
      %v1207 = vadd.f32 0.0, %v1206
      %v1208 = vpop.f32.mrf.mxu0
      %v1209 = vadd.f32 0.0, %v1208
      %1210 = vdwg.mxu0
      %v1211 = vld [vmem:[#allocation2] sm:$0xff]
      %v1212 = vld [vmem:[#allocation2 + $0x8] sm:$0xff]
      %v1213 = vld [vmem:[#allocation2 + $0x10] sm:$0xff]
      %v1214 = vld [vmem:[#allocation2 + $0x18] sm:$0xff]
      %v1215 = vld [vmem:[#allocation2 + $0x20] sm:$0xff]
      %v1216 = vld [vmem:[#allocation2 + $0x28] sm:$0xff]
      %v1217 = vld [vmem:[#allocation2 + $0x30] sm:$0xff]
      %v1218 = vld [vmem:[#allocation2 + $0x38] sm:$0xff]
      %v1219 = vld [vmem:[#allocation2 + $0x40] sm:$0xff]
      %v1220 = vld [vmem:[#allocation2 + $0x48] sm:$0xff]
      %v1221 = vadd.f32 %v1211, %v1187
      %v1222 = vadd.f32 %v1212, %v1189
      %v1223 = vadd.f32 %v1213, %v1192
      %v1224 = vadd.f32 %v1214, %v1194
      %v1225 = vadd.f32 %v1215, %v1197
      %v1226 = vadd.f32 %v1216, %v1199
      %v1227 = vadd.f32 %v1217, %v1202
      %v1228 = vadd.f32 %v1218, %v1204
      %v1229 = vadd.f32 %v1219, %v1207
      %v1230 = vadd.f32 %v1220, %v1209
      %1231 = vst [vmem:[#allocation2] sm:$0xff] %v1221
      %1232 = vst [vmem:[#allocation2 + $0x8] sm:$0xff] %v1222
      %1233 = vst [vmem:[#allocation2 + $0x10] sm:$0xff] %v1223
      %1234 = vst [vmem:[#allocation2 + $0x18] sm:$0xff] %v1224
      %1235 = vst [vmem:[#allocation2 + $0x20] sm:$0xff] %v1225
      %1236 = vst [vmem:[#allocation2 + $0x28] sm:$0xff] %v1226
      %1237 = vst [vmem:[#allocation2 + $0x30] sm:$0xff] %v1227
      %1238 = vst [vmem:[#allocation2 + $0x38] sm:$0xff] %v1228
      %1239 = vst [vmem:[#allocation2 + $0x40] sm:$0xff] %v1229
      %1240 = vst [vmem:[#allocation2 + $0x48] sm:$0xff] %v1230
      %v1241 = vld [vmem:[%s260 + $0x180] sm:$0xf]
      %v1242 = vld [vmem:[%s260 + $0x184] sm:$0xf]
      %v1243 = vld [vmem:[%s260 + $0x188] sm:$0xf]
      %v1244 = vld [vmem:[%s260 + $0x18c] sm:$0xf]
      %v1245 = vld [vmem:[%s260 + $0x190] sm:$0xf]
      %v1246 = vld [vmem:[%s260 + $0x194] sm:$0xf]
      %v1247 = vld [vmem:[%s260 + $0x198] sm:$0xf]
      %v1248 = vld [vmem:[%s260 + $0x19c] sm:$0xf]
      %v1249 = vld [vmem:[%s260 + $0x1a0] sm:$0xf]
      %v1250 = vld [vmem:[%s260 + $0x1a4] sm:$0xf]
      %v1251 = vld [vmem:[%s260 + $0x1a8] sm:$0xf]
      %v1252 = vld [vmem:[%s260 + $0x1ac] sm:$0xf]
      %v1253 = vld [vmem:[%s260 + $0x1b0] sm:$0xf]
      %v1254 = vld [vmem:[%s260 + $0x1b4] sm:$0xf]
      %v1255 = vld [vmem:[%s260 + $0x1b8] sm:$0xf]
      %v1256 = vld [vmem:[%s260 + $0x1bc] sm:$0xf]
      %v1258 = vunpack.c.l.b16 %v292
      %v1259 = vpack.c.b16 %v774, %v448
      %v1260 = vpack.c.b16 %v1258, %v1258
      %v1261 = vrot.slane %v330, 2
      %v1262 = vrot.slane %v331, 2
      %v1263 = vsel %vm1112, %v1261, %v1262
      %v1264 = vrot.slane %v332, 2
      %v1265 = vsel %vm1112, %v1262, %v1264
      %v1266 = vrot.slane %v333, 2
      %v1267 = vsel %vm1112, %v1264, %v1266
      %v1268 = vrot.slane %v1259, 2
      %v1269 = vsel %vm1112, %v1266, %v1268
      %v1270 = vrot.slane %v1260, 2
      %v1271 = vsel %vm1112, %v1268, %v1270
      %v1293 = vunpack.c.l.b16 %v1241
      %v1294 = vunpack.c.l.b16 %v1242
      %v1295 = vunpack.c.l.b16 %v1243
      %v1296 = vunpack.c.l.b16 %v1244
      %v1297 = vunpack.c.l.b16 %v1245
      %v1298 = vunpack.c.l.b16 %v1246
      %v1299 = vunpack.c.l.b16 %v1247
      %v1300 = vunpack.c.l.b16 %v1248
      %v1301 = vunpack.c.l.b16 %v1249
      %v1302 = vunpack.c.l.b16 %v1250
      %v1303 = vunpack.c.l.b16 %v1251
      %v1304 = vunpack.c.l.b16 %v1252
      %v1305 = vunpack.c.l.b16 %v1253
      %v1306 = vunpack.c.l.b16 %v1254
      %v1307 = vunpack.c.l.b16 %v1255
      %v1308 = vunpack.c.l.b16 %v1256
      %v1309 = vpack.c.b16 %v1294, %v1293
      %v1310 = vpack.c.b16 %v1296, %v1295
      %v1311 = vpack.c.b16 %v1298, %v1297
      %v1312 = vpack.c.b16 %v1300, %v1299
      %v1313 = vpack.c.b16 %v1302, %v1301
      %v1314 = vpack.c.b16 %v1304, %v1303
      %v1315 = vpack.c.b16 %v1306, %v1305
      %v1316 = vpack.c.b16 %v1308, %v1307
      %1325 = vmatpush.bf16.msra.mxu0 %v1316
      %1326 = vmatpush.bf16.msra.mxu0 %v1315
      %1327 = vmatpush.bf16.msra.mxu0 %v1314
      %1328 = vmatpush.bf16.msra.mxu0 %v1313
      %1329 = vmatpush.bf16.msra.mxu0 %v1312
      %1330 = vmatpush.bf16.msra.mxu0 %v1311
      %1331 = vmatpush.bf16.msra.mxu0 %v1310
      %1332 = vmatpush.bf16.msra.mxu0 %v1309
      %1333 = vmatmul.bf16.gmra.mxu0 %v1263
      %v1334 = vpop.f32.mrf.mxu0
      %v1335 = vadd.f32 0.0, %v1334
      %v1336 = vpop.f32.mrf.mxu0
      %v1337 = vadd.f32 0.0, %v1336
      %1338 = vmatmul.bf16.gmra.mxu0 %v1265
      %v1339 = vpop.f32.mrf.mxu0
      %v1340 = vadd.f32 0.0, %v1339
      %v1341 = vpop.f32.mrf.mxu0
      %v1342 = vadd.f32 0.0, %v1341
      %1343 = vmatmul.bf16.gmra.mxu0 %v1267
      %v1344 = vpop.f32.mrf.mxu0
      %v1345 = vadd.f32 0.0, %v1344
      %v1346 = vpop.f32.mrf.mxu0
      %v1347 = vadd.f32 0.0, %v1346
      %1348 = vmatmul.bf16.gmra.mxu0 %v1269
      %v1349 = vpop.f32.mrf.mxu0
      %v1350 = vadd.f32 0.0, %v1349
      %v1351 = vpop.f32.mrf.mxu0
      %v1352 = vadd.f32 0.0, %v1351
      %1353 = vmatmul.bf16.gmra.mxu0 %v1271
      %v1354 = vpop.f32.mrf.mxu0
      %v1355 = vadd.f32 0.0, %v1354
      %v1356 = vpop.f32.mrf.mxu0
      %v1357 = vadd.f32 0.0, %v1356
      %1358 = vdwg.mxu0
      %v1359 = vld [vmem:[#allocation2] sm:$0xff]
      %v1360 = vld [vmem:[#allocation2 + $0x8] sm:$0xff]
      %v1361 = vld [vmem:[#allocation2 + $0x10] sm:$0xff]
      %v1362 = vld [vmem:[#allocation2 + $0x18] sm:$0xff]
      %v1363 = vld [vmem:[#allocation2 + $0x20] sm:$0xff]
      %v1364 = vld [vmem:[#allocation2 + $0x28] sm:$0xff]
      %v1365 = vld [vmem:[#allocation2 + $0x30] sm:$0xff]
      %v1366 = vld [vmem:[#allocation2 + $0x38] sm:$0xff]
      %v1367 = vld [vmem:[#allocation2 + $0x40] sm:$0xff]
      %v1368 = vld [vmem:[#allocation2 + $0x48] sm:$0xff]
      %v1369 = vadd.f32 %v1359, %v1335
      %v1370 = vadd.f32 %v1360, %v1337
      %v1371 = vadd.f32 %v1361, %v1340
      %v1372 = vadd.f32 %v1362, %v1342
      %v1373 = vadd.f32 %v1363, %v1345
      %v1374 = vadd.f32 %v1364, %v1347
      %v1375 = vadd.f32 %v1365, %v1350
      %v1376 = vadd.f32 %v1366, %v1352
      %v1377 = vadd.f32 %v1367, %v1355
      %v1378 = vadd.f32 %v1368, %v1357
      %1379 = vst [vmem:[#allocation2] sm:$0xff] %v1369
      %1380 = vst [vmem:[#allocation2 + $0x8] sm:$0xff] %v1370
      %1381 = vst [vmem:[#allocation2 + $0x10] sm:$0xff] %v1371
      %1382 = vst [vmem:[#allocation2 + $0x18] sm:$0xff] %v1372
      %1383 = vst [vmem:[#allocation2 + $0x20] sm:$0xff] %v1373
      %1384 = vst [vmem:[#allocation2 + $0x28] sm:$0xff] %v1374
      %1385 = vst [vmem:[#allocation2 + $0x30] sm:$0xff] %v1375
      %1386 = vst [vmem:[#allocation2 + $0x38] sm:$0xff] %v1376
      %1387 = vst [vmem:[#allocation2 + $0x40] sm:$0xff] %v1377
      %1388 = vst [vmem:[#allocation2 + $0x48] sm:$0xff] %v1378
      %v1389 = vld [vmem:[%s260 + $0x1c0] sm:$0xf]
      %v1390 = vld [vmem:[%s260 + $0x1c4] sm:$0xf]
      %v1391 = vld [vmem:[%s260 + $0x1c8] sm:$0xf]
      %v1392 = vld [vmem:[%s260 + $0x1cc] sm:$0xf]
      %v1393 = vld [vmem:[%s260 + $0x1d0] sm:$0xf]
      %v1394 = vld [vmem:[%s260 + $0x1d4] sm:$0xf]
      %v1395 = vld [vmem:[%s260 + $0x1d8] sm:$0xf]
      %v1396 = vld [vmem:[%s260 + $0x1dc] sm:$0xf]
      %v1397 = vld [vmem:[%s260 + $0x1e0] sm:$0xf]
      %v1398 = vld [vmem:[%s260 + $0x1e4] sm:$0xf]
      %v1399 = vld [vmem:[%s260 + $0x1e8] sm:$0xf]
      %v1400 = vld [vmem:[%s260 + $0x1ec] sm:$0xf]
      %v1401 = vld [vmem:[%s260 + $0x1f0] sm:$0xf]
      %v1402 = vld [vmem:[%s260 + $0x1f4] sm:$0xf]
      %v1403 = vld [vmem:[%s260 + $0x1f8] sm:$0xf]
      %v1404 = vld [vmem:[%s260 + $0x1fc] sm:$0xf]
      %vm1405 = vsmask.f32 5376
      %v1406 = vrot.slane %v463, 2
      %v1407 = vrot.slane %v459, 3
      %v1408 = vor.u32 %v1406, %v1407
      %v1409 = vrot.slane %v471, 2
      %v1410 = vrot.slane %v467, 3
      %v1411 = vor.u32 %v1409, %v1410
      %v1412 = vsel %vm1405, %v1408, %v1411
      %v1413 = vrot.slane %v479, 2
      %v1414 = vrot.slane %v475, 3
      %v1415 = vor.u32 %v1413, %v1414
      %v1416 = vsel %vm1405, %v1411, %v1415
      %v1417 = vrot.slane %v487, 2
      %v1418 = vrot.slane %v483, 3
      %v1419 = vor.u32 %v1417, %v1418
      %v1420 = vsel %vm1405, %v1415, %v1419
      %v1422 = vshrl.u32 %v1259, 16
      %v1424 = vrot.slane %v1422, 2
      %v1425 = vshll.u32 %v1259, 16
      %v1427 = vrot.slane %v1425, 3
      %v1428 = vor.u32 %v1424, %v1427
      %v1429 = vsel %vm1405, %v1419, %v1428
      %v1431 = vshrl.u32 %v1260, 16
      %v1433 = vrot.slane %v1431, 2
      %v1434 = vshll.u32 %v1260, 16
      %v1436 = vrot.slane %v1434, 3
      %v1437 = vor.u32 %v1433, %v1436
      %v1438 = vsel %vm1405, %v1428, %v1437
      %v1460 = vunpack.c.l.b16 %v1389
      %v1461 = vunpack.c.l.b16 %v1390
      %v1462 = vunpack.c.l.b16 %v1391
      %v1463 = vunpack.c.l.b16 %v1392
      %v1464 = vunpack.c.l.b16 %v1393
      %v1465 = vunpack.c.l.b16 %v1394
      %v1466 = vunpack.c.l.b16 %v1395
      %v1467 = vunpack.c.l.b16 %v1396
      %v1468 = vunpack.c.l.b16 %v1397
      %v1469 = vunpack.c.l.b16 %v1398
      %v1470 = vunpack.c.l.b16 %v1399
      %v1471 = vunpack.c.l.b16 %v1400
      %v1472 = vunpack.c.l.b16 %v1401
      %v1473 = vunpack.c.l.b16 %v1402
      %v1474 = vunpack.c.l.b16 %v1403
      %v1475 = vunpack.c.l.b16 %v1404
      %v1476 = vpack.c.b16 %v1461, %v1460
      %v1477 = vpack.c.b16 %v1463, %v1462
      %v1478 = vpack.c.b16 %v1465, %v1464
      %v1479 = vpack.c.b16 %v1467, %v1466
      %v1480 = vpack.c.b16 %v1469, %v1468
      %v1481 = vpack.c.b16 %v1471, %v1470
      %v1482 = vpack.c.b16 %v1473, %v1472
      %v1483 = vpack.c.b16 %v1475, %v1474
      %1492 = vmatpush.bf16.msra.mxu0 %v1483
      %1493 = vmatpush.bf16.msra.mxu0 %v1482
      %1494 = vmatpush.bf16.msra.mxu0 %v1481
      %1495 = vmatpush.bf16.msra.mxu0 %v1480
      %1496 = vmatpush.bf16.msra.mxu0 %v1479
      %1497 = vmatpush.bf16.msra.mxu0 %v1478
      %1498 = vmatpush.bf16.msra.mxu0 %v1477
      %1499 = vmatpush.bf16.msra.mxu0 %v1476
      %1500 = vmatmul.bf16.gmra.mxu0 %v1412
      %v1501 = vpop.f32.mrf.mxu0
      %v1502 = vadd.f32 0.0, %v1501
      %v1503 = vpop.f32.mrf.mxu0
      %v1504 = vadd.f32 0.0, %v1503
      %1505 = vmatmul.bf16.gmra.mxu0 %v1416
      %v1506 = vpop.f32.mrf.mxu0
      %v1507 = vadd.f32 0.0, %v1506
      %v1508 = vpop.f32.mrf.mxu0
      %v1509 = vadd.f32 0.0, %v1508
      %1510 = vmatmul.bf16.gmra.mxu0 %v1420
      %v1511 = vpop.f32.mrf.mxu0
      %v1512 = vadd.f32 0.0, %v1511
      %v1513 = vpop.f32.mrf.mxu0
      %v1514 = vadd.f32 0.0, %v1513
      %1515 = vmatmul.bf16.gmra.mxu0 %v1429
      %v1516 = vpop.f32.mrf.mxu0
      %v1517 = vadd.f32 0.0, %v1516
      %v1518 = vpop.f32.mrf.mxu0
      %v1519 = vadd.f32 0.0, %v1518
      %1520 = vmatmul.bf16.gmra.mxu0 %v1438
      %v1521 = vpop.f32.mrf.mxu0
      %v1522 = vadd.f32 0.0, %v1521
      %v1523 = vpop.f32.mrf.mxu0
      %v1524 = vadd.f32 0.0, %v1523
      %1525 = vdwg.mxu0
      %v1526 = vld [vmem:[#allocation2] sm:$0xff]
      %v1527 = vld [vmem:[#allocation2 + $0x8] sm:$0xff]
      %v1528 = vld [vmem:[#allocation2 + $0x10] sm:$0xff]
      %v1529 = vld [vmem:[#allocation2 + $0x18] sm:$0xff]
      %v1530 = vld [vmem:[#allocation2 + $0x20] sm:$0xff]
      %v1531 = vld [vmem:[#allocation2 + $0x28] sm:$0xff]
      %v1532 = vld [vmem:[#allocation2 + $0x30] sm:$0xff]
      %v1533 = vld [vmem:[#allocation2 + $0x38] sm:$0xff]
      %v1534 = vld [vmem:[#allocation2 + $0x40] sm:$0xff]
      %v1535 = vld [vmem:[#allocation2 + $0x48] sm:$0xff]
      %v1536 = vadd.f32 %v1526, %v1502
      %v1537 = vadd.f32 %v1527, %v1504
      %v1538 = vadd.f32 %v1528, %v1507
      %v1539 = vadd.f32 %v1529, %v1509
      %v1540 = vadd.f32 %v1530, %v1512
      %v1541 = vadd.f32 %v1531, %v1514
      %v1542 = vadd.f32 %v1532, %v1517
      %v1543 = vadd.f32 %v1533, %v1519
      %v1544 = vadd.f32 %v1534, %v1522
      %v1545 = vadd.f32 %v1535, %v1524
      %1546 = vst [vmem:[#allocation2] sm:$0xff] %v1536
      %1547 = vst [vmem:[#allocation2 + $0x8] sm:$0xff] %v1537
      %1548 = vst [vmem:[#allocation2 + $0x10] sm:$0xff] %v1538
      %1549 = vst [vmem:[#allocation2 + $0x18] sm:$0xff] %v1539
      %1550 = vst [vmem:[#allocation2 + $0x20] sm:$0xff] %v1540
      %1551 = vst [vmem:[#allocation2 + $0x28] sm:$0xff] %v1541
      %1552 = vst [vmem:[#allocation2 + $0x30] sm:$0xff] %v1542
      %1553 = vst [vmem:[#allocation2 + $0x38] sm:$0xff] %v1543
      %1554 = vst [vmem:[#allocation2 + $0x40] sm:$0xff] %v1544
      %1555 = vst [vmem:[#allocation2 + $0x48] sm:$0xff] %v1545
      %v1556 = vld [vmem:[%s260 + $0x200] sm:$0xf]
      %v1557 = vld [vmem:[%s260 + $0x204] sm:$0xf]
      %v1558 = vld [vmem:[%s260 + $0x208] sm:$0xf]
      %v1559 = vld [vmem:[%s260 + $0x20c] sm:$0xf]
      %v1560 = vld [vmem:[%s260 + $0x210] sm:$0xf]
      %v1561 = vld [vmem:[%s260 + $0x214] sm:$0xf]
      %v1562 = vld [vmem:[%s260 + $0x218] sm:$0xf]
      %v1563 = vld [vmem:[%s260 + $0x21c] sm:$0xf]
      %v1564 = vld [vmem:[%s260 + $0x220] sm:$0xf]
      %v1565 = vld [vmem:[%s260 + $0x224] sm:$0xf]
      %v1566 = vld [vmem:[%s260 + $0x228] sm:$0xf]
      %v1567 = vld [vmem:[%s260 + $0x22c] sm:$0xf]
      %v1568 = vld [vmem:[%s260 + $0x230] sm:$0xf]
      %v1569 = vld [vmem:[%s260 + $0x234] sm:$0xf]
      %v1570 = vld [vmem:[%s260 + $0x238] sm:$0xf]
      %v1571 = vld [vmem:[%s260 + $0x23c] sm:$0xf]
      %vm1572 = vcmask 1044480
      %v1573 = vrot.slane %v330, 3
      %v1574 = vrot.slane %v331, 3
      %v1575 = vsel %vm1572, %v1573, %v1574
      %v1576 = vrot.slane %v332, 3
      %v1577 = vsel %vm1572, %v1574, %v1576
      %v1578 = vrot.slane %v333, 3
      %v1579 = vsel %vm1572, %v1576, %v1578
      %v1580 = vrot.slane %v1259, 3
      %v1581 = vsel %vm1572, %v1578, %v1580
      %v1582 = vrot.slane %v1260, 3
      %v1583 = vsel %vm1572, %v1580, %v1582
      %v1605 = vunpack.c.l.b16 %v1556
      %v1606 = vunpack.c.l.b16 %v1557
      %v1607 = vunpack.c.l.b16 %v1558
      %v1608 = vunpack.c.l.b16 %v1559
      %v1609 = vunpack.c.l.b16 %v1560
      %v1610 = vunpack.c.l.b16 %v1561
      %v1611 = vunpack.c.l.b16 %v1562
      %v1612 = vunpack.c.l.b16 %v1563
      %v1613 = vunpack.c.l.b16 %v1564
      %v1614 = vunpack.c.l.b16 %v1565
      %v1615 = vunpack.c.l.b16 %v1566
      %v1616 = vunpack.c.l.b16 %v1567
      %v1617 = vunpack.c.l.b16 %v1568
      %v1618 = vunpack.c.l.b16 %v1569
      %v1619 = vunpack.c.l.b16 %v1570
      %v1620 = vunpack.c.l.b16 %v1571
      %v1621 = vpack.c.b16 %v1606, %v1605
      %v1622 = vpack.c.b16 %v1608, %v1607
      %v1623 = vpack.c.b16 %v1610, %v1609
      %v1624 = vpack.c.b16 %v1612, %v1611
      %v1625 = vpack.c.b16 %v1614, %v1613
      %v1626 = vpack.c.b16 %v1616, %v1615
      %v1627 = vpack.c.b16 %v1618, %v1617
      %v1628 = vpack.c.b16 %v1620, %v1619
      %1637 = vmatpush.bf16.msra.mxu0 %v1628
      %1638 = vmatpush.bf16.msra.mxu0 %v1627
      %1639 = vmatpush.bf16.msra.mxu0 %v1626
      %1640 = vmatpush.bf16.msra.mxu0 %v1625
      %1641 = vmatpush.bf16.msra.mxu0 %v1624
      %1642 = vmatpush.bf16.msra.mxu0 %v1623
      %1643 = vmatpush.bf16.msra.mxu0 %v1622
      %1644 = vmatpush.bf16.msra.mxu0 %v1621
      %1645 = vmatmul.bf16.gmra.mxu0 %v1575
      %v1646 = vpop.f32.mrf.mxu0
      %v1647 = vadd.f32 0.0, %v1646
      %v1648 = vpop.f32.mrf.mxu0
      %v1649 = vadd.f32 0.0, %v1648
      %1650 = vmatmul.bf16.gmra.mxu0 %v1577
      %v1651 = vpop.f32.mrf.mxu0
      %v1652 = vadd.f32 0.0, %v1651
      %v1653 = vpop.f32.mrf.mxu0
      %v1654 = vadd.f32 0.0, %v1653
      %1655 = vmatmul.bf16.gmra.mxu0 %v1579
      %v1656 = vpop.f32.mrf.mxu0
      %v1657 = vadd.f32 0.0, %v1656
      %v1658 = vpop.f32.mrf.mxu0
      %v1659 = vadd.f32 0.0, %v1658
      %1660 = vmatmul.bf16.gmra.mxu0 %v1581
      %v1661 = vpop.f32.mrf.mxu0
      %v1662 = vadd.f32 0.0, %v1661
      %v1663 = vpop.f32.mrf.mxu0
      %v1664 = vadd.f32 0.0, %v1663
      %1665 = vmatmul.bf16.gmra.mxu0 %v1583
      %v1666 = vpop.f32.mrf.mxu0
      %v1667 = vadd.f32 0.0, %v1666
      %v1668 = vpop.f32.mrf.mxu0
      %v1669 = vadd.f32 0.0, %v1668
      %1670 = vdwg.mxu0
      %v1671 = vld [vmem:[#allocation2] sm:$0xff]
      %v1672 = vld [vmem:[#allocation2 + $0x8] sm:$0xff]
      %v1673 = vld [vmem:[#allocation2 + $0x10] sm:$0xff]
      %v1674 = vld [vmem:[#allocation2 + $0x18] sm:$0xff]
      %v1675 = vld [vmem:[#allocation2 + $0x20] sm:$0xff]
      %v1676 = vld [vmem:[#allocation2 + $0x28] sm:$0xff]
      %v1677 = vld [vmem:[#allocation2 + $0x30] sm:$0xff]
      %v1678 = vld [vmem:[#allocation2 + $0x38] sm:$0xff]
      %v1679 = vld [vmem:[#allocation2 + $0x40] sm:$0xff]
      %v1680 = vld [vmem:[#allocation2 + $0x48] sm:$0xff]
      %v1681 = vadd.f32 %v1671, %v1647
      %v1682 = vadd.f32 %v1672, %v1649
      %v1683 = vadd.f32 %v1673, %v1652
      %v1684 = vadd.f32 %v1674, %v1654
      %v1685 = vadd.f32 %v1675, %v1657
      %v1686 = vadd.f32 %v1676, %v1659
      %v1687 = vadd.f32 %v1677, %v1662
      %v1688 = vadd.f32 %v1678, %v1664
      %v1689 = vadd.f32 %v1679, %v1667
      %v1690 = vadd.f32 %v1680, %v1669
      %1691 = vst [vmem:[#allocation2] sm:$0xff] %v1681
      %1692 = vst [vmem:[#allocation2 + $0x8] sm:$0xff] %v1682
      %1693 = vst [vmem:[#allocation2 + $0x10] sm:$0xff] %v1683
      %1694 = vst [vmem:[#allocation2 + $0x18] sm:$0xff] %v1684
      %1695 = vst [vmem:[#allocation2 + $0x20] sm:$0xff] %v1685
      %1696 = vst [vmem:[#allocation2 + $0x28] sm:$0xff] %v1686
      %1697 = vst [vmem:[#allocation2 + $0x30] sm:$0xff] %v1687
      %1698 = vst [vmem:[#allocation2 + $0x38] sm:$0xff] %v1688
      %1699 = vst [vmem:[#allocation2 + $0x40] sm:$0xff] %v1689
      %1700 = vst [vmem:[#allocation2 + $0x48] sm:$0xff] %v1690
      %v1701 = vld [vmem:[#allocation2] sm:$0xff]
      %v1702 = vld [vmem:[#allocation2 + $0x8] sm:$0xff]
      %v1703 = vld [vmem:[#allocation2 + $0x10] sm:$0xff]
      %v1704 = vld [vmem:[#allocation2 + $0x18] sm:$0xff]
      %v1705 = vld [vmem:[#allocation2 + $0x20] sm:$0xff]
      %v1706 = vld [vmem:[#allocation2 + $0x28] sm:$0xff]
      %v1707 = vld [vmem:[#allocation2 + $0x30] sm:$0xff]
      %v1708 = vld [vmem:[#allocation2 + $0x38] sm:$0xff]
      %v1709 = vld [vmem:[#allocation2 + $0x40] sm:$0xff]
      %v1710 = vld [vmem:[#allocation2 + $0x48] sm:$0xff]
      %v1711 = vld [vmem:[%s263] sm:$0x1]
      %v1713 = vperm.slane %v1711, 0
      %v1715 = vadd.f32 %v1701, %v1713
      %v1716 = vadd.f32 %v1702, %v1713
      %v1717 = vadd.f32 %v1703, %v1713
      %v1718 = vadd.f32 %v1704, %v1713
      %v1719 = vadd.f32 %v1705, %v1713
      %v1720 = vadd.f32 %v1706, %v1713
      %v1721 = vadd.f32 %v1707, %v1713
      %v1722 = vadd.f32 %v1708, %v1713
      %v1723 = vadd.f32 %v1709, %v1713
      %v1724 = vadd.f32 %v1710, %v1713
      %v1725 = vld [vmem:[%s271] sm:$0xff]
      %v1726 = vld [vmem:[%s271 + $0x8] sm:$0xff]
      %v1727 = vld [vmem:[%s271 + $0x10] sm:$0xff]
      %v1728 = vld [vmem:[%s271 + $0x18] sm:$0xff]
      %v1729 = vld [vmem:[%s271 + $0x20] sm:$0xff]
      %v1730 = vld [vmem:[%s271 + $0x28] sm:$0xff]
      %v1731 = vld [vmem:[%s271 + $0x30] sm:$0xff]
      %v1732 = vld [vmem:[%s271 + $0x38] sm:$0xff]
      %v1733 = vld [vmem:[%s271 + $0x40] sm:$0xff]
      %v1734 = vld [vmem:[%s271 + $0x48] sm:$0xff]
      %v1735 = vadd.f32 %v1715, %v1725
      %v1736 = vadd.f32 %v1716, %v1726
      %v1737 = vadd.f32 %v1717, %v1727
      %v1738 = vadd.f32 %v1718, %v1728
      %v1739 = vadd.f32 %v1719, %v1729
      %v1740 = vadd.f32 %v1720, %v1730
      %v1741 = vadd.f32 %v1721, %v1731
      %v1742 = vadd.f32 %v1722, %v1732
      %v1743 = vadd.f32 %v1723, %v1733
      %v1744 = vadd.f32 %v1724, %v1734
      %1745 = vst [vmem:[%s279] sm:$0xff] %v1735
      %1746 = vst [vmem:[%s279 + $0x8] sm:$0xff] %v1736
      %1747 = vst [vmem:[%s279 + $0x10] sm:$0xff] %v1737
      %1748 = vst [vmem:[%s279 + $0x18] sm:$0xff] %v1738
      %1749 = vst [vmem:[%s279 + $0x20] sm:$0xff] %v1739
      %1750 = vst [vmem:[%s279 + $0x28] sm:$0xff] %v1740
      %1751 = vst [vmem:[%s279 + $0x30] sm:$0xff] %v1741
      %1752 = vst [vmem:[%s279 + $0x38] sm:$0xff] %v1742
      %1753 = vst [vmem:[%s279 + $0x40] sm:$0xff] %v1743
      %1754 = vst [vmem:[%s279 + $0x48] sm:$0xff] %v1744
      %p1755 = scmp.lt.s32.totalorder %s19, 1
      %s1756 = scalar_select %p1755, %s19, 1
      %p1757 = scmp.lt.s32.totalorder %s20, 0
      %s1758 = scalar_select %p1757, %s20, 0
      %s1759 = smul.addr %s1756, 10
      %s1760 = sadd.s32 %s1758, %s1759
      %s1761 = smul.addr %s1760, 8
      %s1762 = scalar_lea.vmem %s4, %s1761
      // Predicated region
      $region37: #{network_block_forward.7} parent=35 // pred_check
        %p1763 = pneg %p153
      $region38: #{network_block_forward.7} parent=35 // pred_check_branch
        %1765 = sbr.rel (%p1763) target = $region40
      $region39: #{network_block_forward.7} parent=35 // pred_region
        _
      $region40: #{network_block_forward.7} parent=35 // pred_fallthru
        _
    $region36: #{network_block_forward.7} parent=5 // pred_fallthru
      _
    %p1766 = scmp.le.s32.totalorder 2, %s10
    // Predicated region
    $region41: #{network_block_forward.7} parent=5 // pred_check
      %p1767 = pneg %p1766
    $region42: #{network_block_forward.7} parent=5 // pred_check_branch
      %1769 = sbr.rel (%p1767) target = $region44
    $region43: #{network_block_forward.7} parent=5 // pred_region
      %s1770 = ssub.s32 %s10, 2
      // Predicated region
      $region45: #{network_block_forward.7} parent=43 // pred_check
        %p1771 = pneg %p159
      $region46: #{network_block_forward.7} parent=43 // pred_check_branch
        %1773 = sbr.rel (%p1771) target = $region48
      $region47: #{network_block_forward.7} parent=43 // pred_region
        %p1774 = scmp.lt.s32.totalorder %s21, 1
        %s1775 = scalar_select %p1774, %s21, 1
        %p1776 = scmp.lt.s32.totalorder %s22, 0
        %s1777 = scalar_select %p1776, %s22, 0
        %s1778 = smul.addr %s1775, 10
        %s1779 = sadd.s32 %s1777, %s1778
        %s1780 = smul.addr %s1779, 8
        %s1781 = scalar_lea.vmem %s4, %s1780
      $region48: #{network_block_forward.7} parent=43 // pred_fallthru
        _
    $region44: #{network_block_forward.7} parent=5 // pred_fallthru
      _
  $region6: #{network_block_forward.7} parent=0 // loop_footer
    %s14 = sadd.s32 1, %s10
  $region7: #{network_block_forward.7} parent=0 // loop_footer_branch
    %9 = sbr.rel target = $region3
  $region8: #{network_block_forward.7} parent=0 // loop_exit
    _

</llo_original>
